<compile_context>
chip_gen: v5e
topology: v5e:2x2
jax: 0.10.0
libtpu: 0.0.40
codegen_flags: <defaults>
</compile_context>

<pallas_src>
import functools

import jax
import jax.numpy as jnp
from jax import lax
from jax.experimental import pallas as pl
from jax.experimental.pallas import tpu as pltpu


_VMEM_LIMIT = 48 * 1024 * 1024   # fits v7x (64 MiB/TC) and v5e/v6e (128 MiB)


def _cparams(*semantics):
    return pltpu.CompilerParams(dimension_semantics=tuple(semantics),
                                vmem_limit_bytes=_VMEM_LIMIT)


# --------------------------------------------------------------------------
# Fused, tiled matmul:
#   out = post_relu( post_s * ( relu(pre_s*A + pre_b) @ B ) + post_b )
# A, B are bf16 (MXU-native); accumulation is f32 in a VMEM scratch.
#   pre  == BN+ReLU preceding a 1x1 conv (per-K-column scale/shift).
#   post == BN(+ReLU) following a conv (per-N-column scale/shift).
# --------------------------------------------------------------------------

def _mm_fused_kernel(*refs, nk, pre, post, post_relu):
    a_ref, b_ref = refs[0], refs[1]
    idx = 2
    if pre:
        ps_ref, pb_ref = refs[idx], refs[idx + 1]
        idx += 2
    if post:
        qs_ref, qb_ref = refs[idx], refs[idx + 1]
        idx += 2
    o_ref, acc_ref = refs[idx], refs[idx + 1]

    k = pl.program_id(2)

    @pl.when(k == 0)
    def _init():
        acc_ref[...] = jnp.zeros_like(acc_ref)

    a = a_ref[...]
    if pre:
        a = jnp.maximum(a.astype(jnp.float32) * ps_ref[...] + pb_ref[...], 0.0)
        a = a.astype(jnp.bfloat16)
    acc_ref[...] += jnp.dot(a, b_ref[...], preferred_element_type=jnp.float32)

    @pl.when(k == nk - 1)
    def _finalize():
        y = acc_ref[...]
        if post:
            y = y * qs_ref[...] + qb_ref[...]
            if post_relu:
                y = jnp.maximum(y, 0.0)
        o_ref[...] = y.astype(o_ref.dtype)


def _pick_tk(K, cap=1024):
    if K <= cap:
        return K
    for t in range(cap - cap % 128, 0, -128):
        if K % t == 0:
            return t
    return K


def matmul_fused(a, b, pre=None, post=None, post_relu=False,
                 out_dtype=jnp.bfloat16):
    M, K = a.shape
    K2, N = b.shape
    assert K == K2
    tm = M if M <= 512 else 512
    tn = N if N <= 512 else 512
    tk = _pick_tk(K)          # always divides K (K <= 1024 at DenseNet scale)
    nk = -(-K // tk)
    grid = (-(-M // tm), -(-N // tn), nk)

    in_specs = [pl.BlockSpec((tm, tk), lambda i, j, k: (i, k)),
                pl.BlockSpec((tk, tn), lambda i, j, k: (k, j))]
    args = [a, b]
    if pre is not None:
        ps, pb = pre
        in_specs += [pl.BlockSpec((1, tk), lambda i, j, k: (0, k)),
                     pl.BlockSpec((1, tk), lambda i, j, k: (0, k))]
        args += [ps.reshape(1, K).astype(jnp.float32),
                 pb.reshape(1, K).astype(jnp.float32)]
    if post is not None:
        qs, qb = post
        in_specs += [pl.BlockSpec((1, tn), lambda i, j, k: (0, j)),
                     pl.BlockSpec((1, tn), lambda i, j, k: (0, j))]
        args += [qs.reshape(1, N).astype(jnp.float32),
                 qb.reshape(1, N).astype(jnp.float32)]

    kern = functools.partial(_mm_fused_kernel, nk=nk, pre=pre is not None,
                             post=post is not None, post_relu=post_relu)
    return pl.pallas_call(
        kern,
        out_shape=jax.ShapeDtypeStruct((M, N), out_dtype),
        grid=grid,
        in_specs=in_specs,
        out_specs=pl.BlockSpec((tm, tn), lambda i, j, k: (i, j)),
        scratch_shapes=[pltpu.VMEM((tm, tn), jnp.float32)],
        compiler_params=_cparams("parallel", "parallel", "arbitrary"),
    )(*args)


# --------------------------------------------------------------------------
# 3x3 / stride-1 / pad-1 conv that reads the padded NHWC tensor directly
# (no im2col).  Grid = (N, H); each step consumes 3 overlapping padded rows
# (as three views of the same array) and runs 9 small MXU dots.
# --------------------------------------------------------------------------

def _conv3x3_kernel(x0_ref, x1_ref, x2_ref, w_ref, o_ref, *, wo):
    rows = (x0_ref, x1_ref, x2_ref)
    acc = None
    for di in range(3):
        for dj in range(3):
            tap = rows[di][0, 0, dj:dj + wo, :]               # (wo, Cin)
            part = jnp.dot(tap, w_ref[di * 3 + dj],
                           preferred_element_type=jnp.float32)
            acc = part if acc is None else acc + part
    o_ref[0, 0] = acc.astype(o_ref.dtype)


def conv3x3_same(x, w_taps):
    """x: (N,H,W,Cin) bf16, already activated; w_taps: (9, Cin, Cout) bf16."""
    N, H, W, Cin = x.shape
    Cout = w_taps.shape[-1]
    xp = jnp.pad(x, ((0, 0), (1, 1), (1, 1), (0, 0)))
    Wp = W + 2
    kern = functools.partial(_conv3x3_kernel, wo=W)
    return pl.pallas_call(
        kern,
        out_shape=jax.ShapeDtypeStruct((N, H, W, Cout), x.dtype),
        grid=(N, H),
        in_specs=[
            pl.BlockSpec((1, 1, Wp, Cin), lambda n, h: (n, h, 0, 0)),
            pl.BlockSpec((1, 1, Wp, Cin), lambda n, h: (n, h + 1, 0, 0)),
            pl.BlockSpec((1, 1, Wp, Cin), lambda n, h: (n, h + 2, 0, 0)),
            pl.BlockSpec((9, Cin, Cout), lambda n, h: (0, 0, 0)),
        ],
        out_specs=pl.BlockSpec((1, 1, W, Cout), lambda n, h: (n, h, 0, 0)),
        compiler_params=_cparams("parallel", "parallel"),
    )(xp, xp, xp, w_taps)


# --------------------------------------------------------------------------
# Pooling: shifted window views are separate kernel inputs (no (K,M,C) stack),
# tiled over rows.
# --------------------------------------------------------------------------

def _pool_kernel(*refs, n_in, op):
    o_ref = refs[n_in]
    if op == "max":
        acc = refs[0][...]
        for r in refs[1:n_in]:
            acc = jnp.maximum(acc, r[...])
        o_ref[...] = acc.astype(o_ref.dtype)
    else:
        acc = refs[0][...].astype(jnp.float32)
        for r in refs[1:n_in]:
            acc = acc + r[...].astype(jnp.float32)
        o_ref[...] = (acc * (1.0 / n_in)).astype(o_ref.dtype)


def pallas_pool(views, op, out_dtype):
    M, C = views[0].shape
    n_in = len(views)
    tm = M if M <= 1024 else 512
    kern = functools.partial(_pool_kernel, n_in=n_in, op=op)
    return pl.pallas_call(
        kern,
        out_shape=jax.ShapeDtypeStruct((M, C), out_dtype),
        grid=(-(-M // tm),),
        in_specs=[pl.BlockSpec((tm, C), lambda i: (i, 0))] * n_in,
        out_specs=pl.BlockSpec((tm, C), lambda i: (i, 0)),
        compiler_params=_cparams("parallel"),
    )(*views)


def maxpool_3x3_s2_p1(x):
    # TODO(synk): could read the padded tensor directly per output row (like
    # conv3x3_same) to avoid materializing the 9 strided views at XLA level.
    N, H, W, C = x.shape
    Ho = (H + 2 - 3) // 2 + 1
    Wo = (W + 2 - 3) // 2 + 1
    xp = jnp.pad(x, ((0, 0), (1, 1), (1, 1), (0, 0)),
                 constant_values=-jnp.inf)    # exact in bf16; inputs are >= 0
    views = []
    for i in range(3):
        for j in range(3):
            sl = lax.slice(xp, (0, i, j, 0),
                           (N, i + 2 * (Ho - 1) + 1, j + 2 * (Wo - 1) + 1, C),
                           (1, 2, 2, 1))
            views.append(sl.reshape(N * Ho * Wo, C))
    out = pallas_pool(views, op="max", out_dtype=x.dtype)
    return out.reshape(N, Ho, Wo, C)


def avgpool_2x2_s2(x):
    N, H, W, C = x.shape
    Ho, Wo = H // 2, W // 2
    views = [x[:, i::2, j::2, :].reshape(N * Ho * Wo, C)
             for i in range(2) for j in range(2)]
    out = pallas_pool(views, op="mean", out_dtype=x.dtype)
    return out.reshape(N, Ho, Wo, C)


# --------------------------------------------------------------------------
# Head: fuses norm5 + ReLU + adaptive_avg_pool2d((1,1)) + flatten + cat(y) + fc.
# Tiled over the H axis with an f32 (N, C) accumulator; fc output padded to 128.
# --------------------------------------------------------------------------

def _head_kernel(*refs, steps, inv_hw, has_label):
    f_ref, s_ref, t_ref = refs[0], refs[1], refs[2]
    idx = 3
    if has_label:
        y_ref, wy_ref = refs[idx], refs[idx + 1]
        idx += 2
    wf_ref, b_ref = refs[idx], refs[idx + 1]
    o_ref, acc_ref = refs[idx + 2], refs[idx + 3]

    k = pl.program_id(0)

    @pl.when(k == 0)
    def _init():
        acc_ref[...] = jnp.zeros_like(acc_ref)

    f = f_ref[...].astype(jnp.float32)                      # (N, 1, W, C)
    f = jnp.maximum(f * s_ref[...] + t_ref[...], 0.0)       # norm5 + ReLU
    acc_ref[...] += jnp.sum(f, axis=2)[:, 0, :]             # sum over W

    @pl.when(k == steps - 1)
    def _finalize():
        pooled = acc_ref[...] * inv_hw                      # global average pool
        out = jnp.dot(pooled, wf_ref[...], preferred_element_type=jnp.float32)
        if has_label:
            out = out + jnp.dot(y_ref[...], wy_ref[...],
                                preferred_element_type=jnp.float32)
        o_ref[...] = out + b_ref[...]


def head_forward(feat, y, norm5_s, norm5_b, fc_w, fc_b, include_label,
                 num_classes):
    N, H, W, C = feat.shape
    nc_pad = fc_w.shape[1]
    has_label = include_label > 0
    wf = fc_w[:C]

    args = [feat,
            norm5_s.reshape(1, 1, 1, C).astype(jnp.float32),
            norm5_b.reshape(1, 1, 1, C).astype(jnp.float32)]
    in_specs = [pl.BlockSpec((N, 1, W, C), lambda k: (0, k, 0, 0)),
                pl.BlockSpec((1, 1, 1, C), lambda k: (0, 0, 0, 0)),
                pl.BlockSpec((1, 1, 1, C), lambda k: (0, 0, 0, 0))]
    if has_label:
        wy = fc_w[C:]
        args += [y.astype(jnp.float32), wy]
        in_specs += [pl.BlockSpec((N, include_label), lambda k: (0, 0)),
                     pl.BlockSpec((include_label, nc_pad), lambda k: (0, 0))]
    args += [wf, fc_b.reshape(1, nc_pad)]
    in_specs += [pl.BlockSpec((C, nc_pad), lambda k: (0, 0)),
                 pl.BlockSpec((1, nc_pad), lambda k: (0, 0))]

    kern = functools.partial(_head_kernel, steps=H, inv_hw=1.0 / (H * W),
                             has_label=has_label)
    out = pl.pallas_call(
        kern,
        out_shape=jax.ShapeDtypeStruct((N, nc_pad), jnp.float32),
        grid=(H,),
        in_specs=in_specs,
        out_specs=pl.BlockSpec((N, nc_pad), lambda k: (0, 0)),
        scratch_shapes=[pltpu.VMEM((N, C), jnp.float32)],
        compiler_params=_cparams("arbitrary"),
    )(*args)
    return out[:, :num_classes]


# --------------------------------------------------------------------------
# JAX glue: stem im2col, dense blocks, transitions
# --------------------------------------------------------------------------

def _im2col(x, kh, kw, stride, pad):
    """NHWC -> (N*Ho*Wo, kh*kw*C) patches.  Used only for the 7x7/2 stem conv."""
    N, H, W, C = x.shape
    xp = jnp.pad(x, ((0, 0), (pad, pad), (pad, pad), (0, 0)))
    Ho = (H + 2 * pad - kh) // stride + 1
    Wo = (W + 2 * pad - kw) // stride + 1
    cols = []
    for i in range(kh):
        for j in range(kw):
            sl = lax.slice(xp, (0, i, j, 0),
                           (N, i + stride * (Ho - 1) + 1,
                            j + stride * (Wo - 1) + 1, C),
                           (1, stride, stride, 1))
            cols.append(sl)
    patches = jnp.concatenate(cols, axis=-1).reshape(N * Ho * Wo, kh * kw * C)
    return patches, (N, Ho, Wo)


def dense_layer(x, p):
    """torchvision _DenseLayer: BN-ReLU-Conv1x1 -> BN-ReLU-Conv3x3, concat."""
    N, H, W, C = x.shape
    mid = matmul_fused(x.reshape(N * H * W, C), p["w1"],
                       pre=(p["n1_s"], p["n1_b"]),
                       post=(p["n2_s"], p["n2_b"]), post_relu=True)
    mid = mid.reshape(N, H, W, p["w1"].shape[1])
    h = conv3x3_same(mid, p["w2"])
    # TODO(synk): the dense concatenation is an HBM copy; avoiding it would need
    # a preallocated per-block channel buffer written via input_output_aliases.
    return jnp.concatenate([x, h], axis=-1)


def transition(x, p):
    N, H, W, C = x.shape
    h = matmul_fused(x.reshape(N * H * W, C), p["w"],
                     pre=(p["n_s"], p["n_b"]))
    h = h.reshape(N, H, W, p["w"].shape[1])
    return avgpool_2x2_s2(h)


def densenet_features(x, params):
    # Stem: conv0 (7x7/2, pad 3) with fused norm0/ReLU epilogue, then maxpool.
    # TODO(synk): the 7x7/2 stem still builds an im2col patch matrix (one-time
    # cost); a direct-tap kernel would need strided sublane reads.
    patches, (N, Ho, Wo) = _im2col(x, 7, 7, 2, 3)
    h = matmul_fused(patches, params["conv0"],
                     post=(params["norm0_s"], params["norm0_b"]),
                     post_relu=True)
    h = h.reshape(N, Ho, Wo, params["conv0"].shape[1])
    h = maxpool_3x3_s2_p1(h)
    for block in params["blocks"]:
        for layer_p in block["layers"]:
            h = dense_layer(h, layer_p)
        if block["transition"] is not None:
            h = transition(h, block["transition"])
    return h        # pre-norm5; norm5 + ReLU are fused into the head kernel


def densenet_base_forward(params, x_nchw, y, cfg):
    """Equivalent of _densenet_base.forward(x, y)."""
    x = jnp.transpose(x_nchw, (0, 2, 3, 1)).astype(jnp.bfloat16)   # NCHW -> NHWC
    feat = densenet_features(x, params)
    return head_forward(feat, y, params["norm5_s"], params["norm5_b"],
                        params["fc_w"], params["fc_b"],
                        cfg["include_label"], cfg["num_classes"])


# --------------------------------------------------------------------------
# Deterministic synthetic parameters (BatchNorm folded to inference scale/shift;
# conv / matmul weights stored in bf16, fc padded to a lane-dense 128 columns).
# --------------------------------------------------------------------------

def _bn_params(key, c):
    k1, k2, k3, k4 = jax.random.split(key, 4)
    gamma = 1.0 + 0.1 * jax.random.normal(k1, (c,), jnp.float32)
    beta = 0.1 * jax.random.normal(k2, (c,), jnp.float32)
    mean = 0.1 * jax.random.normal(k3, (c,), jnp.float32)
    var = 1.0 + 0.1 * jax.random.uniform(k4, (c,), jnp.float32)
    scale = gamma / jnp.sqrt(var + 1e-5)
    shift = beta - mean * scale
    return scale, shift


def _conv_w_mat(key, kh, kw, cin, cout):
    fan_in = kh * kw * cin
    w = jax.random.normal(key, (kh * kw * cin, cout), jnp.float32)
    return (w * (2.0 / fan_in) ** 0.5).astype(jnp.bfloat16)


def _conv_w_taps(key, cin, cout):
    fan_in = 9 * cin
    w = jax.random.normal(key, (9, cin, cout), jnp.float32)
    return (w * (2.0 / fan_in) ** 0.5).astype(jnp.bfloat16)


def init_params(key, cfg):
    keys = iter(jax.random.split(key, 512))
    nif, gr, bs = cfg["num_init_features"], cfg["growth_rate"], cfg["bn_size"]
    params = {}
    params["conv0"] = _conv_w_mat(next(keys), 7, 7, 3, nif)
    params["norm0_s"], params["norm0_b"] = _bn_params(next(keys), nif)
    blocks = []
    c = nif
    for bi, nlayers in enumerate(cfg["block_config"]):
        layers = []
        for _ in range(nlayers):
            p = {}
            p["n1_s"], p["n1_b"] = _bn_params(next(keys), c)
            p["w1"] = _conv_w_mat(next(keys), 1, 1, c, bs * gr)
            p["n2_s"], p["n2_b"] = _bn_params(next(keys), bs * gr)
            p["w2"] = _conv_w_taps(next(keys), bs * gr, gr)
            layers.append(p)
            c += gr
        block = {"layers": layers, "transition": None}
        if bi != len(cfg["block_config"]) - 1:
            t = {}
            t["n_s"], t["n_b"] = _bn_params(next(keys), c)
            t["w"] = _conv_w_mat(next(keys), 1, 1, c, c // 2)
            block["transition"] = t
            c = c // 2
        blocks.append(block)
    params["blocks"] = blocks
    params["norm5_s"], params["norm5_b"] = _bn_params(next(keys), c)
    hidden = c                                   # densenet.classifier.in_features
    fc_in = hidden + cfg["include_label"]
    nc = cfg["num_classes"]
    nc_pad = -(-nc // 128) * 128                 # lane-dense fc output
    w = jax.random.normal(next(keys), (fc_in, nc), jnp.float32) * (1.0 / fc_in) ** 0.5
    b = 0.01 * jax.random.normal(next(keys), (nc,), jnp.float32)
    params["fc_w"] = jnp.pad(w, ((0, 0), (0, nc_pad - nc)))
    params["fc_b"] = jnp.pad(b, (0, nc_pad - nc))
    return params, hidden


# --------------------------------------------------------------------------
# Demo
# --------------------------------------------------------------------------

if __name__ == "__main__":
    # Scaled-down DenseNet config (densenet121 would be num_init_features=64,
    # growth_rate=32, block_config=(6, 12, 24, 16)).
    cfg = dict(num_init_features=16, growth_rate=8, bn_size=4,
               block_config=(2, 2), include_label=2, num_classes=5)

    key = jax.random.PRNGKey(0)
    kp, kx, ky = jax.random.split(key, 3)
    params, hidden = init_params(kp, cfg)

    x = jax.random.normal(kx, (2, 3, 32, 32), jnp.float32)    # NCHW, PyTorch-style
    y = jax.random.normal(ky, (2, cfg["include_label"]), jnp.float32)

    fwd = jax.jit(lambda p, xx, yy: densenet_base_forward(p, xx, yy, cfg))
    out = jax.block_until_ready(fwd(params, x, y))

    assert out.shape == (2, cfg["num_classes"]), out.shape
    assert out.dtype == jnp.float32
    print("KERNEL_OK")
</pallas_src>

<mosaic_0001>
module attributes {stable_mosaic.version = 11 : i64} {
  func.func @_mm_fused_kernel(%arg0: i32, %arg1: i32, %arg2: i32, %arg3: memref<512x147xbf16, #tpu.memory_space<vmem>>, %arg4: memref<147x16xbf16, #tpu.memory_space<vmem>>, %arg5: memref<1x16xf32, #tpu.memory_space<vmem>>, %arg6: memref<1x16xf32, #tpu.memory_space<vmem>>, %arg7: memref<512x16xbf16, #tpu.memory_space<vmem>>, %arg8: memref<512x16xf32, #tpu.memory_space<vmem>>) attributes {dimension_semantics = [#tpu.dimension_semantics<parallel>, #tpu.dimension_semantics<parallel>, #tpu.dimension_semantics<arbitrary>], iteration_bounds = array<i64: 1, 1, 1>, scalar_prefetch = 0 : i64, scratch_operands = 1 : i64, tpu.core_type = #tpu.core_type<tc>, window_params = [{transform_indices = @transform_0, window_bounds = array<i64: 512, 147>}, {transform_indices = @transform_1, window_bounds = array<i64: 147, 16>}, {transform_indices = @transform_2, window_bounds = array<i64: 1, 16>}, {transform_indices = @transform_3, window_bounds = array<i64: 1, 16>}, {transform_indices = @transform_4, window_bounds = array<i64: 512, 16>}]} {
    %c0_i32 = arith.constant 0 : i32
    %0 = arith.cmpi eq, %arg2, %c0_i32 : i32
    %1 = arith.extui %0 : i1 to i32
    %c0_i32_0 = arith.constant 0 : i32
    %2 = arith.cmpi ne, %1, %c0_i32_0 : i32
    scf.if %2 {
      %cst_10 = arith.constant 0.000000e+00 : f32
      %12 = vector.broadcast %cst_10 : f32 to vector<512x16xf32>
      %c0_11 = arith.constant 0 : index
      %c0_12 = arith.constant 0 : index
      %13 = vector.load %arg8[%c0_11, %c0_12] : memref<512x16xf32, #tpu.memory_space<vmem>>, vector<512x16xf32>
      tpu.vector_store %arg8[%c0_11, %c0_12], %12 {strides = array<i32>} : memref<512x16xf32, #tpu.memory_space<vmem>>, vector<512x16xf32>,
    } else {
    }
    %c0 = arith.constant 0 : index
    %c0_1 = arith.constant 0 : index
    %3 = vector.load %arg3[%c0, %c0_1] : memref<512x147xbf16, #tpu.memory_space<vmem>>, vector<512x147xbf16>
    %c0_2 = arith.constant 0 : index
    %c0_3 = arith.constant 0 : index
    %4 = vector.load %arg8[%c0_2, %c0_3] : memref<512x16xf32, #tpu.memory_space<vmem>>, vector<512x16xf32>
    %c0_4 = arith.constant 0 : index
    %c0_5 = arith.constant 0 : index
    %5 = vector.load %arg4[%c0_4, %c0_5] : memref<147x16xbf16, #tpu.memory_space<vmem>>, vector<147x16xbf16>
    %cst = arith.constant dense<0.000000e+00> : vector<512x16xf32>
    %6 = tpu.matmul %3, %5, %cst {dimension_numbers = #tpu.dot_dimension_numbers<[1], [0], [0], [1], [0, 0, 1, 1], [], []>} : vector<512x147xbf16>, vector<147x16xbf16>, vector<512x16xf32> -> vector<512x16xf32>
    %7 = arith.addf %4, %6 : vector<512x16xf32>
    %c0_6 = arith.constant 0 : index
    %c0_7 = arith.constant 0 : index
    %8 = vector.load %arg8[%c0_6, %c0_7] : memref<512x16xf32, #tpu.memory_space<vmem>>, vector<512x16xf32>
    tpu.vector_store %arg8[%c0_6, %c0_7], %7 {strides = array<i32>} : memref<512x16xf32, #tpu.memory_space<vmem>>, vector<512x16xf32>,
    %c0_i32_8 = arith.constant 0 : i32
    %9 = arith.cmpi eq, %arg2, %c0_i32_8 : i32
    %10 = arith.extui %9 : i1 to i32
    %c0_i32_9 = arith.constant 0 : i32
    %11 = arith.cmpi ne, %10, %c0_i32_9 : i32
    scf.if %11 {
      %c0_10 = arith.constant 0 : index
      %c0_11 = arith.constant 0 : index
      %12 = vector.load %arg8[%c0_10, %c0_11] : memref<512x16xf32, #tpu.memory_space<vmem>>, vector<512x16xf32>
      %c0_12 = arith.constant 0 : index
      %c0_13 = arith.constant 0 : index
      %13 = vector.load %arg5[%c0_12, %c0_13] : memref<1x16xf32, #tpu.memory_space<vmem>>, vector<1x16xf32>
      %14 = vector.broadcast %13 : vector<1x16xf32> to vector<512x16xf32>
      %15 = arith.mulf %12, %14 : vector<512x16xf32>
      %c0_14 = arith.constant 0 : index
      %c0_15 = arith.constant 0 : index
      %16 = vector.load %arg6[%c0_14, %c0_15] : memref<1x16xf32, #tpu.memory_space<vmem>>, vector<1x16xf32>
      %17 = vector.broadcast %16 : vector<1x16xf32> to vector<512x16xf32>
      %18 = arith.addf %15, %17 : vector<512x16xf32>
      %cst_16 = arith.constant 0.000000e+00 : f32
      %19 = vector.broadcast %cst_16 : f32 to vector<512x16xf32>
      %20 = arith.maximumf %18, %19 : vector<512x16xf32>
      %21 = arith.truncf %20 : vector<512x16xf32> to vector<512x16xbf16>
      %c0_17 = arith.constant 0 : index
      %c0_18 = arith.constant 0 : index
      %22 = vector.load %arg7[%c0_17, %c0_18] : memref<512x16xbf16, #tpu.memory_space<vmem>>, vector<512x16xbf16>
      tpu.vector_store %arg7[%c0_17, %c0_18], %21 {strides = array<i32>} : memref<512x16xbf16, #tpu.memory_space<vmem>>, vector<512x16xbf16>,
    } else {
    }
    return
  }
  func.func @transform_0(%arg0: i32, %arg1: i32, %arg2: i32) -> (i32, i32) {
    %c0_i32 = arith.constant 0 : i32
    return %arg0, %arg2 : i32, i32
  }
  func.func @transform_1(%arg0: i32, %arg1: i32, %arg2: i32) -> (i32, i32) {
    %c0_i32 = arith.constant 0 : i32
    return %arg2, %arg1 : i32, i32
  }
  func.func @transform_2(%arg0: i32, %arg1: i32, %arg2: i32) -> (i32, i32) {
    %c0_i32 = arith.constant 0 : i32
    %c0_i32_0 = arith.constant 0 : i32
    return %c0_i32, %arg1 : i32, i32
  }
  func.func @transform_3(%arg0: i32, %arg1: i32, %arg2: i32) -> (i32, i32) {
    %c0_i32 = arith.constant 0 : i32
    %c0_i32_0 = arith.constant 0 : i32
    return %c0_i32, %arg1 : i32, i32
  }
  func.func @transform_4(%arg0: i32, %arg1: i32, %arg2: i32) -> (i32, i32) {
    %c0_i32 = arith.constant 0 : i32
    return %arg0, %arg1 : i32, i32
  }
}

module attributes {stable_mosaic.version = 11 : i64} {
  func.func @_pool_kernel(%arg0: i32, %arg1: memref<128x16xbf16, #tpu.memory_space<vmem>>, %arg2: memref<128x16xbf16, #tpu.memory_space<vmem>>, %arg3: memref<128x16xbf16, #tpu.memory_space<vmem>>, %arg4: memref<128x16xbf16, #tpu.memory_space<vmem>>, %arg5: memref<128x16xbf16, #tpu.memory_space<vmem>>, %arg6: memref<128x16xbf16, #tpu.memory_space<vmem>>, %arg7: memref<128x16xbf16, #tpu.memory_space<vmem>>, %arg8: memref<128x16xbf16, #tpu.memory_space<vmem>>, %arg9: memref<128x16xbf16, #tpu.memory_space<vmem>>, %arg10: memref<128x16xbf16, #tpu.memory_space<vmem>>) attributes {dimension_semantics = [#tpu.dimension_semantics<parallel>], iteration_bounds = array<i64: 1>, scalar_prefetch = 0 : i64, scratch_operands = 0 : i64, tpu.core_type = #tpu.core_type<tc>, window_params = [{transform_indices = @transform_0, window_bounds = array<i64: 128, 16>}, {transform_indices = @transform_1, window_bounds = array<i64: 128, 16>}, {transform_indices = @transform_2, window_bounds = array<i64: 128, 16>}, {transform_indices = @transform_3, window_bounds = array<i64: 128, 16>}, {transform_indices = @transform_4, window_bounds = array<i64: 128, 16>}, {transform_indices = @transform_5, window_bounds = array<i64: 128, 16>}, {transform_indices = @transform_6, window_bounds = array<i64: 128, 16>}, {transform_indices = @transform_7, window_bounds = array<i64: 128, 16>}, {transform_indices = @transform_8, window_bounds = array<i64: 128, 16>}, {transform_indices = @transform_9, window_bounds = array<i64: 128, 16>}]} {
    %c0 = arith.constant 0 : index
    %c0_0 = arith.constant 0 : index
    %0 = vector.load %arg1[%c0, %c0_0] : memref<128x16xbf16, #tpu.memory_space<vmem>>, vector<128x16xbf16>
    %c0_1 = arith.constant 0 : index
    %c0_2 = arith.constant 0 : index
    %1 = vector.load %arg2[%c0_1, %c0_2] : memref<128x16xbf16, #tpu.memory_space<vmem>>, vector<128x16xbf16>
    %2 = arith.maximumf %0, %1 : vector<128x16xbf16>
    %c0_3 = arith.constant 0 : index
    %c0_4 = arith.constant 0 : index
    %3 = vector.load %arg3[%c0_3, %c0_4] : memref<128x16xbf16, #tpu.memory_space<vmem>>, vector<128x16xbf16>
    %4 = arith.maximumf %2, %3 : vector<128x16xbf16>
    %c0_5 = arith.constant 0 : index
    %c0_6 = arith.constant 0 : index
    %5 = vector.load %arg4[%c0_5, %c0_6] : memref<128x16xbf16, #tpu.memory_space<vmem>>, vector<128x16xbf16>
    %6 = arith.maximumf %4, %5 : vector<128x16xbf16>
    %c0_7 = arith.constant 0 : index
    %c0_8 = arith.constant 0 : index
    %7 = vector.load %arg5[%c0_7, %c0_8] : memref<128x16xbf16, #tpu.memory_space<vmem>>, vector<128x16xbf16>
    %8 = arith.maximumf %6, %7 : vector<128x16xbf16>
    %c0_9 = arith.constant 0 : index
    %c0_10 = arith.constant 0 : index
    %9 = vector.load %arg6[%c0_9, %c0_10] : memref<128x16xbf16, #tpu.memory_space<vmem>>, vector<128x16xbf16>
    %10 = arith.maximumf %8, %9 : vector<128x16xbf16>
    %c0_11 = arith.constant 0 : index
    %c0_12 = arith.constant 0 : index
    %11 = vector.load %arg7[%c0_11, %c0_12] : memref<128x16xbf16, #tpu.memory_space<vmem>>, vector<128x16xbf16>
    %12 = arith.maximumf %10, %11 : vector<128x16xbf16>
    %c0_13 = arith.constant 0 : index
    %c0_14 = arith.constant 0 : index
    %13 = vector.load %arg8[%c0_13, %c0_14] : memref<128x16xbf16, #tpu.memory_space<vmem>>, vector<128x16xbf16>
    %14 = arith.maximumf %12, %13 : vector<128x16xbf16>
    %c0_15 = arith.constant 0 : index
    %c0_16 = arith.constant 0 : index
    %15 = vector.load %arg9[%c0_15, %c0_16] : memref<128x16xbf16, #tpu.memory_space<vmem>>, vector<128x16xbf16>
    %16 = arith.maximumf %14, %15 : vector<128x16xbf16>
    %c0_17 = arith.constant 0 : index
    %c0_18 = arith.constant 0 : index
    %17 = vector.load %arg10[%c0_17, %c0_18] : memref<128x16xbf16, #tpu.memory_space<vmem>>, vector<128x16xbf16>
    tpu.vector_store %arg10[%c0_17, %c0_18], %16 {strides = array<i32>} : memref<128x16xbf16, #tpu.memory_space<vmem>>, vector<128x16xbf16>,
    return
  }
  func.func @transform_0(%arg0: i32) -> (i32, i32) {
    %c0_i32 = arith.constant 0 : i32
    %c0_i32_0 = arith.constant 0 : i32
    return %arg0, %c0_i32 : i32, i32
  }
  func.func @transform_1(%arg0: i32) -> (i32, i32) {
    %c0_i32 = arith.constant 0 : i32
    %c0_i32_0 = arith.constant 0 : i32
    return %arg0, %c0_i32 : i32, i32
  }
  func.func @transform_2(%arg0: i32) -> (i32, i32) {
    %c0_i32 = arith.constant 0 : i32
    %c0_i32_0 = arith.constant 0 : i32
    return %arg0, %c0_i32 : i32, i32
  }
  func.func @transform_3(%arg0: i32) -> (i32, i32) {
    %c0_i32 = arith.constant 0 : i32
    %c0_i32_0 = arith.constant 0 : i32
    return %arg0, %c0_i32 : i32, i32
  }
  func.func @transform_4(%arg0: i32) -> (i32, i32) {
    %c0_i32 = arith.constant 0 : i32
    %c0_i32_0 = arith.constant 0 : i32
    return %arg0, %c0_i32 : i32, i32
  }
  func.func @transform_5(%arg0: i32) -> (i32, i32) {
    %c0_i32 = arith.constant 0 : i32
    %c0_i32_0 = arith.constant 0 : i32
    return %arg0, %c0_i32 : i32, i32
  }
  func.func @transform_6(%arg0: i32) -> (i32, i32) {
    %c0_i32 = arith.constant 0 : i32
    %c0_i32_0 = arith.constant 0 : i32
    return %arg0, %c0_i32 : i32, i32
  }
  func.func @transform_7(%arg0: i32) -> (i32, i32) {
    %c0_i32 = arith.constant 0 : i32
    %c0_i32_0 = arith.constant 0 : i32
    return %arg0, %c0_i32 : i32, i32
  }
  func.func @transform_8(%arg0: i32) -> (i32, i32) {
    %c0_i32 = arith.constant 0 : i32
    %c0_i32_0 = arith.constant 0 : i32
    return %arg0, %c0_i32 : i32, i32
  }
  func.func @transform_9(%arg0: i32) -> (i32, i32) {
    %c0_i32 = arith.constant 0 : i32
    %c0_i32_0 = arith.constant 0 : i32
    return %arg0, %c0_i32 : i32, i32
  }
}

module attributes {stable_mosaic.version = 11 : i64} {
  func.func @_mm_fused_kernel(%arg0: i32, %arg1: i32, %arg2: i32, %arg3: memref<128x16xbf16, #tpu.memory_space<vmem>>, %arg4: memref<16x32xbf16, #tpu.memory_space<vmem>>, %arg5: memref<1x16xf32, #tpu.memory_space<vmem>>, %arg6: memref<1x16xf32, #tpu.memory_space<vmem>>, %arg7: memref<1x32xf32, #tpu.memory_space<vmem>>, %arg8: memref<1x32xf32, #tpu.memory_space<vmem>>, %arg9: memref<128x32xbf16, #tpu.memory_space<vmem>>, %arg10: memref<128x32xf32, #tpu.memory_space<vmem>>) attributes {dimension_semantics = [#tpu.dimension_semantics<parallel>, #tpu.dimension_semantics<parallel>, #tpu.dimension_semantics<arbitrary>], iteration_bounds = array<i64: 1, 1, 1>, scalar_prefetch = 0 : i64, scratch_operands = 1 : i64, tpu.core_type = #tpu.core_type<tc>, window_params = [{transform_indices = @transform_0, window_bounds = array<i64: 128, 16>}, {transform_indices = @transform_1, window_bounds = array<i64: 16, 32>}, {transform_indices = @transform_2, window_bounds = array<i64: 1, 16>}, {transform_indices = @transform_3, window_bounds = array<i64: 1, 16>}, {transform_indices = @transform_4, window_bounds = array<i64: 1, 32>}, {transform_indices = @transform_5, window_bounds = array<i64: 1, 32>}, {transform_indices = @transform_6, window_bounds = array<i64: 128, 32>}]} {
    %c0_i32 = arith.constant 0 : i32
    %0 = arith.cmpi eq, %arg2, %c0_i32 : i32
    %1 = arith.extui %0 : i1 to i32
    %c0_i32_0 = arith.constant 0 : i32
    %2 = arith.cmpi ne, %1, %c0_i32_0 : i32
    scf.if %2 {
      %cst_15 = arith.constant 0.000000e+00 : f32
      %22 = vector.broadcast %cst_15 : f32 to vector<128x32xf32>
      %c0_16 = arith.constant 0 : index
      %c0_17 = arith.constant 0 : index
      %23 = vector.load %arg10[%c0_16, %c0_17] : memref<128x32xf32, #tpu.memory_space<vmem>>, vector<128x32xf32>
      tpu.vector_store %arg10[%c0_16, %c0_17], %22 {strides = array<i32>} : memref<128x32xf32, #tpu.memory_space<vmem>>, vector<128x32xf32>,
    } else {
    }
    %c0 = arith.constant 0 : index
    %c0_1 = arith.constant 0 : index
    %3 = vector.load %arg3[%c0, %c0_1] : memref<128x16xbf16, #tpu.memory_space<vmem>>, vector<128x16xbf16>
    %4 = arith.extf %3 : vector<128x16xbf16> to vector<128x16xf32>
    %c0_2 = arith.constant 0 : index
    %c0_3 = arith.constant 0 : index
    %5 = vector.load %arg5[%c0_2, %c0_3] : memref<1x16xf32, #tpu.memory_space<vmem>>, vector<1x16xf32>
    %6 = vector.broadcast %5 : vector<1x16xf32> to vector<128x16xf32>
    %7 = arith.mulf %4, %6 : vector<128x16xf32>
    %c0_4 = arith.constant 0 : index
    %c0_5 = arith.constant 0 : index
    %8 = vector.load %arg6[%c0_4, %c0_5] : memref<1x16xf32, #tpu.memory_space<vmem>>, vector<1x16xf32>
    %9 = vector.broadcast %8 : vector<1x16xf32> to vector<128x16xf32>
    %10 = arith.addf %7, %9 : vector<128x16xf32>
    %cst = arith.constant 0.000000e+00 : f32
    %11 = vector.broadcast %cst : f32 to vector<128x16xf32>
    %12 = arith.maximumf %10, %11 : vector<128x16xf32>
    %13 = arith.truncf %12 : vector<128x16xf32> to vector<128x16xbf16>
    %c0_6 = arith.constant 0 : index
    %c0_7 = arith.constant 0 : index
    %14 = vector.load %arg10[%c0_6, %c0_7] : memref<128x32xf32, #tpu.memory_space<vmem>>, vector<128x32xf32>
    %c0_8 = arith.constant 0 : index
    %c0_9 = arith.constant 0 : index
    %15 = vector.load %arg4[%c0_8, %c0_9] : memref<16x32xbf16, #tpu.memory_space<vmem>>, vector<16x32xbf16>
    %cst_10 = arith.constant dense<0.000000e+00> : vector<128x32xf32>
    %16 = tpu.matmul %13, %15, %cst_10 {dimension_numbers = #tpu.dot_dimension_numbers<[1], [0], [0], [1], [0, 0, 1, 1], [], []>} : vector<128x16xbf16>, vector<16x32xbf16>, vector<128x32xf32> -> vector<128x32xf32>
    %17 = arith.addf %14, %16 : vector<128x32xf32>
    %c0_11 = arith.constant 0 : index
    %c0_12 = arith.constant 0 : index
    %18 = vector.load %arg10[%c0_11, %c0_12] : memref<128x32xf32, #tpu.memory_space<vmem>>, vector<128x32xf32>
    tpu.vector_store %arg10[%c0_11, %c0_12], %17 {strides = array<i32>} : memref<128x32xf32, #tpu.memory_space<vmem>>, vector<128x32xf32>,
    %c0_i32_13 = arith.constant 0 : i32
    %19 = arith.cmpi eq, %arg2, %c0_i32_13 : i32
    %20 = arith.extui %19 : i1 to i32
    %c0_i32_14 = arith.constant 0 : i32
    %21 = arith.cmpi ne, %20, %c0_i32_14 : i32
    scf.if %21 {
      %c0_15 = arith.constant 0 : index
      %c0_16 = arith.constant 0 : index
      %22 = vector.load %arg10[%c0_15, %c0_16] : memref<128x32xf32, #tpu.memory_space<vmem>>, vector<128x32xf32>
      %c0_17 = arith.constant 0 : index
      %c0_18 = arith.constant 0 : index
      %23 = vector.load %arg7[%c0_17, %c0_18] : memref<1x32xf32, #tpu.memory_space<vmem>>, vector<1x32xf32>
      %24 = vector.broadcast %23 : vector<1x32xf32> to vector<128x32xf32>
      %25 = arith.mulf %22, %24 : vector<128x32xf32>
      %c0_19 = arith.constant 0 : index
      %c0_20 = arith.constant 0 : index
      %26 = vector.load %arg8[%c0_19, %c0_20] : memref<1x32xf32, #tpu.memory_space<vmem>>, vector<1x32xf32>
      %27 = vector.broadcast %26 : vector<1x32xf32> to vector<128x32xf32>
      %28 = arith.addf %25, %27 : vector<128x32xf32>
      %cst_21 = arith.constant 0.000000e+00 : f32
      %29 = vector.broadcast %cst_21 : f32 to vector<128x32xf32>
      %30 = arith.maximumf %28, %29 : vector<128x32xf32>
      %31 = arith.truncf %30 : vector<128x32xf32> to vector<128x32xbf16>
      %c0_22 = arith.constant 0 : index
      %c0_23 = arith.constant 0 : index
      %32 = vector.load %arg9[%c0_22, %c0_23] : memref<128x32xbf16, #tpu.memory_space<vmem>>, vector<128x32xbf16>
      tpu.vector_store %arg9[%c0_22, %c0_23], %31 {strides = array<i32>} : memref<128x32xbf16, #tpu.memory_space<vmem>>, vector<128x32xbf16>,
    } else {
    }
    return
  }
  func.func @transform_0(%arg0: i32, %arg1: i32, %arg2: i32) -> (i32, i32) {
    %c0_i32 = arith.constant 0 : i32
    return %arg0, %arg2 : i32, i32
  }
  func.func @transform_1(%arg0: i32, %arg1: i32, %arg2: i32) -> (i32, i32) {
    %c0_i32 = arith.constant 0 : i32
    return %arg2, %arg1 : i32, i32
  }
  func.func @transform_2(%arg0: i32, %arg1: i32, %arg2: i32) -> (i32, i32) {
    %c0_i32 = arith.constant 0 : i32
    %c0_i32_0 = arith.constant 0 : i32
    return %c0_i32, %arg2 : i32, i32
  }
  func.func @transform_3(%arg0: i32, %arg1: i32, %arg2: i32) -> (i32, i32) {
    %c0_i32 = arith.constant 0 : i32
    %c0_i32_0 = arith.constant 0 : i32
    return %c0_i32, %arg2 : i32, i32
  }
  func.func @transform_4(%arg0: i32, %arg1: i32, %arg2: i32) -> (i32, i32) {
    %c0_i32 = arith.constant 0 : i32
    %c0_i32_0 = arith.constant 0 : i32
    return %c0_i32, %arg1 : i32, i32
  }
  func.func @transform_5(%arg0: i32, %arg1: i32, %arg2: i32) -> (i32, i32) {
    %c0_i32 = arith.constant 0 : i32
    %c0_i32_0 = arith.constant 0 : i32
    return %c0_i32, %arg1 : i32, i32
  }
  func.func @transform_6(%arg0: i32, %arg1: i32, %arg2: i32) -> (i32, i32) {
    %c0_i32 = arith.constant 0 : i32
    return %arg0, %arg1 : i32, i32
  }
}

module attributes {stable_mosaic.version = 11 : i64} {
  func.func @_conv3x3_kernel(%arg0: i32, %arg1: i32, %arg2: memref<1x1x10x32xbf16, #tpu.memory_space<vmem>>, %arg3: memref<1x1x10x32xbf16, #tpu.memory_space<vmem>>, %arg4: memref<1x1x10x32xbf16, #tpu.memory_space<vmem>>, %arg5: memref<9x32x8xbf16, #tpu.memory_space<vmem>>, %arg6: memref<1x1x8x8xbf16, #tpu.memory_space<vmem>>) attributes {dimension_semantics = [#tpu.dimension_semantics<parallel>, #tpu.dimension_semantics<parallel>], iteration_bounds = array<i64: 2, 8>, scalar_prefetch = 0 : i64, scratch_operands = 0 : i64, tpu.core_type = #tpu.core_type<tc>, window_params = [{transform_indices = @transform_0, window_bounds = array<i64: 1, 1, 10, 32>}, {transform_indices = @transform_1, window_bounds = array<i64: 1, 1, 10, 32>}, {transform_indices = @transform_2, window_bounds = array<i64: 1, 1, 10, 32>}, {pipeline_mode = #tpu.pipeline_mode<synchronous>, transform_indices = @transform_3, window_bounds = array<i64: 9, 32, 8>}, {transform_indices = @transform_4, window_bounds = array<i64: 1, 1, 8, 8>}]} {
    %c0 = arith.constant 0 : index
    %c0_0 = arith.constant 0 : index
    %c0_1 = arith.constant 0 : index
    %c0_2 = arith.constant 0 : index
    %0 = vector.load %arg2[%c0, %c0_0, %c0_1, %c0_2] : memref<1x1x10x32xbf16, #tpu.memory_space<vmem>>, vector<1x1x8x32xbf16>
    %1 = vector.shape_cast %0 : vector<1x1x8x32xbf16> to vector<8x32xbf16>
    %c0_3 = arith.constant 0 : index
    %c0_4 = arith.constant 0 : index
    %c0_5 = arith.constant 0 : index
    %2 = vector.load %arg5[%c0_3, %c0_4, %c0_5] : memref<9x32x8xbf16, #tpu.memory_space<vmem>>, vector<1x32x8xbf16>
    %3 = vector.shape_cast %2 : vector<1x32x8xbf16> to vector<32x8xbf16>
    %cst = arith.constant dense<0.000000e+00> : vector<8x8xf32>
    %4 = tpu.matmul %1, %3, %cst {dimension_numbers = #tpu.dot_dimension_numbers<[1], [0], [0], [1], [0, 0, 1, 1], [], []>} : vector<8x32xbf16>, vector<32x8xbf16>, vector<8x8xf32> -> vector<8x8xf32>
    %c0_6 = arith.constant 0 : index
    %c0_7 = arith.constant 0 : index
    %c1 = arith.constant 1 : index
    %c0_8 = arith.constant 0 : index
    %5 = vector.load %arg2[%c0_6, %c0_7, %c1, %c0_8] : memref<1x1x10x32xbf16, #tpu.memory_space<vmem>>, vector<1x1x8x32xbf16>
    %6 = vector.shape_cast %5 : vector<1x1x8x32xbf16> to vector<8x32xbf16>
    %c1_9 = arith.constant 1 : index
    %c0_10 = arith.constant 0 : index
    %c0_11 = arith.constant 0 : index
    %7 = vector.load %arg5[%c1_9, %c0_10, %c0_11] : memref<9x32x8xbf16, #tpu.memory_space<vmem>>, vector<1x32x8xbf16>
    %8 = vector.shape_cast %7 : vector<1x32x8xbf16> to vector<32x8xbf16>
    %cst_12 = arith.constant dense<0.000000e+00> : vector<8x8xf32>
    %9 = tpu.matmul %6, %8, %cst_12 {dimension_numbers = #tpu.dot_dimension_numbers<[1], [0], [0], [1], [0, 0, 1, 1], [], []>} : vector<8x32xbf16>, vector<32x8xbf16>, vector<8x8xf32> -> vector<8x8xf32>
    %10 = arith.addf %4, %9 : vector<8x8xf32>
    %c0_13 = arith.constant 0 : index
    %c0_14 = arith.constant 0 : index
    %c2 = arith.constant 2 : index
    %c0_15 = arith.constant 0 : index
    %11 = vector.load %arg2[%c0_13, %c0_14, %c2, %c0_15] : memref<1x1x10x32xbf16, #tpu.memory_space<vmem>>, vector<1x1x8x32xbf16>
    %12 = vector.shape_cast %11 : vector<1x1x8x32xbf16> to vector<8x32xbf16>
    %c2_16 = arith.constant 2 : index
    %c0_17 = arith.constant 0 : index
    %c0_18 = arith.constant 0 : index
    %13 = vector.load %arg5[%c2_16, %c0_17, %c0_18] : memref<9x32x8xbf16, #tpu.memory_space<vmem>>, vector<1x32x8xbf16>
    %14 = vector.shape_cast %13 : vector<1x32x8xbf16> to vector<32x8xbf16>
    %cst_19 = arith.constant dense<0.000000e+00> : vector<8x8xf32>
    %15 = tpu.matmul %12, %14, %cst_19 {dimension_numbers = #tpu.dot_dimension_numbers<[1], [0], [0], [1], [0, 0, 1, 1], [], []>} : vector<8x32xbf16>, vector<32x8xbf16>, vector<8x8xf32> -> vector<8x8xf32>
    %16 = arith.addf %10, %15 : vector<8x8xf32>
    %c0_20 = arith.constant 0 : index
    %c0_21 = arith.constant 0 : index
    %c0_22 = arith.constant 0 : index
    %c0_23 = arith.constant 0 : index
    %17 = vector.load %arg3[%c0_20, %c0_21, %c0_22, %c0_23] : memref<1x1x10x32xbf16, #tpu.memory_space<vmem>>, vector<1x1x8x32xbf16>
    %18 = vector.shape_cast %17 : vector<1x1x8x32xbf16> to vector<8x32xbf16>
    %c3 = arith.constant 3 : index
    %c0_24 = arith.constant 0 : index
    %c0_25 = arith.constant 0 : index
    %19 = vector.load %arg5[%c3, %c0_24, %c0_25] : memref<9x32x8xbf16, #tpu.memory_space<vmem>>, vector<1x32x8xbf16>
    %20 = vector.shape_cast %19 : vector<1x32x8xbf16> to vector<32x8xbf16>
    %cst_26 = arith.constant dense<0.000000e+00> : vector<8x8xf32>
    %21 = tpu.matmul %18, %20, %cst_26 {dimension_numbers = #tpu.dot_dimension_numbers<[1], [0], [0], [1], [0, 0, 1, 1], [], []>} : vector<8x32xbf16>, vector<32x8xbf16>, vector<8x8xf32> -> vector<8x8xf32>
    %22 = arith.addf %16, %21 : vector<8x8xf32>
    %c0_27 = arith.constant 0 : index
    %c0_28 = arith.constant 0 : index
    %c1_29 = arith.constant 1 : index
    %c0_30 = arith.constant 0 : index
    %23 = vector.load %arg3[%c0_27, %c0_28, %c1_29, %c0_30] : memref<1x1x10x32xbf16, #tpu.memory_space<vmem>>, vector<1x1x8x32xbf16>
    %24 = vector.shape_cast %23 : vector<1x1x8x32xbf16> to vector<8x32xbf16>
    %c4 = arith.constant 4 : index
    %c0_31 = arith.constant 0 : index
    %c0_32 = arith.constant 0 : index
    %25 = vector.load %arg5[%c4, %c0_31, %c0_32] : memref<9x32x8xbf16, #tpu.memory_space<vmem>>, vector<1x32x8xbf16>
    %26 = vector.shape_cast %25 : vector<1x32x8xbf16> to vector<32x8xbf16>
    %cst_33 = arith.constant dense<0.000000e+00> : vector<8x8xf32>
    %27 = tpu.matmul %24, %26, %cst_33 {dimension_numbers = #tpu.dot_dimension_numbers<[1], [0], [0], [1], [0, 0, 1, 1], [], []>} : vector<8x32xbf16>, vector<32x8xbf16>, vector<8x8xf32> -> vector<8x8xf32>
    %28 = arith.addf %22, %27 : vector<8x8xf32>
    %c0_34 = arith.constant 0 : index
    %c0_35 = arith.constant 0 : index
    %c2_36 = arith.constant 2 : index
    %c0_37 = arith.constant 0 : index
    %29 = vector.load %arg3[%c0_34, %c0_35, %c2_36, %c0_37] : memref<1x1x10x32xbf16, #tpu.memory_space<vmem>>, vector<1x1x8x32xbf16>
    %30 = vector.shape_cast %29 : vector<1x1x8x32xbf16> to vector<8x32xbf16>
    %c5 = arith.constant 5 : index
    %c0_38 = arith.constant 0 : index
    %c0_39 = arith.constant 0 : index
    %31 = vector.load %arg5[%c5, %c0_38, %c0_39] : memref<9x32x8xbf16, #tpu.memory_space<vmem>>, vector<1x32x8xbf16>
    %32 = vector.shape_cast %31 : vector<1x32x8xbf16> to vector<32x8xbf16>
    %cst_40 = arith.constant dense<0.000000e+00> : vector<8x8xf32>
    %33 = tpu.matmul %30, %32, %cst_40 {dimension_numbers = #tpu.dot_dimension_numbers<[1], [0], [0], [1], [0, 0, 1, 1], [], []>} : vector<8x32xbf16>, vector<32x8xbf16>, vector<8x8xf32> -> vector<8x8xf32>
    %34 = arith.addf %28, %33 : vector<8x8xf32>
    %c0_41 = arith.constant 0 : index
    %c0_42 = arith.constant 0 : index
    %c0_43 = arith.constant 0 : index
    %c0_44 = arith.constant 0 : index
    %35 = vector.load %arg4[%c0_41, %c0_42, %c0_43, %c0_44] : memref<1x1x10x32xbf16, #tpu.memory_space<vmem>>, vector<1x1x8x32xbf16>
    %36 = vector.shape_cast %35 : vector<1x1x8x32xbf16> to vector<8x32xbf16>
    %c6 = arith.constant 6 : index
    %c0_45 = arith.constant 0 : index
    %c0_46 = arith.constant 0 : index
    %37 = vector.load %arg5[%c6, %c0_45, %c0_46] : memref<9x32x8xbf16, #tpu.memory_space<vmem>>, vector<1x32x8xbf16>
    %38 = vector.shape_cast %37 : vector<1x32x8xbf16> to vector<32x8xbf16>
    %cst_47 = arith.constant dense<0.000000e+00> : vector<8x8xf32>
    %39 = tpu.matmul %36, %38, %cst_47 {dimension_numbers = #tpu.dot_dimension_numbers<[1], [0], [0], [1], [0, 0, 1, 1], [], []>} : vector<8x32xbf16>, vector<32x8xbf16>, vector<8x8xf32> -> vector<8x8xf32>
    %40 = arith.addf %34, %39 : vector<8x8xf32>
    %c0_48 = arith.constant 0 : index
    %c0_49 = arith.constant 0 : index
    %c1_50 = arith.constant 1 : index
    %c0_51 = arith.constant 0 : index
    %41 = vector.load %arg4[%c0_48, %c0_49, %c1_50, %c0_51] : memref<1x1x10x32xbf16, #tpu.memory_space<vmem>>, vector<1x1x8x32xbf16>
    %42 = vector.shape_cast %41 : vector<1x1x8x32xbf16> to vector<8x32xbf16>
    %c7 = arith.constant 7 : index
    %c0_52 = arith.constant 0 : index
    %c0_53 = arith.constant 0 : index
    %43 = vector.load %arg5[%c7, %c0_52, %c0_53] : memref<9x32x8xbf16, #tpu.memory_space<vmem>>, vector<1x32x8xbf16>
    %44 = vector.shape_cast %43 : vector<1x32x8xbf16> to vector<32x8xbf16>
    %cst_54 = arith.constant dense<0.000000e+00> : vector<8x8xf32>
    %45 = tpu.matmul %42, %44, %cst_54 {dimension_numbers = #tpu.dot_dimension_numbers<[1], [0], [0], [1], [0, 0, 1, 1], [], []>} : vector<8x32xbf16>, vector<32x8xbf16>, vector<8x8xf32> -> vector<8x8xf32>
    %46 = arith.addf %40, %45 : vector<8x8xf32>
    %c0_55 = arith.constant 0 : index
    %c0_56 = arith.constant 0 : index
    %c2_57 = arith.constant 2 : index
    %c0_58 = arith.constant 0 : index
    %47 = vector.load %arg4[%c0_55, %c0_56, %c2_57, %c0_58] : memref<1x1x10x32xbf16, #tpu.memory_space<vmem>>, vector<1x1x8x32xbf16>
    %48 = vector.shape_cast %47 : vector<1x1x8x32xbf16> to vector<8x32xbf16>
    %c8 = arith.constant 8 : index
    %c0_59 = arith.constant 0 : index
    %c0_60 = arith.constant 0 : index
    %49 = vector.load %arg5[%c8, %c0_59, %c0_60] : memref<9x32x8xbf16, #tpu.memory_space<vmem>>, vector<1x32x8xbf16>
    %50 = vector.shape_cast %49 : vector<1x32x8xbf16> to vector<32x8xbf16>
    %cst_61 = arith.constant dense<0.000000e+00> : vector<8x8xf32>
    %51 = tpu.matmul %48, %50, %cst_61 {dimension_numbers = #tpu.dot_dimension_numbers<[1], [0], [0], [1], [0, 0, 1, 1], [], []>} : vector<8x32xbf16>, vector<32x8xbf16>, vector<8x8xf32> -> vector<8x8xf32>
    %52 = arith.addf %46, %51 : vector<8x8xf32>
    %53 = arith.truncf %52 : vector<8x8xf32> to vector<8x8xbf16>
    %c0_62 = arith.constant 0 : index
    %c0_63 = arith.constant 0 : index
    %c0_64 = arith.constant 0 : index
    %c0_65 = arith.constant 0 : index
    %54 = vector.load %arg6[%c0_62, %c0_63, %c0_64, %c0_65] : memref<1x1x8x8xbf16, #tpu.memory_space<vmem>>, vector<1x1x8x8xbf16>
    %55 = vector.shape_cast %54 : vector<1x1x8x8xbf16> to vector<8x8xbf16>
    %56 = vector.shape_cast %53 : vector<8x8xbf16> to vector<1x1x8x8xbf16>
    tpu.vector_store %arg6[%c0_62, %c0_63, %c0_64, %c0_65], %56 {strides = array<i32>} : memref<1x1x8x8xbf16, #tpu.memory_space<vmem>>, vector<1x1x8x8xbf16>,
    return
  }
  func.func @transform_0(%arg0: i32, %arg1: i32) -> (i32, i32, i32, i32) {
    %c0_i32 = arith.constant 0 : i32
    %c0_i32_0 = arith.constant 0 : i32
    %c0_i32_1 = arith.constant 0 : i32
    return %arg0, %arg1, %c0_i32, %c0_i32_0 : i32, i32, i32, i32
  }
  func.func @transform_1(%arg0: i32, %arg1: i32) -> (i32, i32, i32, i32) {
    %c1_i32 = arith.constant 1 : i32
    %0 = arith.addi %arg1, %c1_i32 : i32
    %c0_i32 = arith.constant 0 : i32
    %c0_i32_0 = arith.constant 0 : i32
    %c0_i32_1 = arith.constant 0 : i32
    return %arg0, %0, %c0_i32, %c0_i32_0 : i32, i32, i32, i32
  }
  func.func @transform_2(%arg0: i32, %arg1: i32) -> (i32, i32, i32, i32) {
    %c2_i32 = arith.constant 2 : i32
    %0 = arith.addi %arg1, %c2_i32 : i32
    %c0_i32 = arith.constant 0 : i32
    %c0_i32_0 = arith.constant 0 : i32
    %c0_i32_1 = arith.constant 0 : i32
    return %arg0, %0, %c0_i32, %c0_i32_0 : i32, i32, i32, i32
  }
  func.func @transform_3(%arg0: i32, %arg1: i32) -> (i32, i32, i32) {
    %c0_i32 = arith.constant 0 : i32
    %c0_i32_0 = arith.constant 0 : i32
    %c0_i32_1 = arith.constant 0 : i32
    %c0_i32_2 = arith.constant 0 : i32
    return %c0_i32, %c0_i32_0, %c0_i32_1 : i32, i32, i32
  }
  func.func @transform_4(%arg0: i32, %arg1: i32) -> (i32, i32, i32, i32) {
    %c0_i32 = arith.constant 0 : i32
    %c0_i32_0 = arith.constant 0 : i32
    %c0_i32_1 = arith.constant 0 : i32
    return %arg0, %arg1, %c0_i32, %c0_i32_0 : i32, i32, i32, i32
  }
}

module attributes {stable_mosaic.version = 11 : i64} {
  func.func @_mm_fused_kernel(%arg0: i32, %arg1: i32, %arg2: i32, %arg3: memref<128x32xbf16, #tpu.memory_space<vmem>>, %arg4: memref<32x16xbf16, #tpu.memory_space<vmem>>, %arg5: memref<1x32xf32, #tpu.memory_space<vmem>>, %arg6: memref<1x32xf32, #tpu.memory_space<vmem>>, %arg7: memref<128x16xbf16, #tpu.memory_space<vmem>>, %arg8: memref<128x16xf32, #tpu.memory_space<vmem>>) attributes {dimension_semantics = [#tpu.dimension_semantics<parallel>, #tpu.dimension_semantics<parallel>, #tpu.dimension_semantics<arbitrary>], iteration_bounds = array<i64: 1, 1, 1>, scalar_prefetch = 0 : i64, scratch_operands = 1 : i64, tpu.core_type = #tpu.core_type<tc>, window_params = [{transform_indices = @transform_0, window_bounds = array<i64: 128, 32>}, {transform_indices = @transform_1, window_bounds = array<i64: 32, 16>}, {transform_indices = @transform_2, window_bounds = array<i64: 1, 32>}, {transform_indices = @transform_3, window_bounds = array<i64: 1, 32>}, {transform_indices = @transform_4, window_bounds = array<i64: 128, 16>}]} {
    %c0_i32 = arith.constant 0 : i32
    %0 = arith.cmpi eq, %arg2, %c0_i32 : i32
    %1 = arith.extui %0 : i1 to i32
    %c0_i32_0 = arith.constant 0 : i32
    %2 = arith.cmpi ne, %1, %c0_i32_0 : i32
    scf.if %2 {
      %cst_15 = arith.constant 0.000000e+00 : f32
      %22 = vector.broadcast %cst_15 : f32 to vector<128x16xf32>
      %c0_16 = arith.constant 0 : index
      %c0_17 = arith.constant 0 : index
      %23 = vector.load %arg8[%c0_16, %c0_17] : memref<128x16xf32, #tpu.memory_space<vmem>>, vector<128x16xf32>
      tpu.vector_store %arg8[%c0_16, %c0_17], %22 {strides = array<i32>} : memref<128x16xf32, #tpu.memory_space<vmem>>, vector<128x16xf32>,
    } else {
    }
    %c0 = arith.constant 0 : index
    %c0_1 = arith.constant 0 : index
    %3 = vector.load %arg3[%c0, %c0_1] : memref<128x32xbf16, #tpu.memory_space<vmem>>, vector<128x32xbf16>
    %4 = arith.extf %3 : vector<128x32xbf16> to vector<128x32xf32>
    %c0_2 = arith.constant 0 : index
    %c0_3 = arith.constant 0 : index
    %5 = vector.load %arg5[%c0_2, %c0_3] : memref<1x32xf32, #tpu.memory_space<vmem>>, vector<1x32xf32>
    %6 = vector.broadcast %5 : vector<1x32xf32> to vector<128x32xf32>
    %7 = arith.mulf %4, %6 : vector<128x32xf32>
    %c0_4 = arith.constant 0 : index
    %c0_5 = arith.constant 0 : index
    %8 = vector.load %arg6[%c0_4, %c0_5] : memref<1x32xf32, #tpu.memory_space<vmem>>, vector<1x32xf32>
    %9 = vector.broadcast %8 : vector<1x32xf32> to vector<128x32xf32>
    %10 = arith.addf %7, %9 : vector<128x32xf32>
    %cst = arith.constant 0.000000e+00 : f32
    %11 = vector.broadcast %cst : f32 to vector<128x32xf32>
    %12 = arith.maximumf %10, %11 : vector<128x32xf32>
    %13 = arith.truncf %12 : vector<128x32xf32> to vector<128x32xbf16>
    %c0_6 = arith.constant 0 : index
    %c0_7 = arith.constant 0 : index
    %14 = vector.load %arg8[%c0_6, %c0_7] : memref<128x16xf32, #tpu.memory_space<vmem>>, vector<128x16xf32>
    %c0_8 = arith.constant 0 : index
    %c0_9 = arith.constant 0 : index
    %15 = vector.load %arg4[%c0_8, %c0_9] : memref<32x16xbf16, #tpu.memory_space<vmem>>, vector<32x16xbf16>
    %cst_10 = arith.constant dense<0.000000e+00> : vector<128x16xf32>
    %16 = tpu.matmul %13, %15, %cst_10 {dimension_numbers = #tpu.dot_dimension_numbers<[1], [0], [0], [1], [0, 0, 1, 1], [], []>} : vector<128x32xbf16>, vector<32x16xbf16>, vector<128x16xf32> -> vector<128x16xf32>
    %17 = arith.addf %14, %16 : vector<128x16xf32>
    %c0_11 = arith.constant 0 : index
    %c0_12 = arith.constant 0 : index
    %18 = vector.load %arg8[%c0_11, %c0_12] : memref<128x16xf32, #tpu.memory_space<vmem>>, vector<128x16xf32>
    tpu.vector_store %arg8[%c0_11, %c0_12], %17 {strides = array<i32>} : memref<128x16xf32, #tpu.memory_space<vmem>>, vector<128x16xf32>,
    %c0_i32_13 = arith.constant 0 : i32
    %19 = arith.cmpi eq, %arg2, %c0_i32_13 : i32
    %20 = arith.extui %19 : i1 to i32
    %c0_i32_14 = arith.constant 0 : i32
    %21 = arith.cmpi ne, %20, %c0_i32_14 : i32
    scf.if %21 {
      %c0_15 = arith.constant 0 : index
      %c0_16 = arith.constant 0 : index
      %22 = vector.load %arg8[%c0_15, %c0_16] : memref<128x16xf32, #tpu.memory_space<vmem>>, vector<128x16xf32>
      %23 = arith.truncf %22 : vector<128x16xf32> to vector<128x16xbf16>
      %c0_17 = arith.constant 0 : index
      %c0_18 = arith.constant 0 : index
      %24 = vector.load %arg7[%c0_17, %c0_18] : memref<128x16xbf16, #tpu.memory_space<vmem>>, vector<128x16xbf16>
      tpu.vector_store %arg7[%c0_17, %c0_18], %23 {strides = array<i32>} : memref<128x16xbf16, #tpu.memory_space<vmem>>, vector<128x16xbf16>,
    } else {
    }
    return
  }
  func.func @transform_0(%arg0: i32, %arg1: i32, %arg2: i32) -> (i32, i32) {
    %c0_i32 = arith.constant 0 : i32
    return %arg0, %arg2 : i32, i32
  }
  func.func @transform_1(%arg0: i32, %arg1: i32, %arg2: i32) -> (i32, i32) {
    %c0_i32 = arith.constant 0 : i32
    return %arg2, %arg1 : i32, i32
  }
  func.func @transform_2(%arg0: i32, %arg1: i32, %arg2: i32) -> (i32, i32) {
    %c0_i32 = arith.constant 0 : i32
    %c0_i32_0 = arith.constant 0 : i32
    return %c0_i32, %arg2 : i32, i32
  }
  func.func @transform_3(%arg0: i32, %arg1: i32, %arg2: i32) -> (i32, i32) {
    %c0_i32 = arith.constant 0 : i32
    %c0_i32_0 = arith.constant 0 : i32
    return %c0_i32, %arg2 : i32, i32
  }
  func.func @transform_4(%arg0: i32, %arg1: i32, %arg2: i32) -> (i32, i32) {
    %c0_i32 = arith.constant 0 : i32
    return %arg0, %arg1 : i32, i32
  }
}

module attributes {stable_mosaic.version = 11 : i64} {
  func.func @_mm_fused_kernel(%arg0: i32, %arg1: i32, %arg2: i32, %arg3: memref<128x24xbf16, #tpu.memory_space<vmem>>, %arg4: memref<24x32xbf16, #tpu.memory_space<vmem>>, %arg5: memref<1x24xf32, #tpu.memory_space<vmem>>, %arg6: memref<1x24xf32, #tpu.memory_space<vmem>>, %arg7: memref<1x32xf32, #tpu.memory_space<vmem>>, %arg8: memref<1x32xf32, #tpu.memory_space<vmem>>, %arg9: memref<128x32xbf16, #tpu.memory_space<vmem>>, %arg10: memref<128x32xf32, #tpu.memory_space<vmem>>) attributes {dimension_semantics = [#tpu.dimension_semantics<parallel>, #tpu.dimension_semantics<parallel>, #tpu.dimension_semantics<arbitrary>], iteration_bounds = array<i64: 1, 1, 1>, scalar_prefetch = 0 : i64, scratch_operands = 1 : i64, tpu.core_type = #tpu.core_type<tc>, window_params = [{transform_indices = @transform_0, window_bounds = array<i64: 128, 24>}, {transform_indices = @transform_1, window_bounds = array<i64: 24, 32>}, {transform_indices = @transform_2, window_bounds = array<i64: 1, 24>}, {transform_indices = @transform_3, window_bounds = array<i64: 1, 24>}, {transform_indices = @transform_4, window_bounds = array<i64: 1, 32>}, {transform_indices = @transform_5, window_bounds = array<i64: 1, 32>}, {transform_indices = @transform_6, window_bounds = array<i64: 128, 32>}]} {
    %c0_i32 = arith.constant 0 : i32
    %0 = arith.cmpi eq, %arg2, %c0_i32 : i32
    %1 = arith.extui %0 : i1 to i32
    %c0_i32_0 = arith.constant 0 : i32
    %2 = arith.cmpi ne, %1, %c0_i32_0 : i32
    scf.if %2 {
      %cst_15 = arith.constant 0.000000e+00 : f32
      %22 = vector.broadcast %cst_15 : f32 to vector<128x32xf32>
      %c0_16 = arith.constant 0 : index
      %c0_17 = arith.constant 0 : index
      %23 = vector.load %arg10[%c0_16, %c0_17] : memref<128x32xf32, #tpu.memory_space<vmem>>, vector<128x32xf32>
      tpu.vector_store %arg10[%c0_16, %c0_17], %22 {strides = array<i32>} : memref<128x32xf32, #tpu.memory_space<vmem>>, vector<128x32xf32>,
    } else {
    }
    %c0 = arith.constant 0 : index
    %c0_1 = arith.constant 0 : index
    %3 = vector.load %arg3[%c0, %c0_1] : memref<128x24xbf16, #tpu.memory_space<vmem>>, vector<128x24xbf16>
    %4 = arith.extf %3 : vector<128x24xbf16> to vector<128x24xf32>
    %c0_2 = arith.constant 0 : index
    %c0_3 = arith.constant 0 : index
    %5 = vector.load %arg5[%c0_2, %c0_3] : memref<1x24xf32, #tpu.memory_space<vmem>>, vector<1x24xf32>
    %6 = vector.broadcast %5 : vector<1x24xf32> to vector<128x24xf32>
    %7 = arith.mulf %4, %6 : vector<128x24xf32>
    %c0_4 = arith.constant 0 : index
    %c0_5 = arith.constant 0 : index
    %8 = vector.load %arg6[%c0_4, %c0_5] : memref<1x24xf32, #tpu.memory_space<vmem>>, vector<1x24xf32>
    %9 = vector.broadcast %8 : vector<1x24xf32> to vector<128x24xf32>
    %10 = arith.addf %7, %9 : vector<128x24xf32>
    %cst = arith.constant 0.000000e+00 : f32
    %11 = vector.broadcast %cst : f32 to vector<128x24xf32>
    %12 = arith.maximumf %10, %11 : vector<128x24xf32>
    %13 = arith.truncf %12 : vector<128x24xf32> to vector<128x24xbf16>
    %c0_6 = arith.constant 0 : index
    %c0_7 = arith.constant 0 : index
    %14 = vector.load %arg10[%c0_6, %c0_7] : memref<128x32xf32, #tpu.memory_space<vmem>>, vector<128x32xf32>
    %c0_8 = arith.constant 0 : index
    %c0_9 = arith.constant 0 : index
    %15 = vector.load %arg4[%c0_8, %c0_9] : memref<24x32xbf16, #tpu.memory_space<vmem>>, vector<24x32xbf16>
    %cst_10 = arith.constant dense<0.000000e+00> : vector<128x32xf32>
    %16 = tpu.matmul %13, %15, %cst_10 {dimension_numbers = #tpu.dot_dimension_numbers<[1], [0], [0], [1], [0, 0, 1, 1], [], []>} : vector<128x24xbf16>, vector<24x32xbf16>, vector<128x32xf32> -> vector<128x32xf32>
    %17 = arith.addf %14, %16 : vector<128x32xf32>
    %c0_11 = arith.constant 0 : index
    %c0_12 = arith.constant 0 : index
    %18 = vector.load %arg10[%c0_11, %c0_12] : memref<128x32xf32, #tpu.memory_space<vmem>>, vector<128x32xf32>
    tpu.vector_store %arg10[%c0_11, %c0_12], %17 {strides = array<i32>} : memref<128x32xf32, #tpu.memory_space<vmem>>, vector<128x32xf32>,
    %c0_i32_13 = arith.constant 0 : i32
    %19 = arith.cmpi eq, %arg2, %c0_i32_13 : i32
    %20 = arith.extui %19 : i1 to i32
    %c0_i32_14 = arith.constant 0 : i32
    %21 = arith.cmpi ne, %20, %c0_i32_14 : i32
    scf.if %21 {
      %c0_15 = arith.constant 0 : index
      %c0_16 = arith.constant 0 : index
      %22 = vector.load %arg10[%c0_15, %c0_16] : memref<128x32xf32, #tpu.memory_space<vmem>>, vector<128x32xf32>
      %c0_17 = arith.constant 0 : index
      %c0_18 = arith.constant 0 : index
      %23 = vector.load %arg7[%c0_17, %c0_18] : memref<1x32xf32, #tpu.memory_space<vmem>>, vector<1x32xf32>
      %24 = vector.broadcast %23 : vector<1x32xf32> to vector<128x32xf32>
      %25 = arith.mulf %22, %24 : vector<128x32xf32>
      %c0_19 = arith.constant 0 : index
      %c0_20 = arith.constant 0 : index
      %26 = vector.load %arg8[%c0_19, %c0_20] : memref<1x32xf32, #tpu.memory_space<vmem>>, vector<1x32xf32>
      %27 = vector.broadcast %26 : vector<1x32xf32> to vector<128x32xf32>
      %28 = arith.addf %25, %27 : vector<128x32xf32>
      %cst_21 = arith.constant 0.000000e+00 : f32
      %29 = vector.broadcast %cst_21 : f32 to vector<128x32xf32>
      %30 = arith.maximumf %28, %29 : vector<128x32xf32>
      %31 = arith.truncf %30 : vector<128x32xf32> to vector<128x32xbf16>
      %c0_22 = arith.constant 0 : index
      %c0_23 = arith.constant 0 : index
      %32 = vector.load %arg9[%c0_22, %c0_23] : memref<128x32xbf16, #tpu.memory_space<vmem>>, vector<128x32xbf16>
      tpu.vector_store %arg9[%c0_22, %c0_23], %31 {strides = array<i32>} : memref<128x32xbf16, #tpu.memory_space<vmem>>, vector<128x32xbf16>,
    } else {
    }
    return
  }
  func.func @transform_0(%arg0: i32, %arg1: i32, %arg2: i32) -> (i32, i32) {
    %c0_i32 = arith.constant 0 : i32
    return %arg0, %arg2 : i32, i32
  }
  func.func @transform_1(%arg0: i32, %arg1: i32, %arg2: i32) -> (i32, i32) {
    %c0_i32 = arith.constant 0 : i32
    return %arg2, %arg1 : i32, i32
  }
  func.func @transform_2(%arg0: i32, %arg1: i32, %arg2: i32) -> (i32, i32) {
    %c0_i32 = arith.constant 0 : i32
    %c0_i32_0 = arith.constant 0 : i32
    return %c0_i32, %arg2 : i32, i32
  }
  func.func @transform_3(%arg0: i32, %arg1: i32, %arg2: i32) -> (i32, i32) {
    %c0_i32 = arith.constant 0 : i32
    %c0_i32_0 = arith.constant 0 : i32
    return %c0_i32, %arg2 : i32, i32
  }
  func.func @transform_4(%arg0: i32, %arg1: i32, %arg2: i32) -> (i32, i32) {
    %c0_i32 = arith.constant 0 : i32
    %c0_i32_0 = arith.constant 0 : i32
    return %c0_i32, %arg1 : i32, i32
  }
  func.func @transform_5(%arg0: i32, %arg1: i32, %arg2: i32) -> (i32, i32) {
    %c0_i32 = arith.constant 0 : i32
    %c0_i32_0 = arith.constant 0 : i32
    return %c0_i32, %arg1 : i32, i32
  }
  func.func @transform_6(%arg0: i32, %arg1: i32, %arg2: i32) -> (i32, i32) {
    %c0_i32 = arith.constant 0 : i32
    return %arg0, %arg1 : i32, i32
  }
}

module attributes {stable_mosaic.version = 11 : i64} {
  func.func @_pool_kernel(%arg0: i32, %arg1: memref<32x16xbf16, #tpu.memory_space<vmem>>, %arg2: memref<32x16xbf16, #tpu.memory_space<vmem>>, %arg3: memref<32x16xbf16, #tpu.memory_space<vmem>>, %arg4: memref<32x16xbf16, #tpu.memory_space<vmem>>, %arg5: memref<32x16xbf16, #tpu.memory_space<vmem>>) attributes {dimension_semantics = [#tpu.dimension_semantics<parallel>], iteration_bounds = array<i64: 1>, scalar_prefetch = 0 : i64, scratch_operands = 0 : i64, tpu.core_type = #tpu.core_type<tc>, window_params = [{transform_indices = @transform_0, window_bounds = array<i64: 32, 16>}, {transform_indices = @transform_1, window_bounds = array<i64: 32, 16>}, {transform_indices = @transform_2, window_bounds = array<i64: 32, 16>}, {transform_indices = @transform_3, window_bounds = array<i64: 32, 16>}, {transform_indices = @transform_4, window_bounds = array<i64: 32, 16>}]} {
    %c0 = arith.constant 0 : index
    %c0_0 = arith.constant 0 : index
    %0 = vector.load %arg1[%c0, %c0_0] : memref<32x16xbf16, #tpu.memory_space<vmem>>, vector<32x16xbf16>
    %1 = arith.extf %0 : vector<32x16xbf16> to vector<32x16xf32>
    %c0_1 = arith.constant 0 : index
    %c0_2 = arith.constant 0 : index
    %2 = vector.load %arg2[%c0_1, %c0_2] : memref<32x16xbf16, #tpu.memory_space<vmem>>, vector<32x16xbf16>
    %3 = arith.extf %2 : vector<32x16xbf16> to vector<32x16xf32>
    %4 = arith.addf %1, %3 : vector<32x16xf32>
    %c0_3 = arith.constant 0 : index
    %c0_4 = arith.constant 0 : index
    %5 = vector.load %arg3[%c0_3, %c0_4] : memref<32x16xbf16, #tpu.memory_space<vmem>>, vector<32x16xbf16>
    %6 = arith.extf %5 : vector<32x16xbf16> to vector<32x16xf32>
    %7 = arith.addf %4, %6 : vector<32x16xf32>
    %c0_5 = arith.constant 0 : index
    %c0_6 = arith.constant 0 : index
    %8 = vector.load %arg4[%c0_5, %c0_6] : memref<32x16xbf16, #tpu.memory_space<vmem>>, vector<32x16xbf16>
    %9 = arith.extf %8 : vector<32x16xbf16> to vector<32x16xf32>
    %10 = arith.addf %7, %9 : vector<32x16xf32>
    %cst = arith.constant 2.500000e-01 : f32
    %11 = vector.broadcast %cst : f32 to vector<32x16xf32>
    %12 = arith.mulf %10, %11 : vector<32x16xf32>
    %13 = arith.truncf %12 : vector<32x16xf32> to vector<32x16xbf16>
    %c0_7 = arith.constant 0 : index
    %c0_8 = arith.constant 0 : index
    %14 = vector.load %arg5[%c0_7, %c0_8] : memref<32x16xbf16, #tpu.memory_space<vmem>>, vector<32x16xbf16>
    tpu.vector_store %arg5[%c0_7, %c0_8], %13 {strides = array<i32>} : memref<32x16xbf16, #tpu.memory_space<vmem>>, vector<32x16xbf16>,
    return
  }
  func.func @transform_0(%arg0: i32) -> (i32, i32) {
    %c0_i32 = arith.constant 0 : i32
    %c0_i32_0 = arith.constant 0 : i32
    return %arg0, %c0_i32 : i32, i32
  }
  func.func @transform_1(%arg0: i32) -> (i32, i32) {
    %c0_i32 = arith.constant 0 : i32
    %c0_i32_0 = arith.constant 0 : i32
    return %arg0, %c0_i32 : i32, i32
  }
  func.func @transform_2(%arg0: i32) -> (i32, i32) {
    %c0_i32 = arith.constant 0 : i32
    %c0_i32_0 = arith.constant 0 : i32
    return %arg0, %c0_i32 : i32, i32
  }
  func.func @transform_3(%arg0: i32) -> (i32, i32) {
    %c0_i32 = arith.constant 0 : i32
    %c0_i32_0 = arith.constant 0 : i32
    return %arg0, %c0_i32 : i32, i32
  }
  func.func @transform_4(%arg0: i32) -> (i32, i32) {
    %c0_i32 = arith.constant 0 : i32
    %c0_i32_0 = arith.constant 0 : i32
    return %arg0, %c0_i32 : i32, i32
  }
}

module attributes {stable_mosaic.version = 11 : i64} {
  func.func @_mm_fused_kernel(%arg0: i32, %arg1: i32, %arg2: i32, %arg3: memref<32x16xbf16, #tpu.memory_space<vmem>>, %arg4: memref<16x32xbf16, #tpu.memory_space<vmem>>, %arg5: memref<1x16xf32, #tpu.memory_space<vmem>>, %arg6: memref<1x16xf32, #tpu.memory_space<vmem>>, %arg7: memref<1x32xf32, #tpu.memory_space<vmem>>, %arg8: memref<1x32xf32, #tpu.memory_space<vmem>>, %arg9: memref<32x32xbf16, #tpu.memory_space<vmem>>, %arg10: memref<32x32xf32, #tpu.memory_space<vmem>>) attributes {dimension_semantics = [#tpu.dimension_semantics<parallel>, #tpu.dimension_semantics<parallel>, #tpu.dimension_semantics<arbitrary>], iteration_bounds = array<i64: 1, 1, 1>, scalar_prefetch = 0 : i64, scratch_operands = 1 : i64, tpu.core_type = #tpu.core_type<tc>, window_params = [{transform_indices = @transform_0, window_bounds = array<i64: 32, 16>}, {transform_indices = @transform_1, window_bounds = array<i64: 16, 32>}, {transform_indices = @transform_2, window_bounds = array<i64: 1, 16>}, {transform_indices = @transform_3, window_bounds = array<i64: 1, 16>}, {transform_indices = @transform_4, window_bounds = array<i64: 1, 32>}, {transform_indices = @transform_5, window_bounds = array<i64: 1, 32>}, {transform_indices = @transform_6, window_bounds = array<i64: 32, 32>}]} {
    %c0_i32 = arith.constant 0 : i32
    %0 = arith.cmpi eq, %arg2, %c0_i32 : i32
    %1 = arith.extui %0 : i1 to i32
    %c0_i32_0 = arith.constant 0 : i32
    %2 = arith.cmpi ne, %1, %c0_i32_0 : i32
    scf.if %2 {
      %cst_15 = arith.constant 0.000000e+00 : f32
      %22 = vector.broadcast %cst_15 : f32 to vector<32x32xf32>
      %c0_16 = arith.constant 0 : index
      %c0_17 = arith.constant 0 : index
      %23 = vector.load %arg10[%c0_16, %c0_17] : memref<32x32xf32, #tpu.memory_space<vmem>>, vector<32x32xf32>
      tpu.vector_store %arg10[%c0_16, %c0_17], %22 {strides = array<i32>} : memref<32x32xf32, #tpu.memory_space<vmem>>, vector<32x32xf32>,
    } else {
    }
    %c0 = arith.constant 0 : index
    %c0_1 = arith.constant 0 : index
    %3 = vector.load %arg3[%c0, %c0_1] : memref<32x16xbf16, #tpu.memory_space<vmem>>, vector<32x16xbf16>
    %4 = arith.extf %3 : vector<32x16xbf16> to vector<32x16xf32>
    %c0_2 = arith.constant 0 : index
    %c0_3 = arith.constant 0 : index
    %5 = vector.load %arg5[%c0_2, %c0_3] : memref<1x16xf32, #tpu.memory_space<vmem>>, vector<1x16xf32>
    %6 = vector.broadcast %5 : vector<1x16xf32> to vector<32x16xf32>
    %7 = arith.mulf %4, %6 : vector<32x16xf32>
    %c0_4 = arith.constant 0 : index
    %c0_5 = arith.constant 0 : index
    %8 = vector.load %arg6[%c0_4, %c0_5] : memref<1x16xf32, #tpu.memory_space<vmem>>, vector<1x16xf32>
    %9 = vector.broadcast %8 : vector<1x16xf32> to vector<32x16xf32>
    %10 = arith.addf %7, %9 : vector<32x16xf32>
    %cst = arith.constant 0.000000e+00 : f32
    %11 = vector.broadcast %cst : f32 to vector<32x16xf32>
    %12 = arith.maximumf %10, %11 : vector<32x16xf32>
    %13 = arith.truncf %12 : vector<32x16xf32> to vector<32x16xbf16>
    %c0_6 = arith.constant 0 : index
    %c0_7 = arith.constant 0 : index
    %14 = vector.load %arg10[%c0_6, %c0_7] : memref<32x32xf32, #tpu.memory_space<vmem>>, vector<32x32xf32>
    %c0_8 = arith.constant 0 : index
    %c0_9 = arith.constant 0 : index
    %15 = vector.load %arg4[%c0_8, %c0_9] : memref<16x32xbf16, #tpu.memory_space<vmem>>, vector<16x32xbf16>
    %cst_10 = arith.constant dense<0.000000e+00> : vector<32x32xf32>
    %16 = tpu.matmul %13, %15, %cst_10 {dimension_numbers = #tpu.dot_dimension_numbers<[1], [0], [0], [1], [0, 0, 1, 1], [], []>} : vector<32x16xbf16>, vector<16x32xbf16>, vector<32x32xf32> -> vector<32x32xf32>
    %17 = arith.addf %14, %16 : vector<32x32xf32>
    %c0_11 = arith.constant 0 : index
    %c0_12 = arith.constant 0 : index
    %18 = vector.load %arg10[%c0_11, %c0_12] : memref<32x32xf32, #tpu.memory_space<vmem>>, vector<32x32xf32>
    tpu.vector_store %arg10[%c0_11, %c0_12], %17 {strides = array<i32>} : memref<32x32xf32, #tpu.memory_space<vmem>>, vector<32x32xf32>,
    %c0_i32_13 = arith.constant 0 : i32
    %19 = arith.cmpi eq, %arg2, %c0_i32_13 : i32
    %20 = arith.extui %19 : i1 to i32
    %c0_i32_14 = arith.constant 0 : i32
    %21 = arith.cmpi ne, %20, %c0_i32_14 : i32
    scf.if %21 {
      %c0_15 = arith.constant 0 : index
      %c0_16 = arith.constant 0 : index
      %22 = vector.load %arg10[%c0_15, %c0_16] : memref<32x32xf32, #tpu.memory_space<vmem>>, vector<32x32xf32>
      %c0_17 = arith.constant 0 : index
      %c0_18 = arith.constant 0 : index
      %23 = vector.load %arg7[%c0_17, %c0_18] : memref<1x32xf32, #tpu.memory_space<vmem>>, vector<1x32xf32>
      %24 = vector.broadcast %23 : vector<1x32xf32> to vector<32x32xf32>
      %25 = arith.mulf %22, %24 : vector<32x32xf32>
      %c0_19 = arith.constant 0 : index
      %c0_20 = arith.constant 0 : index
      %26 = vector.load %arg8[%c0_19, %c0_20] : memref<1x32xf32, #tpu.memory_space<vmem>>, vector<1x32xf32>
      %27 = vector.broadcast %26 : vector<1x32xf32> to vector<32x32xf32>
      %28 = arith.addf %25, %27 : vector<32x32xf32>
      %cst_21 = arith.constant 0.000000e+00 : f32
      %29 = vector.broadcast %cst_21 : f32 to vector<32x32xf32>
      %30 = arith.maximumf %28, %29 : vector<32x32xf32>
      %31 = arith.truncf %30 : vector<32x32xf32> to vector<32x32xbf16>
      %c0_22 = arith.constant 0 : index
      %c0_23 = arith.constant 0 : index
      %32 = vector.load %arg9[%c0_22, %c0_23] : memref<32x32xbf16, #tpu.memory_space<vmem>>, vector<32x32xbf16>
      tpu.vector_store %arg9[%c0_22, %c0_23], %31 {strides = array<i32>} : memref<32x32xbf16, #tpu.memory_space<vmem>>, vector<32x32xbf16>,
    } else {
    }
    return
  }
  func.func @transform_0(%arg0: i32, %arg1: i32, %arg2: i32) -> (i32, i32) {
    %c0_i32 = arith.constant 0 : i32
    return %arg0, %arg2 : i32, i32
  }
  func.func @transform_1(%arg0: i32, %arg1: i32, %arg2: i32) -> (i32, i32) {
    %c0_i32 = arith.constant 0 : i32
    return %arg2, %arg1 : i32, i32
  }
  func.func @transform_2(%arg0: i32, %arg1: i32, %arg2: i32) -> (i32, i32) {
    %c0_i32 = arith.constant 0 : i32
    %c0_i32_0 = arith.constant 0 : i32
    return %c0_i32, %arg2 : i32, i32
  }
  func.func @transform_3(%arg0: i32, %arg1: i32, %arg2: i32) -> (i32, i32) {
    %c0_i32 = arith.constant 0 : i32
    %c0_i32_0 = arith.constant 0 : i32
    return %c0_i32, %arg2 : i32, i32
  }
  func.func @transform_4(%arg0: i32, %arg1: i32, %arg2: i32) -> (i32, i32) {
    %c0_i32 = arith.constant 0 : i32
    %c0_i32_0 = arith.constant 0 : i32
    return %c0_i32, %arg1 : i32, i32
  }
  func.func @transform_5(%arg0: i32, %arg1: i32, %arg2: i32) -> (i32, i32) {
    %c0_i32 = arith.constant 0 : i32
    %c0_i32_0 = arith.constant 0 : i32
    return %c0_i32, %arg1 : i32, i32
  }
  func.func @transform_6(%arg0: i32, %arg1: i32, %arg2: i32) -> (i32, i32) {
    %c0_i32 = arith.constant 0 : i32
    return %arg0, %arg1 : i32, i32
  }
}

module attributes {stable_mosaic.version = 11 : i64} {
  func.func @_conv3x3_kernel(%arg0: i32, %arg1: i32, %arg2: memref<1x1x6x32xbf16, #tpu.memory_space<vmem>>, %arg3: memref<1x1x6x32xbf16, #tpu.memory_space<vmem>>, %arg4: memref<1x1x6x32xbf16, #tpu.memory_space<vmem>>, %arg5: memref<9x32x8xbf16, #tpu.memory_space<vmem>>, %arg6: memref<1x1x4x8xbf16, #tpu.memory_space<vmem>>) attributes {dimension_semantics = [#tpu.dimension_semantics<parallel>, #tpu.dimension_semantics<parallel>], iteration_bounds = array<i64: 2, 4>, scalar_prefetch = 0 : i64, scratch_operands = 0 : i64, tpu.core_type = #tpu.core_type<tc>, window_params = [{transform_indices = @transform_0, window_bounds = array<i64: 1, 1, 6, 32>}, {transform_indices = @transform_1, window_bounds = array<i64: 1, 1, 6, 32>}, {transform_indices = @transform_2, window_bounds = array<i64: 1, 1, 6, 32>}, {pipeline_mode = #tpu.pipeline_mode<synchronous>, transform_indices = @transform_3, window_bounds = array<i64: 9, 32, 8>}, {transform_indices = @transform_4, window_bounds = array<i64: 1, 1, 4, 8>}]} {
    %c0 = arith.constant 0 : index
    %c0_0 = arith.constant 0 : index
    %c0_1 = arith.constant 0 : index
    %c0_2 = arith.constant 0 : index
    %0 = vector.load %arg2[%c0, %c0_0, %c0_1, %c0_2] : memref<1x1x6x32xbf16, #tpu.memory_space<vmem>>, vector<1x1x4x32xbf16>
    %1 = vector.shape_cast %0 : vector<1x1x4x32xbf16> to vector<4x32xbf16>
    %c0_3 = arith.constant 0 : index
    %c0_4 = arith.constant 0 : index
    %c0_5 = arith.constant 0 : index
    %2 = vector.load %arg5[%c0_3, %c0_4, %c0_5] : memref<9x32x8xbf16, #tpu.memory_space<vmem>>, vector<1x32x8xbf16>
    %3 = vector.shape_cast %2 : vector<1x32x8xbf16> to vector<32x8xbf16>
    %cst = arith.constant dense<0.000000e+00> : vector<4x8xf32>
    %4 = tpu.matmul %1, %3, %cst {dimension_numbers = #tpu.dot_dimension_numbers<[1], [0], [0], [1], [0, 0, 1, 1], [], []>} : vector<4x32xbf16>, vector<32x8xbf16>, vector<4x8xf32> -> vector<4x8xf32>
    %c0_6 = arith.constant 0 : index
    %c0_7 = arith.constant 0 : index
    %c1 = arith.constant 1 : index
    %c0_8 = arith.constant 0 : index
    %5 = vector.load %arg2[%c0_6, %c0_7, %c1, %c0_8] : memref<1x1x6x32xbf16, #tpu.memory_space<vmem>>, vector<1x1x4x32xbf16>
    %6 = vector.shape_cast %5 : vector<1x1x4x32xbf16> to vector<4x32xbf16>
    %c1_9 = arith.constant 1 : index
    %c0_10 = arith.constant 0 : index
    %c0_11 = arith.constant 0 : index
    %7 = vector.load %arg5[%c1_9, %c0_10, %c0_11] : memref<9x32x8xbf16, #tpu.memory_space<vmem>>, vector<1x32x8xbf16>
    %8 = vector.shape_cast %7 : vector<1x32x8xbf16> to vector<32x8xbf16>
    %cst_12 = arith.constant dense<0.000000e+00> : vector<4x8xf32>
    %9 = tpu.matmul %6, %8, %cst_12 {dimension_numbers = #tpu.dot_dimension_numbers<[1], [0], [0], [1], [0, 0, 1, 1], [], []>} : vector<4x32xbf16>, vector<32x8xbf16>, vector<4x8xf32> -> vector<4x8xf32>
    %10 = arith.addf %4, %9 : vector<4x8xf32>
    %c0_13 = arith.constant 0 : index
    %c0_14 = arith.constant 0 : index
    %c2 = arith.constant 2 : index
    %c0_15 = arith.constant 0 : index
    %11 = vector.load %arg2[%c0_13, %c0_14, %c2, %c0_15] : memref<1x1x6x32xbf16, #tpu.memory_space<vmem>>, vector<1x1x4x32xbf16>
    %12 = vector.shape_cast %11 : vector<1x1x4x32xbf16> to vector<4x32xbf16>
    %c2_16 = arith.constant 2 : index
    %c0_17 = arith.constant 0 : index
    %c0_18 = arith.constant 0 : index
    %13 = vector.load %arg5[%c2_16, %c0_17, %c0_18] : memref<9x32x8xbf16, #tpu.memory_space<vmem>>, vector<1x32x8xbf16>
    %14 = vector.shape_cast %13 : vector<1x32x8xbf16> to vector<32x8xbf16>
    %cst_19 = arith.constant dense<0.000000e+00> : vector<4x8xf32>
    %15 = tpu.matmul %12, %14, %cst_19 {dimension_numbers = #tpu.dot_dimension_numbers<[1], [0], [0], [1], [0, 0, 1, 1], [], []>} : vector<4x32xbf16>, vector<32x8xbf16>, vector<4x8xf32> -> vector<4x8xf32>
    %16 = arith.addf %10, %15 : vector<4x8xf32>
    %c0_20 = arith.constant 0 : index
    %c0_21 = arith.constant 0 : index
    %c0_22 = arith.constant 0 : index
    %c0_23 = arith.constant 0 : index
    %17 = vector.load %arg3[%c0_20, %c0_21, %c0_22, %c0_23] : memref<1x1x6x32xbf16, #tpu.memory_space<vmem>>, vector<1x1x4x32xbf16>
    %18 = vector.shape_cast %17 : vector<1x1x4x32xbf16> to vector<4x32xbf16>
    %c3 = arith.constant 3 : index
    %c0_24 = arith.constant 0 : index
    %c0_25 = arith.constant 0 : index
    %19 = vector.load %arg5[%c3, %c0_24, %c0_25] : memref<9x32x8xbf16, #tpu.memory_space<vmem>>, vector<1x32x8xbf16>
    %20 = vector.shape_cast %19 : vector<1x32x8xbf16> to vector<32x8xbf16>
    %cst_26 = arith.constant dense<0.000000e+00> : vector<4x8xf32>
    %21 = tpu.matmul %18, %20, %cst_26 {dimension_numbers = #tpu.dot_dimension_numbers<[1], [0], [0], [1], [0, 0, 1, 1], [], []>} : vector<4x32xbf16>, vector<32x8xbf16>, vector<4x8xf32> -> vector<4x8xf32>
    %22 = arith.addf %16, %21 : vector<4x8xf32>
    %c0_27 = arith.constant 0 : index
    %c0_28 = arith.constant 0 : index
    %c1_29 = arith.constant 1 : index
    %c0_30 = arith.constant 0 : index
    %23 = vector.load %arg3[%c0_27, %c0_28, %c1_29, %c0_30] : memref<1x1x6x32xbf16, #tpu.memory_space<vmem>>, vector<1x1x4x32xbf16>
    %24 = vector.shape_cast %23 : vector<1x1x4x32xbf16> to vector<4x32xbf16>
    %c4 = arith.constant 4 : index
    %c0_31 = arith.constant 0 : index
    %c0_32 = arith.constant 0 : index
    %25 = vector.load %arg5[%c4, %c0_31, %c0_32] : memref<9x32x8xbf16, #tpu.memory_space<vmem>>, vector<1x32x8xbf16>
    %26 = vector.shape_cast %25 : vector<1x32x8xbf16> to vector<32x8xbf16>
    %cst_33 = arith.constant dense<0.000000e+00> : vector<4x8xf32>
    %27 = tpu.matmul %24, %26, %cst_33 {dimension_numbers = #tpu.dot_dimension_numbers<[1], [0], [0], [1], [0, 0, 1, 1], [], []>} : vector<4x32xbf16>, vector<32x8xbf16>, vector<4x8xf32> -> vector<4x8xf32>
    %28 = arith.addf %22, %27 : vector<4x8xf32>
    %c0_34 = arith.constant 0 : index
    %c0_35 = arith.constant 0 : index
    %c2_36 = arith.constant 2 : index
    %c0_37 = arith.constant 0 : index
    %29 = vector.load %arg3[%c0_34, %c0_35, %c2_36, %c0_37] : memref<1x1x6x32xbf16, #tpu.memory_space<vmem>>, vector<1x1x4x32xbf16>
    %30 = vector.shape_cast %29 : vector<1x1x4x32xbf16> to vector<4x32xbf16>
    %c5 = arith.constant 5 : index
    %c0_38 = arith.constant 0 : index
    %c0_39 = arith.constant 0 : index
    %31 = vector.load %arg5[%c5, %c0_38, %c0_39] : memref<9x32x8xbf16, #tpu.memory_space<vmem>>, vector<1x32x8xbf16>
    %32 = vector.shape_cast %31 : vector<1x32x8xbf16> to vector<32x8xbf16>
    %cst_40 = arith.constant dense<0.000000e+00> : vector<4x8xf32>
    %33 = tpu.matmul %30, %32, %cst_40 {dimension_numbers = #tpu.dot_dimension_numbers<[1], [0], [0], [1], [0, 0, 1, 1], [], []>} : vector<4x32xbf16>, vector<32x8xbf16>, vector<4x8xf32> -> vector<4x8xf32>
    %34 = arith.addf %28, %33 : vector<4x8xf32>
    %c0_41 = arith.constant 0 : index
    %c0_42 = arith.constant 0 : index
    %c0_43 = arith.constant 0 : index
    %c0_44 = arith.constant 0 : index
    %35 = vector.load %arg4[%c0_41, %c0_42, %c0_43, %c0_44] : memref<1x1x6x32xbf16, #tpu.memory_space<vmem>>, vector<1x1x4x32xbf16>
    %36 = vector.shape_cast %35 : vector<1x1x4x32xbf16> to vector<4x32xbf16>
    %c6 = arith.constant 6 : index
    %c0_45 = arith.constant 0 : index
    %c0_46 = arith.constant 0 : index
    %37 = vector.load %arg5[%c6, %c0_45, %c0_46] : memref<9x32x8xbf16, #tpu.memory_space<vmem>>, vector<1x32x8xbf16>
    %38 = vector.shape_cast %37 : vector<1x32x8xbf16> to vector<32x8xbf16>
    %cst_47 = arith.constant dense<0.000000e+00> : vector<4x8xf32>
    %39 = tpu.matmul %36, %38, %cst_47 {dimension_numbers = #tpu.dot_dimension_numbers<[1], [0], [0], [1], [0, 0, 1, 1], [], []>} : vector<4x32xbf16>, vector<32x8xbf16>, vector<4x8xf32> -> vector<4x8xf32>
    %40 = arith.addf %34, %39 : vector<4x8xf32>
    %c0_48 = arith.constant 0 : index
    %c0_49 = arith.constant 0 : index
    %c1_50 = arith.constant 1 : index
    %c0_51 = arith.constant 0 : index
    %41 = vector.load %arg4[%c0_48, %c0_49, %c1_50, %c0_51] : memref<1x1x6x32xbf16, #tpu.memory_space<vmem>>, vector<1x1x4x32xbf16>
    %42 = vector.shape_cast %41 : vector<1x1x4x32xbf16> to vector<4x32xbf16>
    %c7 = arith.constant 7 : index
    %c0_52 = arith.constant 0 : index
    %c0_53 = arith.constant 0 : index
    %43 = vector.load %arg5[%c7, %c0_52, %c0_53] : memref<9x32x8xbf16, #tpu.memory_space<vmem>>, vector<1x32x8xbf16>
    %44 = vector.shape_cast %43 : vector<1x32x8xbf16> to vector<32x8xbf16>
    %cst_54 = arith.constant dense<0.000000e+00> : vector<4x8xf32>
    %45 = tpu.matmul %42, %44, %cst_54 {dimension_numbers = #tpu.dot_dimension_numbers<[1], [0], [0], [1], [0, 0, 1, 1], [], []>} : vector<4x32xbf16>, vector<32x8xbf16>, vector<4x8xf32> -> vector<4x8xf32>
    %46 = arith.addf %40, %45 : vector<4x8xf32>
    %c0_55 = arith.constant 0 : index
    %c0_56 = arith.constant 0 : index
    %c2_57 = arith.constant 2 : index
    %c0_58 = arith.constant 0 : index
    %47 = vector.load %arg4[%c0_55, %c0_56, %c2_57, %c0_58] : memref<1x1x6x32xbf16, #tpu.memory_space<vmem>>, vector<1x1x4x32xbf16>
    %48 = vector.shape_cast %47 : vector<1x1x4x32xbf16> to vector<4x32xbf16>
    %c8 = arith.constant 8 : index
    %c0_59 = arith.constant 0 : index
    %c0_60 = arith.constant 0 : index
    %49 = vector.load %arg5[%c8, %c0_59, %c0_60] : memref<9x32x8xbf16, #tpu.memory_space<vmem>>, vector<1x32x8xbf16>
    %50 = vector.shape_cast %49 : vector<1x32x8xbf16> to vector<32x8xbf16>
    %cst_61 = arith.constant dense<0.000000e+00> : vector<4x8xf32>
    %51 = tpu.matmul %48, %50, %cst_61 {dimension_numbers = #tpu.dot_dimension_numbers<[1], [0], [0], [1], [0, 0, 1, 1], [], []>} : vector<4x32xbf16>, vector<32x8xbf16>, vector<4x8xf32> -> vector<4x8xf32>
    %52 = arith.addf %46, %51 : vector<4x8xf32>
    %53 = arith.truncf %52 : vector<4x8xf32> to vector<4x8xbf16>
    %c0_62 = arith.constant 0 : index
    %c0_63 = arith.constant 0 : index
    %c0_64 = arith.constant 0 : index
    %c0_65 = arith.constant 0 : index
    %54 = vector.load %arg6[%c0_62, %c0_63, %c0_64, %c0_65] : memref<1x1x4x8xbf16, #tpu.memory_space<vmem>>, vector<1x1x4x8xbf16>
    %55 = vector.shape_cast %54 : vector<1x1x4x8xbf16> to vector<4x8xbf16>
    %56 = vector.shape_cast %53 : vector<4x8xbf16> to vector<1x1x4x8xbf16>
    tpu.vector_store %arg6[%c0_62, %c0_63, %c0_64, %c0_65], %56 {strides = array<i32>} : memref<1x1x4x8xbf16, #tpu.memory_space<vmem>>, vector<1x1x4x8xbf16>,
    return
  }
  func.func @transform_0(%arg0: i32, %arg1: i32) -> (i32, i32, i32, i32) {
    %c0_i32 = arith.constant 0 : i32
    %c0_i32_0 = arith.constant 0 : i32
    %c0_i32_1 = arith.constant 0 : i32
    return %arg0, %arg1, %c0_i32, %c0_i32_0 : i32, i32, i32, i32
  }
  func.func @transform_1(%arg0: i32, %arg1: i32) -> (i32, i32, i32, i32) {
    %c1_i32 = arith.constant 1 : i32
    %0 = arith.addi %arg1, %c1_i32 : i32
    %c0_i32 = arith.constant 0 : i32
    %c0_i32_0 = arith.constant 0 : i32
    %c0_i32_1 = arith.constant 0 : i32
    return %arg0, %0, %c0_i32, %c0_i32_0 : i32, i32, i32, i32
  }
  func.func @transform_2(%arg0: i32, %arg1: i32) -> (i32, i32, i32, i32) {
    %c2_i32 = arith.constant 2 : i32
    %0 = arith.addi %arg1, %c2_i32 : i32
    %c0_i32 = arith.constant 0 : i32
    %c0_i32_0 = arith.constant 0 : i32
    %c0_i32_1 = arith.constant 0 : i32
    return %arg0, %0, %c0_i32, %c0_i32_0 : i32, i32, i32, i32
  }
  func.func @transform_3(%arg0: i32, %arg1: i32) -> (i32, i32, i32) {
    %c0_i32 = arith.constant 0 : i32
    %c0_i32_0 = arith.constant 0 : i32
    %c0_i32_1 = arith.constant 0 : i32
    %c0_i32_2 = arith.constant 0 : i32
    return %c0_i32, %c0_i32_0, %c0_i32_1 : i32, i32, i32
  }
  func.func @transform_4(%arg0: i32, %arg1: i32) -> (i32, i32, i32, i32) {
    %c0_i32 = arith.constant 0 : i32
    %c0_i32_0 = arith.constant 0 : i32
    %c0_i32_1 = arith.constant 0 : i32
    return %arg0, %arg1, %c0_i32, %c0_i32_0 : i32, i32, i32, i32
  }
}

module attributes {stable_mosaic.version = 11 : i64} {
  func.func @_mm_fused_kernel(%arg0: i32, %arg1: i32, %arg2: i32, %arg3: memref<32x24xbf16, #tpu.memory_space<vmem>>, %arg4: memref<24x32xbf16, #tpu.memory_space<vmem>>, %arg5: memref<1x24xf32, #tpu.memory_space<vmem>>, %arg6: memref<1x24xf32, #tpu.memory_space<vmem>>, %arg7: memref<1x32xf32, #tpu.memory_space<vmem>>, %arg8: memref<1x32xf32, #tpu.memory_space<vmem>>, %arg9: memref<32x32xbf16, #tpu.memory_space<vmem>>, %arg10: memref<32x32xf32, #tpu.memory_space<vmem>>) attributes {dimension_semantics = [#tpu.dimension_semantics<parallel>, #tpu.dimension_semantics<parallel>, #tpu.dimension_semantics<arbitrary>], iteration_bounds = array<i64: 1, 1, 1>, scalar_prefetch = 0 : i64, scratch_operands = 1 : i64, tpu.core_type = #tpu.core_type<tc>, window_params = [{transform_indices = @transform_0, window_bounds = array<i64: 32, 24>}, {transform_indices = @transform_1, window_bounds = array<i64: 24, 32>}, {transform_indices = @transform_2, window_bounds = array<i64: 1, 24>}, {transform_indices = @transform_3, window_bounds = array<i64: 1, 24>}, {transform_indices = @transform_4, window_bounds = array<i64: 1, 32>}, {transform_indices = @transform_5, window_bounds = array<i64: 1, 32>}, {transform_indices = @transform_6, window_bounds = array<i64: 32, 32>}]} {
    %c0_i32 = arith.constant 0 : i32
    %0 = arith.cmpi eq, %arg2, %c0_i32 : i32
    %1 = arith.extui %0 : i1 to i32
    %c0_i32_0 = arith.constant 0 : i32
    %2 = arith.cmpi ne, %1, %c0_i32_0 : i32
    scf.if %2 {
      %cst_15 = arith.constant 0.000000e+00 : f32
      %22 = vector.broadcast %cst_15 : f32 to vector<32x32xf32>
      %c0_16 = arith.constant 0 : index
      %c0_17 = arith.constant 0 : index
      %23 = vector.load %arg10[%c0_16, %c0_17] : memref<32x32xf32, #tpu.memory_space<vmem>>, vector<32x32xf32>
      tpu.vector_store %arg10[%c0_16, %c0_17], %22 {strides = array<i32>} : memref<32x32xf32, #tpu.memory_space<vmem>>, vector<32x32xf32>,
    } else {
    }
    %c0 = arith.constant 0 : index
    %c0_1 = arith.constant 0 : index
    %3 = vector.load %arg3[%c0, %c0_1] : memref<32x24xbf16, #tpu.memory_space<vmem>>, vector<32x24xbf16>
    %4 = arith.extf %3 : vector<32x24xbf16> to vector<32x24xf32>
    %c0_2 = arith.constant 0 : index
    %c0_3 = arith.constant 0 : index
    %5 = vector.load %arg5[%c0_2, %c0_3] : memref<1x24xf32, #tpu.memory_space<vmem>>, vector<1x24xf32>
    %6 = vector.broadcast %5 : vector<1x24xf32> to vector<32x24xf32>
    %7 = arith.mulf %4, %6 : vector<32x24xf32>
    %c0_4 = arith.constant 0 : index
    %c0_5 = arith.constant 0 : index
    %8 = vector.load %arg6[%c0_4, %c0_5] : memref<1x24xf32, #tpu.memory_space<vmem>>, vector<1x24xf32>
    %9 = vector.broadcast %8 : vector<1x24xf32> to vector<32x24xf32>
    %10 = arith.addf %7, %9 : vector<32x24xf32>
    %cst = arith.constant 0.000000e+00 : f32
    %11 = vector.broadcast %cst : f32 to vector<32x24xf32>
    %12 = arith.maximumf %10, %11 : vector<32x24xf32>
    %13 = arith.truncf %12 : vector<32x24xf32> to vector<32x24xbf16>
    %c0_6 = arith.constant 0 : index
    %c0_7 = arith.constant 0 : index
    %14 = vector.load %arg10[%c0_6, %c0_7] : memref<32x32xf32, #tpu.memory_space<vmem>>, vector<32x32xf32>
    %c0_8 = arith.constant 0 : index
    %c0_9 = arith.constant 0 : index
    %15 = vector.load %arg4[%c0_8, %c0_9] : memref<24x32xbf16, #tpu.memory_space<vmem>>, vector<24x32xbf16>
    %cst_10 = arith.constant dense<0.000000e+00> : vector<32x32xf32>
    %16 = tpu.matmul %13, %15, %cst_10 {dimension_numbers = #tpu.dot_dimension_numbers<[1], [0], [0], [1], [0, 0, 1, 1], [], []>} : vector<32x24xbf16>, vector<24x32xbf16>, vector<32x32xf32> -> vector<32x32xf32>
    %17 = arith.addf %14, %16 : vector<32x32xf32>
    %c0_11 = arith.constant 0 : index
    %c0_12 = arith.constant 0 : index
    %18 = vector.load %arg10[%c0_11, %c0_12] : memref<32x32xf32, #tpu.memory_space<vmem>>, vector<32x32xf32>
    tpu.vector_store %arg10[%c0_11, %c0_12], %17 {strides = array<i32>} : memref<32x32xf32, #tpu.memory_space<vmem>>, vector<32x32xf32>,
    %c0_i32_13 = arith.constant 0 : i32
    %19 = arith.cmpi eq, %arg2, %c0_i32_13 : i32
    %20 = arith.extui %19 : i1 to i32
    %c0_i32_14 = arith.constant 0 : i32
    %21 = arith.cmpi ne, %20, %c0_i32_14 : i32
    scf.if %21 {
      %c0_15 = arith.constant 0 : index
      %c0_16 = arith.constant 0 : index
      %22 = vector.load %arg10[%c0_15, %c0_16] : memref<32x32xf32, #tpu.memory_space<vmem>>, vector<32x32xf32>
      %c0_17 = arith.constant 0 : index
      %c0_18 = arith.constant 0 : index
      %23 = vector.load %arg7[%c0_17, %c0_18] : memref<1x32xf32, #tpu.memory_space<vmem>>, vector<1x32xf32>
      %24 = vector.broadcast %23 : vector<1x32xf32> to vector<32x32xf32>
      %25 = arith.mulf %22, %24 : vector<32x32xf32>
      %c0_19 = arith.constant 0 : index
      %c0_20 = arith.constant 0 : index
      %26 = vector.load %arg8[%c0_19, %c0_20] : memref<1x32xf32, #tpu.memory_space<vmem>>, vector<1x32xf32>
      %27 = vector.broadcast %26 : vector<1x32xf32> to vector<32x32xf32>
      %28 = arith.addf %25, %27 : vector<32x32xf32>
      %cst_21 = arith.constant 0.000000e+00 : f32
      %29 = vector.broadcast %cst_21 : f32 to vector<32x32xf32>
      %30 = arith.maximumf %28, %29 : vector<32x32xf32>
      %31 = arith.truncf %30 : vector<32x32xf32> to vector<32x32xbf16>
      %c0_22 = arith.constant 0 : index
      %c0_23 = arith.constant 0 : index
      %32 = vector.load %arg9[%c0_22, %c0_23] : memref<32x32xbf16, #tpu.memory_space<vmem>>, vector<32x32xbf16>
      tpu.vector_store %arg9[%c0_22, %c0_23], %31 {strides = array<i32>} : memref<32x32xbf16, #tpu.memory_space<vmem>>, vector<32x32xbf16>,
    } else {
    }
    return
  }
  func.func @transform_0(%arg0: i32, %arg1: i32, %arg2: i32) -> (i32, i32) {
    %c0_i32 = arith.constant 0 : i32
    return %arg0, %arg2 : i32, i32
  }
  func.func @transform_1(%arg0: i32, %arg1: i32, %arg2: i32) -> (i32, i32) {
    %c0_i32 = arith.constant 0 : i32
    return %arg2, %arg1 : i32, i32
  }
  func.func @transform_2(%arg0: i32, %arg1: i32, %arg2: i32) -> (i32, i32) {
    %c0_i32 = arith.constant 0 : i32
    %c0_i32_0 = arith.constant 0 : i32
    return %c0_i32, %arg2 : i32, i32
  }
  func.func @transform_3(%arg0: i32, %arg1: i32, %arg2: i32) -> (i32, i32) {
    %c0_i32 = arith.constant 0 : i32
    %c0_i32_0 = arith.constant 0 : i32
    return %c0_i32, %arg2 : i32, i32
  }
  func.func @transform_4(%arg0: i32, %arg1: i32, %arg2: i32) -> (i32, i32) {
    %c0_i32 = arith.constant 0 : i32
    %c0_i32_0 = arith.constant 0 : i32
    return %c0_i32, %arg1 : i32, i32
  }
  func.func @transform_5(%arg0: i32, %arg1: i32, %arg2: i32) -> (i32, i32) {
    %c0_i32 = arith.constant 0 : i32
    %c0_i32_0 = arith.constant 0 : i32
    return %c0_i32, %arg1 : i32, i32
  }
  func.func @transform_6(%arg0: i32, %arg1: i32, %arg2: i32) -> (i32, i32) {
    %c0_i32 = arith.constant 0 : i32
    return %arg0, %arg1 : i32, i32
  }
}

module attributes {stable_mosaic.version = 11 : i64} {
  func.func @_head_kernel(%arg0: i32, %arg1: memref<2x1x4x32xbf16, #tpu.memory_space<vmem>>, %arg2: memref<1x1x1x32xf32, #tpu.memory_space<vmem>>, %arg3: memref<1x1x1x32xf32, #tpu.memory_space<vmem>>, %arg4: memref<2x2xf32, #tpu.memory_space<vmem>>, %arg5: memref<2x128xf32, #tpu.memory_space<vmem>>, %arg6: memref<32x128xf32, #tpu.memory_space<vmem>>, %arg7: memref<1x128xf32, #tpu.memory_space<vmem>>, %arg8: memref<2x128xf32, #tpu.memory_space<vmem>>, %arg9: memref<2x32xf32, #tpu.memory_space<vmem>>) attributes {dimension_semantics = [#tpu.dimension_semantics<arbitrary>], iteration_bounds = array<i64: 4>, scalar_prefetch = 0 : i64, scratch_operands = 1 : i64, tpu.core_type = #tpu.core_type<tc>, window_params = [{transform_indices = @transform_0, window_bounds = array<i64: 2, 1, 4, 32>}, {pipeline_mode = #tpu.pipeline_mode<synchronous>, transform_indices = @transform_1, window_bounds = array<i64: 1, 1, 1, 32>}, {pipeline_mode = #tpu.pipeline_mode<synchronous>, transform_indices = @transform_2, window_bounds = array<i64: 1, 1, 1, 32>}, {pipeline_mode = #tpu.pipeline_mode<synchronous>, transform_indices = @transform_3, window_bounds = array<i64: 2, 2>}, {pipeline_mode = #tpu.pipeline_mode<synchronous>, transform_indices = @transform_4, window_bounds = array<i64: 2, 128>}, {pipeline_mode = #tpu.pipeline_mode<synchronous>, transform_indices = @transform_5, window_bounds = array<i64: 32, 128>}, {pipeline_mode = #tpu.pipeline_mode<synchronous>, transform_indices = @transform_6, window_bounds = array<i64: 1, 128>}, {pipeline_mode = #tpu.pipeline_mode<synchronous>, transform_indices = @transform_7, window_bounds = array<i64: 2, 128>}]} {
    %c0_i32 = arith.constant 0 : i32
    %0 = arith.cmpi eq, %arg0, %c0_i32 : i32
    %1 = arith.extui %0 : i1 to i32
    %c0_i32_0 = arith.constant 0 : i32
    %2 = arith.cmpi ne, %1, %c0_i32_0 : i32
    scf.if %2 {
      %cst_18 = arith.constant 0.000000e+00 : f32
      %21 = vector.broadcast %cst_18 : f32 to vector<2x32xf32>
      %c0_19 = arith.constant 0 : index
      %c0_20 = arith.constant 0 : index
      %22 = vector.load %arg9[%c0_19, %c0_20] : memref<2x32xf32, #tpu.memory_space<vmem>>, vector<2x32xf32>
      tpu.vector_store %arg9[%c0_19, %c0_20], %21 {strides = array<i32>} : memref<2x32xf32, #tpu.memory_space<vmem>>, vector<2x32xf32>,
    } else {
    }
    %c0 = arith.constant 0 : index
    %c0_1 = arith.constant 0 : index
    %c0_2 = arith.constant 0 : index
    %c0_3 = arith.constant 0 : index
    %3 = vector.load %arg1[%c0, %c0_1, %c0_2, %c0_3] : memref<2x1x4x32xbf16, #tpu.memory_space<vmem>>, vector<2x1x4x32xbf16>
    %4 = arith.extf %3 : vector<2x1x4x32xbf16> to vector<2x1x4x32xf32>
    %c0_4 = arith.constant 0 : index
    %c0_5 = arith.constant 0 : index
    %c0_6 = arith.constant 0 : index
    %c0_7 = arith.constant 0 : index
    %5 = vector.load %arg2[%c0_4, %c0_5, %c0_6, %c0_7] : memref<1x1x1x32xf32, #tpu.memory_space<vmem>>, vector<1x1x1x32xf32>
    %6 = vector.broadcast %5 : vector<1x1x1x32xf32> to vector<2x1x4x32xf32>
    %7 = arith.mulf %4, %6 : vector<2x1x4x32xf32>
    %c0_8 = arith.constant 0 : index
    %c0_9 = arith.constant 0 : index
    %c0_10 = arith.constant 0 : index
    %c0_11 = arith.constant 0 : index
    %8 = vector.load %arg3[%c0_8, %c0_9, %c0_10, %c0_11] : memref<1x1x1x32xf32, #tpu.memory_space<vmem>>, vector<1x1x1x32xf32>
    %9 = vector.broadcast %8 : vector<1x1x1x32xf32> to vector<2x1x4x32xf32>
    %10 = arith.addf %7, %9 : vector<2x1x4x32xf32>
    %cst = arith.constant 0.000000e+00 : f32
    %11 = vector.broadcast %cst : f32 to vector<2x1x4x32xf32>
    %12 = arith.maximumf %10, %11 : vector<2x1x4x32xf32>
    %c0_12 = arith.constant 0 : index
    %c0_13 = arith.constant 0 : index
    %13 = vector.load %arg9[%c0_12, %c0_13] : memref<2x32xf32, #tpu.memory_space<vmem>>, vector<2x32xf32>
    %cst_14 = arith.constant dense<0.000000e+00> : vector<2x1x32xf32>
    %14 = vector.multi_reduction <add>, %12, %cst_14 [2] : vector<2x1x4x32xf32> to vector<2x1x32xf32>
    %15 = vector.shape_cast %14 : vector<2x1x32xf32> to vector<2x32xf32>
    %16 = arith.addf %13, %15 : vector<2x32xf32>
    %c0_15 = arith.constant 0 : index
    %c0_16 = arith.constant 0 : index
    %17 = vector.load %arg9[%c0_15, %c0_16] : memref<2x32xf32, #tpu.memory_space<vmem>>, vector<2x32xf32>
    tpu.vector_store %arg9[%c0_15, %c0_16], %16 {strides = array<i32>} : memref<2x32xf32, #tpu.memory_space<vmem>>, vector<2x32xf32>,
    %c3_i32 = arith.constant 3 : i32
    %18 = arith.cmpi eq, %arg0, %c3_i32 : i32
    %19 = arith.extui %18 : i1 to i32
    %c0_i32_17 = arith.constant 0 : i32
    %20 = arith.cmpi ne, %19, %c0_i32_17 : i32
    scf.if %20 {
      %c0_18 = arith.constant 0 : index
      %c0_19 = arith.constant 0 : index
      %21 = vector.load %arg9[%c0_18, %c0_19] : memref<2x32xf32, #tpu.memory_space<vmem>>, vector<2x32xf32>
      %cst_20 = arith.constant 6.250000e-02 : f32
      %22 = vector.broadcast %cst_20 : f32 to vector<2x32xf32>
      %23 = arith.mulf %21, %22 : vector<2x32xf32>
      %c0_21 = arith.constant 0 : index
      %c0_22 = arith.constant 0 : index
      %24 = vector.load %arg6[%c0_21, %c0_22] : memref<32x128xf32, #tpu.memory_space<vmem>>, vector<32x128xf32>
      %cst_23 = arith.constant dense<0.000000e+00> : vector<2x128xf32>
      %25 = tpu.matmul %23, %24, %cst_23 {dimension_numbers = #tpu.dot_dimension_numbers<[1], [0], [0], [1], [0, 0, 1, 1], [], []>} : vector<2x32xf32>, vector<32x128xf32>, vector<2x128xf32> -> vector<2x128xf32>
      %c0_24 = arith.constant 0 : index
      %c0_25 = arith.constant 0 : index
      %26 = vector.load %arg4[%c0_24, %c0_25] : memref<2x2xf32, #tpu.memory_space<vmem>>, vector<2x2xf32>
      %c0_26 = arith.constant 0 : index
      %c0_27 = arith.constant 0 : index
      %27 = vector.load %arg5[%c0_26, %c0_27] : memref<2x128xf32, #tpu.memory_space<vmem>>, vector<2x128xf32>
      %cst_28 = arith.constant dense<0.000000e+00> : vector<2x128xf32>
      %28 = tpu.matmul %26, %27, %cst_28 {dimension_numbers = #tpu.dot_dimension_numbers<[1], [0], [0], [1], [0, 0, 1, 1], [], []>} : vector<2x2xf32>, vector<2x128xf32>, vector<2x128xf32> -> vector<2x128xf32>
      %29 = arith.addf %25, %28 : vector<2x128xf32>
      %c0_29 = arith.constant 0 : index
      %c0_30 = arith.constant 0 : index
      %30 = vector.load %arg7[%c0_29, %c0_30] : memref<1x128xf32, #tpu.memory_space<vmem>>, vector<1x128xf32>
      %31 = vector.broadcast %30 : vector<1x128xf32> to vector<2x128xf32>
      %32 = arith.addf %29, %31 : vector<2x128xf32>
      %c0_31 = arith.constant 0 : index
      %c0_32 = arith.constant 0 : index
      %33 = vector.load %arg8[%c0_31, %c0_32] : memref<2x128xf32, #tpu.memory_space<vmem>>, vector<2x128xf32>
      tpu.vector_store %arg8[%c0_31, %c0_32], %32 {strides = array<i32>} : memref<2x128xf32, #tpu.memory_space<vmem>>, vector<2x128xf32>,
    } else {
    }
    return
  }
  func.func @transform_0(%arg0: i32) -> (i32, i32, i32, i32) {
    %c0_i32 = arith.constant 0 : i32
    %c0_i32_0 = arith.constant 0 : i32
    %c0_i32_1 = arith.constant 0 : i32
    %c0_i32_2 = arith.constant 0 : i32
    return %c0_i32, %arg0, %c0_i32_0, %c0_i32_1 : i32, i32, i32, i32
  }
  func.func @transform_1(%arg0: i32) -> (i32, i32, i32, i32) {
    %c0_i32 = arith.constant 0 : i32
    %c0_i32_0 = arith.constant 0 : i32
    %c0_i32_1 = arith.constant 0 : i32
    %c0_i32_2 = arith.constant 0 : i32
    %c0_i32_3 = arith.constant 0 : i32
    return %c0_i32, %c0_i32_0, %c0_i32_1, %c0_i32_2 : i32, i32, i32, i32
  }
  func.func @transform_2(%arg0: i32) -> (i32, i32, i32, i32) {
    %c0_i32 = arith.constant 0 : i32
    %c0_i32_0 = arith.constant 0 : i32
    %c0_i32_1 = arith.constant 0 : i32
    %c0_i32_2 = arith.constant 0 : i32
    %c0_i32_3 = arith.constant 0 : i32
    return %c0_i32, %c0_i32_0, %c0_i32_1, %c0_i32_2 : i32, i32, i32, i32
  }
  func.func @transform_3(%arg0: i32) -> (i32, i32) {
    %c0_i32 = arith.constant 0 : i32
    %c0_i32_0 = arith.constant 0 : i32
    %c0_i32_1 = arith.constant 0 : i32
    return %c0_i32, %c0_i32_0 : i32, i32
  }
  func.func @transform_4(%arg0: i32) -> (i32, i32) {
    %c0_i32 = arith.constant 0 : i32
    %c0_i32_0 = arith.constant 0 : i32
    %c0_i32_1 = arith.constant 0 : i32
    return %c0_i32, %c0_i32_0 : i32, i32
  }
  func.func @transform_5(%arg0: i32) -> (i32, i32) {
    %c0_i32 = arith.constant 0 : i32
    %c0_i32_0 = arith.constant 0 : i32
    %c0_i32_1 = arith.constant 0 : i32
    return %c0_i32, %c0_i32_0 : i32, i32
  }
  func.func @transform_6(%arg0: i32) -> (i32, i32) {
    %c0_i32 = arith.constant 0 : i32
    %c0_i32_0 = arith.constant 0 : i32
    %c0_i32_1 = arith.constant 0 : i32
    return %c0_i32, %c0_i32_0 : i32, i32
  }
  func.func @transform_7(%arg0: i32) -> (i32, i32) {
    %c0_i32 = arith.constant 0 : i32
    %c0_i32_0 = arith.constant 0 : i32
    %c0_i32_1 = arith.constant 0 : i32
    return %c0_i32, %c0_i32_0 : i32, i32
  }
}

</mosaic_0001>

<llo_original>
// kernel: _lambda_.15
$region0: #{_lambda_.15}
  #allocation0 [shape = 'u32[]', space=smem, size = 0x4, offset = 0x4, fixed_abs, tag = 'smem constant byte address 0x4 - core index']
  #allocation1 [shape = 'u32[72,128]{1,0:T(1,128)}', space=vmem, size = 0x9000, scoped, tag = 'internal scratch']
  #allocation2 [shape = 'f32[128,32]{1,0:T(8,128)}', space=vmem, size = 0x10000, scoped, tag = 'scratch operand']
  %s0 = inlined_call_operand.vmem [shape: bf16[128,16], index: 0, kind: input, shape index: {}]
  %s1 = inlined_call_operand.vmem [shape: bf16[16,32], index: 1, kind: input, shape index: {}]
  %s2 = inlined_call_operand.vmem [shape: f32[1,16], index: 2, kind: input, shape index: {}]
  %s3 = inlined_call_operand.vmem [shape: f32[1,16], index: 3, kind: input, shape index: {}]
  %s4 = inlined_call_operand.vmem [shape: f32[1,32], index: 4, kind: input, shape index: {}]
  %s5 = inlined_call_operand.vmem [shape: f32[1,32], index: 5, kind: input, shape index: {}]
  %s6 = inlined_call_operand.vmem [shape: bf16[128,32], index: 6, kind: output, shape index: {}]
  %s7 = sld [smem:[#allocation0]]
  $region42: #{_lambda_.15} parent=0
    _
  %s9 = ssub.s32 1, %s7
  %s10 = scalar_select 0, %s9, %s7
  // Predicated region
  $region2: #{_lambda_.15} parent=0 // pred_check
    _
  $region3: #{_lambda_.15} parent=0 // pred_check_branch
    %12 = sbr.rel (0) target = $region5
  $region4: #{_lambda_.15} parent=0 // pred_region
    _
  $region5: #{_lambda_.15} parent=0 // pred_fallthru
    _
  // Predicated region
  $region6: #{_lambda_.15} parent=0 // pred_check
    _
  $region7: #{_lambda_.15} parent=0 // pred_check_branch
    %14 = sbr.rel (0) target = $region9
  $region8: #{_lambda_.15} parent=0 // pred_region
    _
  $region9: #{_lambda_.15} parent=0 // pred_fallthru
    _
  // Predicated region
  $region10: #{_lambda_.15} parent=0 // pred_check
    _
  $region11: #{_lambda_.15} parent=0 // pred_check_branch
    %16 = sbr.rel (0) target = $region13
  $region12: #{_lambda_.15} parent=0 // pred_region
    _
  $region13: #{_lambda_.15} parent=0 // pred_fallthru
    _
  // Predicated region
  $region14: #{_lambda_.15} parent=0 // pred_check
    _
  $region15: #{_lambda_.15} parent=0 // pred_check_branch
    %18 = sbr.rel (0) target = $region17
  $region16: #{_lambda_.15} parent=0 // pred_region
    _
  $region17: #{_lambda_.15} parent=0 // pred_fallthru
    _
  // Predicated region
  $region18: #{_lambda_.15} parent=0 // pred_check
    _
  $region19: #{_lambda_.15} parent=0 // pred_check_branch
    %20 = sbr.rel (0) target = $region21
  $region20: #{_lambda_.15} parent=0 // pred_region
    _
  $region21: #{_lambda_.15} parent=0 // pred_fallthru
    _
  // Predicated region
  $region22: #{_lambda_.15} parent=0 // pred_check
    _
  $region23: #{_lambda_.15} parent=0 // pred_check_branch
    %22 = sbr.rel (0) target = $region25
  $region24: #{_lambda_.15} parent=0 // pred_region
    _
  $region25: #{_lambda_.15} parent=0 // pred_fallthru
    _
  %p24 = scmp.eq.s32.totalorder 0, 0
  // Predicated region
  $region26: #{_lambda_.15} parent=0 // pred_check
    %p25 = pneg %p24
  $region27: #{_lambda_.15} parent=0 // pred_check_branch
    %27 = sbr.rel (%p25) target = $region29
  $region28: #{_lambda_.15} parent=0 // pred_region
    %vm28 = vcmask 261120
    %29 = vst.msk [vmem:[#allocation2] sm:$0xff] %vm28, 0.0
    %30 = vst.msk [vmem:[#allocation2 + $0x8] sm:$0xff] %vm28, 0.0
    %31 = vst.msk [vmem:[#allocation2 + $0x10] sm:$0xff] %vm28, 0.0
    %32 = vst.msk [vmem:[#allocation2 + $0x18] sm:$0xff] %vm28, 0.0
    %33 = vst.msk [vmem:[#allocation2 + $0x20] sm:$0xff] %vm28, 0.0
    %34 = vst.msk [vmem:[#allocation2 + $0x28] sm:$0xff] %vm28, 0.0
    %35 = vst.msk [vmem:[#allocation2 + $0x30] sm:$0xff] %vm28, 0.0
    %36 = vst.msk [vmem:[#allocation2 + $0x38] sm:$0xff] %vm28, 0.0
    %37 = vst.msk [vmem:[#allocation2 + $0x40] sm:$0xff] %vm28, 0.0
    %38 = vst.msk [vmem:[#allocation2 + $0x48] sm:$0xff] %vm28, 0.0
    %39 = vst.msk [vmem:[#allocation2 + $0x50] sm:$0xff] %vm28, 0.0
    %40 = vst.msk [vmem:[#allocation2 + $0x58] sm:$0xff] %vm28, 0.0
    %41 = vst.msk [vmem:[#allocation2 + $0x60] sm:$0xff] %vm28, 0.0
    %42 = vst.msk [vmem:[#allocation2 + $0x68] sm:$0xff] %vm28, 0.0
    %43 = vst.msk [vmem:[#allocation2 + $0x70] sm:$0xff] %vm28, 0.0
    %44 = vst.msk [vmem:[#allocation2 + $0x78] sm:$0xff] %vm28, 0.0
  $region29: #{_lambda_.15} parent=0 // pred_fallthru
    _
  %v45 = vld [vmem:[%s0] sm:$0xf]
  %v46 = vld [vmem:[%s0 + $0x4] sm:$0xf]
  %v47 = vld [vmem:[%s0 + $0x8] sm:$0xf]
  %v48 = vld [vmem:[%s0 + $0xc] sm:$0xf]
  %v49 = vld [vmem:[%s0 + $0x10] sm:$0xf]
  %v50 = vld [vmem:[%s0 + $0x14] sm:$0xf]
  %v51 = vld [vmem:[%s0 + $0x18] sm:$0xf]
  %v52 = vld [vmem:[%s0 + $0x1c] sm:$0xf]
  %v53 = vld [vmem:[%s0 + $0x20] sm:$0xf]
  %v54 = vld [vmem:[%s0 + $0x24] sm:$0xf]
  %v55 = vld [vmem:[%s0 + $0x28] sm:$0xf]
  %v56 = vld [vmem:[%s0 + $0x2c] sm:$0xf]
  %v57 = vld [vmem:[%s0 + $0x30] sm:$0xf]
  %v58 = vld [vmem:[%s0 + $0x34] sm:$0xf]
  %v59 = vld [vmem:[%s0 + $0x38] sm:$0xf]
  %v60 = vld [vmem:[%s0 + $0x3c] sm:$0xf]
  %v61 = vunpack.c.l.bf16 %v45
  %v62 = vunpack.c.l.bf16 %v46
  %v63 = vunpack.c.l.bf16 %v47
  %v64 = vunpack.c.l.bf16 %v48
  %v65 = vunpack.c.l.bf16 %v49
  %v66 = vunpack.c.l.bf16 %v50
  %v67 = vunpack.c.l.bf16 %v51
  %v68 = vunpack.c.l.bf16 %v52
  %v69 = vunpack.c.l.bf16 %v53
  %v70 = vunpack.c.l.bf16 %v54
  %v71 = vunpack.c.l.bf16 %v55
  %v72 = vunpack.c.l.bf16 %v56
  %v73 = vunpack.c.l.bf16 %v57
  %v74 = vunpack.c.l.bf16 %v58
  %v75 = vunpack.c.l.bf16 %v59
  %v76 = vunpack.c.l.bf16 %v60
  %v77 = vld [vmem:[%s2] sm:$0x1]
  %v79 = vperm.slane %v77, 0
  %v81 = vmul.f32 %v61, %v79
  %v82 = vmul.f32 %v62, %v79
  %v83 = vmul.f32 %v63, %v79
  %v84 = vmul.f32 %v64, %v79
  %v85 = vmul.f32 %v65, %v79
  %v86 = vmul.f32 %v66, %v79
  %v87 = vmul.f32 %v67, %v79
  %v88 = vmul.f32 %v68, %v79
  %v89 = vmul.f32 %v69, %v79
  %v90 = vmul.f32 %v70, %v79
  %v91 = vmul.f32 %v71, %v79
  %v92 = vmul.f32 %v72, %v79
  %v93 = vmul.f32 %v73, %v79
  %v94 = vmul.f32 %v74, %v79
  %v95 = vmul.f32 %v75, %v79
  %v96 = vmul.f32 %v76, %v79
  %v97 = vld [vmem:[%s3] sm:$0x1]
  %v99 = vperm.slane %v97, 0
  %v101 = vadd.f32 %v81, %v99
  %v102 = vadd.f32 %v82, %v99
  %v103 = vadd.f32 %v83, %v99
  %v104 = vadd.f32 %v84, %v99
  %v105 = vadd.f32 %v85, %v99
  %v106 = vadd.f32 %v86, %v99
  %v107 = vadd.f32 %v87, %v99
  %v108 = vadd.f32 %v88, %v99
  %v109 = vadd.f32 %v89, %v99
  %v110 = vadd.f32 %v90, %v99
  %v111 = vadd.f32 %v91, %v99
  %v112 = vadd.f32 %v92, %v99
  %v113 = vadd.f32 %v93, %v99
  %v114 = vadd.f32 %v94, %v99
  %v115 = vadd.f32 %v95, %v99
  %v116 = vadd.f32 %v96, %v99
  %v117 = vmax.f32 %v101, 0.0
  %v118 = vmax.f32 %v102, 0.0
  %v119 = vmax.f32 %v103, 0.0
  %v120 = vmax.f32 %v104, 0.0
  %v121 = vmax.f32 %v105, 0.0
  %v122 = vmax.f32 %v106, 0.0
  %v123 = vmax.f32 %v107, 0.0
  %v124 = vmax.f32 %v108, 0.0
  %v125 = vmax.f32 %v109, 0.0
  %v126 = vmax.f32 %v110, 0.0
  %v127 = vmax.f32 %v111, 0.0
  %v128 = vmax.f32 %v112, 0.0
  %v129 = vmax.f32 %v113, 0.0
  %v130 = vmax.f32 %v114, 0.0
  %v131 = vmax.f32 %v115, 0.0
  %v132 = vmax.f32 %v116, 0.0
  %v133 = vpack.c.bf16 %v118, %v117
  %v134 = vpack.c.bf16 %v120, %v119
  %v135 = vpack.c.bf16 %v122, %v121
  %v136 = vpack.c.bf16 %v124, %v123
  %v137 = vpack.c.bf16 %v126, %v125
  %v138 = vpack.c.bf16 %v128, %v127
  %v139 = vpack.c.bf16 %v130, %v129
  %v140 = vpack.c.bf16 %v132, %v131
  %v141 = vld [vmem:[#allocation2] sm:$0xff]
  %v142 = vld [vmem:[#allocation2 + $0x8] sm:$0xff]
  %v143 = vld [vmem:[#allocation2 + $0x10] sm:$0xff]
  %v144 = vld [vmem:[#allocation2 + $0x18] sm:$0xff]
  %v145 = vld [vmem:[#allocation2 + $0x20] sm:$0xff]
  %v146 = vld [vmem:[#allocation2 + $0x28] sm:$0xff]
  %v147 = vld [vmem:[#allocation2 + $0x30] sm:$0xff]
  %v148 = vld [vmem:[#allocation2 + $0x38] sm:$0xff]
  %v149 = vld [vmem:[#allocation2 + $0x40] sm:$0xff]
  %v150 = vld [vmem:[#allocation2 + $0x48] sm:$0xff]
  %v151 = vld [vmem:[#allocation2 + $0x50] sm:$0xff]
  %v152 = vld [vmem:[#allocation2 + $0x58] sm:$0xff]
  %v153 = vld [vmem:[#allocation2 + $0x60] sm:$0xff]
  %v154 = vld [vmem:[#allocation2 + $0x68] sm:$0xff]
  %v155 = vld [vmem:[#allocation2 + $0x70] sm:$0xff]
  %v156 = vld [vmem:[#allocation2 + $0x78] sm:$0xff]
  %v157 = vld [vmem:[%s1] sm:$0xf]
  %v158 = vld [vmem:[%s1 + $0x4] sm:$0xf]
  %v161 = vunpack.c.l.b16 %v157
  %v162 = vunpack.c.l.b16 %v158
  %v163 = vpack.c.b16 %v162, %v161
  %vm165 = vcmask 130048
  %v167 = vsel %vm165, %v133, 0
  %v170 = vsel %vm165, %v134, 0
  %v173 = vsel %vm165, %v135, 0
  %v176 = vsel %vm165, %v136, 0
  %v179 = vsel %vm165, %v137, 0
  %v182 = vsel %vm165, %v138, 0
  %v185 = vsel %vm165, %v139, 0
  %v188 = vsel %vm165, %v140, 0
  %190 = vmatpush.bf16.msra.mxu0 0
  %191 = vmatpush.bf16.msra.mxu0 0
  %192 = vmatpush.bf16.msra.mxu0 0
  %193 = vmatpush.bf16.msra.mxu0 0
  %194 = vmatpush.bf16.msra.mxu0 0
  %195 = vmatpush.bf16.msra.mxu0 0
  %196 = vmatpush.bf16.msra.mxu0 0
  %197 = vmatpush.bf16.msra.mxu0 %v163
  %198 = vmatmul.bf16.gmra.mxu0 %v167
  %v199 = vpop.f32.mrf.mxu0
  %v200 = vadd.f32 0.0, %v199
  %v201 = vpop.f32.mrf.mxu0
  %v202 = vadd.f32 0.0, %v201
  %203 = vmatmul.bf16.gmra.mxu0 %v170
  %v204 = vpop.f32.mrf.mxu0
  %v205 = vadd.f32 0.0, %v204
  %v206 = vpop.f32.mrf.mxu0
  %v207 = vadd.f32 0.0, %v206
  %208 = vmatmul.bf16.gmra.mxu0 %v173
  %v209 = vpop.f32.mrf.mxu0
  %v210 = vadd.f32 0.0, %v209
  %v211 = vpop.f32.mrf.mxu0
  %v212 = vadd.f32 0.0, %v211
  %213 = vmatmul.bf16.gmra.mxu0 %v176
  %v214 = vpop.f32.mrf.mxu0
  %v215 = vadd.f32 0.0, %v214
  %v216 = vpop.f32.mrf.mxu0
  %v217 = vadd.f32 0.0, %v216
  %218 = vmatmul.bf16.gmra.mxu0 %v179
  %v219 = vpop.f32.mrf.mxu0
  %v220 = vadd.f32 0.0, %v219
  %v221 = vpop.f32.mrf.mxu0
  %v222 = vadd.f32 0.0, %v221
  %223 = vmatmul.bf16.gmra.mxu0 %v182
  %v224 = vpop.f32.mrf.mxu0
  %v225 = vadd.f32 0.0, %v224
  %v226 = vpop.f32.mrf.mxu0
  %v227 = vadd.f32 0.0, %v226
  %228 = vmatmul.bf16.gmra.mxu0 %v185
  %v229 = vpop.f32.mrf.mxu0
  %v230 = vadd.f32 0.0, %v229
  %v231 = vpop.f32.mrf.mxu0
  %v232 = vadd.f32 0.0, %v231
  %233 = vmatmul.bf16.gmra.mxu0 %v188
  %v234 = vpop.f32.mrf.mxu0
  %v235 = vadd.f32 0.0, %v234
  %v236 = vpop.f32.mrf.mxu0
  %v237 = vadd.f32 0.0, %v236
  %238 = vdwg.mxu0
  %v239 = vadd.f32 %v141, %v200
  %v240 = vadd.f32 %v142, %v202
  %v241 = vadd.f32 %v143, %v205
  %v242 = vadd.f32 %v144, %v207
  %v243 = vadd.f32 %v145, %v210
  %v244 = vadd.f32 %v146, %v212
  %v245 = vadd.f32 %v147, %v215
  %v246 = vadd.f32 %v148, %v217
  %v247 = vadd.f32 %v149, %v220
  %v248 = vadd.f32 %v150, %v222
  %v249 = vadd.f32 %v151, %v225
  %v250 = vadd.f32 %v152, %v227
  %v251 = vadd.f32 %v153, %v230
  %v252 = vadd.f32 %v154, %v232
  %v253 = vadd.f32 %v155, %v235
  %v254 = vadd.f32 %v156, %v237
  %vm255 = vcmask 261120
  %256 = vst.msk [vmem:[#allocation2] sm:$0xff] %vm255, %v239
  %257 = vst.msk [vmem:[#allocation2 + $0x8] sm:$0xff] %vm255, %v240
  %258 = vst.msk [vmem:[#allocation2 + $0x10] sm:$0xff] %vm255, %v241
  %259 = vst.msk [vmem:[#allocation2 + $0x18] sm:$0xff] %vm255, %v242
  %260 = vst.msk [vmem:[#allocation2 + $0x20] sm:$0xff] %vm255, %v243
  %261 = vst.msk [vmem:[#allocation2 + $0x28] sm:$0xff] %vm255, %v244
  %262 = vst.msk [vmem:[#allocation2 + $0x30] sm:$0xff] %vm255, %v245
  %263 = vst.msk [vmem:[#allocation2 + $0x38] sm:$0xff] %vm255, %v246
  %264 = vst.msk [vmem:[#allocation2 + $0x40] sm:$0xff] %vm255, %v247
  %265 = vst.msk [vmem:[#allocation2 + $0x48] sm:$0xff] %vm255, %v248
  %266 = vst.msk [vmem:[#allocation2 + $0x50] sm:$0xff] %vm255, %v249
  %267 = vst.msk [vmem:[#allocation2 + $0x58] sm:$0xff] %vm255, %v250
  %268 = vst.msk [vmem:[#allocation2 + $0x60] sm:$0xff] %vm255, %v251
  %269 = vst.msk [vmem:[#allocation2 + $0x68] sm:$0xff] %vm255, %v252
  %270 = vst.msk [vmem:[#allocation2 + $0x70] sm:$0xff] %vm255, %v253
  %271 = vst.msk [vmem:[#allocation2 + $0x78] sm:$0xff] %vm255, %v254
  // Predicated region
  $region30: #{_lambda_.15} parent=0 // pred_check
    %p272 = pneg %p24
  $region31: #{_lambda_.15} parent=0 // pred_check_branch
    %274 = sbr.rel (%p272) target = $region33
  $region32: #{_lambda_.15} parent=0 // pred_region
    %v275 = vld [vmem:[#allocation2] sm:$0xff]
    %v276 = vld [vmem:[#allocation2 + $0x8] sm:$0xff]
    %v277 = vld [vmem:[#allocation2 + $0x10] sm:$0xff]
    %v278 = vld [vmem:[#allocation2 + $0x18] sm:$0xff]
    %v279 = vld [vmem:[#allocation2 + $0x20] sm:$0xff]
    %v280 = vld [vmem:[#allocation2 + $0x28] sm:$0xff]
    %v281 = vld [vmem:[#allocation2 + $0x30] sm:$0xff]
    %v282 = vld [vmem:[#allocation2 + $0x38] sm:$0xff]
    %v283 = vld [vmem:[#allocation2 + $0x40] sm:$0xff]
    %v284 = vld [vmem:[#allocation2 + $0x48] sm:$0xff]
    %v285 = vld [vmem:[#allocation2 + $0x50] sm:$0xff]
    %v286 = vld [vmem:[#allocation2 + $0x58] sm:$0xff]
    %v287 = vld [vmem:[#allocation2 + $0x60] sm:$0xff]
    %v288 = vld [vmem:[#allocation2 + $0x68] sm:$0xff]
    %v289 = vld [vmem:[#allocation2 + $0x70] sm:$0xff]
    %v290 = vld [vmem:[#allocation2 + $0x78] sm:$0xff]
    %v291 = vld [vmem:[%s4] sm:$0x1]
    %v293 = vperm.slane %v291, 0
    %v295 = vmul.f32 %v275, %v293
    %v296 = vmul.f32 %v276, %v293
    %v297 = vmul.f32 %v277, %v293
    %v298 = vmul.f32 %v278, %v293
    %v299 = vmul.f32 %v279, %v293
    %v300 = vmul.f32 %v280, %v293
    %v301 = vmul.f32 %v281, %v293
    %v302 = vmul.f32 %v282, %v293
    %v303 = vmul.f32 %v283, %v293
    %v304 = vmul.f32 %v284, %v293
    %v305 = vmul.f32 %v285, %v293
    %v306 = vmul.f32 %v286, %v293
    %v307 = vmul.f32 %v287, %v293
    %v308 = vmul.f32 %v288, %v293
    %v309 = vmul.f32 %v289, %v293
    %v310 = vmul.f32 %v290, %v293
    %v311 = vld [vmem:[%s5] sm:$0x1]
    %v313 = vperm.slane %v311, 0
    %v315 = vadd.f32 %v295, %v313
    %v316 = vadd.f32 %v296, %v313
    %v317 = vadd.f32 %v297, %v313
    %v318 = vadd.f32 %v298, %v313
    %v319 = vadd.f32 %v299, %v313
    %v320 = vadd.f32 %v300, %v313
    %v321 = vadd.f32 %v301, %v313
    %v322 = vadd.f32 %v302, %v313
    %v323 = vadd.f32 %v303, %v313
    %v324 = vadd.f32 %v304, %v313
    %v325 = vadd.f32 %v305, %v313
    %v326 = vadd.f32 %v306, %v313
    %v327 = vadd.f32 %v307, %v313
    %v328 = vadd.f32 %v308, %v313
    %v329 = vadd.f32 %v309, %v313
    %v330 = vadd.f32 %v310, %v313
    %v331 = vmax.f32 %v315, 0.0
    %v332 = vmax.f32 %v316, 0.0
    %v333 = vmax.f32 %v317, 0.0
    %v334 = vmax.f32 %v318, 0.0
    %v335 = vmax.f32 %v319, 0.0
    %v336 = vmax.f32 %v320, 0.0
    %v337 = vmax.f32 %v321, 0.0
    %v338 = vmax.f32 %v322, 0.0
    %v339 = vmax.f32 %v323, 0.0
    %v340 = vmax.f32 %v324, 0.0
    %v341 = vmax.f32 %v325, 0.0
    %v342 = vmax.f32 %v326, 0.0
    %v343 = vmax.f32 %v327, 0.0
    %v344 = vmax.f32 %v328, 0.0
    %v345 = vmax.f32 %v329, 0.0
    %v346 = vmax.f32 %v330, 0.0
    %v347 = vpack.c.bf16 %v331, %v331
    %v348 = vpack.c.bf16 %v332, %v332
    %v349 = vpack.c.bf16 %v333, %v333
    %v350 = vpack.c.bf16 %v334, %v334
    %v351 = vpack.c.bf16 %v335, %v335
    %v352 = vpack.c.bf16 %v336, %v336
    %v353 = vpack.c.bf16 %v337, %v337
    %v354 = vpack.c.bf16 %v338, %v338
    %v355 = vpack.c.bf16 %v339, %v339
    %v356 = vpack.c.bf16 %v340, %v340
    %v357 = vpack.c.bf16 %v341, %v341
    %v358 = vpack.c.bf16 %v342, %v342
    %v359 = vpack.c.bf16 %v343, %v343
    %v360 = vpack.c.bf16 %v344, %v344
    %v361 = vpack.c.bf16 %v345, %v345
    %v362 = vpack.c.bf16 %v346, %v346
    %vm363 = vcmask 257024
    %364 = vst.msk [vmem:[%s6] sm:$0xf] %vm363, %v347
    %365 = vst.msk [vmem:[%s6 + $0x4] sm:$0xf] %vm363, %v348
    %366 = vst.msk [vmem:[%s6 + $0x8] sm:$0xf] %vm363, %v349
    %367 = vst.msk [vmem:[%s6 + $0xc] sm:$0xf] %vm363, %v350
    %368 = vst.msk [vmem:[%s6 + $0x10] sm:$0xf] %vm363, %v351
    %369 = vst.msk [vmem:[%s6 + $0x14] sm:$0xf] %vm363, %v352
    %370 = vst.msk [vmem:[%s6 + $0x18] sm:$0xf] %vm363, %v353
    %371 = vst.msk [vmem:[%s6 + $0x1c] sm:$0xf] %vm363, %v354
    %372 = vst.msk [vmem:[%s6 + $0x20] sm:$0xf] %vm363, %v355
    %373 = vst.msk [vmem:[%s6 + $0x24] sm:$0xf] %vm363, %v356
    %374 = vst.msk [vmem:[%s6 + $0x28] sm:$0xf] %vm363, %v357
    %375 = vst.msk [vmem:[%s6 + $0x2c] sm:$0xf] %vm363, %v358
    %376 = vst.msk [vmem:[%s6 + $0x30] sm:$0xf] %vm363, %v359
    %377 = vst.msk [vmem:[%s6 + $0x34] sm:$0xf] %vm363, %v360
    %378 = vst.msk [vmem:[%s6 + $0x38] sm:$0xf] %vm363, %v361
    %379 = vst.msk [vmem:[%s6 + $0x3c] sm:$0xf] %vm363, %v362
  $region33: #{_lambda_.15} parent=0 // pred_fallthru
    _
  // Predicated region
  $region34: #{_lambda_.15} parent=0 // pred_check
    _
  $region35: #{_lambda_.15} parent=0 // pred_check_branch
    %381 = sbr.rel (0) target = $region37
  $region36: #{_lambda_.15} parent=0 // pred_region
    _
  $region37: #{_lambda_.15} parent=0 // pred_fallthru
    _
  // Predicated region
  $region38: #{_lambda_.15} parent=0 // pred_check
    _
  $region39: #{_lambda_.15} parent=0 // pred_check_branch
    %383 = sbr.rel (0) target = $region41
  $region40: #{_lambda_.15} parent=0 // pred_region
    _
  $region41: #{_lambda_.15} parent=0 // pred_fallthru
    _

// kernel: _lambda_.16
$region0: #{_lambda_.16}
  #allocation0 [shape = 'u32[]', space=smem, size = 0x4, offset = 0x4, fixed_abs, tag = 'smem constant byte address 0x4 - core index']
  #allocation1 [shape = 'u32[72,128]{1,0:T(1,128)}', space=vmem, size = 0x9000, scoped, tag = 'internal scratch']
  %s0 = inlined_call_operand.vmem [shape: bf16[2,10,10,32], index: 0, kind: input, shape index: {}, may-alias: {0,1,2}]
  %s1 = inlined_call_operand.vmem [shape: bf16[2,10,10,32], index: 1, kind: input, shape index: {}, may-alias: {0,1,2}]
  %s2 = inlined_call_operand.vmem [shape: bf16[2,10,10,32], index: 2, kind: input, shape index: {}, may-alias: {0,1,2}]
  %s3 = inlined_call_operand.vmem [shape: bf16[9,32,8], index: 3, kind: input, shape index: {}]
  %s4 = inlined_call_operand.vmem [shape: bf16[2,8,8,8], index: 4, kind: output, shape index: {}]
  %s5 = sld [smem:[#allocation0]]
  $region49: #{_lambda_.16} parent=0
    _
  %s7 = ssub.s32 1, %s5
  %s8 = scalar_select 0, %s7, %s5
  loop: start=0, step=1, limit=18
  $region2: #{_lambda_.16} parent=0 // loop_pre_header
    _
  $region3: #{_lambda_.16} parent=0 // loop_header
    %s10 = sphi 0, %s14
    %p11 = scmp.ge.s32.totalorder %s10, 18
    %s17 = sphi 0, %s29
    %s18 = sphi 0, %s25
    %s19 = sphi 0, %s17
    %s20 = sphi 0, %s18
    %s21 = sphi 0, %s19
    %s22 = sphi 0, %s20
    %s34 = sphi 0, %s36
    %s37 = sphi 0, %s34
    %s38 = sphi 0, %s37
    %s54 = sphi 0, %s38
    %s64 = sphi 0, %s66
    %s67 = sphi 0, %s64
    %s68 = sphi 0, %s67
    %s84 = sphi 0, %s68
    %s94 = sphi 0, %s96
    %s97 = sphi 0, %s94
    %s98 = sphi 0, %s97
    %s114 = sphi 0, %s98
    %s118 = sphi 0, %s118
    %s120 = sphi 0, %s118
    %s121 = sphi 0, %s120
    %s135 = sphi 0, %s121
    %s143 = sphi 0, %s145
    %s146 = sphi 0, %s143
    %s147 = sphi 0, %s146
    %s163 = sphi 0, %s147
  $region4: #{_lambda_.16} parent=0 // loop_header_branch
    %13 = sbr.rel (%p11) target = $region8
  $region5: #{_lambda_.16} parent=0 // loop_body
    %s15 = ssub.s32 %s10, 1
    %s16 = ssub.s32 %s10, 2
    %s23 = sadd.s32 1, %s18
    %p24 = scmp.ge.s32.totalorder %s23, 8
    %s25 = scalar_select %p24, 0, %s23
    %s26 = sadd.s32 1, %s17
    %s27 = scalar_select %p24, %s26, %s17
    %p28 = scmp.ge.s32.totalorder %s27, 2
    %s29 = scalar_select %p28, 0, %s27
    %s30 = ssub.s32 %s17, %s29
    %s31 = ssub.s32 %s18, %s25
    %s32 = sor.u32 %s30, %s31
    %p33 = scmp.eq.s32.totalorder %s32, 0
    %s35 = sadd.s32 %s34, 1
    %s36 = scalar_select %p33, %s34, %s35
    %p39 = pneg %p33
    %p40 = scmp.eq.s32.totalorder %s10, 15
    %p41 = por %p39, %p40
    %p42 = scmp.ne.s32.totalorder %s34, %s37
    %p43 = scmp.eq.s32.totalorder %s10, 0
    %p44 = por %p42, %p43
    %p45 = scmp.ne.s32.totalorder %s34, %s37
    %p46 = scmp.eq.s32.totalorder %s15, 15
    %p47 = por %p45, %p46
    %p48 = scmp.ne.s32.totalorder %s37, %s38
    %p49 = scmp.eq.s32.totalorder %s15, 0
    %p50 = por %p48, %p49
    %p51 = scmp.ne.s32.totalorder %s37, %s38
    %p52 = scmp.eq.s32.totalorder %s16, 15
    %p53 = por %p51, %p52
    %p55 = scmp.ne.s32.totalorder %s38, %s54
    %p56 = scmp.eq.s32.totalorder %s16, 0
    %p57 = por %p55, %p56
    %s58 = sadd.s32 %s18, 1
    %s59 = sadd.s32 %s25, 1
    %s60 = ssub.s32 %s17, %s29
    %s61 = ssub.s32 %s58, %s59
    %s62 = sor.u32 %s60, %s61
    %p63 = scmp.eq.s32.totalorder %s62, 0
    %s65 = sadd.s32 %s64, 1
    %s66 = scalar_select %p63, %s64, %s65
    %p69 = pneg %p63
    %p70 = scmp.eq.s32.totalorder %s10, 15
    %p71 = por %p69, %p70
    %p72 = scmp.ne.s32.totalorder %s64, %s67
    %p73 = scmp.eq.s32.totalorder %s10, 0
    %p74 = por %p72, %p73
    %p75 = scmp.ne.s32.totalorder %s64, %s67
    %p76 = scmp.eq.s32.totalorder %s15, 15
    %p77 = por %p75, %p76
    %p78 = scmp.ne.s32.totalorder %s67, %s68
    %p79 = scmp.eq.s32.totalorder %s15, 0
    %p80 = por %p78, %p79
    %p81 = scmp.ne.s32.totalorder %s67, %s68
    %p82 = scmp.eq.s32.totalorder %s16, 15
    %p83 = por %p81, %p82
    %p85 = scmp.ne.s32.totalorder %s68, %s84
    %p86 = scmp.eq.s32.totalorder %s16, 0
    %p87 = por %p85, %p86
    %s88 = sadd.s32 %s18, 2
    %s89 = sadd.s32 %s25, 2
    %s90 = ssub.s32 %s17, %s29
    %s91 = ssub.s32 %s88, %s89
    %s92 = sor.u32 %s90, %s91
    %p93 = scmp.eq.s32.totalorder %s92, 0
    %s95 = sadd.s32 %s94, 1
    %s96 = scalar_select %p93, %s94, %s95
    %p99 = pneg %p93
    %p100 = scmp.eq.s32.totalorder %s10, 15
    %p101 = por %p99, %p100
    %p102 = scmp.ne.s32.totalorder %s94, %s97
    %p103 = scmp.eq.s32.totalorder %s10, 0
    %p104 = por %p102, %p103
    %p105 = scmp.ne.s32.totalorder %s94, %s97
    %p106 = scmp.eq.s32.totalorder %s15, 15
    %p107 = por %p105, %p106
    %p108 = scmp.ne.s32.totalorder %s97, %s98
    %p109 = scmp.eq.s32.totalorder %s15, 0
    %p110 = por %p108, %p109
    %p111 = scmp.ne.s32.totalorder %s97, %s98
    %p112 = scmp.eq.s32.totalorder %s16, 15
    %p113 = por %p111, %p112
    %p115 = scmp.ne.s32.totalorder %s98, %s114
    %p116 = scmp.eq.s32.totalorder %s16, 0
    %p117 = por %p115, %p116
    %s119 = sadd.s32 %s118, 1
    %p122 = scmp.eq.s32.totalorder %s10, 15
    %p123 = scmp.ne.s32.totalorder %s118, %s120
    %p124 = scmp.eq.s32.totalorder %s10, 0
    %p125 = por %p123, %p124
    %p126 = scmp.ne.s32.totalorder %s118, %s120
    %p127 = scmp.eq.s32.totalorder %s15, 15
    %p128 = por %p126, %p127
    %p129 = scmp.ne.s32.totalorder %s120, %s121
    %p130 = scmp.eq.s32.totalorder %s15, 0
    %p131 = por %p129, %p130
    %p132 = scmp.ne.s32.totalorder %s120, %s121
    %p133 = scmp.eq.s32.totalorder %s16, 15
    %p134 = por %p132, %p133
    %p136 = scmp.ne.s32.totalorder %s121, %s135
    %p137 = scmp.eq.s32.totalorder %s16, 0
    %p138 = por %p136, %p137
    %s139 = ssub.s32 %s17, %s29
    %s140 = ssub.s32 %s18, %s25
    %s141 = sor.u32 %s139, %s140
    %p142 = scmp.eq.s32.totalorder %s141, 0
    %s144 = sadd.s32 %s143, 1
    %s145 = scalar_select %p142, %s143, %s144
    %p148 = pneg %p142
    %p149 = scmp.eq.s32.totalorder %s10, 15
    %p150 = por %p148, %p149
    %p151 = scmp.ne.s32.totalorder %s143, %s146
    %p152 = scmp.eq.s32.totalorder %s10, 0
    %p153 = por %p151, %p152
    %p154 = scmp.ne.s32.totalorder %s143, %s146
    %p155 = scmp.eq.s32.totalorder %s15, 15
    %p156 = por %p154, %p155
    %p157 = scmp.ne.s32.totalorder %s146, %s147
    %p158 = scmp.eq.s32.totalorder %s15, 0
    %p159 = por %p157, %p158
    %p160 = scmp.ne.s32.totalorder %s146, %s147
    %p161 = scmp.eq.s32.totalorder %s16, 15
    %p162 = por %p160, %p161
    %p164 = scmp.ne.s32.totalorder %s147, %s163
    %p165 = scmp.eq.s32.totalorder %s16, 0
    %p166 = por %p164, %p165
    %p167 = scmp.le.s32.totalorder 1, %s10
    %p168 = scmp.lt.s32.totalorder %s10, 17
    %p169 = pnand %p167, %p168
    %p170 = pneg %p169
    // Predicated region
    $region9: #{_lambda_.16} parent=5 // pred_check
      _
    $region10: #{_lambda_.16} parent=5 // pred_check_branch
      %172 = sbr.rel (%p169) target = $region12
    $region11: #{_lambda_.16} parent=5 // pred_region
      %s173 = ssub.s32 %s10, 1
      // Predicated region
      $region13: #{_lambda_.16} parent=11 // pred_check
        %p174 = pneg %p131
      $region14: #{_lambda_.16} parent=11 // pred_check_branch
        %176 = sbr.rel (%p174) target = $region16
      $region15: #{_lambda_.16} parent=11 // pred_region
        _
      $region16: #{_lambda_.16} parent=11 // pred_fallthru
        _
    $region12: #{_lambda_.16} parent=5 // pred_fallthru
      _
    %p177 = scmp.lt.s32.totalorder %s10, 16
    // Predicated region
    $region17: #{_lambda_.16} parent=5 // pred_check
      %p178 = pneg %p177
    $region18: #{_lambda_.16} parent=5 // pred_check_branch
      %180 = sbr.rel (%p178) target = $region20
    $region19: #{_lambda_.16} parent=5 // pred_region
      // Predicated region
      $region21: #{_lambda_.16} parent=19 // pred_check
        %p181 = pneg %p44
      $region22: #{_lambda_.16} parent=19 // pred_check_branch
        %183 = sbr.rel (%p181) target = $region24
      $region23: #{_lambda_.16} parent=19 // pred_region
        %p184 = scmp.lt.s32.totalorder %s17, 1
        %s185 = scalar_select %p184, %s17, 1
        %p186 = scmp.lt.s32.totalorder %s18, 9
        %s187 = scalar_select %p186, %s18, 9
        %s188 = smul.addr %s187, 2
        %s189 = smul.addr %s185, 20
        %s190 = sadd.s32 %s188, %s189
        %s191 = smul.addr %s190, 4
        %s192 = scalar_lea.vmem %s0, %s191
      $region24: #{_lambda_.16} parent=19 // pred_fallthru
        _
      // Predicated region
      $region25: #{_lambda_.16} parent=19 // pred_check
        %p193 = pneg %p74
      $region26: #{_lambda_.16} parent=19 // pred_check_branch
        %195 = sbr.rel (%p193) target = $region28
      $region27: #{_lambda_.16} parent=19 // pred_region
        %s196 = sadd.s32 %s18, 1
        %p197 = scmp.lt.s32.totalorder %s17, 1
        %s198 = scalar_select %p197, %s17, 1
        %p199 = scmp.lt.s32.totalorder %s196, 9
        %s200 = scalar_select %p199, %s196, 9
        %s201 = smul.addr %s200, 2
        %s202 = smul.addr %s198, 20
        %s203 = sadd.s32 %s201, %s202
        %s204 = smul.addr %s203, 4
        %s205 = scalar_lea.vmem %s1, %s204
        %s206 = sadd.s32 %s18, 1
      $region28: #{_lambda_.16} parent=19 // pred_fallthru
        _
      // Predicated region
      $region29: #{_lambda_.16} parent=19 // pred_check
        %p207 = pneg %p104
      $region30: #{_lambda_.16} parent=19 // pred_check_branch
        %209 = sbr.rel (%p207) target = $region32
      $region31: #{_lambda_.16} parent=19 // pred_region
        %s210 = sadd.s32 %s18, 2
        %p211 = scmp.lt.s32.totalorder %s17, 1
        %s212 = scalar_select %p211, %s17, 1
        %p213 = scmp.lt.s32.totalorder %s210, 9
        %s214 = scalar_select %p213, %s210, 9
        %s215 = smul.addr %s214, 2
        %s216 = smul.addr %s212, 20
        %s217 = sadd.s32 %s215, %s216
        %s218 = smul.addr %s217, 4
        %s219 = scalar_lea.vmem %s2, %s218
        %s220 = sadd.s32 %s18, 2
      $region32: #{_lambda_.16} parent=19 // pred_fallthru
        _
    $region20: #{_lambda_.16} parent=5 // pred_fallthru
      _
    %p221 = scmp.le.s32.totalorder 1, %s10
    %p222 = scmp.lt.s32.totalorder %s10, 17
    %p223 = pnand %p221, %p222
    %p224 = pneg %p223
    // Predicated region
    $region33: #{_lambda_.16} parent=5 // pred_check
      _
    $region34: #{_lambda_.16} parent=5 // pred_check_branch
      %226 = sbr.rel (%p223) target = $region36
    $region35: #{_lambda_.16} parent=5 // pred_region
      %s227 = ssub.s32 %s10, 1
      %p228 = scmp.lt.s32.totalorder %s19, 1
      %s229 = scalar_select %p228, %s19, 1
      %p230 = scmp.lt.s32.totalorder %s20, 9
      %s231 = scalar_select %p230, %s20, 9
      %s232 = smul.addr %s231, 2
      %s233 = smul.addr %s229, 20
      %s234 = sadd.s32 %s232, %s233
      %s235 = smul.addr %s234, 4
      %s236 = scalar_lea.vmem %s0, %s235
      %p237 = pneg %p50
      %p238 = pneg %p47
      %s239 = sadd.s32 %s20, 1
      %p240 = scmp.lt.s32.totalorder %s19, 1
      %s241 = scalar_select %p240, %s19, 1
      %p242 = scmp.lt.s32.totalorder %s239, 9
      %s243 = scalar_select %p242, %s239, 9
      %s244 = smul.addr %s243, 2
      %s245 = smul.addr %s241, 20
      %s246 = sadd.s32 %s244, %s245
      %s247 = smul.addr %s246, 4
      %s248 = scalar_lea.vmem %s1, %s247
      %p249 = pneg %p80
      %p250 = pneg %p77
      %s251 = sadd.s32 %s20, 2
      %p252 = scmp.lt.s32.totalorder %s19, 1
      %s253 = scalar_select %p252, %s19, 1
      %p254 = scmp.lt.s32.totalorder %s251, 9
      %s255 = scalar_select %p254, %s251, 9
      %s256 = smul.addr %s255, 2
      %s257 = smul.addr %s253, 20
      %s258 = sadd.s32 %s256, %s257
      %s259 = smul.addr %s258, 4
      %s260 = scalar_lea.vmem %s2, %s259
      %p261 = pneg %p110
      %p262 = pneg %p107
      %p263 = pneg %p131
      %p264 = pneg %p128
      %p265 = pneg %p159
      %p266 = pneg %p156
      %p267 = scmp.lt.s32.totalorder %s19, 1
      %s268 = scalar_select %p267, %s19, 1
      %p269 = scmp.lt.s32.totalorder %s20, 7
      %s270 = scalar_select %p269, %s20, 7
      %s271 = smul.addr %s268, 8
      %s272 = sadd.s32 %s270, %s271
      %s273 = smul.addr %s272, 4
      %s274 = scalar_lea.vmem %s4, %s273
      %p275 = scmp.lt.s32.totalorder %s19, 1
      %s276 = scalar_select %p275, %s19, 1
      %p277 = scmp.lt.s32.totalorder %s20, 9
      %s278 = scalar_select %p277, %s20, 9
      %s279 = smul.addr %s278, 2
      %s280 = smul.addr %s276, 20
      %s281 = sadd.s32 %s279, %s280
      %s282 = smul.addr %s281, 4
      %s283 = scalar_lea.vmem %s0, %s282
      %s284 = sadd.s32 %s20, 1
      %p285 = scmp.lt.s32.totalorder %s19, 1
      %s286 = scalar_select %p285, %s19, 1
      %p287 = scmp.lt.s32.totalorder %s284, 9
      %s288 = scalar_select %p287, %s284, 9
      %s289 = smul.addr %s288, 2
      %s290 = smul.addr %s286, 20
      %s291 = sadd.s32 %s289, %s290
      %s292 = smul.addr %s291, 4
      %s293 = scalar_lea.vmem %s1, %s292
      %s294 = sadd.s32 %s20, 1
      %s295 = sadd.s32 %s20, 2
      %p296 = scmp.lt.s32.totalorder %s19, 1
      %s297 = scalar_select %p296, %s19, 1
      %p298 = scmp.lt.s32.totalorder %s295, 9
      %s299 = scalar_select %p298, %s295, 9
      %s300 = smul.addr %s299, 2
      %s301 = smul.addr %s297, 20
      %s302 = sadd.s32 %s300, %s301
      %s303 = smul.addr %s302, 4
      %s304 = scalar_lea.vmem %s2, %s303
      %s305 = sadd.s32 %s20, 2
      %p306 = scmp.lt.s32.totalorder %s19, 1
      %s307 = scalar_select %p306, %s19, 1
      %p308 = scmp.lt.s32.totalorder %s20, 7
      %s309 = scalar_select %p308, %s20, 7
      %s310 = smul.addr %s307, 8
      %s311 = sadd.s32 %s309, %s310
      %s312 = smul.addr %s311, 4
      %s313 = scalar_lea.vmem %s4, %s312
      %v315 = vld [vmem:[%s283] sm:$0xf]
      %v316 = vld [vmem:[%s3] sm:$0xf]
      %v317 = vld [vmem:[%s3 + $0x4] sm:$0xf]
      %v318 = vld [vmem:[%s3 + $0x8] sm:$0xf]
      %v319 = vld [vmem:[%s3 + $0xc] sm:$0xf]
      %v320 = vld [vmem:[%s283 + $0x4] sm:$0x1]
      %s321 = scalar_lea.vmem %s3, 16
      %v322 = vld [vmem:[%s321] sm:$0xf]
      %v323 = vld [vmem:[%s321 + $0x4] sm:$0xf]
      %v324 = vld [vmem:[%s321 + $0x8] sm:$0xf]
      %v325 = vld [vmem:[%s321 + $0xc] sm:$0xf]
      %v328 = vunpack.c.l.b16 %v315
      %v329 = vunpack.c.l.b16 %v320
      %v330 = vpack.c.b16 %v329, %v328
      %v332 = vshrl.u32 %v330, 16
      %v334 = vshll.u32 %v330, 16
      %v336 = vrot.slane %v334, 1
      %v337 = vor.u32 %v332, %v336
      %v342 = vunpack.c.l.b16 %v322
      %v343 = vunpack.c.l.b16 %v323
      %v344 = vunpack.c.l.b16 %v324
      %v345 = vunpack.c.l.b16 %v325
      %v346 = vpack.c.b16 %v343, %v342
      %v347 = vpack.c.b16 %v345, %v344
      %vm350 = vcmask 261120
      %v352 = vsel %vm350, %v337, 0
      %354 = vmatpush.bf16.msra.mxu0 0
      %355 = vmatpush.bf16.msra.mxu0 0
      %356 = vmatpush.bf16.msra.mxu0 0
      %357 = vmatpush.bf16.msra.mxu0 0
      %358 = vmatpush.bf16.msra.mxu0 0
      %359 = vmatpush.bf16.msra.mxu0 0
      %360 = vmatpush.bf16.msra.mxu0 %v347
      %361 = vmatpush.bf16.msra.mxu0 %v346
      %362 = vmatmul.bf16.gmra.mxu0 %v352
      %v363 = vpop.f32.mrf.mxu0
      %v364 = vadd.f32 0.0, %v363
      %v365 = vpop.f32.mrf.mxu0
      %366 = vdwg.mxu0
      %v371 = vunpack.c.l.b16 %v316
      %v372 = vunpack.c.l.b16 %v317
      %v373 = vunpack.c.l.b16 %v318
      %v374 = vunpack.c.l.b16 %v319
      %v375 = vpack.c.b16 %v372, %v371
      %v376 = vpack.c.b16 %v374, %v373
      %v380 = vsel %vm350, %v315, 0
      %382 = vmatpush.bf16.msra.mxu0 0
      %383 = vmatpush.bf16.msra.mxu0 0
      %384 = vmatpush.bf16.msra.mxu0 0
      %385 = vmatpush.bf16.msra.mxu0 0
      %386 = vmatpush.bf16.msra.mxu0 0
      %387 = vmatpush.bf16.msra.mxu0 0
      %388 = vmatpush.bf16.msra.mxu0 %v376
      %389 = vmatpush.bf16.msra.mxu0 %v375
      %390 = vmatmul.bf16.gmra.mxu0 %v380
      %v391 = vpop.f32.mrf.mxu0
      %v392 = vadd.f32 %v364, %v391
      %v393 = vpop.f32.mrf.mxu0
      %394 = vdwg.mxu0
      %v395 = vld [vmem:[%s283] sm:$0xe]
      %s396 = scalar_lea.vmem %s3, 32
      %v397 = vld [vmem:[%s396] sm:$0xf]
      %v398 = vld [vmem:[%s396 + $0x4] sm:$0xf]
      %v399 = vld [vmem:[%s396 + $0x8] sm:$0xf]
      %v400 = vld [vmem:[%s396 + $0xc] sm:$0xf]
      %v402 = vunpack.c.l.b16 %v395
      %v403 = vpack.c.b16 %v329, %v402
      %v404 = vrot.slane %v403, 1
      %v409 = vunpack.c.l.b16 %v397
      %v410 = vunpack.c.l.b16 %v398
      %v411 = vunpack.c.l.b16 %v399
      %v412 = vunpack.c.l.b16 %v400
      %v413 = vpack.c.b16 %v410, %v409
      %v414 = vpack.c.b16 %v412, %v411
      %v418 = vsel %vm350, %v404, 0
      %420 = vmatpush.bf16.msra.mxu0 0
      %421 = vmatpush.bf16.msra.mxu0 0
      %422 = vmatpush.bf16.msra.mxu0 0
      %423 = vmatpush.bf16.msra.mxu0 0
      %424 = vmatpush.bf16.msra.mxu0 0
      %425 = vmatpush.bf16.msra.mxu0 0
      %426 = vmatpush.bf16.msra.mxu0 %v414
      %427 = vmatpush.bf16.msra.mxu0 %v413
      %428 = vmatmul.bf16.gmra.mxu0 %v418
      %v429 = vpop.f32.mrf.mxu0
      %v430 = vadd.f32 0.0, %v429
      %v431 = vpop.f32.mrf.mxu0
      %432 = vdwg.mxu0
      %v433 = vadd.f32 %v392, %v430
      %v434 = vld [vmem:[%s293] sm:$0xf]
      %s435 = scalar_lea.vmem %s3, 48
      %v436 = vld [vmem:[%s435] sm:$0xf]
      %v437 = vld [vmem:[%s435 + $0x4] sm:$0xf]
      %v438 = vld [vmem:[%s435 + $0x8] sm:$0xf]
      %v439 = vld [vmem:[%s435 + $0xc] sm:$0xf]
      %v444 = vunpack.c.l.b16 %v436
      %v445 = vunpack.c.l.b16 %v437
      %v446 = vunpack.c.l.b16 %v438
      %v447 = vunpack.c.l.b16 %v439
      %v448 = vpack.c.b16 %v445, %v444
      %v449 = vpack.c.b16 %v447, %v446
      %v453 = vsel %vm350, %v434, 0
      %455 = vmatpush.bf16.msra.mxu0 0
      %456 = vmatpush.bf16.msra.mxu0 0
      %457 = vmatpush.bf16.msra.mxu0 0
      %458 = vmatpush.bf16.msra.mxu0 0
      %459 = vmatpush.bf16.msra.mxu0 0
      %460 = vmatpush.bf16.msra.mxu0 0
      %461 = vmatpush.bf16.msra.mxu0 %v449
      %462 = vmatpush.bf16.msra.mxu0 %v448
      %463 = vmatmul.bf16.gmra.mxu0 %v453
      %v464 = vpop.f32.mrf.mxu0
      %v465 = vadd.f32 0.0, %v464
      %v466 = vpop.f32.mrf.mxu0
      %467 = vdwg.mxu0
      %v468 = vadd.f32 %v433, %v465
      %v469 = vld [vmem:[%s293] sm:$0xf]
      %v470 = vld [vmem:[%s293 + $0x4] sm:$0x1]
      %s471 = scalar_lea.vmem %s3, 64
      %v472 = vld [vmem:[%s471] sm:$0xf]
      %v473 = vld [vmem:[%s471 + $0x4] sm:$0xf]
      %v474 = vld [vmem:[%s471 + $0x8] sm:$0xf]
      %v475 = vld [vmem:[%s471 + $0xc] sm:$0xf]
      %v478 = vunpack.c.l.b16 %v469
      %v479 = vunpack.c.l.b16 %v470
      %v480 = vpack.c.b16 %v479, %v478
      %v482 = vshrl.u32 %v480, 16
      %v484 = vshll.u32 %v480, 16
      %v486 = vrot.slane %v484, 1
      %v487 = vor.u32 %v482, %v486
      %v492 = vunpack.c.l.b16 %v472
      %v493 = vunpack.c.l.b16 %v473
      %v494 = vunpack.c.l.b16 %v474
      %v495 = vunpack.c.l.b16 %v475
      %v496 = vpack.c.b16 %v493, %v492
      %v497 = vpack.c.b16 %v495, %v494
      %v501 = vsel %vm350, %v487, 0
      %503 = vmatpush.bf16.msra.mxu0 0
      %504 = vmatpush.bf16.msra.mxu0 0
      %505 = vmatpush.bf16.msra.mxu0 0
      %506 = vmatpush.bf16.msra.mxu0 0
      %507 = vmatpush.bf16.msra.mxu0 0
      %508 = vmatpush.bf16.msra.mxu0 0
      %509 = vmatpush.bf16.msra.mxu0 %v497
      %510 = vmatpush.bf16.msra.mxu0 %v496
      %511 = vmatmul.bf16.gmra.mxu0 %v501
      %v512 = vpop.f32.mrf.mxu0
      %v513 = vadd.f32 0.0, %v512
      %v514 = vpop.f32.mrf.mxu0
      %515 = vdwg.mxu0
      %v516 = vadd.f32 %v468, %v513
      %v517 = vld [vmem:[%s293] sm:$0xe]
      %s518 = scalar_lea.vmem %s3, 80
      %v519 = vld [vmem:[%s518] sm:$0xf]
      %v520 = vld [vmem:[%s518 + $0x4] sm:$0xf]
      %v521 = vld [vmem:[%s518 + $0x8] sm:$0xf]
      %v522 = vld [vmem:[%s518 + $0xc] sm:$0xf]
      %v524 = vunpack.c.l.b16 %v517
      %v525 = vpack.c.b16 %v479, %v524
      %v526 = vrot.slane %v525, 1
      %v531 = vunpack.c.l.b16 %v519
      %v532 = vunpack.c.l.b16 %v520
      %v533 = vunpack.c.l.b16 %v521
      %v534 = vunpack.c.l.b16 %v522
      %v535 = vpack.c.b16 %v532, %v531
      %v536 = vpack.c.b16 %v534, %v533
      %v540 = vsel %vm350, %v526, 0
      %542 = vmatpush.bf16.msra.mxu0 0
      %543 = vmatpush.bf16.msra.mxu0 0
      %544 = vmatpush.bf16.msra.mxu0 0
      %545 = vmatpush.bf16.msra.mxu0 0
      %546 = vmatpush.bf16.msra.mxu0 0
      %547 = vmatpush.bf16.msra.mxu0 0
      %548 = vmatpush.bf16.msra.mxu0 %v536
      %549 = vmatpush.bf16.msra.mxu0 %v535
      %550 = vmatmul.bf16.gmra.mxu0 %v540
      %v551 = vpop.f32.mrf.mxu0
      %v552 = vadd.f32 0.0, %v551
      %v553 = vpop.f32.mrf.mxu0
      %554 = vdwg.mxu0
      %v555 = vadd.f32 %v516, %v552
      %v556 = vld [vmem:[%s304] sm:$0xf]
      %s557 = scalar_lea.vmem %s3, 96
      %v558 = vld [vmem:[%s557] sm:$0xf]
      %v559 = vld [vmem:[%s557 + $0x4] sm:$0xf]
      %v560 = vld [vmem:[%s557 + $0x8] sm:$0xf]
      %v561 = vld [vmem:[%s557 + $0xc] sm:$0xf]
      %v566 = vunpack.c.l.b16 %v558
      %v567 = vunpack.c.l.b16 %v559
      %v568 = vunpack.c.l.b16 %v560
      %v569 = vunpack.c.l.b16 %v561
      %v570 = vpack.c.b16 %v567, %v566
      %v571 = vpack.c.b16 %v569, %v568
      %v575 = vsel %vm350, %v556, 0
      %577 = vmatpush.bf16.msra.mxu0 0
      %578 = vmatpush.bf16.msra.mxu0 0
      %579 = vmatpush.bf16.msra.mxu0 0
      %580 = vmatpush.bf16.msra.mxu0 0
      %581 = vmatpush.bf16.msra.mxu0 0
      %582 = vmatpush.bf16.msra.mxu0 0
      %583 = vmatpush.bf16.msra.mxu0 %v571
      %584 = vmatpush.bf16.msra.mxu0 %v570
      %585 = vmatmul.bf16.gmra.mxu0 %v575
      %v586 = vpop.f32.mrf.mxu0
      %v587 = vadd.f32 0.0, %v586
      %v588 = vpop.f32.mrf.mxu0
      %589 = vdwg.mxu0
      %v590 = vadd.f32 %v555, %v587
      %v591 = vld [vmem:[%s304] sm:$0xf]
      %v592 = vld [vmem:[%s304 + $0x4] sm:$0x1]
      %s593 = scalar_lea.vmem %s3, 112
      %v594 = vld [vmem:[%s593] sm:$0xf]
      %v595 = vld [vmem:[%s593 + $0x4] sm:$0xf]
      %v596 = vld [vmem:[%s593 + $0x8] sm:$0xf]
      %v597 = vld [vmem:[%s593 + $0xc] sm:$0xf]
      %v600 = vunpack.c.l.b16 %v591
      %v601 = vunpack.c.l.b16 %v592
      %v602 = vpack.c.b16 %v601, %v600
      %v604 = vshrl.u32 %v602, 16
      %v606 = vshll.u32 %v602, 16
      %v608 = vrot.slane %v606, 1
      %v609 = vor.u32 %v604, %v608
      %v614 = vunpack.c.l.b16 %v594
      %v615 = vunpack.c.l.b16 %v595
      %v616 = vunpack.c.l.b16 %v596
      %v617 = vunpack.c.l.b16 %v597
      %v618 = vpack.c.b16 %v615, %v614
      %v619 = vpack.c.b16 %v617, %v616
      %v623 = vsel %vm350, %v609, 0
      %625 = vmatpush.bf16.msra.mxu0 0
      %626 = vmatpush.bf16.msra.mxu0 0
      %627 = vmatpush.bf16.msra.mxu0 0
      %628 = vmatpush.bf16.msra.mxu0 0
      %629 = vmatpush.bf16.msra.mxu0 0
      %630 = vmatpush.bf16.msra.mxu0 0
      %631 = vmatpush.bf16.msra.mxu0 %v619
      %632 = vmatpush.bf16.msra.mxu0 %v618
      %633 = vmatmul.bf16.gmra.mxu0 %v623
      %v634 = vpop.f32.mrf.mxu0
      %v635 = vadd.f32 0.0, %v634
      %v636 = vpop.f32.mrf.mxu0
      %637 = vdwg.mxu0
      %v638 = vadd.f32 %v590, %v635
      %v639 = vld [vmem:[%s304] sm:$0xe]
      %s640 = scalar_lea.vmem %s3, 128
      %v641 = vld [vmem:[%s640] sm:$0xf]
      %v642 = vld [vmem:[%s640 + $0x4] sm:$0xf]
      %v643 = vld [vmem:[%s640 + $0x8] sm:$0xf]
      %v644 = vld [vmem:[%s640 + $0xc] sm:$0xf]
      %v646 = vunpack.c.l.b16 %v639
      %v647 = vpack.c.b16 %v601, %v646
      %v648 = vrot.slane %v647, 1
      %v653 = vunpack.c.l.b16 %v641
      %v654 = vunpack.c.l.b16 %v642
      %v655 = vunpack.c.l.b16 %v643
      %v656 = vunpack.c.l.b16 %v644
      %v657 = vpack.c.b16 %v654, %v653
      %v658 = vpack.c.b16 %v656, %v655
      %v662 = vsel %vm350, %v648, 0
      %664 = vmatpush.bf16.msra.mxu0 0
      %665 = vmatpush.bf16.msra.mxu0 0
      %666 = vmatpush.bf16.msra.mxu0 0
      %667 = vmatpush.bf16.msra.mxu0 0
      %668 = vmatpush.bf16.msra.mxu0 0
      %669 = vmatpush.bf16.msra.mxu0 0
      %670 = vmatpush.bf16.msra.mxu0 %v658
      %671 = vmatpush.bf16.msra.mxu0 %v657
      %672 = vmatmul.bf16.gmra.mxu0 %v662
      %v673 = vpop.f32.mrf.mxu0
      %v674 = vadd.f32 0.0, %v673
      %v675 = vpop.f32.mrf.mxu0
      %676 = vdwg.mxu0
      %v677 = vadd.f32 %v638, %v674
      %v678 = vpack.c.bf16 %v677, %v677
      %vm679 = vcmask 60416
      %680 = vst.msk [vmem:[%s313] sm:$0xf] %vm679, %v678
      %p681 = scmp.lt.s32.totalorder %s19, 1
      %s682 = scalar_select %p681, %s19, 1
      %p683 = scmp.lt.s32.totalorder %s20, 7
      %s684 = scalar_select %p683, %s20, 7
      %s685 = smul.addr %s682, 8
      %s686 = sadd.s32 %s684, %s685
      %s687 = smul.addr %s686, 4
      %s688 = scalar_lea.vmem %s4, %s687
      // Predicated region
      $region37: #{_lambda_.16} parent=35 // pred_check
        %p689 = pneg %p156
      $region38: #{_lambda_.16} parent=35 // pred_check_branch
        %691 = sbr.rel (%p689) target = $region40
      $region39: #{_lambda_.16} parent=35 // pred_region
        _
      $region40: #{_lambda_.16} parent=35 // pred_fallthru
        _
    $region36: #{_lambda_.16} parent=5 // pred_fallthru
      _
    %p692 = scmp.le.s32.totalorder 2, %s10
    // Predicated region
    $region41: #{_lambda_.16} parent=5 // pred_check
      %p693 = pneg %p692
    $region42: #{_lambda_.16} parent=5 // pred_check_branch
      %695 = sbr.rel (%p693) target = $region44
    $region43: #{_lambda_.16} parent=5 // pred_region
      %s696 = ssub.s32 %s10, 2
      // Predicated region
      $region45: #{_lambda_.16} parent=43 // pred_check
        %p697 = pneg %p162
      $region46: #{_lambda_.16} parent=43 // pred_check_branch
        %699 = sbr.rel (%p697) target = $region48
      $region47: #{_lambda_.16} parent=43 // pred_region
        %p700 = scmp.lt.s32.totalorder %s21, 1
        %s701 = scalar_select %p700, %s21, 1
        %p702 = scmp.lt.s32.totalorder %s22, 7
        %s703 = scalar_select %p702, %s22, 7
        %s704 = smul.addr %s701, 8
        %s705 = sadd.s32 %s703, %s704
        %s706 = smul.addr %s705, 4
        %s707 = scalar_lea.vmem %s4, %s706
      $region48: #{_lambda_.16} parent=43 // pred_fallthru
        _
    $region44: #{_lambda_.16} parent=5 // pred_fallthru
      _
  $region6: #{_lambda_.16} parent=0 // loop_footer
    %s14 = sadd.s32 1, %s10
  $region7: #{_lambda_.16} parent=0 // loop_footer_branch
    %9 = sbr.rel target = $region3
  $region8: #{_lambda_.16} parent=0 // loop_exit
    _

// kernel: _lambda_.14
$region0: #{_lambda_.14}
  #allocation0 [shape = 'u32[]', space=smem, size = 0x4, offset = 0x4, fixed_abs, tag = 'smem constant byte address 0x4 - core index']
  #allocation1 [shape = 'u32[72,128]{1,0:T(1,128)}', space=vmem, size = 0x9000, scoped, tag = 'internal scratch']
  %s0 = inlined_call_operand.vmem [shape: bf16[128,16], index: 0, kind: input, shape index: {}]
  %s1 = inlined_call_operand.vmem [shape: bf16[128,16], index: 1, kind: input, shape index: {}]
  %s2 = inlined_call_operand.vmem [shape: bf16[128,16], index: 2, kind: input, shape index: {}]
  %s3 = inlined_call_operand.vmem [shape: bf16[128,16], index: 3, kind: input, shape index: {}]
  %s4 = inlined_call_operand.vmem [shape: bf16[128,16], index: 4, kind: input, shape index: {}]
  %s5 = inlined_call_operand.vmem [shape: bf16[128,16], index: 5, kind: input, shape index: {}]
  %s6 = inlined_call_operand.vmem [shape: bf16[128,16], index: 6, kind: input, shape index: {}]
  %s7 = inlined_call_operand.vmem [shape: bf16[128,16], index: 7, kind: input, shape index: {}]
  %s8 = inlined_call_operand.vmem [shape: bf16[128,16], index: 8, kind: input, shape index: {}]
  %s9 = inlined_call_operand.vmem [shape: bf16[128,16], index: 9, kind: output, shape index: {}]
  %s10 = sld [smem:[#allocation0]]
  $region46: #{_lambda_.14} parent=0
    _
  %s12 = ssub.s32 1, %s10
  %s13 = scalar_select 0, %s12, %s10
  // Predicated region
  $region2: #{_lambda_.14} parent=0 // pred_check
    _
  $region3: #{_lambda_.14} parent=0 // pred_check_branch
    %15 = sbr.rel (0) target = $region5
  $region4: #{_lambda_.14} parent=0 // pred_region
    _
  $region5: #{_lambda_.14} parent=0 // pred_fallthru
    _
  // Predicated region
  $region6: #{_lambda_.14} parent=0 // pred_check
    _
  $region7: #{_lambda_.14} parent=0 // pred_check_branch
    %17 = sbr.rel (0) target = $region9
  $region8: #{_lambda_.14} parent=0 // pred_region
    _
  $region9: #{_lambda_.14} parent=0 // pred_fallthru
    _
  // Predicated region
  $region10: #{_lambda_.14} parent=0 // pred_check
    _
  $region11: #{_lambda_.14} parent=0 // pred_check_branch
    %19 = sbr.rel (0) target = $region13
  $region12: #{_lambda_.14} parent=0 // pred_region
    _
  $region13: #{_lambda_.14} parent=0 // pred_fallthru
    _
  // Predicated region
  $region14: #{_lambda_.14} parent=0 // pred_check
    _
  $region15: #{_lambda_.14} parent=0 // pred_check_branch
    %21 = sbr.rel (0) target = $region17
  $region16: #{_lambda_.14} parent=0 // pred_region
    _
  $region17: #{_lambda_.14} parent=0 // pred_fallthru
    _
  // Predicated region
  $region18: #{_lambda_.14} parent=0 // pred_check
    _
  $region19: #{_lambda_.14} parent=0 // pred_check_branch
    %23 = sbr.rel (0) target = $region21
  $region20: #{_lambda_.14} parent=0 // pred_region
    _
  $region21: #{_lambda_.14} parent=0 // pred_fallthru
    _
  // Predicated region
  $region22: #{_lambda_.14} parent=0 // pred_check
    _
  $region23: #{_lambda_.14} parent=0 // pred_check_branch
    %25 = sbr.rel (0) target = $region25
  $region24: #{_lambda_.14} parent=0 // pred_region
    _
  $region25: #{_lambda_.14} parent=0 // pred_fallthru
    _
  // Predicated region
  $region26: #{_lambda_.14} parent=0 // pred_check
    _
  $region27: #{_lambda_.14} parent=0 // pred_check_branch
    %27 = sbr.rel (0) target = $region29
  $region28: #{_lambda_.14} parent=0 // pred_region
    _
  $region29: #{_lambda_.14} parent=0 // pred_fallthru
    _
  // Predicated region
  $region30: #{_lambda_.14} parent=0 // pred_check
    _
  $region31: #{_lambda_.14} parent=0 // pred_check_branch
    %29 = sbr.rel (0) target = $region33
  $region32: #{_lambda_.14} parent=0 // pred_region
    _
  $region33: #{_lambda_.14} parent=0 // pred_fallthru
    _
  // Predicated region
  $region34: #{_lambda_.14} parent=0 // pred_check
    _
  $region35: #{_lambda_.14} parent=0 // pred_check_branch
    %31 = sbr.rel (0) target = $region37
  $region36: #{_lambda_.14} parent=0 // pred_region
    _
  $region37: #{_lambda_.14} parent=0 // pred_fallthru
    _
  %v32 = vld [vmem:[%s0] sm:$0xf]
  %v33 = vld [vmem:[%s0 + $0x4] sm:$0xf]
  %v34 = vld [vmem:[%s0 + $0x8] sm:$0xf]
  %v35 = vld [vmem:[%s0 + $0xc] sm:$0xf]
  %v36 = vld [vmem:[%s0 + $0x10] sm:$0xf]
  %v37 = vld [vmem:[%s0 + $0x14] sm:$0xf]
  %v38 = vld [vmem:[%s0 + $0x18] sm:$0xf]
  %v39 = vld [vmem:[%s0 + $0x1c] sm:$0xf]
  %v40 = vld [vmem:[%s0 + $0x20] sm:$0xf]
  %v41 = vld [vmem:[%s0 + $0x24] sm:$0xf]
  %v42 = vld [vmem:[%s0 + $0x28] sm:$0xf]
  %v43 = vld [vmem:[%s0 + $0x2c] sm:$0xf]
  %v44 = vld [vmem:[%s0 + $0x30] sm:$0xf]
  %v45 = vld [vmem:[%s0 + $0x34] sm:$0xf]
  %v46 = vld [vmem:[%s0 + $0x38] sm:$0xf]
  %v47 = vld [vmem:[%s0 + $0x3c] sm:$0xf]
  %v48 = vld [vmem:[%s1] sm:$0xf]
  %v49 = vld [vmem:[%s1 + $0x4] sm:$0xf]
  %v50 = vld [vmem:[%s1 + $0x8] sm:$0xf]
  %v51 = vld [vmem:[%s1 + $0xc] sm:$0xf]
  %v52 = vld [vmem:[%s1 + $0x10] sm:$0xf]
  %v53 = vld [vmem:[%s1 + $0x14] sm:$0xf]
  %v54 = vld [vmem:[%s1 + $0x18] sm:$0xf]
  %v55 = vld [vmem:[%s1 + $0x1c] sm:$0xf]
  %v56 = vld [vmem:[%s1 + $0x20] sm:$0xf]
  %v57 = vld [vmem:[%s1 + $0x24] sm:$0xf]
  %v58 = vld [vmem:[%s1 + $0x28] sm:$0xf]
  %v59 = vld [vmem:[%s1 + $0x2c] sm:$0xf]
  %v60 = vld [vmem:[%s1 + $0x30] sm:$0xf]
  %v61 = vld [vmem:[%s1 + $0x34] sm:$0xf]
  %v62 = vld [vmem:[%s1 + $0x38] sm:$0xf]
  %v63 = vld [vmem:[%s1 + $0x3c] sm:$0xf]
  %v64 = vunpack.c.l.bf16 %v32
  %v65 = vunpack.c.l.bf16 %v33
  %v66 = vunpack.c.l.bf16 %v34
  %v67 = vunpack.c.l.bf16 %v35
  %v68 = vunpack.c.l.bf16 %v36
  %v69 = vunpack.c.l.bf16 %v37
  %v70 = vunpack.c.l.bf16 %v38
  %v71 = vunpack.c.l.bf16 %v39
  %v72 = vunpack.c.l.bf16 %v40
  %v73 = vunpack.c.l.bf16 %v41
  %v74 = vunpack.c.l.bf16 %v42
  %v75 = vunpack.c.l.bf16 %v43
  %v76 = vunpack.c.l.bf16 %v44
  %v77 = vunpack.c.l.bf16 %v45
  %v78 = vunpack.c.l.bf16 %v46
  %v79 = vunpack.c.l.bf16 %v47
  %v80 = vunpack.c.l.bf16 %v48
  %v81 = vunpack.c.l.bf16 %v49
  %v82 = vunpack.c.l.bf16 %v50
  %v83 = vunpack.c.l.bf16 %v51
  %v84 = vunpack.c.l.bf16 %v52
  %v85 = vunpack.c.l.bf16 %v53
  %v86 = vunpack.c.l.bf16 %v54
  %v87 = vunpack.c.l.bf16 %v55
  %v88 = vunpack.c.l.bf16 %v56
  %v89 = vunpack.c.l.bf16 %v57
  %v90 = vunpack.c.l.bf16 %v58
  %v91 = vunpack.c.l.bf16 %v59
  %v92 = vunpack.c.l.bf16 %v60
  %v93 = vunpack.c.l.bf16 %v61
  %v94 = vunpack.c.l.bf16 %v62
  %v95 = vunpack.c.l.bf16 %v63
  %v96 = vmax.f32 %v64, %v80
  %v97 = vmax.f32 %v65, %v81
  %v98 = vmax.f32 %v66, %v82
  %v99 = vmax.f32 %v67, %v83
  %v100 = vmax.f32 %v68, %v84
  %v101 = vmax.f32 %v69, %v85
  %v102 = vmax.f32 %v70, %v86
  %v103 = vmax.f32 %v71, %v87
  %v104 = vmax.f32 %v72, %v88
  %v105 = vmax.f32 %v73, %v89
  %v106 = vmax.f32 %v74, %v90
  %v107 = vmax.f32 %v75, %v91
  %v108 = vmax.f32 %v76, %v92
  %v109 = vmax.f32 %v77, %v93
  %v110 = vmax.f32 %v78, %v94
  %v111 = vmax.f32 %v79, %v95
  %v112 = vpack.c.bf16 %v96, %v96
  %v113 = vpack.c.bf16 %v97, %v97
  %v114 = vpack.c.bf16 %v98, %v98
  %v115 = vpack.c.bf16 %v99, %v99
  %v116 = vpack.c.bf16 %v100, %v100
  %v117 = vpack.c.bf16 %v101, %v101
  %v118 = vpack.c.bf16 %v102, %v102
  %v119 = vpack.c.bf16 %v103, %v103
  %v120 = vpack.c.bf16 %v104, %v104
  %v121 = vpack.c.bf16 %v105, %v105
  %v122 = vpack.c.bf16 %v106, %v106
  %v123 = vpack.c.bf16 %v107, %v107
  %v124 = vpack.c.bf16 %v108, %v108
  %v125 = vpack.c.bf16 %v109, %v109
  %v126 = vpack.c.bf16 %v110, %v110
  %v127 = vpack.c.bf16 %v111, %v111
  %v128 = vld [vmem:[%s2] sm:$0xf]
  %v129 = vld [vmem:[%s2 + $0x4] sm:$0xf]
  %v130 = vld [vmem:[%s2 + $0x8] sm:$0xf]
  %v131 = vld [vmem:[%s2 + $0xc] sm:$0xf]
  %v132 = vld [vmem:[%s2 + $0x10] sm:$0xf]
  %v133 = vld [vmem:[%s2 + $0x14] sm:$0xf]
  %v134 = vld [vmem:[%s2 + $0x18] sm:$0xf]
  %v135 = vld [vmem:[%s2 + $0x1c] sm:$0xf]
  %v136 = vld [vmem:[%s2 + $0x20] sm:$0xf]
  %v137 = vld [vmem:[%s2 + $0x24] sm:$0xf]
  %v138 = vld [vmem:[%s2 + $0x28] sm:$0xf]
  %v139 = vld [vmem:[%s2 + $0x2c] sm:$0xf]
  %v140 = vld [vmem:[%s2 + $0x30] sm:$0xf]
  %v141 = vld [vmem:[%s2 + $0x34] sm:$0xf]
  %v142 = vld [vmem:[%s2 + $0x38] sm:$0xf]
  %v143 = vld [vmem:[%s2 + $0x3c] sm:$0xf]
  %v144 = vunpack.c.l.bf16 %v112
  %v145 = vunpack.c.l.bf16 %v113
  %v146 = vunpack.c.l.bf16 %v114
  %v147 = vunpack.c.l.bf16 %v115
  %v148 = vunpack.c.l.bf16 %v116
  %v149 = vunpack.c.l.bf16 %v117
  %v150 = vunpack.c.l.bf16 %v118
  %v151 = vunpack.c.l.bf16 %v119
  %v152 = vunpack.c.l.bf16 %v120
  %v153 = vunpack.c.l.bf16 %v121
  %v154 = vunpack.c.l.bf16 %v122
  %v155 = vunpack.c.l.bf16 %v123
  %v156 = vunpack.c.l.bf16 %v124
  %v157 = vunpack.c.l.bf16 %v125
  %v158 = vunpack.c.l.bf16 %v126
  %v159 = vunpack.c.l.bf16 %v127
  %v160 = vunpack.c.l.bf16 %v128
  %v161 = vunpack.c.l.bf16 %v129
  %v162 = vunpack.c.l.bf16 %v130
  %v163 = vunpack.c.l.bf16 %v131
  %v164 = vunpack.c.l.bf16 %v132
  %v165 = vunpack.c.l.bf16 %v133
  %v166 = vunpack.c.l.bf16 %v134
  %v167 = vunpack.c.l.bf16 %v135
  %v168 = vunpack.c.l.bf16 %v136
  %v169 = vunpack.c.l.bf16 %v137
  %v170 = vunpack.c.l.bf16 %v138
  %v171 = vunpack.c.l.bf16 %v139
  %v172 = vunpack.c.l.bf16 %v140
  %v173 = vunpack.c.l.bf16 %v141
  %v174 = vunpack.c.l.bf16 %v142
  %v175 = vunpack.c.l.bf16 %v143
  %v176 = vmax.f32 %v144, %v160
  %v177 = vmax.f32 %v145, %v161
  %v178 = vmax.f32 %v146, %v162
  %v179 = vmax.f32 %v147, %v163
  %v180 = vmax.f32 %v148, %v164
  %v181 = vmax.f32 %v149, %v165
  %v182 = vmax.f32 %v150, %v166
  %v183 = vmax.f32 %v151, %v167
  %v184 = vmax.f32 %v152, %v168
  %v185 = vmax.f32 %v153, %v169
  %v186 = vmax.f32 %v154, %v170
  %v187 = vmax.f32 %v155, %v171
  %v188 = vmax.f32 %v156, %v172
  %v189 = vmax.f32 %v157, %v173
  %v190 = vmax.f32 %v158, %v174
  %v191 = vmax.f32 %v159, %v175
  %v192 = vpack.c.bf16 %v176, %v176
  %v193 = vpack.c.bf16 %v177, %v177
  %v194 = vpack.c.bf16 %v178, %v178
  %v195 = vpack.c.bf16 %v179, %v179
  %v196 = vpack.c.bf16 %v180, %v180
  %v197 = vpack.c.bf16 %v181, %v181
  %v198 = vpack.c.bf16 %v182, %v182
  %v199 = vpack.c.bf16 %v183, %v183
  %v200 = vpack.c.bf16 %v184, %v184
  %v201 = vpack.c.bf16 %v185, %v185
  %v202 = vpack.c.bf16 %v186, %v186
  %v203 = vpack.c.bf16 %v187, %v187
  %v204 = vpack.c.bf16 %v188, %v188
  %v205 = vpack.c.bf16 %v189, %v189
  %v206 = vpack.c.bf16 %v190, %v190
  %v207 = vpack.c.bf16 %v191, %v191
  %v208 = vld [vmem:[%s3] sm:$0xf]
  %v209 = vld [vmem:[%s3 + $0x4] sm:$0xf]
  %v210 = vld [vmem:[%s3 + $0x8] sm:$0xf]
  %v211 = vld [vmem:[%s3 + $0xc] sm:$0xf]
  %v212 = vld [vmem:[%s3 + $0x10] sm:$0xf]
  %v213 = vld [vmem:[%s3 + $0x14] sm:$0xf]
  %v214 = vld [vmem:[%s3 + $0x18] sm:$0xf]
  %v215 = vld [vmem:[%s3 + $0x1c] sm:$0xf]
  %v216 = vld [vmem:[%s3 + $0x20] sm:$0xf]
  %v217 = vld [vmem:[%s3 + $0x24] sm:$0xf]
  %v218 = vld [vmem:[%s3 + $0x28] sm:$0xf]
  %v219 = vld [vmem:[%s3 + $0x2c] sm:$0xf]
  %v220 = vld [vmem:[%s3 + $0x30] sm:$0xf]
  %v221 = vld [vmem:[%s3 + $0x34] sm:$0xf]
  %v222 = vld [vmem:[%s3 + $0x38] sm:$0xf]
  %v223 = vld [vmem:[%s3 + $0x3c] sm:$0xf]
  %v224 = vunpack.c.l.bf16 %v192
  %v225 = vunpack.c.l.bf16 %v193
  %v226 = vunpack.c.l.bf16 %v194
  %v227 = vunpack.c.l.bf16 %v195
  %v228 = vunpack.c.l.bf16 %v196
  %v229 = vunpack.c.l.bf16 %v197
  %v230 = vunpack.c.l.bf16 %v198
  %v231 = vunpack.c.l.bf16 %v199
  %v232 = vunpack.c.l.bf16 %v200
  %v233 = vunpack.c.l.bf16 %v201
  %v234 = vunpack.c.l.bf16 %v202
  %v235 = vunpack.c.l.bf16 %v203
  %v236 = vunpack.c.l.bf16 %v204
  %v237 = vunpack.c.l.bf16 %v205
  %v238 = vunpack.c.l.bf16 %v206
  %v239 = vunpack.c.l.bf16 %v207
  %v240 = vunpack.c.l.bf16 %v208
  %v241 = vunpack.c.l.bf16 %v209
  %v242 = vunpack.c.l.bf16 %v210
  %v243 = vunpack.c.l.bf16 %v211
  %v244 = vunpack.c.l.bf16 %v212
  %v245 = vunpack.c.l.bf16 %v213
  %v246 = vunpack.c.l.bf16 %v214
  %v247 = vunpack.c.l.bf16 %v215
  %v248 = vunpack.c.l.bf16 %v216
  %v249 = vunpack.c.l.bf16 %v217
  %v250 = vunpack.c.l.bf16 %v218
  %v251 = vunpack.c.l.bf16 %v219
  %v252 = vunpack.c.l.bf16 %v220
  %v253 = vunpack.c.l.bf16 %v221
  %v254 = vunpack.c.l.bf16 %v222
  %v255 = vunpack.c.l.bf16 %v223
  %v256 = vmax.f32 %v224, %v240
  %v257 = vmax.f32 %v225, %v241
  %v258 = vmax.f32 %v226, %v242
  %v259 = vmax.f32 %v227, %v243
  %v260 = vmax.f32 %v228, %v244
  %v261 = vmax.f32 %v229, %v245
  %v262 = vmax.f32 %v230, %v246
  %v263 = vmax.f32 %v231, %v247
  %v264 = vmax.f32 %v232, %v248
  %v265 = vmax.f32 %v233, %v249
  %v266 = vmax.f32 %v234, %v250
  %v267 = vmax.f32 %v235, %v251
  %v268 = vmax.f32 %v236, %v252
  %v269 = vmax.f32 %v237, %v253
  %v270 = vmax.f32 %v238, %v254
  %v271 = vmax.f32 %v239, %v255
  %v272 = vpack.c.bf16 %v256, %v256
  %v273 = vpack.c.bf16 %v257, %v257
  %v274 = vpack.c.bf16 %v258, %v258
  %v275 = vpack.c.bf16 %v259, %v259
  %v276 = vpack.c.bf16 %v260, %v260
  %v277 = vpack.c.bf16 %v261, %v261
  %v278 = vpack.c.bf16 %v262, %v262
  %v279 = vpack.c.bf16 %v263, %v263
  %v280 = vpack.c.bf16 %v264, %v264
  %v281 = vpack.c.bf16 %v265, %v265
  %v282 = vpack.c.bf16 %v266, %v266
  %v283 = vpack.c.bf16 %v267, %v267
  %v284 = vpack.c.bf16 %v268, %v268
  %v285 = vpack.c.bf16 %v269, %v269
  %v286 = vpack.c.bf16 %v270, %v270
  %v287 = vpack.c.bf16 %v271, %v271
  %v288 = vld [vmem:[%s4] sm:$0xf]
  %v289 = vld [vmem:[%s4 + $0x4] sm:$0xf]
  %v290 = vld [vmem:[%s4 + $0x8] sm:$0xf]
  %v291 = vld [vmem:[%s4 + $0xc] sm:$0xf]
  %v292 = vld [vmem:[%s4 + $0x10] sm:$0xf]
  %v293 = vld [vmem:[%s4 + $0x14] sm:$0xf]
  %v294 = vld [vmem:[%s4 + $0x18] sm:$0xf]
  %v295 = vld [vmem:[%s4 + $0x1c] sm:$0xf]
  %v296 = vld [vmem:[%s4 + $0x20] sm:$0xf]
  %v297 = vld [vmem:[%s4 + $0x24] sm:$0xf]
  %v298 = vld [vmem:[%s4 + $0x28] sm:$0xf]
  %v299 = vld [vmem:[%s4 + $0x2c] sm:$0xf]
  %v300 = vld [vmem:[%s4 + $0x30] sm:$0xf]
  %v301 = vld [vmem:[%s4 + $0x34] sm:$0xf]
  %v302 = vld [vmem:[%s4 + $0x38] sm:$0xf]
  %v303 = vld [vmem:[%s4 + $0x3c] sm:$0xf]
  %v304 = vunpack.c.l.bf16 %v272
  %v305 = vunpack.c.l.bf16 %v273
  %v306 = vunpack.c.l.bf16 %v274
  %v307 = vunpack.c.l.bf16 %v275
  %v308 = vunpack.c.l.bf16 %v276
  %v309 = vunpack.c.l.bf16 %v277
  %v310 = vunpack.c.l.bf16 %v278
  %v311 = vunpack.c.l.bf16 %v279
  %v312 = vunpack.c.l.bf16 %v280
  %v313 = vunpack.c.l.bf16 %v281
  %v314 = vunpack.c.l.bf16 %v282
  %v315 = vunpack.c.l.bf16 %v283
  %v316 = vunpack.c.l.bf16 %v284
  %v317 = vunpack.c.l.bf16 %v285
  %v318 = vunpack.c.l.bf16 %v286
  %v319 = vunpack.c.l.bf16 %v287
  %v320 = vunpack.c.l.bf16 %v288
  %v321 = vunpack.c.l.bf16 %v289
  %v322 = vunpack.c.l.bf16 %v290
  %v323 = vunpack.c.l.bf16 %v291
  %v324 = vunpack.c.l.bf16 %v292
  %v325 = vunpack.c.l.bf16 %v293
  %v326 = vunpack.c.l.bf16 %v294
  %v327 = vunpack.c.l.bf16 %v295
  %v328 = vunpack.c.l.bf16 %v296
  %v329 = vunpack.c.l.bf16 %v297
  %v330 = vunpack.c.l.bf16 %v298
  %v331 = vunpack.c.l.bf16 %v299
  %v332 = vunpack.c.l.bf16 %v300
  %v333 = vunpack.c.l.bf16 %v301
  %v334 = vunpack.c.l.bf16 %v302
  %v335 = vunpack.c.l.bf16 %v303
  %v336 = vmax.f32 %v304, %v320
  %v337 = vmax.f32 %v305, %v321
  %v338 = vmax.f32 %v306, %v322
  %v339 = vmax.f32 %v307, %v323
  %v340 = vmax.f32 %v308, %v324
  %v341 = vmax.f32 %v309, %v325
  %v342 = vmax.f32 %v310, %v326
  %v343 = vmax.f32 %v311, %v327
  %v344 = vmax.f32 %v312, %v328
  %v345 = vmax.f32 %v313, %v329
  %v346 = vmax.f32 %v314, %v330
  %v347 = vmax.f32 %v315, %v331
  %v348 = vmax.f32 %v316, %v332
  %v349 = vmax.f32 %v317, %v333
  %v350 = vmax.f32 %v318, %v334
  %v351 = vmax.f32 %v319, %v335
  %v352 = vpack.c.bf16 %v336, %v336
  %v353 = vpack.c.bf16 %v337, %v337
  %v354 = vpack.c.bf16 %v338, %v338
  %v355 = vpack.c.bf16 %v339, %v339
  %v356 = vpack.c.bf16 %v340, %v340
  %v357 = vpack.c.bf16 %v341, %v341
  %v358 = vpack.c.bf16 %v342, %v342
  %v359 = vpack.c.bf16 %v343, %v343
  %v360 = vpack.c.bf16 %v344, %v344
  %v361 = vpack.c.bf16 %v345, %v345
  %v362 = vpack.c.bf16 %v346, %v346
  %v363 = vpack.c.bf16 %v347, %v347
  %v364 = vpack.c.bf16 %v348, %v348
  %v365 = vpack.c.bf16 %v349, %v349
  %v366 = vpack.c.bf16 %v350, %v350
  %v367 = vpack.c.bf16 %v351, %v351
  %v368 = vld [vmem:[%s5] sm:$0xf]
  %v369 = vld [vmem:[%s5 + $0x4] sm:$0xf]
  %v370 = vld [vmem:[%s5 + $0x8] sm:$0xf]
  %v371 = vld [vmem:[%s5 + $0xc] sm:$0xf]
  %v372 = vld [vmem:[%s5 + $0x10] sm:$0xf]
  %v373 = vld [vmem:[%s5 + $0x14] sm:$0xf]
  %v374 = vld [vmem:[%s5 + $0x18] sm:$0xf]
  %v375 = vld [vmem:[%s5 + $0x1c] sm:$0xf]
  %v376 = vld [vmem:[%s5 + $0x20] sm:$0xf]
  %v377 = vld [vmem:[%s5 + $0x24] sm:$0xf]
  %v378 = vld [vmem:[%s5 + $0x28] sm:$0xf]
  %v379 = vld [vmem:[%s5 + $0x2c] sm:$0xf]
  %v380 = vld [vmem:[%s5 + $0x30] sm:$0xf]
  %v381 = vld [vmem:[%s5 + $0x34] sm:$0xf]
  %v382 = vld [vmem:[%s5 + $0x38] sm:$0xf]
  %v383 = vld [vmem:[%s5 + $0x3c] sm:$0xf]
  %v384 = vunpack.c.l.bf16 %v352
  %v385 = vunpack.c.l.bf16 %v353
  %v386 = vunpack.c.l.bf16 %v354
  %v387 = vunpack.c.l.bf16 %v355
  %v388 = vunpack.c.l.bf16 %v356
  %v389 = vunpack.c.l.bf16 %v357
  %v390 = vunpack.c.l.bf16 %v358
  %v391 = vunpack.c.l.bf16 %v359
  %v392 = vunpack.c.l.bf16 %v360
  %v393 = vunpack.c.l.bf16 %v361
  %v394 = vunpack.c.l.bf16 %v362
  %v395 = vunpack.c.l.bf16 %v363
  %v396 = vunpack.c.l.bf16 %v364
  %v397 = vunpack.c.l.bf16 %v365
  %v398 = vunpack.c.l.bf16 %v366
  %v399 = vunpack.c.l.bf16 %v367
  %v400 = vunpack.c.l.bf16 %v368
  %v401 = vunpack.c.l.bf16 %v369
  %v402 = vunpack.c.l.bf16 %v370
  %v403 = vunpack.c.l.bf16 %v371
  %v404 = vunpack.c.l.bf16 %v372
  %v405 = vunpack.c.l.bf16 %v373
  %v406 = vunpack.c.l.bf16 %v374
  %v407 = vunpack.c.l.bf16 %v375
  %v408 = vunpack.c.l.bf16 %v376
  %v409 = vunpack.c.l.bf16 %v377
  %v410 = vunpack.c.l.bf16 %v378
  %v411 = vunpack.c.l.bf16 %v379
  %v412 = vunpack.c.l.bf16 %v380
  %v413 = vunpack.c.l.bf16 %v381
  %v414 = vunpack.c.l.bf16 %v382
  %v415 = vunpack.c.l.bf16 %v383
  %v416 = vmax.f32 %v384, %v400
  %v417 = vmax.f32 %v385, %v401
  %v418 = vmax.f32 %v386, %v402
  %v419 = vmax.f32 %v387, %v403
  %v420 = vmax.f32 %v388, %v404
  %v421 = vmax.f32 %v389, %v405
  %v422 = vmax.f32 %v390, %v406
  %v423 = vmax.f32 %v391, %v407
  %v424 = vmax.f32 %v392, %v408
  %v425 = vmax.f32 %v393, %v409
  %v426 = vmax.f32 %v394, %v410
  %v427 = vmax.f32 %v395, %v411
  %v428 = vmax.f32 %v396, %v412
  %v429 = vmax.f32 %v397, %v413
  %v430 = vmax.f32 %v398, %v414
  %v431 = vmax.f32 %v399, %v415
  %v432 = vpack.c.bf16 %v416, %v416
  %v433 = vpack.c.bf16 %v417, %v417
  %v434 = vpack.c.bf16 %v418, %v418
  %v435 = vpack.c.bf16 %v419, %v419
  %v436 = vpack.c.bf16 %v420, %v420
  %v437 = vpack.c.bf16 %v421, %v421
  %v438 = vpack.c.bf16 %v422, %v422
  %v439 = vpack.c.bf16 %v423, %v423
  %v440 = vpack.c.bf16 %v424, %v424
  %v441 = vpack.c.bf16 %v425, %v425
  %v442 = vpack.c.bf16 %v426, %v426
  %v443 = vpack.c.bf16 %v427, %v427
  %v444 = vpack.c.bf16 %v428, %v428
  %v445 = vpack.c.bf16 %v429, %v429
  %v446 = vpack.c.bf16 %v430, %v430
  %v447 = vpack.c.bf16 %v431, %v431
  %v448 = vld [vmem:[%s6] sm:$0xf]
  %v449 = vld [vmem:[%s6 + $0x4] sm:$0xf]
  %v450 = vld [vmem:[%s6 + $0x8] sm:$0xf]
  %v451 = vld [vmem:[%s6 + $0xc] sm:$0xf]
  %v452 = vld [vmem:[%s6 + $0x10] sm:$0xf]
  %v453 = vld [vmem:[%s6 + $0x14] sm:$0xf]
  %v454 = vld [vmem:[%s6 + $0x18] sm:$0xf]
  %v455 = vld [vmem:[%s6 + $0x1c] sm:$0xf]
  %v456 = vld [vmem:[%s6 + $0x20] sm:$0xf]
  %v457 = vld [vmem:[%s6 + $0x24] sm:$0xf]
  %v458 = vld [vmem:[%s6 + $0x28] sm:$0xf]
  %v459 = vld [vmem:[%s6 + $0x2c] sm:$0xf]
  %v460 = vld [vmem:[%s6 + $0x30] sm:$0xf]
  %v461 = vld [vmem:[%s6 + $0x34] sm:$0xf]
  %v462 = vld [vmem:[%s6 + $0x38] sm:$0xf]
  %v463 = vld [vmem:[%s6 + $0x3c] sm:$0xf]
  %v464 = vunpack.c.l.bf16 %v432
  %v465 = vunpack.c.l.bf16 %v433
  %v466 = vunpack.c.l.bf16 %v434
  %v467 = vunpack.c.l.bf16 %v435
  %v468 = vunpack.c.l.bf16 %v436
  %v469 = vunpack.c.l.bf16 %v437
  %v470 = vunpack.c.l.bf16 %v438
  %v471 = vunpack.c.l.bf16 %v439
  %v472 = vunpack.c.l.bf16 %v440
  %v473 = vunpack.c.l.bf16 %v441
  %v474 = vunpack.c.l.bf16 %v442
  %v475 = vunpack.c.l.bf16 %v443
  %v476 = vunpack.c.l.bf16 %v444
  %v477 = vunpack.c.l.bf16 %v445
  %v478 = vunpack.c.l.bf16 %v446
  %v479 = vunpack.c.l.bf16 %v447
  %v480 = vunpack.c.l.bf16 %v448
  %v481 = vunpack.c.l.bf16 %v449
  %v482 = vunpack.c.l.bf16 %v450
  %v483 = vunpack.c.l.bf16 %v451
  %v484 = vunpack.c.l.bf16 %v452
  %v485 = vunpack.c.l.bf16 %v453
  %v486 = vunpack.c.l.bf16 %v454
  %v487 = vunpack.c.l.bf16 %v455
  %v488 = vunpack.c.l.bf16 %v456
  %v489 = vunpack.c.l.bf16 %v457
  %v490 = vunpack.c.l.bf16 %v458
  %v491 = vunpack.c.l.bf16 %v459
  %v492 = vunpack.c.l.bf16 %v460
  %v493 = vunpack.c.l.bf16 %v461
  %v494 = vunpack.c.l.bf16 %v462
  %v495 = vunpack.c.l.bf16 %v463
  %v496 = vmax.f32 %v464, %v480
  %v497 = vmax.f32 %v465, %v481
  %v498 = vmax.f32 %v466, %v482
  %v499 = vmax.f32 %v467, %v483
  %v500 = vmax.f32 %v468, %v484
  %v501 = vmax.f32 %v469, %v485
  %v502 = vmax.f32 %v470, %v486
  %v503 = vmax.f32 %v471, %v487
  %v504 = vmax.f32 %v472, %v488
  %v505 = vmax.f32 %v473, %v489
  %v506 = vmax.f32 %v474, %v490
  %v507 = vmax.f32 %v475, %v491
  %v508 = vmax.f32 %v476, %v492
  %v509 = vmax.f32 %v477, %v493
  %v510 = vmax.f32 %v478, %v494
  %v511 = vmax.f32 %v479, %v495
  %v512 = vpack.c.bf16 %v496, %v496
  %v513 = vpack.c.bf16 %v497, %v497
  %v514 = vpack.c.bf16 %v498, %v498
  %v515 = vpack.c.bf16 %v499, %v499
  %v516 = vpack.c.bf16 %v500, %v500
  %v517 = vpack.c.bf16 %v501, %v501
  %v518 = vpack.c.bf16 %v502, %v502
  %v519 = vpack.c.bf16 %v503, %v503
  %v520 = vpack.c.bf16 %v504, %v504
  %v521 = vpack.c.bf16 %v505, %v505
  %v522 = vpack.c.bf16 %v506, %v506
  %v523 = vpack.c.bf16 %v507, %v507
  %v524 = vpack.c.bf16 %v508, %v508
  %v525 = vpack.c.bf16 %v509, %v509
  %v526 = vpack.c.bf16 %v510, %v510
  %v527 = vpack.c.bf16 %v511, %v511
  %v528 = vld [vmem:[%s7] sm:$0xf]
  %v529 = vld [vmem:[%s7 + $0x4] sm:$0xf]
  %v530 = vld [vmem:[%s7 + $0x8] sm:$0xf]
  %v531 = vld [vmem:[%s7 + $0xc] sm:$0xf]
  %v532 = vld [vmem:[%s7 + $0x10] sm:$0xf]
  %v533 = vld [vmem:[%s7 + $0x14] sm:$0xf]
  %v534 = vld [vmem:[%s7 + $0x18] sm:$0xf]
  %v535 = vld [vmem:[%s7 + $0x1c] sm:$0xf]
  %v536 = vld [vmem:[%s7 + $0x20] sm:$0xf]
  %v537 = vld [vmem:[%s7 + $0x24] sm:$0xf]
  %v538 = vld [vmem:[%s7 + $0x28] sm:$0xf]
  %v539 = vld [vmem:[%s7 + $0x2c] sm:$0xf]
  %v540 = vld [vmem:[%s7 + $0x30] sm:$0xf]
  %v541 = vld [vmem:[%s7 + $0x34] sm:$0xf]
  %v542 = vld [vmem:[%s7 + $0x38] sm:$0xf]
  %v543 = vld [vmem:[%s7 + $0x3c] sm:$0xf]
  %v544 = vunpack.c.l.bf16 %v512
  %v545 = vunpack.c.l.bf16 %v513
  %v546 = vunpack.c.l.bf16 %v514
  %v547 = vunpack.c.l.bf16 %v515
  %v548 = vunpack.c.l.bf16 %v516
  %v549 = vunpack.c.l.bf16 %v517
  %v550 = vunpack.c.l.bf16 %v518
  %v551 = vunpack.c.l.bf16 %v519
  %v552 = vunpack.c.l.bf16 %v520
  %v553 = vunpack.c.l.bf16 %v521
  %v554 = vunpack.c.l.bf16 %v522
  %v555 = vunpack.c.l.bf16 %v523
  %v556 = vunpack.c.l.bf16 %v524
  %v557 = vunpack.c.l.bf16 %v525
  %v558 = vunpack.c.l.bf16 %v526
  %v559 = vunpack.c.l.bf16 %v527
  %v560 = vunpack.c.l.bf16 %v528
  %v561 = vunpack.c.l.bf16 %v529
  %v562 = vunpack.c.l.bf16 %v530
  %v563 = vunpack.c.l.bf16 %v531
  %v564 = vunpack.c.l.bf16 %v532
  %v565 = vunpack.c.l.bf16 %v533
  %v566 = vunpack.c.l.bf16 %v534
  %v567 = vunpack.c.l.bf16 %v535
  %v568 = vunpack.c.l.bf16 %v536
  %v569 = vunpack.c.l.bf16 %v537
  %v570 = vunpack.c.l.bf16 %v538
  %v571 = vunpack.c.l.bf16 %v539
  %v572 = vunpack.c.l.bf16 %v540
  %v573 = vunpack.c.l.bf16 %v541
  %v574 = vunpack.c.l.bf16 %v542
  %v575 = vunpack.c.l.bf16 %v543
  %v576 = vmax.f32 %v544, %v560
  %v577 = vmax.f32 %v545, %v561
  %v578 = vmax.f32 %v546, %v562
  %v579 = vmax.f32 %v547, %v563
  %v580 = vmax.f32 %v548, %v564
  %v581 = vmax.f32 %v549, %v565
  %v582 = vmax.f32 %v550, %v566
  %v583 = vmax.f32 %v551, %v567
  %v584 = vmax.f32 %v552, %v568
  %v585 = vmax.f32 %v553, %v569
  %v586 = vmax.f32 %v554, %v570
  %v587 = vmax.f32 %v555, %v571
  %v588 = vmax.f32 %v556, %v572
  %v589 = vmax.f32 %v557, %v573
  %v590 = vmax.f32 %v558, %v574
  %v591 = vmax.f32 %v559, %v575
  %v592 = vpack.c.bf16 %v576, %v576
  %v593 = vpack.c.bf16 %v577, %v577
  %v594 = vpack.c.bf16 %v578, %v578
  %v595 = vpack.c.bf16 %v579, %v579
  %v596 = vpack.c.bf16 %v580, %v580
  %v597 = vpack.c.bf16 %v581, %v581
  %v598 = vpack.c.bf16 %v582, %v582
  %v599 = vpack.c.bf16 %v583, %v583
  %v600 = vpack.c.bf16 %v584, %v584
  %v601 = vpack.c.bf16 %v585, %v585
  %v602 = vpack.c.bf16 %v586, %v586
  %v603 = vpack.c.bf16 %v587, %v587
  %v604 = vpack.c.bf16 %v588, %v588
  %v605 = vpack.c.bf16 %v589, %v589
  %v606 = vpack.c.bf16 %v590, %v590
  %v607 = vpack.c.bf16 %v591, %v591
  %v608 = vld [vmem:[%s8] sm:$0xf]
  %v609 = vld [vmem:[%s8 + $0x4] sm:$0xf]
  %v610 = vld [vmem:[%s8 + $0x8] sm:$0xf]
  %v611 = vld [vmem:[%s8 + $0xc] sm:$0xf]
  %v612 = vld [vmem:[%s8 + $0x10] sm:$0xf]
  %v613 = vld [vmem:[%s8 + $0x14] sm:$0xf]
  %v614 = vld [vmem:[%s8 + $0x18] sm:$0xf]
  %v615 = vld [vmem:[%s8 + $0x1c] sm:$0xf]
  %v616 = vld [vmem:[%s8 + $0x20] sm:$0xf]
  %v617 = vld [vmem:[%s8 + $0x24] sm:$0xf]
  %v618 = vld [vmem:[%s8 + $0x28] sm:$0xf]
  %v619 = vld [vmem:[%s8 + $0x2c] sm:$0xf]
  %v620 = vld [vmem:[%s8 + $0x30] sm:$0xf]
  %v621 = vld [vmem:[%s8 + $0x34] sm:$0xf]
  %v622 = vld [vmem:[%s8 + $0x38] sm:$0xf]
  %v623 = vld [vmem:[%s8 + $0x3c] sm:$0xf]
  %v624 = vunpack.c.l.bf16 %v592
  %v625 = vunpack.c.l.bf16 %v593
  %v626 = vunpack.c.l.bf16 %v594
  %v627 = vunpack.c.l.bf16 %v595
  %v628 = vunpack.c.l.bf16 %v596
  %v629 = vunpack.c.l.bf16 %v597
  %v630 = vunpack.c.l.bf16 %v598
  %v631 = vunpack.c.l.bf16 %v599
  %v632 = vunpack.c.l.bf16 %v600
  %v633 = vunpack.c.l.bf16 %v601
  %v634 = vunpack.c.l.bf16 %v602
  %v635 = vunpack.c.l.bf16 %v603
  %v636 = vunpack.c.l.bf16 %v604
  %v637 = vunpack.c.l.bf16 %v605
  %v638 = vunpack.c.l.bf16 %v606
  %v639 = vunpack.c.l.bf16 %v607
  %v640 = vunpack.c.l.bf16 %v608
  %v641 = vunpack.c.l.bf16 %v609
  %v642 = vunpack.c.l.bf16 %v610
  %v643 = vunpack.c.l.bf16 %v611
  %v644 = vunpack.c.l.bf16 %v612
  %v645 = vunpack.c.l.bf16 %v613
  %v646 = vunpack.c.l.bf16 %v614
  %v647 = vunpack.c.l.bf16 %v615
  %v648 = vunpack.c.l.bf16 %v616
  %v649 = vunpack.c.l.bf16 %v617
  %v650 = vunpack.c.l.bf16 %v618
  %v651 = vunpack.c.l.bf16 %v619
  %v652 = vunpack.c.l.bf16 %v620
  %v653 = vunpack.c.l.bf16 %v621
  %v654 = vunpack.c.l.bf16 %v622
  %v655 = vunpack.c.l.bf16 %v623
  %v656 = vmax.f32 %v624, %v640
  %v657 = vmax.f32 %v625, %v641
  %v658 = vmax.f32 %v626, %v642
  %v659 = vmax.f32 %v627, %v643
  %v660 = vmax.f32 %v628, %v644
  %v661 = vmax.f32 %v629, %v645
  %v662 = vmax.f32 %v630, %v646
  %v663 = vmax.f32 %v631, %v647
  %v664 = vmax.f32 %v632, %v648
  %v665 = vmax.f32 %v633, %v649
  %v666 = vmax.f32 %v634, %v650
  %v667 = vmax.f32 %v635, %v651
  %v668 = vmax.f32 %v636, %v652
  %v669 = vmax.f32 %v637, %v653
  %v670 = vmax.f32 %v638, %v654
  %v671 = vmax.f32 %v639, %v655
  %v672 = vpack.c.bf16 %v656, %v656
  %v673 = vpack.c.bf16 %v657, %v657
  %v674 = vpack.c.bf16 %v658, %v658
  %v675 = vpack.c.bf16 %v659, %v659
  %v676 = vpack.c.bf16 %v660, %v660
  %v677 = vpack.c.bf16 %v661, %v661
  %v678 = vpack.c.bf16 %v662, %v662
  %v679 = vpack.c.bf16 %v663, %v663
  %v680 = vpack.c.bf16 %v664, %v664
  %v681 = vpack.c.bf16 %v665, %v665
  %v682 = vpack.c.bf16 %v666, %v666
  %v683 = vpack.c.bf16 %v667, %v667
  %v684 = vpack.c.bf16 %v668, %v668
  %v685 = vpack.c.bf16 %v669, %v669
  %v686 = vpack.c.bf16 %v670, %v670
  %v687 = vpack.c.bf16 %v671, %v671
  %vm688 = vcmask 125952
  %689 = vst.msk [vmem:[%s9] sm:$0xf] %vm688, %v672
  %690 = vst.msk [vmem:[%s9 + $0x4] sm:$0xf] %vm688, %v673
  %691 = vst.msk [vmem:[%s9 + $0x8] sm:$0xf] %vm688, %v674
  %692 = vst.msk [vmem:[%s9 + $0xc] sm:$0xf] %vm688, %v675
  %693 = vst.msk [vmem:[%s9 + $0x10] sm:$0xf] %vm688, %v676
  %694 = vst.msk [vmem:[%s9 + $0x14] sm:$0xf] %vm688, %v677
  %695 = vst.msk [vmem:[%s9 + $0x18] sm:$0xf] %vm688, %v678
  %696 = vst.msk [vmem:[%s9 + $0x1c] sm:$0xf] %vm688, %v679
  %697 = vst.msk [vmem:[%s9 + $0x20] sm:$0xf] %vm688, %v680
  %698 = vst.msk [vmem:[%s9 + $0x24] sm:$0xf] %vm688, %v681
  %699 = vst.msk [vmem:[%s9 + $0x28] sm:$0xf] %vm688, %v682
  %700 = vst.msk [vmem:[%s9 + $0x2c] sm:$0xf] %vm688, %v683
  %701 = vst.msk [vmem:[%s9 + $0x30] sm:$0xf] %vm688, %v684
  %702 = vst.msk [vmem:[%s9 + $0x34] sm:$0xf] %vm688, %v685
  %703 = vst.msk [vmem:[%s9 + $0x38] sm:$0xf] %vm688, %v686
  %704 = vst.msk [vmem:[%s9 + $0x3c] sm:$0xf] %vm688, %v687
  // Predicated region
  $region38: #{_lambda_.14} parent=0 // pred_check
    _
  $region39: #{_lambda_.14} parent=0 // pred_check_branch
    %706 = sbr.rel (0) target = $region41
  $region40: #{_lambda_.14} parent=0 // pred_region
    _
  $region41: #{_lambda_.14} parent=0 // pred_fallthru
    _
  // Predicated region
  $region42: #{_lambda_.14} parent=0 // pred_check
    _
  $region43: #{_lambda_.14} parent=0 // pred_check_branch
    %708 = sbr.rel (0) target = $region45
  $region44: #{_lambda_.14} parent=0 // pred_region
    _
  $region45: #{_lambda_.14} parent=0 // pred_fallthru
    _

// kernel: _lambda_.13
$region0: #{_lambda_.13}
  #allocation0 [shape = 'u32[]', space=smem, size = 0x4, offset = 0x4, fixed_abs, tag = 'smem constant byte address 0x4 - core index']
  #allocation1 [shape = 'u32[72,128]{1,0:T(1,128)}', space=vmem, size = 0x9000, scoped, tag = 'internal scratch']
  #allocation2 [shape = 'f32[512,16]{1,0:T(8,128)}', space=vmem, size = 0x40000, scoped, tag = 'scratch operand']
  %s0 = inlined_call_operand.vmem [shape: bf16[512,147], index: 0, kind: input, shape index: {}]
  %s1 = inlined_call_operand.vmem [shape: bf16[147,16], index: 1, kind: input, shape index: {}]
  %s2 = inlined_call_operand.vmem [shape: f32[1,16], index: 2, kind: input, shape index: {}]
  %s3 = inlined_call_operand.vmem [shape: f32[1,16], index: 3, kind: input, shape index: {}]
  %s4 = inlined_call_operand.vmem [shape: bf16[512,16], index: 4, kind: output, shape index: {}]
  %s5 = sld [smem:[#allocation0]]
  $region34: #{_lambda_.13} parent=0
    _
  %s7 = ssub.s32 1, %s5
  %s8 = scalar_select 0, %s7, %s5
  // Predicated region
  $region2: #{_lambda_.13} parent=0 // pred_check
    _
  $region3: #{_lambda_.13} parent=0 // pred_check_branch
    %10 = sbr.rel (0) target = $region5
  $region4: #{_lambda_.13} parent=0 // pred_region
    _
  $region5: #{_lambda_.13} parent=0 // pred_fallthru
    _
  // Predicated region
  $region6: #{_lambda_.13} parent=0 // pred_check
    _
  $region7: #{_lambda_.13} parent=0 // pred_check_branch
    %12 = sbr.rel (0) target = $region9
  $region8: #{_lambda_.13} parent=0 // pred_region
    _
  $region9: #{_lambda_.13} parent=0 // pred_fallthru
    _
  // Predicated region
  $region10: #{_lambda_.13} parent=0 // pred_check
    _
  $region11: #{_lambda_.13} parent=0 // pred_check_branch
    %14 = sbr.rel (0) target = $region13
  $region12: #{_lambda_.13} parent=0 // pred_region
    _
  $region13: #{_lambda_.13} parent=0 // pred_fallthru
    _
  // Predicated region
  $region14: #{_lambda_.13} parent=0 // pred_check
    _
  $region15: #{_lambda_.13} parent=0 // pred_check_branch
    %16 = sbr.rel (0) target = $region17
  $region16: #{_lambda_.13} parent=0 // pred_region
    _
  $region17: #{_lambda_.13} parent=0 // pred_fallthru
    _
  %p18 = scmp.eq.s32.totalorder 0, 0
  // Predicated region
  $region18: #{_lambda_.13} parent=0 // pred_check
    %p19 = pneg %p18
  $region19: #{_lambda_.13} parent=0 // pred_check_branch
    %21 = sbr.rel (%p19) target = $region21
  $region20: #{_lambda_.13} parent=0 // pred_region
    %vm22 = vcmask 130048
    %23 = vst.msk [vmem:[#allocation2] sm:$0xff] %vm22, 0.0
    %24 = vst.msk [vmem:[#allocation2 + $0x8] sm:$0xff] %vm22, 0.0
    %25 = vst.msk [vmem:[#allocation2 + $0x10] sm:$0xff] %vm22, 0.0
    %26 = vst.msk [vmem:[#allocation2 + $0x18] sm:$0xff] %vm22, 0.0
    %27 = vst.msk [vmem:[#allocation2 + $0x20] sm:$0xff] %vm22, 0.0
    %28 = vst.msk [vmem:[#allocation2 + $0x28] sm:$0xff] %vm22, 0.0
    %29 = vst.msk [vmem:[#allocation2 + $0x30] sm:$0xff] %vm22, 0.0
    %30 = vst.msk [vmem:[#allocation2 + $0x38] sm:$0xff] %vm22, 0.0
    %31 = vst.msk [vmem:[#allocation2 + $0x40] sm:$0xff] %vm22, 0.0
    %32 = vst.msk [vmem:[#allocation2 + $0x48] sm:$0xff] %vm22, 0.0
    %33 = vst.msk [vmem:[#allocation2 + $0x50] sm:$0xff] %vm22, 0.0
    %34 = vst.msk [vmem:[#allocation2 + $0x58] sm:$0xff] %vm22, 0.0
    %35 = vst.msk [vmem:[#allocation2 + $0x60] sm:$0xff] %vm22, 0.0
    %36 = vst.msk [vmem:[#allocation2 + $0x68] sm:$0xff] %vm22, 0.0
    %37 = vst.msk [vmem:[#allocation2 + $0x70] sm:$0xff] %vm22, 0.0
    %38 = vst.msk [vmem:[#allocation2 + $0x78] sm:$0xff] %vm22, 0.0
    %39 = vst.msk [vmem:[#allocation2 + $0x80] sm:$0xff] %vm22, 0.0
    %40 = vst.msk [vmem:[#allocation2 + $0x88] sm:$0xff] %vm22, 0.0
    %41 = vst.msk [vmem:[#allocation2 + $0x90] sm:$0xff] %vm22, 0.0
    %42 = vst.msk [vmem:[#allocation2 + $0x98] sm:$0xff] %vm22, 0.0
    %43 = vst.msk [vmem:[#allocation2 + $0xa0] sm:$0xff] %vm22, 0.0
    %44 = vst.msk [vmem:[#allocation2 + $0xa8] sm:$0xff] %vm22, 0.0
    %45 = vst.msk [vmem:[#allocation2 + $0xb0] sm:$0xff] %vm22, 0.0
    %46 = vst.msk [vmem:[#allocation2 + $0xb8] sm:$0xff] %vm22, 0.0
    %47 = vst.msk [vmem:[#allocation2 + $0xc0] sm:$0xff] %vm22, 0.0
    %48 = vst.msk [vmem:[#allocation2 + $0xc8] sm:$0xff] %vm22, 0.0
    %49 = vst.msk [vmem:[#allocation2 + $0xd0] sm:$0xff] %vm22, 0.0
    %50 = vst.msk [vmem:[#allocation2 + $0xd8] sm:$0xff] %vm22, 0.0
    %51 = vst.msk [vmem:[#allocation2 + $0xe0] sm:$0xff] %vm22, 0.0
    %52 = vst.msk [vmem:[#allocation2 + $0xe8] sm:$0xff] %vm22, 0.0
    %53 = vst.msk [vmem:[#allocation2 + $0xf0] sm:$0xff] %vm22, 0.0
    %54 = vst.msk [vmem:[#allocation2 + $0xf8] sm:$0xff] %vm22, 0.0
    %55 = vst.msk [vmem:[#allocation2 + $0x100] sm:$0xff] %vm22, 0.0
    %56 = vst.msk [vmem:[#allocation2 + $0x108] sm:$0xff] %vm22, 0.0
    %57 = vst.msk [vmem:[#allocation2 + $0x110] sm:$0xff] %vm22, 0.0
    %58 = vst.msk [vmem:[#allocation2 + $0x118] sm:$0xff] %vm22, 0.0
    %59 = vst.msk [vmem:[#allocation2 + $0x120] sm:$0xff] %vm22, 0.0
    %60 = vst.msk [vmem:[#allocation2 + $0x128] sm:$0xff] %vm22, 0.0
    %61 = vst.msk [vmem:[#allocation2 + $0x130] sm:$0xff] %vm22, 0.0
    %62 = vst.msk [vmem:[#allocation2 + $0x138] sm:$0xff] %vm22, 0.0
    %63 = vst.msk [vmem:[#allocation2 + $0x140] sm:$0xff] %vm22, 0.0
    %64 = vst.msk [vmem:[#allocation2 + $0x148] sm:$0xff] %vm22, 0.0
    %65 = vst.msk [vmem:[#allocation2 + $0x150] sm:$0xff] %vm22, 0.0
    %66 = vst.msk [vmem:[#allocation2 + $0x158] sm:$0xff] %vm22, 0.0
    %67 = vst.msk [vmem:[#allocation2 + $0x160] sm:$0xff] %vm22, 0.0
    %68 = vst.msk [vmem:[#allocation2 + $0x168] sm:$0xff] %vm22, 0.0
    %69 = vst.msk [vmem:[#allocation2 + $0x170] sm:$0xff] %vm22, 0.0
    %70 = vst.msk [vmem:[#allocation2 + $0x178] sm:$0xff] %vm22, 0.0
    %71 = vst.msk [vmem:[#allocation2 + $0x180] sm:$0xff] %vm22, 0.0
    %72 = vst.msk [vmem:[#allocation2 + $0x188] sm:$0xff] %vm22, 0.0
    %73 = vst.msk [vmem:[#allocation2 + $0x190] sm:$0xff] %vm22, 0.0
    %74 = vst.msk [vmem:[#allocation2 + $0x198] sm:$0xff] %vm22, 0.0
    %75 = vst.msk [vmem:[#allocation2 + $0x1a0] sm:$0xff] %vm22, 0.0
    %76 = vst.msk [vmem:[#allocation2 + $0x1a8] sm:$0xff] %vm22, 0.0
    %77 = vst.msk [vmem:[#allocation2 + $0x1b0] sm:$0xff] %vm22, 0.0
    %78 = vst.msk [vmem:[#allocation2 + $0x1b8] sm:$0xff] %vm22, 0.0
    %79 = vst.msk [vmem:[#allocation2 + $0x1c0] sm:$0xff] %vm22, 0.0
    %80 = vst.msk [vmem:[#allocation2 + $0x1c8] sm:$0xff] %vm22, 0.0
    %81 = vst.msk [vmem:[#allocation2 + $0x1d0] sm:$0xff] %vm22, 0.0
    %82 = vst.msk [vmem:[#allocation2 + $0x1d8] sm:$0xff] %vm22, 0.0
    %83 = vst.msk [vmem:[#allocation2 + $0x1e0] sm:$0xff] %vm22, 0.0
    %84 = vst.msk [vmem:[#allocation2 + $0x1e8] sm:$0xff] %vm22, 0.0
    %85 = vst.msk [vmem:[#allocation2 + $0x1f0] sm:$0xff] %vm22, 0.0
    %86 = vst.msk [vmem:[#allocation2 + $0x1f8] sm:$0xff] %vm22, 0.0
  $region21: #{_lambda_.13} parent=0 // pred_fallthru
    _
  %v87 = vld [vmem:[%s0] sm:$0xff]
  %v88 = vld [vmem:[%s0 + $0x8] sm:$0xff]
  %v89 = vld [vmem:[%s0 + $0x10] sm:$0xff]
  %v90 = vld [vmem:[%s0 + $0x18] sm:$0xff]
  %v91 = vld [vmem:[%s0 + $0x20] sm:$0xff]
  %v92 = vld [vmem:[%s0 + $0x28] sm:$0xff]
  %v93 = vld [vmem:[%s0 + $0x30] sm:$0xff]
  %v94 = vld [vmem:[%s0 + $0x38] sm:$0xff]
  %v95 = vld [vmem:[%s0 + $0x40] sm:$0xff]
  %v96 = vld [vmem:[%s0 + $0x48] sm:$0xff]
  %v97 = vld [vmem:[%s0 + $0x50] sm:$0xff]
  %v98 = vld [vmem:[%s0 + $0x58] sm:$0xff]
  %v99 = vld [vmem:[%s0 + $0x60] sm:$0xff]
  %v100 = vld [vmem:[%s0 + $0x68] sm:$0xff]
  %v101 = vld [vmem:[%s0 + $0x70] sm:$0xff]
  %v102 = vld [vmem:[%s0 + $0x78] sm:$0xff]
  %v103 = vld [vmem:[%s0 + $0x80] sm:$0xff]
  %v104 = vld [vmem:[%s0 + $0x88] sm:$0xff]
  %v105 = vld [vmem:[%s0 + $0x90] sm:$0xff]
  %v106 = vld [vmem:[%s0 + $0x98] sm:$0xff]
  %v107 = vld [vmem:[%s0 + $0xa0] sm:$0xff]
  %v108 = vld [vmem:[%s0 + $0xa8] sm:$0xff]
  %v109 = vld [vmem:[%s0 + $0xb0] sm:$0xff]
  %v110 = vld [vmem:[%s0 + $0xb8] sm:$0xff]
  %v111 = vld [vmem:[%s0 + $0xc0] sm:$0xff]
  %v112 = vld [vmem:[%s0 + $0xc8] sm:$0xff]
  %v113 = vld [vmem:[%s0 + $0xd0] sm:$0xff]
  %v114 = vld [vmem:[%s0 + $0xd8] sm:$0xff]
  %v115 = vld [vmem:[%s0 + $0xe0] sm:$0xff]
  %v116 = vld [vmem:[%s0 + $0xe8] sm:$0xff]
  %v117 = vld [vmem:[%s0 + $0xf0] sm:$0xff]
  %v118 = vld [vmem:[%s0 + $0xf8] sm:$0xff]
  %v119 = vld [vmem:[%s0 + $0x100] sm:$0xff]
  %v120 = vld [vmem:[%s0 + $0x108] sm:$0xff]
  %v121 = vld [vmem:[%s0 + $0x110] sm:$0xff]
  %v122 = vld [vmem:[%s0 + $0x118] sm:$0xff]
  %v123 = vld [vmem:[%s0 + $0x120] sm:$0xff]
  %v124 = vld [vmem:[%s0 + $0x128] sm:$0xff]
  %v125 = vld [vmem:[%s0 + $0x130] sm:$0xff]
  %v126 = vld [vmem:[%s0 + $0x138] sm:$0xff]
  %v127 = vld [vmem:[%s0 + $0x140] sm:$0xff]
  %v128 = vld [vmem:[%s0 + $0x148] sm:$0xff]
  %v129 = vld [vmem:[%s0 + $0x150] sm:$0xff]
  %v130 = vld [vmem:[%s0 + $0x158] sm:$0xff]
  %v131 = vld [vmem:[%s0 + $0x160] sm:$0xff]
  %v132 = vld [vmem:[%s0 + $0x168] sm:$0xff]
  %v133 = vld [vmem:[%s0 + $0x170] sm:$0xff]
  %v134 = vld [vmem:[%s0 + $0x178] sm:$0xff]
  %v135 = vld [vmem:[%s0 + $0x180] sm:$0xff]
  %v136 = vld [vmem:[%s0 + $0x188] sm:$0xff]
  %v137 = vld [vmem:[%s0 + $0x190] sm:$0xff]
  %v138 = vld [vmem:[%s0 + $0x198] sm:$0xff]
  %v139 = vld [vmem:[%s0 + $0x1a0] sm:$0xff]
  %v140 = vld [vmem:[%s0 + $0x1a8] sm:$0xff]
  %v141 = vld [vmem:[%s0 + $0x1b0] sm:$0xff]
  %v142 = vld [vmem:[%s0 + $0x1b8] sm:$0xff]
  %v143 = vld [vmem:[%s0 + $0x1c0] sm:$0xff]
  %v144 = vld [vmem:[%s0 + $0x1c8] sm:$0xff]
  %v145 = vld [vmem:[%s0 + $0x1d0] sm:$0xff]
  %v146 = vld [vmem:[%s0 + $0x1d8] sm:$0xff]
  %v147 = vld [vmem:[%s0 + $0x1e0] sm:$0xff]
  %v148 = vld [vmem:[%s0 + $0x1e8] sm:$0xff]
  %v149 = vld [vmem:[%s0 + $0x1f0] sm:$0xff]
  %v150 = vld [vmem:[%s0 + $0x1f8] sm:$0xff]
  %v151 = vld [vmem:[#allocation2] sm:$0xff]
  %v152 = vld [vmem:[#allocation2 + $0x8] sm:$0xff]
  %v153 = vld [vmem:[#allocation2 + $0x10] sm:$0xff]
  %v154 = vld [vmem:[#allocation2 + $0x18] sm:$0xff]
  %v155 = vld [vmem:[#allocation2 + $0x20] sm:$0xff]
  %v156 = vld [vmem:[#allocation2 + $0x28] sm:$0xff]
  %v157 = vld [vmem:[#allocation2 + $0x30] sm:$0xff]
  %v158 = vld [vmem:[#allocation2 + $0x38] sm:$0xff]
  %v159 = vld [vmem:[#allocation2 + $0x40] sm:$0xff]
  %v160 = vld [vmem:[#allocation2 + $0x48] sm:$0xff]
  %v161 = vld [vmem:[#allocation2 + $0x50] sm:$0xff]
  %v162 = vld [vmem:[#allocation2 + $0x58] sm:$0xff]
  %v163 = vld [vmem:[#allocation2 + $0x60] sm:$0xff]
  %v164 = vld [vmem:[#allocation2 + $0x68] sm:$0xff]
  %v165 = vld [vmem:[#allocation2 + $0x70] sm:$0xff]
  %v166 = vld [vmem:[#allocation2 + $0x78] sm:$0xff]
  %v167 = vld [vmem:[#allocation2 + $0x80] sm:$0xff]
  %v168 = vld [vmem:[#allocation2 + $0x88] sm:$0xff]
  %v169 = vld [vmem:[#allocation2 + $0x90] sm:$0xff]
  %v170 = vld [vmem:[#allocation2 + $0x98] sm:$0xff]
  %v171 = vld [vmem:[#allocation2 + $0xa0] sm:$0xff]
  %v172 = vld [vmem:[#allocation2 + $0xa8] sm:$0xff]
  %v173 = vld [vmem:[#allocation2 + $0xb0] sm:$0xff]
  %v174 = vld [vmem:[#allocation2 + $0xb8] sm:$0xff]
  %v175 = vld [vmem:[#allocation2 + $0xc0] sm:$0xff]
  %v176 = vld [vmem:[#allocation2 + $0xc8] sm:$0xff]
  %v177 = vld [vmem:[#allocation2 + $0xd0] sm:$0xff]
  %v178 = vld [vmem:[#allocation2 + $0xd8] sm:$0xff]
  %v179 = vld [vmem:[#allocation2 + $0xe0] sm:$0xff]
  %v180 = vld [vmem:[#allocation2 + $0xe8] sm:$0xff]
  %v181 = vld [vmem:[#allocation2 + $0xf0] sm:$0xff]
  %v182 = vld [vmem:[#allocation2 + $0xf8] sm:$0xff]
  %v183 = vld [vmem:[#allocation2 + $0x100] sm:$0xff]
  %v184 = vld [vmem:[#allocation2 + $0x108] sm:$0xff]
  %v185 = vld [vmem:[#allocation2 + $0x110] sm:$0xff]
  %v186 = vld [vmem:[#allocation2 + $0x118] sm:$0xff]
  %v187 = vld [vmem:[#allocation2 + $0x120] sm:$0xff]
  %v188 = vld [vmem:[#allocation2 + $0x128] sm:$0xff]
  %v189 = vld [vmem:[#allocation2 + $0x130] sm:$0xff]
  %v190 = vld [vmem:[#allocation2 + $0x138] sm:$0xff]
  %v191 = vld [vmem:[#allocation2 + $0x140] sm:$0xff]
  %v192 = vld [vmem:[#allocation2 + $0x148] sm:$0xff]
  %v193 = vld [vmem:[#allocation2 + $0x150] sm:$0xff]
  %v194 = vld [vmem:[#allocation2 + $0x158] sm:$0xff]
  %v195 = vld [vmem:[#allocation2 + $0x160] sm:$0xff]
  %v196 = vld [vmem:[#allocation2 + $0x168] sm:$0xff]
  %v197 = vld [vmem:[#allocation2 + $0x170] sm:$0xff]
  %v198 = vld [vmem:[#allocation2 + $0x178] sm:$0xff]
  %v199 = vld [vmem:[#allocation2 + $0x180] sm:$0xff]
  %v200 = vld [vmem:[#allocation2 + $0x188] sm:$0xff]
  %v201 = vld [vmem:[#allocation2 + $0x190] sm:$0xff]
  %v202 = vld [vmem:[#allocation2 + $0x198] sm:$0xff]
  %v203 = vld [vmem:[#allocation2 + $0x1a0] sm:$0xff]
  %v204 = vld [vmem:[#allocation2 + $0x1a8] sm:$0xff]
  %v205 = vld [vmem:[#allocation2 + $0x1b0] sm:$0xff]
  %v206 = vld [vmem:[#allocation2 + $0x1b8] sm:$0xff]
  %v207 = vld [vmem:[#allocation2 + $0x1c0] sm:$0xff]
  %v208 = vld [vmem:[#allocation2 + $0x1c8] sm:$0xff]
  %v209 = vld [vmem:[#allocation2 + $0x1d0] sm:$0xff]
  %v210 = vld [vmem:[#allocation2 + $0x1d8] sm:$0xff]
  %v211 = vld [vmem:[#allocation2 + $0x1e0] sm:$0xff]
  %v212 = vld [vmem:[#allocation2 + $0x1e8] sm:$0xff]
  %v213 = vld [vmem:[#allocation2 + $0x1f0] sm:$0xff]
  %v214 = vld [vmem:[#allocation2 + $0x1f8] sm:$0xff]
  %v215 = vld [vmem:[%s1] sm:$0xf]
  %v216 = vld [vmem:[%s1 + $0x4] sm:$0xf]
  %v217 = vld [vmem:[%s1 + $0x8] sm:$0xf]
  %v218 = vld [vmem:[%s1 + $0xc] sm:$0xf]
  %v219 = vld [vmem:[%s1 + $0x10] sm:$0xf]
  %v220 = vld [vmem:[%s1 + $0x14] sm:$0xf]
  %v221 = vld [vmem:[%s1 + $0x18] sm:$0xf]
  %v222 = vld [vmem:[%s1 + $0x1c] sm:$0xf]
  %v223 = vld [vmem:[%s1 + $0x20] sm:$0xf]
  %v224 = vld [vmem:[%s1 + $0x24] sm:$0xf]
  %v225 = vld [vmem:[%s1 + $0x28] sm:$0xf]
  %v226 = vld [vmem:[%s1 + $0x2c] sm:$0xf]
  %v227 = vld [vmem:[%s1 + $0x30] sm:$0xf]
  %v228 = vld [vmem:[%s1 + $0x34] sm:$0xf]
  %v229 = vld [vmem:[%s1 + $0x38] sm:$0xf]
  %v230 = vld [vmem:[%s1 + $0x3c] sm:$0xf]
  %v231 = vld [vmem:[%s1 + $0x40] sm:$0xf]
  %v232 = vld [vmem:[%s1 + $0x44] sm:$0xf]
  %v233 = vld [vmem:[%s1 + $0x48] sm:$0x3]
  %v298 = vunpack.c.l.b16 %v87
  %v299 = vunpack.c.h.b16 %v87
  %v300 = vunpack.c.l.b16 %v88
  %v301 = vunpack.c.h.b16 %v88
  %v302 = vunpack.c.l.b16 %v89
  %v303 = vunpack.c.h.b16 %v89
  %v304 = vunpack.c.l.b16 %v90
  %v305 = vunpack.c.h.b16 %v90
  %v306 = vunpack.c.l.b16 %v91
  %v307 = vunpack.c.h.b16 %v91
  %v308 = vunpack.c.l.b16 %v92
  %v309 = vunpack.c.h.b16 %v92
  %v310 = vunpack.c.l.b16 %v93
  %v311 = vunpack.c.h.b16 %v93
  %v312 = vunpack.c.l.b16 %v94
  %v313 = vunpack.c.h.b16 %v94
  %v314 = vunpack.c.l.b16 %v95
  %v315 = vunpack.c.h.b16 %v95
  %v316 = vunpack.c.l.b16 %v96
  %v317 = vunpack.c.h.b16 %v96
  %v318 = vunpack.c.l.b16 %v97
  %v319 = vunpack.c.h.b16 %v97
  %v320 = vunpack.c.l.b16 %v98
  %v321 = vunpack.c.h.b16 %v98
  %v322 = vunpack.c.l.b16 %v99
  %v323 = vunpack.c.h.b16 %v99
  %v324 = vunpack.c.l.b16 %v100
  %v325 = vunpack.c.h.b16 %v100
  %v326 = vunpack.c.l.b16 %v101
  %v327 = vunpack.c.h.b16 %v101
  %v328 = vunpack.c.l.b16 %v102
  %v329 = vunpack.c.h.b16 %v102
  %v330 = vunpack.c.l.b16 %v103
  %v331 = vunpack.c.h.b16 %v103
  %v332 = vunpack.c.l.b16 %v104
  %v333 = vunpack.c.h.b16 %v104
  %v334 = vunpack.c.l.b16 %v105
  %v335 = vunpack.c.h.b16 %v105
  %v336 = vunpack.c.l.b16 %v106
  %v337 = vunpack.c.h.b16 %v106
  %v338 = vunpack.c.l.b16 %v107
  %v339 = vunpack.c.h.b16 %v107
  %v340 = vunpack.c.l.b16 %v108
  %v341 = vunpack.c.h.b16 %v108
  %v342 = vunpack.c.l.b16 %v109
  %v343 = vunpack.c.h.b16 %v109
  %v344 = vunpack.c.l.b16 %v110
  %v345 = vunpack.c.h.b16 %v110
  %v346 = vunpack.c.l.b16 %v111
  %v347 = vunpack.c.h.b16 %v111
  %v348 = vunpack.c.l.b16 %v112
  %v349 = vunpack.c.h.b16 %v112
  %v350 = vunpack.c.l.b16 %v113
  %v351 = vunpack.c.h.b16 %v113
  %v352 = vunpack.c.l.b16 %v114
  %v353 = vunpack.c.h.b16 %v114
  %v354 = vunpack.c.l.b16 %v115
  %v355 = vunpack.c.h.b16 %v115
  %v356 = vunpack.c.l.b16 %v116
  %v357 = vunpack.c.h.b16 %v116
  %v358 = vunpack.c.l.b16 %v117
  %v359 = vunpack.c.h.b16 %v117
  %v360 = vunpack.c.l.b16 %v118
  %v361 = vunpack.c.h.b16 %v118
  %v362 = vunpack.c.l.b16 %v119
  %v363 = vunpack.c.h.b16 %v119
  %v364 = vunpack.c.l.b16 %v120
  %v365 = vunpack.c.h.b16 %v120
  %v366 = vunpack.c.l.b16 %v121
  %v367 = vunpack.c.h.b16 %v121
  %v368 = vunpack.c.l.b16 %v122
  %v369 = vunpack.c.h.b16 %v122
  %v370 = vunpack.c.l.b16 %v123
  %v371 = vunpack.c.h.b16 %v123
  %v372 = vunpack.c.l.b16 %v124
  %v373 = vunpack.c.h.b16 %v124
  %v374 = vunpack.c.l.b16 %v125
  %v375 = vunpack.c.h.b16 %v125
  %v376 = vunpack.c.l.b16 %v126
  %v377 = vunpack.c.h.b16 %v126
  %v378 = vunpack.c.l.b16 %v127
  %v379 = vunpack.c.h.b16 %v127
  %v380 = vunpack.c.l.b16 %v128
  %v381 = vunpack.c.h.b16 %v128
  %v382 = vunpack.c.l.b16 %v129
  %v383 = vunpack.c.h.b16 %v129
  %v384 = vunpack.c.l.b16 %v130
  %v385 = vunpack.c.h.b16 %v130
  %v386 = vunpack.c.l.b16 %v131
  %v387 = vunpack.c.h.b16 %v131
  %v388 = vunpack.c.l.b16 %v132
  %v389 = vunpack.c.h.b16 %v132
  %v390 = vunpack.c.l.b16 %v133
  %v391 = vunpack.c.h.b16 %v133
  %v392 = vunpack.c.l.b16 %v134
  %v393 = vunpack.c.h.b16 %v134
  %v394 = vunpack.c.l.b16 %v135
  %v395 = vunpack.c.h.b16 %v135
  %v396 = vunpack.c.l.b16 %v136
  %v397 = vunpack.c.h.b16 %v136
  %v398 = vunpack.c.l.b16 %v137
  %v399 = vunpack.c.h.b16 %v137
  %v400 = vunpack.c.l.b16 %v138
  %v401 = vunpack.c.h.b16 %v138
  %v402 = vunpack.c.l.b16 %v139
  %v403 = vunpack.c.h.b16 %v139
  %v404 = vunpack.c.l.b16 %v140
  %v405 = vunpack.c.h.b16 %v140
  %v406 = vunpack.c.l.b16 %v141
  %v407 = vunpack.c.h.b16 %v141
  %v408 = vunpack.c.l.b16 %v142
  %v409 = vunpack.c.h.b16 %v142
  %v410 = vunpack.c.l.b16 %v143
  %v411 = vunpack.c.h.b16 %v143
  %v412 = vunpack.c.l.b16 %v144
  %v413 = vunpack.c.h.b16 %v144
  %v414 = vunpack.c.l.b16 %v145
  %v415 = vunpack.c.h.b16 %v145
  %v416 = vunpack.c.l.b16 %v146
  %v417 = vunpack.c.h.b16 %v146
  %v418 = vunpack.c.l.b16 %v147
  %v419 = vunpack.c.h.b16 %v147
  %v420 = vunpack.c.l.b16 %v148
  %v421 = vunpack.c.h.b16 %v148
  %v422 = vunpack.c.l.b16 %v149
  %v423 = vunpack.c.h.b16 %v149
  %v424 = vunpack.c.l.b16 %v150
  %v425 = vunpack.c.h.b16 %v150
  %v426 = vpack.c.b16 %v300, %v298
  %v427 = vpack.c.b16 %v301, %v299
  %v428 = vpack.c.b16 %v304, %v302
  %v429 = vpack.c.b16 %v305, %v303
  %v430 = vpack.c.b16 %v308, %v306
  %v431 = vpack.c.b16 %v309, %v307
  %v432 = vpack.c.b16 %v312, %v310
  %v433 = vpack.c.b16 %v313, %v311
  %v434 = vpack.c.b16 %v316, %v314
  %v435 = vpack.c.b16 %v317, %v315
  %v436 = vpack.c.b16 %v320, %v318
  %v437 = vpack.c.b16 %v321, %v319
  %v438 = vpack.c.b16 %v324, %v322
  %v439 = vpack.c.b16 %v325, %v323
  %v440 = vpack.c.b16 %v328, %v326
  %v441 = vpack.c.b16 %v329, %v327
  %v442 = vpack.c.b16 %v332, %v330
  %v443 = vpack.c.b16 %v333, %v331
  %v444 = vpack.c.b16 %v336, %v334
  %v445 = vpack.c.b16 %v337, %v335
  %v446 = vpack.c.b16 %v340, %v338
  %v447 = vpack.c.b16 %v341, %v339
  %v448 = vpack.c.b16 %v344, %v342
  %v449 = vpack.c.b16 %v345, %v343
  %v450 = vpack.c.b16 %v348, %v346
  %v451 = vpack.c.b16 %v349, %v347
  %v452 = vpack.c.b16 %v352, %v350
  %v453 = vpack.c.b16 %v353, %v351
  %v454 = vpack.c.b16 %v356, %v354
  %v455 = vpack.c.b16 %v357, %v355
  %v456 = vpack.c.b16 %v360, %v358
  %v457 = vpack.c.b16 %v361, %v359
  %v458 = vpack.c.b16 %v364, %v362
  %v459 = vpack.c.b16 %v365, %v363
  %v460 = vpack.c.b16 %v368, %v366
  %v461 = vpack.c.b16 %v369, %v367
  %v462 = vpack.c.b16 %v372, %v370
  %v463 = vpack.c.b16 %v373, %v371
  %v464 = vpack.c.b16 %v376, %v374
  %v465 = vpack.c.b16 %v377, %v375
  %v466 = vpack.c.b16 %v380, %v378
  %v467 = vpack.c.b16 %v381, %v379
  %v468 = vpack.c.b16 %v384, %v382
  %v469 = vpack.c.b16 %v385, %v383
  %v470 = vpack.c.b16 %v388, %v386
  %v471 = vpack.c.b16 %v389, %v387
  %v472 = vpack.c.b16 %v392, %v390
  %v473 = vpack.c.b16 %v393, %v391
  %v474 = vpack.c.b16 %v396, %v394
  %v475 = vpack.c.b16 %v397, %v395
  %v476 = vpack.c.b16 %v400, %v398
  %v477 = vpack.c.b16 %v401, %v399
  %v478 = vpack.c.b16 %v404, %v402
  %v479 = vpack.c.b16 %v405, %v403
  %v480 = vpack.c.b16 %v408, %v406
  %v481 = vpack.c.b16 %v409, %v407
  %v482 = vpack.c.b16 %v412, %v410
  %v483 = vpack.c.b16 %v413, %v411
  %v484 = vpack.c.b16 %v416, %v414
  %v485 = vpack.c.b16 %v417, %v415
  %v486 = vpack.c.b16 %v420, %v418
  %v487 = vpack.c.b16 %v421, %v419
  %v488 = vpack.c.b16 %v424, %v422
  %v489 = vpack.c.b16 %v425, %v423
  %v541 = vunpack.c.l.b16 %v215
  %v542 = vunpack.c.l.b16 %v216
  %v543 = vunpack.c.l.b16 %v217
  %v544 = vunpack.c.l.b16 %v218
  %v545 = vunpack.c.l.b16 %v219
  %v546 = vunpack.c.l.b16 %v220
  %v547 = vunpack.c.l.b16 %v221
  %v548 = vunpack.c.l.b16 %v222
  %v549 = vunpack.c.l.b16 %v223
  %v550 = vunpack.c.l.b16 %v224
  %v551 = vunpack.c.l.b16 %v225
  %v552 = vunpack.c.l.b16 %v226
  %v553 = vunpack.c.l.b16 %v227
  %v554 = vunpack.c.l.b16 %v228
  %v555 = vunpack.c.l.b16 %v229
  %v556 = vunpack.c.l.b16 %v230
  %v557 = vunpack.c.l.b16 %v231
  %v558 = vunpack.c.l.b16 %v232
  %v559 = vunpack.c.l.b16 %v233
  %v560 = vpack.c.b16 %v542, %v541
  %v561 = vpack.c.b16 %v544, %v543
  %v562 = vpack.c.b16 %v546, %v545
  %v563 = vpack.c.b16 %v548, %v547
  %v564 = vpack.c.b16 %v550, %v549
  %v565 = vpack.c.b16 %v552, %v551
  %v566 = vpack.c.b16 %v554, %v553
  %v567 = vpack.c.b16 %v556, %v555
  %v568 = vpack.c.b16 %v558, %v557
  %v569 = vpack.c.b16 %v559, %v559
  %vm579 = vcmask 154624
  %v581 = vsel %vm579, %v427, 0
  %v584 = vsel %vm579, %v429, 0
  %v587 = vsel %vm579, %v431, 0
  %v590 = vsel %vm579, %v433, 0
  %v593 = vsel %vm579, %v435, 0
  %v596 = vsel %vm579, %v437, 0
  %v599 = vsel %vm579, %v439, 0
  %v602 = vsel %vm579, %v441, 0
  %v605 = vsel %vm579, %v443, 0
  %v608 = vsel %vm579, %v445, 0
  %v611 = vsel %vm579, %v447, 0
  %v614 = vsel %vm579, %v449, 0
  %v617 = vsel %vm579, %v451, 0
  %v620 = vsel %vm579, %v453, 0
  %v623 = vsel %vm579, %v455, 0
  %v626 = vsel %vm579, %v457, 0
  %v629 = vsel %vm579, %v459, 0
  %v632 = vsel %vm579, %v461, 0
  %v635 = vsel %vm579, %v463, 0
  %v638 = vsel %vm579, %v465, 0
  %v641 = vsel %vm579, %v467, 0
  %v644 = vsel %vm579, %v469, 0
  %v647 = vsel %vm579, %v471, 0
  %v650 = vsel %vm579, %v473, 0
  %v653 = vsel %vm579, %v475, 0
  %v656 = vsel %vm579, %v477, 0
  %v659 = vsel %vm579, %v479, 0
  %v662 = vsel %vm579, %v481, 0
  %v665 = vsel %vm579, %v483, 0
  %v668 = vsel %vm579, %v485, 0
  %v671 = vsel %vm579, %v487, 0
  %v674 = vsel %vm579, %v489, 0
  %vm676 = vcmask 1040384
  %vm677 = vcmask 1041408
  %v678 = vsel %vm676, 4294967295, 65535
  %v679 = vsel %vm677, %v678, 0
  %v681 = vand.u32 %v569, %v679
  %683 = vmatpush.bf16.msra.mxu0 %v567
  %684 = vmatpush.bf16.msra.mxu0 %v566
  %685 = vmatpush.bf16.msra.mxu0 %v565
  %686 = vmatpush.bf16.msra.mxu0 %v564
  %687 = vmatpush.bf16.msra.mxu0 %v563
  %688 = vmatpush.bf16.msra.mxu0 %v562
  %689 = vmatpush.bf16.msra.mxu0 %v561
  %690 = vmatpush.bf16.msra.mxu0 %v560
  %691 = vmatmul.bf16.gmra.mxu0 %v426
  %v692 = vpop.f32.mrf.mxu0
  %v693 = vadd.f32 0.0, %v692
  %v694 = vpop.f32.mrf.mxu0
  %v695 = vadd.f32 0.0, %v694
  %696 = vmatmul.bf16.gmra.mxu0 %v428
  %v697 = vpop.f32.mrf.mxu0
  %v698 = vadd.f32 0.0, %v697
  %v699 = vpop.f32.mrf.mxu0
  %v700 = vadd.f32 0.0, %v699
  %701 = vmatmul.bf16.gmra.mxu0 %v430
  %v702 = vpop.f32.mrf.mxu0
  %v703 = vadd.f32 0.0, %v702
  %v704 = vpop.f32.mrf.mxu0
  %v705 = vadd.f32 0.0, %v704
  %706 = vmatmul.bf16.gmra.mxu0 %v432
  %v707 = vpop.f32.mrf.mxu0
  %v708 = vadd.f32 0.0, %v707
  %v709 = vpop.f32.mrf.mxu0
  %v710 = vadd.f32 0.0, %v709
  %711 = vmatmul.bf16.gmra.mxu0 %v434
  %v712 = vpop.f32.mrf.mxu0
  %v713 = vadd.f32 0.0, %v712
  %v714 = vpop.f32.mrf.mxu0
  %v715 = vadd.f32 0.0, %v714
  %716 = vmatmul.bf16.gmra.mxu0 %v436
  %v717 = vpop.f32.mrf.mxu0
  %v718 = vadd.f32 0.0, %v717
  %v719 = vpop.f32.mrf.mxu0
  %v720 = vadd.f32 0.0, %v719
  %721 = vmatmul.bf16.gmra.mxu0 %v438
  %v722 = vpop.f32.mrf.mxu0
  %v723 = vadd.f32 0.0, %v722
  %v724 = vpop.f32.mrf.mxu0
  %v725 = vadd.f32 0.0, %v724
  %726 = vmatmul.bf16.gmra.mxu0 %v440
  %v727 = vpop.f32.mrf.mxu0
  %v728 = vadd.f32 0.0, %v727
  %v729 = vpop.f32.mrf.mxu0
  %v730 = vadd.f32 0.0, %v729
  %731 = vmatmul.bf16.gmra.mxu0 %v442
  %v732 = vpop.f32.mrf.mxu0
  %v733 = vadd.f32 0.0, %v732
  %v734 = vpop.f32.mrf.mxu0
  %v735 = vadd.f32 0.0, %v734
  %736 = vmatmul.bf16.gmra.mxu0 %v444
  %v737 = vpop.f32.mrf.mxu0
  %v738 = vadd.f32 0.0, %v737
  %v739 = vpop.f32.mrf.mxu0
  %v740 = vadd.f32 0.0, %v739
  %741 = vmatmul.bf16.gmra.mxu0 %v446
  %v742 = vpop.f32.mrf.mxu0
  %v743 = vadd.f32 0.0, %v742
  %v744 = vpop.f32.mrf.mxu0
  %v745 = vadd.f32 0.0, %v744
  %746 = vmatmul.bf16.gmra.mxu0 %v448
  %v747 = vpop.f32.mrf.mxu0
  %v748 = vadd.f32 0.0, %v747
  %v749 = vpop.f32.mrf.mxu0
  %v750 = vadd.f32 0.0, %v749
  %751 = vmatmul.bf16.gmra.mxu0 %v450
  %v752 = vpop.f32.mrf.mxu0
  %v753 = vadd.f32 0.0, %v752
  %v754 = vpop.f32.mrf.mxu0
  %v755 = vadd.f32 0.0, %v754
  %756 = vmatmul.bf16.gmra.mxu0 %v452
  %v757 = vpop.f32.mrf.mxu0
  %v758 = vadd.f32 0.0, %v757
  %v759 = vpop.f32.mrf.mxu0
  %v760 = vadd.f32 0.0, %v759
  %761 = vmatmul.bf16.gmra.mxu0 %v454
  %v762 = vpop.f32.mrf.mxu0
  %v763 = vadd.f32 0.0, %v762
  %v764 = vpop.f32.mrf.mxu0
  %v765 = vadd.f32 0.0, %v764
  %766 = vmatmul.bf16.gmra.mxu0 %v456
  %v767 = vpop.f32.mrf.mxu0
  %v768 = vadd.f32 0.0, %v767
  %v769 = vpop.f32.mrf.mxu0
  %v770 = vadd.f32 0.0, %v769
  %771 = vmatmul.bf16.gmra.mxu0 %v458
  %v772 = vpop.f32.mrf.mxu0
  %v773 = vadd.f32 0.0, %v772
  %v774 = vpop.f32.mrf.mxu0
  %v775 = vadd.f32 0.0, %v774
  %776 = vmatmul.bf16.gmra.mxu0 %v460
  %v777 = vpop.f32.mrf.mxu0
  %v778 = vadd.f32 0.0, %v777
  %v779 = vpop.f32.mrf.mxu0
  %v780 = vadd.f32 0.0, %v779
  %781 = vmatmul.bf16.gmra.mxu0 %v462
  %v782 = vpop.f32.mrf.mxu0
  %v783 = vadd.f32 0.0, %v782
  %v784 = vpop.f32.mrf.mxu0
  %v785 = vadd.f32 0.0, %v784
  %786 = vmatmul.bf16.gmra.mxu0 %v464
  %v787 = vpop.f32.mrf.mxu0
  %v788 = vadd.f32 0.0, %v787
  %v789 = vpop.f32.mrf.mxu0
  %v790 = vadd.f32 0.0, %v789
  %791 = vmatmul.bf16.gmra.mxu0 %v466
  %v792 = vpop.f32.mrf.mxu0
  %v793 = vadd.f32 0.0, %v792
  %v794 = vpop.f32.mrf.mxu0
  %v795 = vadd.f32 0.0, %v794
  %796 = vmatmul.bf16.gmra.mxu0 %v468
  %v797 = vpop.f32.mrf.mxu0
  %v798 = vadd.f32 0.0, %v797
  %v799 = vpop.f32.mrf.mxu0
  %v800 = vadd.f32 0.0, %v799
  %801 = vmatmul.bf16.gmra.mxu0 %v470
  %v802 = vpop.f32.mrf.mxu0
  %v803 = vadd.f32 0.0, %v802
  %v804 = vpop.f32.mrf.mxu0
  %v805 = vadd.f32 0.0, %v804
  %806 = vmatmul.bf16.gmra.mxu0 %v472
  %v807 = vpop.f32.mrf.mxu0
  %v808 = vadd.f32 0.0, %v807
  %v809 = vpop.f32.mrf.mxu0
  %v810 = vadd.f32 0.0, %v809
  %811 = vmatmul.bf16.gmra.mxu0 %v474
  %v812 = vpop.f32.mrf.mxu0
  %v813 = vadd.f32 0.0, %v812
  %v814 = vpop.f32.mrf.mxu0
  %v815 = vadd.f32 0.0, %v814
  %816 = vmatmul.bf16.gmra.mxu0 %v476
  %v817 = vpop.f32.mrf.mxu0
  %v818 = vadd.f32 0.0, %v817
  %v819 = vpop.f32.mrf.mxu0
  %v820 = vadd.f32 0.0, %v819
  %821 = vmatmul.bf16.gmra.mxu0 %v478
  %v822 = vpop.f32.mrf.mxu0
  %v823 = vadd.f32 0.0, %v822
  %v824 = vpop.f32.mrf.mxu0
  %v825 = vadd.f32 0.0, %v824
  %826 = vmatmul.bf16.gmra.mxu0 %v480
  %v827 = vpop.f32.mrf.mxu0
  %v828 = vadd.f32 0.0, %v827
  %v829 = vpop.f32.mrf.mxu0
  %v830 = vadd.f32 0.0, %v829
  %831 = vmatmul.bf16.gmra.mxu0 %v482
  %v832 = vpop.f32.mrf.mxu0
  %v833 = vadd.f32 0.0, %v832
  %v834 = vpop.f32.mrf.mxu0
  %v835 = vadd.f32 0.0, %v834
  %836 = vmatmul.bf16.gmra.mxu0 %v484
  %v837 = vpop.f32.mrf.mxu0
  %v838 = vadd.f32 0.0, %v837
  %v839 = vpop.f32.mrf.mxu0
  %v840 = vadd.f32 0.0, %v839
  %841 = vmatmul.bf16.gmra.mxu0 %v486
  %v842 = vpop.f32.mrf.mxu0
  %v843 = vadd.f32 0.0, %v842
  %v844 = vpop.f32.mrf.mxu0
  %v845 = vadd.f32 0.0, %v844
  %846 = vmatmul.bf16.gmra.mxu0 %v488
  %v847 = vpop.f32.mrf.mxu0
  %v848 = vadd.f32 0.0, %v847
  %v849 = vpop.f32.mrf.mxu0
  %v850 = vadd.f32 0.0, %v849
  %851 = vdwg.mxu0
  %852 = vmatpush.bf16.msra.mxu0 0
  %853 = vmatpush.bf16.msra.mxu0 0
  %854 = vmatpush.bf16.msra.mxu0 0
  %855 = vmatpush.bf16.msra.mxu0 0
  %856 = vmatpush.bf16.msra.mxu0 0
  %857 = vmatpush.bf16.msra.mxu0 0
  %858 = vmatpush.bf16.msra.mxu0 %v681
  %859 = vmatpush.bf16.msra.mxu0 %v568
  %860 = vmatmul.bf16.gmra.mxu0 %v581
  %v861 = vpop.f32.mrf.mxu0
  %v862 = vadd.f32 %v693, %v861
  %v863 = vpop.f32.mrf.mxu0
  %v864 = vadd.f32 %v695, %v863
  %865 = vmatmul.bf16.gmra.mxu0 %v584
  %v866 = vpop.f32.mrf.mxu0
  %v867 = vadd.f32 %v698, %v866
  %v868 = vpop.f32.mrf.mxu0
  %v869 = vadd.f32 %v700, %v868
  %870 = vmatmul.bf16.gmra.mxu0 %v587
  %v871 = vpop.f32.mrf.mxu0
  %v872 = vadd.f32 %v703, %v871
  %v873 = vpop.f32.mrf.mxu0
  %v874 = vadd.f32 %v705, %v873
  %875 = vmatmul.bf16.gmra.mxu0 %v590
  %v876 = vpop.f32.mrf.mxu0
  %v877 = vadd.f32 %v708, %v876
  %v878 = vpop.f32.mrf.mxu0
  %v879 = vadd.f32 %v710, %v878
  %880 = vmatmul.bf16.gmra.mxu0 %v593
  %v881 = vpop.f32.mrf.mxu0
  %v882 = vadd.f32 %v713, %v881
  %v883 = vpop.f32.mrf.mxu0
  %v884 = vadd.f32 %v715, %v883
  %885 = vmatmul.bf16.gmra.mxu0 %v596
  %v886 = vpop.f32.mrf.mxu0
  %v887 = vadd.f32 %v718, %v886
  %v888 = vpop.f32.mrf.mxu0
  %v889 = vadd.f32 %v720, %v888
  %890 = vmatmul.bf16.gmra.mxu0 %v599
  %v891 = vpop.f32.mrf.mxu0
  %v892 = vadd.f32 %v723, %v891
  %v893 = vpop.f32.mrf.mxu0
  %v894 = vadd.f32 %v725, %v893
  %895 = vmatmul.bf16.gmra.mxu0 %v602
  %v896 = vpop.f32.mrf.mxu0
  %v897 = vadd.f32 %v728, %v896
  %v898 = vpop.f32.mrf.mxu0
  %v899 = vadd.f32 %v730, %v898
  %900 = vmatmul.bf16.gmra.mxu0 %v605
  %v901 = vpop.f32.mrf.mxu0
  %v902 = vadd.f32 %v733, %v901
  %v903 = vpop.f32.mrf.mxu0
  %v904 = vadd.f32 %v735, %v903
  %905 = vmatmul.bf16.gmra.mxu0 %v608
  %v906 = vpop.f32.mrf.mxu0
  %v907 = vadd.f32 %v738, %v906
  %v908 = vpop.f32.mrf.mxu0
  %v909 = vadd.f32 %v740, %v908
  %910 = vmatmul.bf16.gmra.mxu0 %v611
  %v911 = vpop.f32.mrf.mxu0
  %v912 = vadd.f32 %v743, %v911
  %v913 = vpop.f32.mrf.mxu0
  %v914 = vadd.f32 %v745, %v913
  %915 = vmatmul.bf16.gmra.mxu0 %v614
  %v916 = vpop.f32.mrf.mxu0
  %v917 = vadd.f32 %v748, %v916
  %v918 = vpop.f32.mrf.mxu0
  %v919 = vadd.f32 %v750, %v918
  %920 = vmatmul.bf16.gmra.mxu0 %v617
  %v921 = vpop.f32.mrf.mxu0
  %v922 = vadd.f32 %v753, %v921
  %v923 = vpop.f32.mrf.mxu0
  %v924 = vadd.f32 %v755, %v923
  %925 = vmatmul.bf16.gmra.mxu0 %v620
  %v926 = vpop.f32.mrf.mxu0
  %v927 = vadd.f32 %v758, %v926
  %v928 = vpop.f32.mrf.mxu0
  %v929 = vadd.f32 %v760, %v928
  %930 = vmatmul.bf16.gmra.mxu0 %v623
  %v931 = vpop.f32.mrf.mxu0
  %v932 = vadd.f32 %v763, %v931
  %v933 = vpop.f32.mrf.mxu0
  %v934 = vadd.f32 %v765, %v933
  %935 = vmatmul.bf16.gmra.mxu0 %v626
  %v936 = vpop.f32.mrf.mxu0
  %v937 = vadd.f32 %v768, %v936
  %v938 = vpop.f32.mrf.mxu0
  %v939 = vadd.f32 %v770, %v938
  %940 = vmatmul.bf16.gmra.mxu0 %v629
  %v941 = vpop.f32.mrf.mxu0
  %v942 = vadd.f32 %v773, %v941
  %v943 = vpop.f32.mrf.mxu0
  %v944 = vadd.f32 %v775, %v943
  %945 = vmatmul.bf16.gmra.mxu0 %v632
  %v946 = vpop.f32.mrf.mxu0
  %v947 = vadd.f32 %v778, %v946
  %v948 = vpop.f32.mrf.mxu0
  %v949 = vadd.f32 %v780, %v948
  %950 = vmatmul.bf16.gmra.mxu0 %v635
  %v951 = vpop.f32.mrf.mxu0
  %v952 = vadd.f32 %v783, %v951
  %v953 = vpop.f32.mrf.mxu0
  %v954 = vadd.f32 %v785, %v953
  %955 = vmatmul.bf16.gmra.mxu0 %v638
  %v956 = vpop.f32.mrf.mxu0
  %v957 = vadd.f32 %v788, %v956
  %v958 = vpop.f32.mrf.mxu0
  %v959 = vadd.f32 %v790, %v958
  %960 = vmatmul.bf16.gmra.mxu0 %v641
  %v961 = vpop.f32.mrf.mxu0
  %v962 = vadd.f32 %v793, %v961
  %v963 = vpop.f32.mrf.mxu0
  %v964 = vadd.f32 %v795, %v963
  %965 = vmatmul.bf16.gmra.mxu0 %v644
  %v966 = vpop.f32.mrf.mxu0
  %v967 = vadd.f32 %v798, %v966
  %v968 = vpop.f32.mrf.mxu0
  %v969 = vadd.f32 %v800, %v968
  %970 = vmatmul.bf16.gmra.mxu0 %v647
  %v971 = vpop.f32.mrf.mxu0
  %v972 = vadd.f32 %v803, %v971
  %v973 = vpop.f32.mrf.mxu0
  %v974 = vadd.f32 %v805, %v973
  %975 = vmatmul.bf16.gmra.mxu0 %v650
  %v976 = vpop.f32.mrf.mxu0
  %v977 = vadd.f32 %v808, %v976
  %v978 = vpop.f32.mrf.mxu0
  %v979 = vadd.f32 %v810, %v978
  %980 = vmatmul.bf16.gmra.mxu0 %v653
  %v981 = vpop.f32.mrf.mxu0
  %v982 = vadd.f32 %v813, %v981
  %v983 = vpop.f32.mrf.mxu0
  %v984 = vadd.f32 %v815, %v983
  %985 = vmatmul.bf16.gmra.mxu0 %v656
  %v986 = vpop.f32.mrf.mxu0
  %v987 = vadd.f32 %v818, %v986
  %v988 = vpop.f32.mrf.mxu0
  %v989 = vadd.f32 %v820, %v988
  %990 = vmatmul.bf16.gmra.mxu0 %v659
  %v991 = vpop.f32.mrf.mxu0
  %v992 = vadd.f32 %v823, %v991
  %v993 = vpop.f32.mrf.mxu0
  %v994 = vadd.f32 %v825, %v993
  %995 = vmatmul.bf16.gmra.mxu0 %v662
  %v996 = vpop.f32.mrf.mxu0
  %v997 = vadd.f32 %v828, %v996
  %v998 = vpop.f32.mrf.mxu0
  %v999 = vadd.f32 %v830, %v998
  %1000 = vmatmul.bf16.gmra.mxu0 %v665
  %v1001 = vpop.f32.mrf.mxu0
  %v1002 = vadd.f32 %v833, %v1001
  %v1003 = vpop.f32.mrf.mxu0
  %v1004 = vadd.f32 %v835, %v1003
  %1005 = vmatmul.bf16.gmra.mxu0 %v668
  %v1006 = vpop.f32.mrf.mxu0
  %v1007 = vadd.f32 %v838, %v1006
  %v1008 = vpop.f32.mrf.mxu0
  %v1009 = vadd.f32 %v840, %v1008
  %1010 = vmatmul.bf16.gmra.mxu0 %v671
  %v1011 = vpop.f32.mrf.mxu0
  %v1012 = vadd.f32 %v843, %v1011
  %v1013 = vpop.f32.mrf.mxu0
  %v1014 = vadd.f32 %v845, %v1013
  %1015 = vmatmul.bf16.gmra.mxu0 %v674
  %v1016 = vpop.f32.mrf.mxu0
  %v1017 = vadd.f32 %v848, %v1016
  %v1018 = vpop.f32.mrf.mxu0
  %v1019 = vadd.f32 %v850, %v1018
  %1020 = vdwg.mxu0
  %v1021 = vadd.f32 %v151, %v862
  %v1022 = vadd.f32 %v152, %v864
  %v1023 = vadd.f32 %v153, %v867
  %v1024 = vadd.f32 %v154, %v869
  %v1025 = vadd.f32 %v155, %v872
  %v1026 = vadd.f32 %v156, %v874
  %v1027 = vadd.f32 %v157, %v877
  %v1028 = vadd.f32 %v158, %v879
  %v1029 = vadd.f32 %v159, %v882
  %v1030 = vadd.f32 %v160, %v884
  %v1031 = vadd.f32 %v161, %v887
  %v1032 = vadd.f32 %v162, %v889
  %v1033 = vadd.f32 %v163, %v892
  %v1034 = vadd.f32 %v164, %v894
  %v1035 = vadd.f32 %v165, %v897
  %v1036 = vadd.f32 %v166, %v899
  %v1037 = vadd.f32 %v167, %v902
  %v1038 = vadd.f32 %v168, %v904
  %v1039 = vadd.f32 %v169, %v907
  %v1040 = vadd.f32 %v170, %v909
  %v1041 = vadd.f32 %v171, %v912
  %v1042 = vadd.f32 %v172, %v914
  %v1043 = vadd.f32 %v173, %v917
  %v1044 = vadd.f32 %v174, %v919
  %v1045 = vadd.f32 %v175, %v922
  %v1046 = vadd.f32 %v176, %v924
  %v1047 = vadd.f32 %v177, %v927
  %v1048 = vadd.f32 %v178, %v929
  %v1049 = vadd.f32 %v179, %v932
  %v1050 = vadd.f32 %v180, %v934
  %v1051 = vadd.f32 %v181, %v937
  %v1052 = vadd.f32 %v182, %v939
  %v1053 = vadd.f32 %v183, %v942
  %v1054 = vadd.f32 %v184, %v944
  %v1055 = vadd.f32 %v185, %v947
  %v1056 = vadd.f32 %v186, %v949
  %v1057 = vadd.f32 %v187, %v952
  %v1058 = vadd.f32 %v188, %v954
  %v1059 = vadd.f32 %v189, %v957
  %v1060 = vadd.f32 %v190, %v959
  %v1061 = vadd.f32 %v191, %v962
  %v1062 = vadd.f32 %v192, %v964
  %v1063 = vadd.f32 %v193, %v967
  %v1064 = vadd.f32 %v194, %v969
  %v1065 = vadd.f32 %v195, %v972
  %v1066 = vadd.f32 %v196, %v974
  %v1067 = vadd.f32 %v197, %v977
  %v1068 = vadd.f32 %v198, %v979
  %v1069 = vadd.f32 %v199, %v982
  %v1070 = vadd.f32 %v200, %v984
  %v1071 = vadd.f32 %v201, %v987
  %v1072 = vadd.f32 %v202, %v989
  %v1073 = vadd.f32 %v203, %v992
  %v1074 = vadd.f32 %v204, %v994
  %v1075 = vadd.f32 %v205, %v997
  %v1076 = vadd.f32 %v206, %v999
  %v1077 = vadd.f32 %v207, %v1002
  %v1078 = vadd.f32 %v208, %v1004
  %v1079 = vadd.f32 %v209, %v1007
  %v1080 = vadd.f32 %v210, %v1009
  %v1081 = vadd.f32 %v211, %v1012
  %v1082 = vadd.f32 %v212, %v1014
  %v1083 = vadd.f32 %v213, %v1017
  %v1084 = vadd.f32 %v214, %v1019
  %vm1085 = vcmask 130048
  %1086 = vst.msk [vmem:[#allocation2] sm:$0xff] %vm1085, %v1021
  %1087 = vst.msk [vmem:[#allocation2 + $0x8] sm:$0xff] %vm1085, %v1022
  %1088 = vst.msk [vmem:[#allocation2 + $0x10] sm:$0xff] %vm1085, %v1023
  %1089 = vst.msk [vmem:[#allocation2 + $0x18] sm:$0xff] %vm1085, %v1024
  %1090 = vst.msk [vmem:[#allocation2 + $0x20] sm:$0xff] %vm1085, %v1025
  %1091 = vst.msk [vmem:[#allocation2 + $0x28] sm:$0xff] %vm1085, %v1026
  %1092 = vst.msk [vmem:[#allocation2 + $0x30] sm:$0xff] %vm1085, %v1027
  %1093 = vst.msk [vmem:[#allocation2 + $0x38] sm:$0xff] %vm1085, %v1028
  %1094 = vst.msk [vmem:[#allocation2 + $0x40] sm:$0xff] %vm1085, %v1029
  %1095 = vst.msk [vmem:[#allocation2 + $0x48] sm:$0xff] %vm1085, %v1030
  %1096 = vst.msk [vmem:[#allocation2 + $0x50] sm:$0xff] %vm1085, %v1031
  %1097 = vst.msk [vmem:[#allocation2 + $0x58] sm:$0xff] %vm1085, %v1032
  %1098 = vst.msk [vmem:[#allocation2 + $0x60] sm:$0xff] %vm1085, %v1033
  %1099 = vst.msk [vmem:[#allocation2 + $0x68] sm:$0xff] %vm1085, %v1034
  %1100 = vst.msk [vmem:[#allocation2 + $0x70] sm:$0xff] %vm1085, %v1035
  %1101 = vst.msk [vmem:[#allocation2 + $0x78] sm:$0xff] %vm1085, %v1036
  %1102 = vst.msk [vmem:[#allocation2 + $0x80] sm:$0xff] %vm1085, %v1037
  %1103 = vst.msk [vmem:[#allocation2 + $0x88] sm:$0xff] %vm1085, %v1038
  %1104 = vst.msk [vmem:[#allocation2 + $0x90] sm:$0xff] %vm1085, %v1039
  %1105 = vst.msk [vmem:[#allocation2 + $0x98] sm:$0xff] %vm1085, %v1040
  %1106 = vst.msk [vmem:[#allocation2 + $0xa0] sm:$0xff] %vm1085, %v1041
  %1107 = vst.msk [vmem:[#allocation2 + $0xa8] sm:$0xff] %vm1085, %v1042
  %1108 = vst.msk [vmem:[#allocation2 + $0xb0] sm:$0xff] %vm1085, %v1043
  %1109 = vst.msk [vmem:[#allocation2 + $0xb8] sm:$0xff] %vm1085, %v1044
  %1110 = vst.msk [vmem:[#allocation2 + $0xc0] sm:$0xff] %vm1085, %v1045
  %1111 = vst.msk [vmem:[#allocation2 + $0xc8] sm:$0xff] %vm1085, %v1046
  %1112 = vst.msk [vmem:[#allocation2 + $0xd0] sm:$0xff] %vm1085, %v1047
  %1113 = vst.msk [vmem:[#allocation2 + $0xd8] sm:$0xff] %vm1085, %v1048
  %1114 = vst.msk [vmem:[#allocation2 + $0xe0] sm:$0xff] %vm1085, %v1049
  %1115 = vst.msk [vmem:[#allocation2 + $0xe8] sm:$0xff] %vm1085, %v1050
  %1116 = vst.msk [vmem:[#allocation2 + $0xf0] sm:$0xff] %vm1085, %v1051
  %1117 = vst.msk [vmem:[#allocation2 + $0xf8] sm:$0xff] %vm1085, %v1052
  %1118 = vst.msk [vmem:[#allocation2 + $0x100] sm:$0xff] %vm1085, %v1053
  %1119 = vst.msk [vmem:[#allocation2 + $0x108] sm:$0xff] %vm1085, %v1054
  %1120 = vst.msk [vmem:[#allocation2 + $0x110] sm:$0xff] %vm1085, %v1055
  %1121 = vst.msk [vmem:[#allocation2 + $0x118] sm:$0xff] %vm1085, %v1056
  %1122 = vst.msk [vmem:[#allocation2 + $0x120] sm:$0xff] %vm1085, %v1057
  %1123 = vst.msk [vmem:[#allocation2 + $0x128] sm:$0xff] %vm1085, %v1058
  %1124 = vst.msk [vmem:[#allocation2 + $0x130] sm:$0xff] %vm1085, %v1059
  %1125 = vst.msk [vmem:[#allocation2 + $0x138] sm:$0xff] %vm1085, %v1060
  %1126 = vst.msk [vmem:[#allocation2 + $0x140] sm:$0xff] %vm1085, %v1061
  %1127 = vst.msk [vmem:[#allocation2 + $0x148] sm:$0xff] %vm1085, %v1062
  %1128 = vst.msk [vmem:[#allocation2 + $0x150] sm:$0xff] %vm1085, %v1063
  %1129 = vst.msk [vmem:[#allocation2 + $0x158] sm:$0xff] %vm1085, %v1064
  %1130 = vst.msk [vmem:[#allocation2 + $0x160] sm:$0xff] %vm1085, %v1065
  %1131 = vst.msk [vmem:[#allocation2 + $0x168] sm:$0xff] %vm1085, %v1066
  %1132 = vst.msk [vmem:[#allocation2 + $0x170] sm:$0xff] %vm1085, %v1067
  %1133 = vst.msk [vmem:[#allocation2 + $0x178] sm:$0xff] %vm1085, %v1068
  %1134 = vst.msk [vmem:[#allocation2 + $0x180] sm:$0xff] %vm1085, %v1069
  %1135 = vst.msk [vmem:[#allocation2 + $0x188] sm:$0xff] %vm1085, %v1070
  %1136 = vst.msk [vmem:[#allocation2 + $0x190] sm:$0xff] %vm1085, %v1071
  %1137 = vst.msk [vmem:[#allocation2 + $0x198] sm:$0xff] %vm1085, %v1072
  %1138 = vst.msk [vmem:[#allocation2 + $0x1a0] sm:$0xff] %vm1085, %v1073
  %1139 = vst.msk [vmem:[#allocation2 + $0x1a8] sm:$0xff] %vm1085, %v1074
  %1140 = vst.msk [vmem:[#allocation2 + $0x1b0] sm:$0xff] %vm1085, %v1075
  %1141 = vst.msk [vmem:[#allocation2 + $0x1b8] sm:$0xff] %vm1085, %v1076
  %1142 = vst.msk [vmem:[#allocation2 + $0x1c0] sm:$0xff] %vm1085, %v1077
  %1143 = vst.msk [vmem:[#allocation2 + $0x1c8] sm:$0xff] %vm1085, %v1078
  %1144 = vst.msk [vmem:[#allocation2 + $0x1d0] sm:$0xff] %vm1085, %v1079
  %1145 = vst.msk [vmem:[#allocation2 + $0x1d8] sm:$0xff] %vm1085, %v1080
  %1146 = vst.msk [vmem:[#allocation2 + $0x1e0] sm:$0xff] %vm1085, %v1081
  %1147 = vst.msk [vmem:[#allocation2 + $0x1e8] sm:$0xff] %vm1085, %v1082
  %1148 = vst.msk [vmem:[#allocation2 + $0x1f0] sm:$0xff] %vm1085, %v1083
  %1149 = vst.msk [vmem:[#allocation2 + $0x1f8] sm:$0xff] %vm1085, %v1084
  // Predicated region
  $region22: #{_lambda_.13} parent=0 // pred_check
    %p1150 = pneg %p18
  $region23: #{_lambda_.13} parent=0 // pred_check_branch
    %1152 = sbr.rel (%p1150) target = $region25
  $region24: #{_lambda_.13} parent=0 // pred_region
    %v1153 = vld [vmem:[#allocation2] sm:$0xff]
    %v1154 = vld [vmem:[#allocation2 + $0x8] sm:$0xff]
    %v1155 = vld [vmem:[#allocation2 + $0x10] sm:$0xff]
    %v1156 = vld [vmem:[#allocation2 + $0x18] sm:$0xff]
    %v1157 = vld [vmem:[#allocation2 + $0x20] sm:$0xff]
    %v1158 = vld [vmem:[#allocation2 + $0x28] sm:$0xff]
    %v1159 = vld [vmem:[#allocation2 + $0x30] sm:$0xff]
    %v1160 = vld [vmem:[#allocation2 + $0x38] sm:$0xff]
    %v1161 = vld [vmem:[#allocation2 + $0x40] sm:$0xff]
    %v1162 = vld [vmem:[#allocation2 + $0x48] sm:$0xff]
    %v1163 = vld [vmem:[#allocation2 + $0x50] sm:$0xff]
    %v1164 = vld [vmem:[#allocation2 + $0x58] sm:$0xff]
    %v1165 = vld [vmem:[#allocation2 + $0x60] sm:$0xff]
    %v1166 = vld [vmem:[#allocation2 + $0x68] sm:$0xff]
    %v1167 = vld [vmem:[#allocation2 + $0x70] sm:$0xff]
    %v1168 = vld [vmem:[#allocation2 + $0x78] sm:$0xff]
    %v1169 = vld [vmem:[#allocation2 + $0x80] sm:$0xff]
    %v1170 = vld [vmem:[#allocation2 + $0x88] sm:$0xff]
    %v1171 = vld [vmem:[#allocation2 + $0x90] sm:$0xff]
    %v1172 = vld [vmem:[#allocation2 + $0x98] sm:$0xff]
    %v1173 = vld [vmem:[#allocation2 + $0xa0] sm:$0xff]
    %v1174 = vld [vmem:[#allocation2 + $0xa8] sm:$0xff]
    %v1175 = vld [vmem:[#allocation2 + $0xb0] sm:$0xff]
    %v1176 = vld [vmem:[#allocation2 + $0xb8] sm:$0xff]
    %v1177 = vld [vmem:[#allocation2 + $0xc0] sm:$0xff]
    %v1178 = vld [vmem:[#allocation2 + $0xc8] sm:$0xff]
    %v1179 = vld [vmem:[#allocation2 + $0xd0] sm:$0xff]
    %v1180 = vld [vmem:[#allocation2 + $0xd8] sm:$0xff]
    %v1181 = vld [vmem:[#allocation2 + $0xe0] sm:$0xff]
    %v1182 = vld [vmem:[#allocation2 + $0xe8] sm:$0xff]
    %v1183 = vld [vmem:[#allocation2 + $0xf0] sm:$0xff]
    %v1184 = vld [vmem:[#allocation2 + $0xf8] sm:$0xff]
    %v1185 = vld [vmem:[#allocation2 + $0x100] sm:$0xff]
    %v1186 = vld [vmem:[#allocation2 + $0x108] sm:$0xff]
    %v1187 = vld [vmem:[#allocation2 + $0x110] sm:$0xff]
    %v1188 = vld [vmem:[#allocation2 + $0x118] sm:$0xff]
    %v1189 = vld [vmem:[#allocation2 + $0x120] sm:$0xff]
    %v1190 = vld [vmem:[#allocation2 + $0x128] sm:$0xff]
    %v1191 = vld [vmem:[#allocation2 + $0x130] sm:$0xff]
    %v1192 = vld [vmem:[#allocation2 + $0x138] sm:$0xff]
    %v1193 = vld [vmem:[#allocation2 + $0x140] sm:$0xff]
    %v1194 = vld [vmem:[#allocation2 + $0x148] sm:$0xff]
    %v1195 = vld [vmem:[#allocation2 + $0x150] sm:$0xff]
    %v1196 = vld [vmem:[#allocation2 + $0x158] sm:$0xff]
    %v1197 = vld [vmem:[#allocation2 + $0x160] sm:$0xff]
    %v1198 = vld [vmem:[#allocation2 + $0x168] sm:$0xff]
    %v1199 = vld [vmem:[#allocation2 + $0x170] sm:$0xff]
    %v1200 = vld [vmem:[#allocation2 + $0x178] sm:$0xff]
    %v1201 = vld [vmem:[#allocation2 + $0x180] sm:$0xff]
    %v1202 = vld [vmem:[#allocation2 + $0x188] sm:$0xff]
    %v1203 = vld [vmem:[#allocation2 + $0x190] sm:$0xff]
    %v1204 = vld [vmem:[#allocation2 + $0x198] sm:$0xff]
    %v1205 = vld [vmem:[#allocation2 + $0x1a0] sm:$0xff]
    %v1206 = vld [vmem:[#allocation2 + $0x1a8] sm:$0xff]
    %v1207 = vld [vmem:[#allocation2 + $0x1b0] sm:$0xff]
    %v1208 = vld [vmem:[#allocation2 + $0x1b8] sm:$0xff]
    %v1209 = vld [vmem:[#allocation2 + $0x1c0] sm:$0xff]
    %v1210 = vld [vmem:[#allocation2 + $0x1c8] sm:$0xff]
    %v1211 = vld [vmem:[#allocation2 + $0x1d0] sm:$0xff]
    %v1212 = vld [vmem:[#allocation2 + $0x1d8] sm:$0xff]
    %v1213 = vld [vmem:[#allocation2 + $0x1e0] sm:$0xff]
    %v1214 = vld [vmem:[#allocation2 + $0x1e8] sm:$0xff]
    %v1215 = vld [vmem:[#allocation2 + $0x1f0] sm:$0xff]
    %v1216 = vld [vmem:[#allocation2 + $0x1f8] sm:$0xff]
    %v1217 = vld [vmem:[%s2] sm:$0x1]
    %v1219 = vperm.slane %v1217, 0
    %v1221 = vmul.f32 %v1153, %v1219
    %v1222 = vmul.f32 %v1154, %v1219
    %v1223 = vmul.f32 %v1155, %v1219
    %v1224 = vmul.f32 %v1156, %v1219
    %v1225 = vmul.f32 %v1157, %v1219
    %v1226 = vmul.f32 %v1158, %v1219
    %v1227 = vmul.f32 %v1159, %v1219
    %v1228 = vmul.f32 %v1160, %v1219
    %v1229 = vmul.f32 %v1161, %v1219
    %v1230 = vmul.f32 %v1162, %v1219
    %v1231 = vmul.f32 %v1163, %v1219
    %v1232 = vmul.f32 %v1164, %v1219
    %v1233 = vmul.f32 %v1165, %v1219
    %v1234 = vmul.f32 %v1166, %v1219
    %v1235 = vmul.f32 %v1167, %v1219
    %v1236 = vmul.f32 %v1168, %v1219
    %v1237 = vmul.f32 %v1169, %v1219
    %v1238 = vmul.f32 %v1170, %v1219
    %v1239 = vmul.f32 %v1171, %v1219
    %v1240 = vmul.f32 %v1172, %v1219
    %v1241 = vmul.f32 %v1173, %v1219
    %v1242 = vmul.f32 %v1174, %v1219
    %v1243 = vmul.f32 %v1175, %v1219
    %v1244 = vmul.f32 %v1176, %v1219
    %v1245 = vmul.f32 %v1177, %v1219
    %v1246 = vmul.f32 %v1178, %v1219
    %v1247 = vmul.f32 %v1179, %v1219
    %v1248 = vmul.f32 %v1180, %v1219
    %v1249 = vmul.f32 %v1181, %v1219
    %v1250 = vmul.f32 %v1182, %v1219
    %v1251 = vmul.f32 %v1183, %v1219
    %v1252 = vmul.f32 %v1184, %v1219
    %v1253 = vmul.f32 %v1185, %v1219
    %v1254 = vmul.f32 %v1186, %v1219
    %v1255 = vmul.f32 %v1187, %v1219
    %v1256 = vmul.f32 %v1188, %v1219
    %v1257 = vmul.f32 %v1189, %v1219
    %v1258 = vmul.f32 %v1190, %v1219
    %v1259 = vmul.f32 %v1191, %v1219
    %v1260 = vmul.f32 %v1192, %v1219
    %v1261 = vmul.f32 %v1193, %v1219
    %v1262 = vmul.f32 %v1194, %v1219
    %v1263 = vmul.f32 %v1195, %v1219
    %v1264 = vmul.f32 %v1196, %v1219
    %v1265 = vmul.f32 %v1197, %v1219
    %v1266 = vmul.f32 %v1198, %v1219
    %v1267 = vmul.f32 %v1199, %v1219
    %v1268 = vmul.f32 %v1200, %v1219
    %v1269 = vmul.f32 %v1201, %v1219
    %v1270 = vmul.f32 %v1202, %v1219
    %v1271 = vmul.f32 %v1203, %v1219
    %v1272 = vmul.f32 %v1204, %v1219
    %v1273 = vmul.f32 %v1205, %v1219
    %v1274 = vmul.f32 %v1206, %v1219
    %v1275 = vmul.f32 %v1207, %v1219
    %v1276 = vmul.f32 %v1208, %v1219
    %v1277 = vmul.f32 %v1209, %v1219
    %v1278 = vmul.f32 %v1210, %v1219
    %v1279 = vmul.f32 %v1211, %v1219
    %v1280 = vmul.f32 %v1212, %v1219
    %v1281 = vmul.f32 %v1213, %v1219
    %v1282 = vmul.f32 %v1214, %v1219
    %v1283 = vmul.f32 %v1215, %v1219
    %v1284 = vmul.f32 %v1216, %v1219
    %v1285 = vld [vmem:[%s3] sm:$0x1]
    %v1287 = vperm.slane %v1285, 0
    %v1289 = vadd.f32 %v1221, %v1287
    %v1290 = vadd.f32 %v1222, %v1287
    %v1291 = vadd.f32 %v1223, %v1287
    %v1292 = vadd.f32 %v1224, %v1287
    %v1293 = vadd.f32 %v1225, %v1287
    %v1294 = vadd.f32 %v1226, %v1287
    %v1295 = vadd.f32 %v1227, %v1287
    %v1296 = vadd.f32 %v1228, %v1287
    %v1297 = vadd.f32 %v1229, %v1287
    %v1298 = vadd.f32 %v1230, %v1287
    %v1299 = vadd.f32 %v1231, %v1287
    %v1300 = vadd.f32 %v1232, %v1287
    %v1301 = vadd.f32 %v1233, %v1287
    %v1302 = vadd.f32 %v1234, %v1287
    %v1303 = vadd.f32 %v1235, %v1287
    %v1304 = vadd.f32 %v1236, %v1287
    %v1305 = vadd.f32 %v1237, %v1287
    %v1306 = vadd.f32 %v1238, %v1287
    %v1307 = vadd.f32 %v1239, %v1287
    %v1308 = vadd.f32 %v1240, %v1287
    %v1309 = vadd.f32 %v1241, %v1287
    %v1310 = vadd.f32 %v1242, %v1287
    %v1311 = vadd.f32 %v1243, %v1287
    %v1312 = vadd.f32 %v1244, %v1287
    %v1313 = vadd.f32 %v1245, %v1287
    %v1314 = vadd.f32 %v1246, %v1287
    %v1315 = vadd.f32 %v1247, %v1287
    %v1316 = vadd.f32 %v1248, %v1287
    %v1317 = vadd.f32 %v1249, %v1287
    %v1318 = vadd.f32 %v1250, %v1287
    %v1319 = vadd.f32 %v1251, %v1287
    %v1320 = vadd.f32 %v1252, %v1287
    %v1321 = vadd.f32 %v1253, %v1287
    %v1322 = vadd.f32 %v1254, %v1287
    %v1323 = vadd.f32 %v1255, %v1287
    %v1324 = vadd.f32 %v1256, %v1287
    %v1325 = vadd.f32 %v1257, %v1287
    %v1326 = vadd.f32 %v1258, %v1287
    %v1327 = vadd.f32 %v1259, %v1287
    %v1328 = vadd.f32 %v1260, %v1287
    %v1329 = vadd.f32 %v1261, %v1287
    %v1330 = vadd.f32 %v1262, %v1287
    %v1331 = vadd.f32 %v1263, %v1287
    %v1332 = vadd.f32 %v1264, %v1287
    %v1333 = vadd.f32 %v1265, %v1287
    %v1334 = vadd.f32 %v1266, %v1287
    %v1335 = vadd.f32 %v1267, %v1287
    %v1336 = vadd.f32 %v1268, %v1287
    %v1337 = vadd.f32 %v1269, %v1287
    %v1338 = vadd.f32 %v1270, %v1287
    %v1339 = vadd.f32 %v1271, %v1287
    %v1340 = vadd.f32 %v1272, %v1287
    %v1341 = vadd.f32 %v1273, %v1287
    %v1342 = vadd.f32 %v1274, %v1287
    %v1343 = vadd.f32 %v1275, %v1287
    %v1344 = vadd.f32 %v1276, %v1287
    %v1345 = vadd.f32 %v1277, %v1287
    %v1346 = vadd.f32 %v1278, %v1287
    %v1347 = vadd.f32 %v1279, %v1287
    %v1348 = vadd.f32 %v1280, %v1287
    %v1349 = vadd.f32 %v1281, %v1287
    %v1350 = vadd.f32 %v1282, %v1287
    %v1351 = vadd.f32 %v1283, %v1287
    %v1352 = vadd.f32 %v1284, %v1287
    %v1353 = vmax.f32 %v1289, 0.0
    %v1354 = vmax.f32 %v1290, 0.0
    %v1355 = vmax.f32 %v1291, 0.0
    %v1356 = vmax.f32 %v1292, 0.0
    %v1357 = vmax.f32 %v1293, 0.0
    %v1358 = vmax.f32 %v1294, 0.0
    %v1359 = vmax.f32 %v1295, 0.0
    %v1360 = vmax.f32 %v1296, 0.0
    %v1361 = vmax.f32 %v1297, 0.0
    %v1362 = vmax.f32 %v1298, 0.0
    %v1363 = vmax.f32 %v1299, 0.0
    %v1364 = vmax.f32 %v1300, 0.0
    %v1365 = vmax.f32 %v1301, 0.0
    %v1366 = vmax.f32 %v1302, 0.0
    %v1367 = vmax.f32 %v1303, 0.0
    %v1368 = vmax.f32 %v1304, 0.0
    %v1369 = vmax.f32 %v1305, 0.0
    %v1370 = vmax.f32 %v1306, 0.0
    %v1371 = vmax.f32 %v1307, 0.0
    %v1372 = vmax.f32 %v1308, 0.0
    %v1373 = vmax.f32 %v1309, 0.0
    %v1374 = vmax.f32 %v1310, 0.0
    %v1375 = vmax.f32 %v1311, 0.0
    %v1376 = vmax.f32 %v1312, 0.0
    %v1377 = vmax.f32 %v1313, 0.0
    %v1378 = vmax.f32 %v1314, 0.0
    %v1379 = vmax.f32 %v1315, 0.0
    %v1380 = vmax.f32 %v1316, 0.0
    %v1381 = vmax.f32 %v1317, 0.0
    %v1382 = vmax.f32 %v1318, 0.0
    %v1383 = vmax.f32 %v1319, 0.0
    %v1384 = vmax.f32 %v1320, 0.0
    %v1385 = vmax.f32 %v1321, 0.0
    %v1386 = vmax.f32 %v1322, 0.0
    %v1387 = vmax.f32 %v1323, 0.0
    %v1388 = vmax.f32 %v1324, 0.0
    %v1389 = vmax.f32 %v1325, 0.0
    %v1390 = vmax.f32 %v1326, 0.0
    %v1391 = vmax.f32 %v1327, 0.0
    %v1392 = vmax.f32 %v1328, 0.0
    %v1393 = vmax.f32 %v1329, 0.0
    %v1394 = vmax.f32 %v1330, 0.0
    %v1395 = vmax.f32 %v1331, 0.0
    %v1396 = vmax.f32 %v1332, 0.0
    %v1397 = vmax.f32 %v1333, 0.0
    %v1398 = vmax.f32 %v1334, 0.0
    %v1399 = vmax.f32 %v1335, 0.0
    %v1400 = vmax.f32 %v1336, 0.0
    %v1401 = vmax.f32 %v1337, 0.0
    %v1402 = vmax.f32 %v1338, 0.0
    %v1403 = vmax.f32 %v1339, 0.0
    %v1404 = vmax.f32 %v1340, 0.0
    %v1405 = vmax.f32 %v1341, 0.0
    %v1406 = vmax.f32 %v1342, 0.0
    %v1407 = vmax.f32 %v1343, 0.0
    %v1408 = vmax.f32 %v1344, 0.0
    %v1409 = vmax.f32 %v1345, 0.0
    %v1410 = vmax.f32 %v1346, 0.0
    %v1411 = vmax.f32 %v1347, 0.0
    %v1412 = vmax.f32 %v1348, 0.0
    %v1413 = vmax.f32 %v1349, 0.0
    %v1414 = vmax.f32 %v1350, 0.0
    %v1415 = vmax.f32 %v1351, 0.0
    %v1416 = vmax.f32 %v1352, 0.0
    %v1417 = vpack.c.bf16 %v1353, %v1353
    %v1418 = vpack.c.bf16 %v1354, %v1354
    %v1419 = vpack.c.bf16 %v1355, %v1355
    %v1420 = vpack.c.bf16 %v1356, %v1356
    %v1421 = vpack.c.bf16 %v1357, %v1357
    %v1422 = vpack.c.bf16 %v1358, %v1358
    %v1423 = vpack.c.bf16 %v1359, %v1359
    %v1424 = vpack.c.bf16 %v1360, %v1360
    %v1425 = vpack.c.bf16 %v1361, %v1361
    %v1426 = vpack.c.bf16 %v1362, %v1362
    %v1427 = vpack.c.bf16 %v1363, %v1363
    %v1428 = vpack.c.bf16 %v1364, %v1364
    %v1429 = vpack.c.bf16 %v1365, %v1365
    %v1430 = vpack.c.bf16 %v1366, %v1366
    %v1431 = vpack.c.bf16 %v1367, %v1367
    %v1432 = vpack.c.bf16 %v1368, %v1368
    %v1433 = vpack.c.bf16 %v1369, %v1369
    %v1434 = vpack.c.bf16 %v1370, %v1370
    %v1435 = vpack.c.bf16 %v1371, %v1371
    %v1436 = vpack.c.bf16 %v1372, %v1372
    %v1437 = vpack.c.bf16 %v1373, %v1373
    %v1438 = vpack.c.bf16 %v1374, %v1374
    %v1439 = vpack.c.bf16 %v1375, %v1375
    %v1440 = vpack.c.bf16 %v1376, %v1376
    %v1441 = vpack.c.bf16 %v1377, %v1377
    %v1442 = vpack.c.bf16 %v1378, %v1378
    %v1443 = vpack.c.bf16 %v1379, %v1379
    %v1444 = vpack.c.bf16 %v1380, %v1380
    %v1445 = vpack.c.bf16 %v1381, %v1381
    %v1446 = vpack.c.bf16 %v1382, %v1382
    %v1447 = vpack.c.bf16 %v1383, %v1383
    %v1448 = vpack.c.bf16 %v1384, %v1384
    %v1449 = vpack.c.bf16 %v1385, %v1385
    %v1450 = vpack.c.bf16 %v1386, %v1386
    %v1451 = vpack.c.bf16 %v1387, %v1387
    %v1452 = vpack.c.bf16 %v1388, %v1388
    %v1453 = vpack.c.bf16 %v1389, %v1389
    %v1454 = vpack.c.bf16 %v1390, %v1390
    %v1455 = vpack.c.bf16 %v1391, %v1391
    %v1456 = vpack.c.bf16 %v1392, %v1392
    %v1457 = vpack.c.bf16 %v1393, %v1393
    %v1458 = vpack.c.bf16 %v1394, %v1394
    %v1459 = vpack.c.bf16 %v1395, %v1395
    %v1460 = vpack.c.bf16 %v1396, %v1396
    %v1461 = vpack.c.bf16 %v1397, %v1397
    %v1462 = vpack.c.bf16 %v1398, %v1398
    %v1463 = vpack.c.bf16 %v1399, %v1399
    %v1464 = vpack.c.bf16 %v1400, %v1400
    %v1465 = vpack.c.bf16 %v1401, %v1401
    %v1466 = vpack.c.bf16 %v1402, %v1402
    %v1467 = vpack.c.bf16 %v1403, %v1403
    %v1468 = vpack.c.bf16 %v1404, %v1404
    %v1469 = vpack.c.bf16 %v1405, %v1405
    %v1470 = vpack.c.bf16 %v1406, %v1406
    %v1471 = vpack.c.bf16 %v1407, %v1407
    %v1472 = vpack.c.bf16 %v1408, %v1408
    %v1473 = vpack.c.bf16 %v1409, %v1409
    %v1474 = vpack.c.bf16 %v1410, %v1410
    %v1475 = vpack.c.bf16 %v1411, %v1411
    %v1476 = vpack.c.bf16 %v1412, %v1412
    %v1477 = vpack.c.bf16 %v1413, %v1413
    %v1478 = vpack.c.bf16 %v1414, %v1414
    %v1479 = vpack.c.bf16 %v1415, %v1415
    %v1480 = vpack.c.bf16 %v1416, %v1416
    %vm1481 = vcmask 125952
    %1482 = vst.msk [vmem:[%s4] sm:$0xf] %vm1481, %v1417
    %1483 = vst.msk [vmem:[%s4 + $0x4] sm:$0xf] %vm1481, %v1418
    %1484 = vst.msk [vmem:[%s4 + $0x8] sm:$0xf] %vm1481, %v1419
    %1485 = vst.msk [vmem:[%s4 + $0xc] sm:$0xf] %vm1481, %v1420
    %1486 = vst.msk [vmem:[%s4 + $0x10] sm:$0xf] %vm1481, %v1421
    %1487 = vst.msk [vmem:[%s4 + $0x14] sm:$0xf] %vm1481, %v1422
    %1488 = vst.msk [vmem:[%s4 + $0x18] sm:$0xf] %vm1481, %v1423
    %1489 = vst.msk [vmem:[%s4 + $0x1c] sm:$0xf] %vm1481, %v1424
    %1490 = vst.msk [vmem:[%s4 + $0x20] sm:$0xf] %vm1481, %v1425
    %1491 = vst.msk [vmem:[%s4 + $0x24] sm:$0xf] %vm1481, %v1426
    %1492 = vst.msk [vmem:[%s4 + $0x28] sm:$0xf] %vm1481, %v1427
    %1493 = vst.msk [vmem:[%s4 + $0x2c] sm:$0xf] %vm1481, %v1428
    %1494 = vst.msk [vmem:[%s4 + $0x30] sm:$0xf] %vm1481, %v1429
    %1495 = vst.msk [vmem:[%s4 + $0x34] sm:$0xf] %vm1481, %v1430
    %1496 = vst.msk [vmem:[%s4 + $0x38] sm:$0xf] %vm1481, %v1431
    %1497 = vst.msk [vmem:[%s4 + $0x3c] sm:$0xf] %vm1481, %v1432
    %1498 = vst.msk [vmem:[%s4 + $0x40] sm:$0xf] %vm1481, %v1433
    %1499 = vst.msk [vmem:[%s4 + $0x44] sm:$0xf] %vm1481, %v1434
    %1500 = vst.msk [vmem:[%s4 + $0x48] sm:$0xf] %vm1481, %v1435
    %1501 = vst.msk [vmem:[%s4 + $0x4c] sm:$0xf] %vm1481, %v1436
    %1502 = vst.msk [vmem:[%s4 + $0x50] sm:$0xf] %vm1481, %v1437
    %1503 = vst.msk [vmem:[%s4 + $0x54] sm:$0xf] %vm1481, %v1438
    %1504 = vst.msk [vmem:[%s4 + $0x58] sm:$0xf] %vm1481, %v1439
    %1505 = vst.msk [vmem:[%s4 + $0x5c] sm:$0xf] %vm1481, %v1440
    %1506 = vst.msk [vmem:[%s4 + $0x60] sm:$0xf] %vm1481, %v1441
    %1507 = vst.msk [vmem:[%s4 + $0x64] sm:$0xf] %vm1481, %v1442
    %1508 = vst.msk [vmem:[%s4 + $0x68] sm:$0xf] %vm1481, %v1443
    %1509 = vst.msk [vmem:[%s4 + $0x6c] sm:$0xf] %vm1481, %v1444
    %1510 = vst.msk [vmem:[%s4 + $0x70] sm:$0xf] %vm1481, %v1445
    %1511 = vst.msk [vmem:[%s4 + $0x74] sm:$0xf] %vm1481, %v1446
    %1512 = vst.msk [vmem:[%s4 + $0x78] sm:$0xf] %vm1481, %v1447
    %1513 = vst.msk [vmem:[%s4 + $0x7c] sm:$0xf] %vm1481, %v1448
    %1514 = vst.msk [vmem:[%s4 + $0x80] sm:$0xf] %vm1481, %v1449
    %1515 = vst.msk [vmem:[%s4 + $0x84] sm:$0xf] %vm1481, %v1450
    %1516 = vst.msk [vmem:[%s4 + $0x88] sm:$0xf] %vm1481, %v1451
    %1517 = vst.msk [vmem:[%s4 + $0x8c] sm:$0xf] %vm1481, %v1452
    %1518 = vst.msk [vmem:[%s4 + $0x90] sm:$0xf] %vm1481, %v1453
    %1519 = vst.msk [vmem:[%s4 + $0x94] sm:$0xf] %vm1481, %v1454
    %1520 = vst.msk [vmem:[%s4 + $0x98] sm:$0xf] %vm1481, %v1455
    %1521 = vst.msk [vmem:[%s4 + $0x9c] sm:$0xf] %vm1481, %v1456
    %1522 = vst.msk [vmem:[%s4 + $0xa0] sm:$0xf] %vm1481, %v1457
    %1523 = vst.msk [vmem:[%s4 + $0xa4] sm:$0xf] %vm1481, %v1458
    %1524 = vst.msk [vmem:[%s4 + $0xa8] sm:$0xf] %vm1481, %v1459
    %1525 = vst.msk [vmem:[%s4 + $0xac] sm:$0xf] %vm1481, %v1460
    %1526 = vst.msk [vmem:[%s4 + $0xb0] sm:$0xf] %vm1481, %v1461
    %1527 = vst.msk [vmem:[%s4 + $0xb4] sm:$0xf] %vm1481, %v1462
    %1528 = vst.msk [vmem:[%s4 + $0xb8] sm:$0xf] %vm1481, %v1463
    %1529 = vst.msk [vmem:[%s4 + $0xbc] sm:$0xf] %vm1481, %v1464
    %1530 = vst.msk [vmem:[%s4 + $0xc0] sm:$0xf] %vm1481, %v1465
    %1531 = vst.msk [vmem:[%s4 + $0xc4] sm:$0xf] %vm1481, %v1466
    %1532 = vst.msk [vmem:[%s4 + $0xc8] sm:$0xf] %vm1481, %v1467
    %1533 = vst.msk [vmem:[%s4 + $0xcc] sm:$0xf] %vm1481, %v1468
    %1534 = vst.msk [vmem:[%s4 + $0xd0] sm:$0xf] %vm1481, %v1469
    %1535 = vst.msk [vmem:[%s4 + $0xd4] sm:$0xf] %vm1481, %v1470
    %1536 = vst.msk [vmem:[%s4 + $0xd8] sm:$0xf] %vm1481, %v1471
    %1537 = vst.msk [vmem:[%s4 + $0xdc] sm:$0xf] %vm1481, %v1472
    %1538 = vst.msk [vmem:[%s4 + $0xe0] sm:$0xf] %vm1481, %v1473
    %1539 = vst.msk [vmem:[%s4 + $0xe4] sm:$0xf] %vm1481, %v1474
    %1540 = vst.msk [vmem:[%s4 + $0xe8] sm:$0xf] %vm1481, %v1475
    %1541 = vst.msk [vmem:[%s4 + $0xec] sm:$0xf] %vm1481, %v1476
    %1542 = vst.msk [vmem:[%s4 + $0xf0] sm:$0xf] %vm1481, %v1477
    %1543 = vst.msk [vmem:[%s4 + $0xf4] sm:$0xf] %vm1481, %v1478
    %1544 = vst.msk [vmem:[%s4 + $0xf8] sm:$0xf] %vm1481, %v1479
    %1545 = vst.msk [vmem:[%s4 + $0xfc] sm:$0xf] %vm1481, %v1480
  $region25: #{_lambda_.13} parent=0 // pred_fallthru
    _
  // Predicated region
  $region26: #{_lambda_.13} parent=0 // pred_check
    _
  $region27: #{_lambda_.13} parent=0 // pred_check_branch
    %1547 = sbr.rel (0) target = $region29
  $region28: #{_lambda_.13} parent=0 // pred_region
    _
  $region29: #{_lambda_.13} parent=0 // pred_fallthru
    _
  // Predicated region
  $region30: #{_lambda_.13} parent=0 // pred_check
    _
  $region31: #{_lambda_.13} parent=0 // pred_check_branch
    %1549 = sbr.rel (0) target = $region33
  $region32: #{_lambda_.13} parent=0 // pred_region
    _
  $region33: #{_lambda_.13} parent=0 // pred_fallthru
    _

// kernel: _lambda_.19
$region0: #{_lambda_.19}
  #allocation0 [shape = 'u32[]', space=smem, size = 0x4, offset = 0x4, fixed_abs, tag = 'smem constant byte address 0x4 - core index']
  #allocation1 [shape = 'u32[72,128]{1,0:T(1,128)}', space=vmem, size = 0x9000, scoped, tag = 'internal scratch']
  #allocation2 [shape = 'f32[128,16]{1,0:T(8,128)}', space=vmem, size = 0x10000, scoped, tag = 'scratch operand']
  %s0 = inlined_call_operand.vmem [shape: bf16[128,32], index: 0, kind: input, shape index: {}]
  %s1 = inlined_call_operand.vmem [shape: bf16[32,16], index: 1, kind: input, shape index: {}]
  %s2 = inlined_call_operand.vmem [shape: f32[1,32], index: 2, kind: input, shape index: {}]
  %s3 = inlined_call_operand.vmem [shape: f32[1,32], index: 3, kind: input, shape index: {}]
  %s4 = inlined_call_operand.vmem [shape: bf16[128,16], index: 4, kind: output, shape index: {}]
  %s5 = sld [smem:[#allocation0]]
  $region34: #{_lambda_.19} parent=0
    _
  %s7 = ssub.s32 1, %s5
  %s8 = scalar_select 0, %s7, %s5
  // Predicated region
  $region2: #{_lambda_.19} parent=0 // pred_check
    _
  $region3: #{_lambda_.19} parent=0 // pred_check_branch
    %10 = sbr.rel (0) target = $region5
  $region4: #{_lambda_.19} parent=0 // pred_region
    _
  $region5: #{_lambda_.19} parent=0 // pred_fallthru
    _
  // Predicated region
  $region6: #{_lambda_.19} parent=0 // pred_check
    _
  $region7: #{_lambda_.19} parent=0 // pred_check_branch
    %12 = sbr.rel (0) target = $region9
  $region8: #{_lambda_.19} parent=0 // pred_region
    _
  $region9: #{_lambda_.19} parent=0 // pred_fallthru
    _
  // Predicated region
  $region10: #{_lambda_.19} parent=0 // pred_check
    _
  $region11: #{_lambda_.19} parent=0 // pred_check_branch
    %14 = sbr.rel (0) target = $region13
  $region12: #{_lambda_.19} parent=0 // pred_region
    _
  $region13: #{_lambda_.19} parent=0 // pred_fallthru
    _
  // Predicated region
  $region14: #{_lambda_.19} parent=0 // pred_check
    _
  $region15: #{_lambda_.19} parent=0 // pred_check_branch
    %16 = sbr.rel (0) target = $region17
  $region16: #{_lambda_.19} parent=0 // pred_region
    _
  $region17: #{_lambda_.19} parent=0 // pred_fallthru
    _
  %p18 = scmp.eq.s32.totalorder 0, 0
  // Predicated region
  $region18: #{_lambda_.19} parent=0 // pred_check
    %p19 = pneg %p18
  $region19: #{_lambda_.19} parent=0 // pred_check_branch
    %21 = sbr.rel (%p19) target = $region21
  $region20: #{_lambda_.19} parent=0 // pred_region
    %vm22 = vcmask 130048
    %23 = vst.msk [vmem:[#allocation2] sm:$0xff] %vm22, 0.0
    %24 = vst.msk [vmem:[#allocation2 + $0x8] sm:$0xff] %vm22, 0.0
    %25 = vst.msk [vmem:[#allocation2 + $0x10] sm:$0xff] %vm22, 0.0
    %26 = vst.msk [vmem:[#allocation2 + $0x18] sm:$0xff] %vm22, 0.0
    %27 = vst.msk [vmem:[#allocation2 + $0x20] sm:$0xff] %vm22, 0.0
    %28 = vst.msk [vmem:[#allocation2 + $0x28] sm:$0xff] %vm22, 0.0
    %29 = vst.msk [vmem:[#allocation2 + $0x30] sm:$0xff] %vm22, 0.0
    %30 = vst.msk [vmem:[#allocation2 + $0x38] sm:$0xff] %vm22, 0.0
    %31 = vst.msk [vmem:[#allocation2 + $0x40] sm:$0xff] %vm22, 0.0
    %32 = vst.msk [vmem:[#allocation2 + $0x48] sm:$0xff] %vm22, 0.0
    %33 = vst.msk [vmem:[#allocation2 + $0x50] sm:$0xff] %vm22, 0.0
    %34 = vst.msk [vmem:[#allocation2 + $0x58] sm:$0xff] %vm22, 0.0
    %35 = vst.msk [vmem:[#allocation2 + $0x60] sm:$0xff] %vm22, 0.0
    %36 = vst.msk [vmem:[#allocation2 + $0x68] sm:$0xff] %vm22, 0.0
    %37 = vst.msk [vmem:[#allocation2 + $0x70] sm:$0xff] %vm22, 0.0
    %38 = vst.msk [vmem:[#allocation2 + $0x78] sm:$0xff] %vm22, 0.0
  $region21: #{_lambda_.19} parent=0 // pred_fallthru
    _
  %v39 = vld [vmem:[%s0] sm:$0xf]
  %v40 = vld [vmem:[%s0 + $0x4] sm:$0xf]
  %v41 = vld [vmem:[%s0 + $0x8] sm:$0xf]
  %v42 = vld [vmem:[%s0 + $0xc] sm:$0xf]
  %v43 = vld [vmem:[%s0 + $0x10] sm:$0xf]
  %v44 = vld [vmem:[%s0 + $0x14] sm:$0xf]
  %v45 = vld [vmem:[%s0 + $0x18] sm:$0xf]
  %v46 = vld [vmem:[%s0 + $0x1c] sm:$0xf]
  %v47 = vld [vmem:[%s0 + $0x20] sm:$0xf]
  %v48 = vld [vmem:[%s0 + $0x24] sm:$0xf]
  %v49 = vld [vmem:[%s0 + $0x28] sm:$0xf]
  %v50 = vld [vmem:[%s0 + $0x2c] sm:$0xf]
  %v51 = vld [vmem:[%s0 + $0x30] sm:$0xf]
  %v52 = vld [vmem:[%s0 + $0x34] sm:$0xf]
  %v53 = vld [vmem:[%s0 + $0x38] sm:$0xf]
  %v54 = vld [vmem:[%s0 + $0x3c] sm:$0xf]
  %v55 = vunpack.c.l.bf16 %v39
  %v56 = vunpack.c.l.bf16 %v40
  %v57 = vunpack.c.l.bf16 %v41
  %v58 = vunpack.c.l.bf16 %v42
  %v59 = vunpack.c.l.bf16 %v43
  %v60 = vunpack.c.l.bf16 %v44
  %v61 = vunpack.c.l.bf16 %v45
  %v62 = vunpack.c.l.bf16 %v46
  %v63 = vunpack.c.l.bf16 %v47
  %v64 = vunpack.c.l.bf16 %v48
  %v65 = vunpack.c.l.bf16 %v49
  %v66 = vunpack.c.l.bf16 %v50
  %v67 = vunpack.c.l.bf16 %v51
  %v68 = vunpack.c.l.bf16 %v52
  %v69 = vunpack.c.l.bf16 %v53
  %v70 = vunpack.c.l.bf16 %v54
  %v71 = vld [vmem:[%s2] sm:$0x1]
  %v73 = vperm.slane %v71, 0
  %v75 = vmul.f32 %v55, %v73
  %v76 = vmul.f32 %v56, %v73
  %v77 = vmul.f32 %v57, %v73
  %v78 = vmul.f32 %v58, %v73
  %v79 = vmul.f32 %v59, %v73
  %v80 = vmul.f32 %v60, %v73
  %v81 = vmul.f32 %v61, %v73
  %v82 = vmul.f32 %v62, %v73
  %v83 = vmul.f32 %v63, %v73
  %v84 = vmul.f32 %v64, %v73
  %v85 = vmul.f32 %v65, %v73
  %v86 = vmul.f32 %v66, %v73
  %v87 = vmul.f32 %v67, %v73
  %v88 = vmul.f32 %v68, %v73
  %v89 = vmul.f32 %v69, %v73
  %v90 = vmul.f32 %v70, %v73
  %v91 = vld [vmem:[%s3] sm:$0x1]
  %v93 = vperm.slane %v91, 0
  %v95 = vadd.f32 %v75, %v93
  %v96 = vadd.f32 %v76, %v93
  %v97 = vadd.f32 %v77, %v93
  %v98 = vadd.f32 %v78, %v93
  %v99 = vadd.f32 %v79, %v93
  %v100 = vadd.f32 %v80, %v93
  %v101 = vadd.f32 %v81, %v93
  %v102 = vadd.f32 %v82, %v93
  %v103 = vadd.f32 %v83, %v93
  %v104 = vadd.f32 %v84, %v93
  %v105 = vadd.f32 %v85, %v93
  %v106 = vadd.f32 %v86, %v93
  %v107 = vadd.f32 %v87, %v93
  %v108 = vadd.f32 %v88, %v93
  %v109 = vadd.f32 %v89, %v93
  %v110 = vadd.f32 %v90, %v93
  %v111 = vmax.f32 %v95, 0.0
  %v112 = vmax.f32 %v96, 0.0
  %v113 = vmax.f32 %v97, 0.0
  %v114 = vmax.f32 %v98, 0.0
  %v115 = vmax.f32 %v99, 0.0
  %v116 = vmax.f32 %v100, 0.0
  %v117 = vmax.f32 %v101, 0.0
  %v118 = vmax.f32 %v102, 0.0
  %v119 = vmax.f32 %v103, 0.0
  %v120 = vmax.f32 %v104, 0.0
  %v121 = vmax.f32 %v105, 0.0
  %v122 = vmax.f32 %v106, 0.0
  %v123 = vmax.f32 %v107, 0.0
  %v124 = vmax.f32 %v108, 0.0
  %v125 = vmax.f32 %v109, 0.0
  %v126 = vmax.f32 %v110, 0.0
  %v127 = vpack.c.bf16 %v112, %v111
  %v128 = vpack.c.bf16 %v114, %v113
  %v129 = vpack.c.bf16 %v116, %v115
  %v130 = vpack.c.bf16 %v118, %v117
  %v131 = vpack.c.bf16 %v120, %v119
  %v132 = vpack.c.bf16 %v122, %v121
  %v133 = vpack.c.bf16 %v124, %v123
  %v134 = vpack.c.bf16 %v126, %v125
  %v135 = vld [vmem:[#allocation2] sm:$0xff]
  %v136 = vld [vmem:[#allocation2 + $0x8] sm:$0xff]
  %v137 = vld [vmem:[#allocation2 + $0x10] sm:$0xff]
  %v138 = vld [vmem:[#allocation2 + $0x18] sm:$0xff]
  %v139 = vld [vmem:[#allocation2 + $0x20] sm:$0xff]
  %v140 = vld [vmem:[#allocation2 + $0x28] sm:$0xff]
  %v141 = vld [vmem:[#allocation2 + $0x30] sm:$0xff]
  %v142 = vld [vmem:[#allocation2 + $0x38] sm:$0xff]
  %v143 = vld [vmem:[#allocation2 + $0x40] sm:$0xff]
  %v144 = vld [vmem:[#allocation2 + $0x48] sm:$0xff]
  %v145 = vld [vmem:[#allocation2 + $0x50] sm:$0xff]
  %v146 = vld [vmem:[#allocation2 + $0x58] sm:$0xff]
  %v147 = vld [vmem:[#allocation2 + $0x60] sm:$0xff]
  %v148 = vld [vmem:[#allocation2 + $0x68] sm:$0xff]
  %v149 = vld [vmem:[#allocation2 + $0x70] sm:$0xff]
  %v150 = vld [vmem:[#allocation2 + $0x78] sm:$0xff]
  %v151 = vld [vmem:[%s1] sm:$0xf]
  %v152 = vld [vmem:[%s1 + $0x4] sm:$0xf]
  %v153 = vld [vmem:[%s1 + $0x8] sm:$0xf]
  %v154 = vld [vmem:[%s1 + $0xc] sm:$0xf]
  %v159 = vunpack.c.l.b16 %v151
  %v160 = vunpack.c.l.b16 %v152
  %v161 = vunpack.c.l.b16 %v153
  %v162 = vunpack.c.l.b16 %v154
  %v163 = vpack.c.b16 %v160, %v159
  %v164 = vpack.c.b16 %v162, %v161
  %vm167 = vcmask 261120
  %v169 = vsel %vm167, %v127, 0
  %v172 = vsel %vm167, %v128, 0
  %v175 = vsel %vm167, %v129, 0
  %v178 = vsel %vm167, %v130, 0
  %v181 = vsel %vm167, %v131, 0
  %v184 = vsel %vm167, %v132, 0
  %v187 = vsel %vm167, %v133, 0
  %v190 = vsel %vm167, %v134, 0
  %192 = vmatpush.bf16.msra.mxu0 0
  %193 = vmatpush.bf16.msra.mxu0 0
  %194 = vmatpush.bf16.msra.mxu0 0
  %195 = vmatpush.bf16.msra.mxu0 0
  %196 = vmatpush.bf16.msra.mxu0 0
  %197 = vmatpush.bf16.msra.mxu0 0
  %198 = vmatpush.bf16.msra.mxu0 %v164
  %199 = vmatpush.bf16.msra.mxu0 %v163
  %200 = vmatmul.bf16.gmra.mxu0 %v169
  %v201 = vpop.f32.mrf.mxu0
  %v202 = vadd.f32 0.0, %v201
  %v203 = vpop.f32.mrf.mxu0
  %v204 = vadd.f32 0.0, %v203
  %205 = vmatmul.bf16.gmra.mxu0 %v172
  %v206 = vpop.f32.mrf.mxu0
  %v207 = vadd.f32 0.0, %v206
  %v208 = vpop.f32.mrf.mxu0
  %v209 = vadd.f32 0.0, %v208
  %210 = vmatmul.bf16.gmra.mxu0 %v175
  %v211 = vpop.f32.mrf.mxu0
  %v212 = vadd.f32 0.0, %v211
  %v213 = vpop.f32.mrf.mxu0
  %v214 = vadd.f32 0.0, %v213
  %215 = vmatmul.bf16.gmra.mxu0 %v178
  %v216 = vpop.f32.mrf.mxu0
  %v217 = vadd.f32 0.0, %v216
  %v218 = vpop.f32.mrf.mxu0
  %v219 = vadd.f32 0.0, %v218
  %220 = vmatmul.bf16.gmra.mxu0 %v181
  %v221 = vpop.f32.mrf.mxu0
  %v222 = vadd.f32 0.0, %v221
  %v223 = vpop.f32.mrf.mxu0
  %v224 = vadd.f32 0.0, %v223
  %225 = vmatmul.bf16.gmra.mxu0 %v184
  %v226 = vpop.f32.mrf.mxu0
  %v227 = vadd.f32 0.0, %v226
  %v228 = vpop.f32.mrf.mxu0
  %v229 = vadd.f32 0.0, %v228
  %230 = vmatmul.bf16.gmra.mxu0 %v187
  %v231 = vpop.f32.mrf.mxu0
  %v232 = vadd.f32 0.0, %v231
  %v233 = vpop.f32.mrf.mxu0
  %v234 = vadd.f32 0.0, %v233
  %235 = vmatmul.bf16.gmra.mxu0 %v190
  %v236 = vpop.f32.mrf.mxu0
  %v237 = vadd.f32 0.0, %v236
  %v238 = vpop.f32.mrf.mxu0
  %v239 = vadd.f32 0.0, %v238
  %240 = vdwg.mxu0
  %v241 = vadd.f32 %v135, %v202
  %v242 = vadd.f32 %v136, %v204
  %v243 = vadd.f32 %v137, %v207
  %v244 = vadd.f32 %v138, %v209
  %v245 = vadd.f32 %v139, %v212
  %v246 = vadd.f32 %v140, %v214
  %v247 = vadd.f32 %v141, %v217
  %v248 = vadd.f32 %v142, %v219
  %v249 = vadd.f32 %v143, %v222
  %v250 = vadd.f32 %v144, %v224
  %v251 = vadd.f32 %v145, %v227
  %v252 = vadd.f32 %v146, %v229
  %v253 = vadd.f32 %v147, %v232
  %v254 = vadd.f32 %v148, %v234
  %v255 = vadd.f32 %v149, %v237
  %v256 = vadd.f32 %v150, %v239
  %vm257 = vcmask 130048
  %258 = vst.msk [vmem:[#allocation2] sm:$0xff] %vm257, %v241
  %259 = vst.msk [vmem:[#allocation2 + $0x8] sm:$0xff] %vm257, %v242
  %260 = vst.msk [vmem:[#allocation2 + $0x10] sm:$0xff] %vm257, %v243
  %261 = vst.msk [vmem:[#allocation2 + $0x18] sm:$0xff] %vm257, %v244
  %262 = vst.msk [vmem:[#allocation2 + $0x20] sm:$0xff] %vm257, %v245
  %263 = vst.msk [vmem:[#allocation2 + $0x28] sm:$0xff] %vm257, %v246
  %264 = vst.msk [vmem:[#allocation2 + $0x30] sm:$0xff] %vm257, %v247
  %265 = vst.msk [vmem:[#allocation2 + $0x38] sm:$0xff] %vm257, %v248
  %266 = vst.msk [vmem:[#allocation2 + $0x40] sm:$0xff] %vm257, %v249
  %267 = vst.msk [vmem:[#allocation2 + $0x48] sm:$0xff] %vm257, %v250
  %268 = vst.msk [vmem:[#allocation2 + $0x50] sm:$0xff] %vm257, %v251
  %269 = vst.msk [vmem:[#allocation2 + $0x58] sm:$0xff] %vm257, %v252
  %270 = vst.msk [vmem:[#allocation2 + $0x60] sm:$0xff] %vm257, %v253
  %271 = vst.msk [vmem:[#allocation2 + $0x68] sm:$0xff] %vm257, %v254
  %272 = vst.msk [vmem:[#allocation2 + $0x70] sm:$0xff] %vm257, %v255
  %273 = vst.msk [vmem:[#allocation2 + $0x78] sm:$0xff] %vm257, %v256
  // Predicated region
  $region22: #{_lambda_.19} parent=0 // pred_check
    %p274 = pneg %p18
  $region23: #{_lambda_.19} parent=0 // pred_check_branch
    %276 = sbr.rel (%p274) target = $region25
  $region24: #{_lambda_.19} parent=0 // pred_region
    %v277 = vld [vmem:[#allocation2] sm:$0xff]
    %v278 = vld [vmem:[#allocation2 + $0x8] sm:$0xff]
    %v279 = vld [vmem:[#allocation2 + $0x10] sm:$0xff]
    %v280 = vld [vmem:[#allocation2 + $0x18] sm:$0xff]
    %v281 = vld [vmem:[#allocation2 + $0x20] sm:$0xff]
    %v282 = vld [vmem:[#allocation2 + $0x28] sm:$0xff]
    %v283 = vld [vmem:[#allocation2 + $0x30] sm:$0xff]
    %v284 = vld [vmem:[#allocation2 + $0x38] sm:$0xff]
    %v285 = vld [vmem:[#allocation2 + $0x40] sm:$0xff]
    %v286 = vld [vmem:[#allocation2 + $0x48] sm:$0xff]
    %v287 = vld [vmem:[#allocation2 + $0x50] sm:$0xff]
    %v288 = vld [vmem:[#allocation2 + $0x58] sm:$0xff]
    %v289 = vld [vmem:[#allocation2 + $0x60] sm:$0xff]
    %v290 = vld [vmem:[#allocation2 + $0x68] sm:$0xff]
    %v291 = vld [vmem:[#allocation2 + $0x70] sm:$0xff]
    %v292 = vld [vmem:[#allocation2 + $0x78] sm:$0xff]
    %v293 = vpack.c.bf16 %v277, %v277
    %v294 = vpack.c.bf16 %v278, %v278
    %v295 = vpack.c.bf16 %v279, %v279
    %v296 = vpack.c.bf16 %v280, %v280
    %v297 = vpack.c.bf16 %v281, %v281
    %v298 = vpack.c.bf16 %v282, %v282
    %v299 = vpack.c.bf16 %v283, %v283
    %v300 = vpack.c.bf16 %v284, %v284
    %v301 = vpack.c.bf16 %v285, %v285
    %v302 = vpack.c.bf16 %v286, %v286
    %v303 = vpack.c.bf16 %v287, %v287
    %v304 = vpack.c.bf16 %v288, %v288
    %v305 = vpack.c.bf16 %v289, %v289
    %v306 = vpack.c.bf16 %v290, %v290
    %v307 = vpack.c.bf16 %v291, %v291
    %v308 = vpack.c.bf16 %v292, %v292
    %vm309 = vcmask 125952
    %310 = vst.msk [vmem:[%s4] sm:$0xf] %vm309, %v293
    %311 = vst.msk [vmem:[%s4 + $0x4] sm:$0xf] %vm309, %v294
    %312 = vst.msk [vmem:[%s4 + $0x8] sm:$0xf] %vm309, %v295
    %313 = vst.msk [vmem:[%s4 + $0xc] sm:$0xf] %vm309, %v296
    %314 = vst.msk [vmem:[%s4 + $0x10] sm:$0xf] %vm309, %v297
    %315 = vst.msk [vmem:[%s4 + $0x14] sm:$0xf] %vm309, %v298
    %316 = vst.msk [vmem:[%s4 + $0x18] sm:$0xf] %vm309, %v299
    %317 = vst.msk [vmem:[%s4 + $0x1c] sm:$0xf] %vm309, %v300
    %318 = vst.msk [vmem:[%s4 + $0x20] sm:$0xf] %vm309, %v301
    %319 = vst.msk [vmem:[%s4 + $0x24] sm:$0xf] %vm309, %v302
    %320 = vst.msk [vmem:[%s4 + $0x28] sm:$0xf] %vm309, %v303
    %321 = vst.msk [vmem:[%s4 + $0x2c] sm:$0xf] %vm309, %v304
    %322 = vst.msk [vmem:[%s4 + $0x30] sm:$0xf] %vm309, %v305
    %323 = vst.msk [vmem:[%s4 + $0x34] sm:$0xf] %vm309, %v306
    %324 = vst.msk [vmem:[%s4 + $0x38] sm:$0xf] %vm309, %v307
    %325 = vst.msk [vmem:[%s4 + $0x3c] sm:$0xf] %vm309, %v308
  $region25: #{_lambda_.19} parent=0 // pred_fallthru
    _
  // Predicated region
  $region26: #{_lambda_.19} parent=0 // pred_check
    _
  $region27: #{_lambda_.19} parent=0 // pred_check_branch
    %327 = sbr.rel (0) target = $region29
  $region28: #{_lambda_.19} parent=0 // pred_region
    _
  $region29: #{_lambda_.19} parent=0 // pred_fallthru
    _
  // Predicated region
  $region30: #{_lambda_.19} parent=0 // pred_check
    _
  $region31: #{_lambda_.19} parent=0 // pred_check_branch
    %329 = sbr.rel (0) target = $region33
  $region32: #{_lambda_.19} parent=0 // pred_region
    _
  $region33: #{_lambda_.19} parent=0 // pred_fallthru
    _

// kernel: _lambda_.17
$region0: #{_lambda_.17}
  #allocation0 [shape = 'u32[]', space=smem, size = 0x4, offset = 0x4, fixed_abs, tag = 'smem constant byte address 0x4 - core index']
  #allocation1 [shape = 'u32[72,128]{1,0:T(1,128)}', space=vmem, size = 0x9000, scoped, tag = 'internal scratch']
  #allocation2 [shape = 'f32[128,32]{1,0:T(8,128)}', space=vmem, size = 0x10000, scoped, tag = 'scratch operand']
  %s0 = inlined_call_operand.vmem [shape: bf16[128,24], index: 0, kind: input, shape index: {}]
  %s1 = inlined_call_operand.vmem [shape: bf16[24,32], index: 1, kind: input, shape index: {}]
  %s2 = inlined_call_operand.vmem [shape: f32[1,24], index: 2, kind: input, shape index: {}]
  %s3 = inlined_call_operand.vmem [shape: f32[1,24], index: 3, kind: input, shape index: {}]
  %s4 = inlined_call_operand.vmem [shape: f32[1,32], index: 4, kind: input, shape index: {}]
  %s5 = inlined_call_operand.vmem [shape: f32[1,32], index: 5, kind: input, shape index: {}]
  %s6 = inlined_call_operand.vmem [shape: bf16[128,32], index: 6, kind: output, shape index: {}]
  %s7 = sld [smem:[#allocation0]]
  $region42: #{_lambda_.17} parent=0
    _
  %s9 = ssub.s32 1, %s7
  %s10 = scalar_select 0, %s9, %s7
  // Predicated region
  $region2: #{_lambda_.17} parent=0 // pred_check
    _
  $region3: #{_lambda_.17} parent=0 // pred_check_branch
    %12 = sbr.rel (0) target = $region5
  $region4: #{_lambda_.17} parent=0 // pred_region
    _
  $region5: #{_lambda_.17} parent=0 // pred_fallthru
    _
  // Predicated region
  $region6: #{_lambda_.17} parent=0 // pred_check
    _
  $region7: #{_lambda_.17} parent=0 // pred_check_branch
    %14 = sbr.rel (0) target = $region9
  $region8: #{_lambda_.17} parent=0 // pred_region
    _
  $region9: #{_lambda_.17} parent=0 // pred_fallthru
    _
  // Predicated region
  $region10: #{_lambda_.17} parent=0 // pred_check
    _
  $region11: #{_lambda_.17} parent=0 // pred_check_branch
    %16 = sbr.rel (0) target = $region13
  $region12: #{_lambda_.17} parent=0 // pred_region
    _
  $region13: #{_lambda_.17} parent=0 // pred_fallthru
    _
  // Predicated region
  $region14: #{_lambda_.17} parent=0 // pred_check
    _
  $region15: #{_lambda_.17} parent=0 // pred_check_branch
    %18 = sbr.rel (0) target = $region17
  $region16: #{_lambda_.17} parent=0 // pred_region
    _
  $region17: #{_lambda_.17} parent=0 // pred_fallthru
    _
  // Predicated region
  $region18: #{_lambda_.17} parent=0 // pred_check
    _
  $region19: #{_lambda_.17} parent=0 // pred_check_branch
    %20 = sbr.rel (0) target = $region21
  $region20: #{_lambda_.17} parent=0 // pred_region
    _
  $region21: #{_lambda_.17} parent=0 // pred_fallthru
    _
  // Predicated region
  $region22: #{_lambda_.17} parent=0 // pred_check
    _
  $region23: #{_lambda_.17} parent=0 // pred_check_branch
    %22 = sbr.rel (0) target = $region25
  $region24: #{_lambda_.17} parent=0 // pred_region
    _
  $region25: #{_lambda_.17} parent=0 // pred_fallthru
    _
  %p24 = scmp.eq.s32.totalorder 0, 0
  // Predicated region
  $region26: #{_lambda_.17} parent=0 // pred_check
    %p25 = pneg %p24
  $region27: #{_lambda_.17} parent=0 // pred_check_branch
    %27 = sbr.rel (%p25) target = $region29
  $region28: #{_lambda_.17} parent=0 // pred_region
    %vm28 = vcmask 261120
    %29 = vst.msk [vmem:[#allocation2] sm:$0xff] %vm28, 0.0
    %30 = vst.msk [vmem:[#allocation2 + $0x8] sm:$0xff] %vm28, 0.0
    %31 = vst.msk [vmem:[#allocation2 + $0x10] sm:$0xff] %vm28, 0.0
    %32 = vst.msk [vmem:[#allocation2 + $0x18] sm:$0xff] %vm28, 0.0
    %33 = vst.msk [vmem:[#allocation2 + $0x20] sm:$0xff] %vm28, 0.0
    %34 = vst.msk [vmem:[#allocation2 + $0x28] sm:$0xff] %vm28, 0.0
    %35 = vst.msk [vmem:[#allocation2 + $0x30] sm:$0xff] %vm28, 0.0
    %36 = vst.msk [vmem:[#allocation2 + $0x38] sm:$0xff] %vm28, 0.0
    %37 = vst.msk [vmem:[#allocation2 + $0x40] sm:$0xff] %vm28, 0.0
    %38 = vst.msk [vmem:[#allocation2 + $0x48] sm:$0xff] %vm28, 0.0
    %39 = vst.msk [vmem:[#allocation2 + $0x50] sm:$0xff] %vm28, 0.0
    %40 = vst.msk [vmem:[#allocation2 + $0x58] sm:$0xff] %vm28, 0.0
    %41 = vst.msk [vmem:[#allocation2 + $0x60] sm:$0xff] %vm28, 0.0
    %42 = vst.msk [vmem:[#allocation2 + $0x68] sm:$0xff] %vm28, 0.0
    %43 = vst.msk [vmem:[#allocation2 + $0x70] sm:$0xff] %vm28, 0.0
    %44 = vst.msk [vmem:[#allocation2 + $0x78] sm:$0xff] %vm28, 0.0
  $region29: #{_lambda_.17} parent=0 // pred_fallthru
    _
  %v45 = vld [vmem:[%s0] sm:$0xf]
  %v46 = vld [vmem:[%s0 + $0x4] sm:$0xf]
  %v47 = vld [vmem:[%s0 + $0x8] sm:$0xf]
  %v48 = vld [vmem:[%s0 + $0xc] sm:$0xf]
  %v49 = vld [vmem:[%s0 + $0x10] sm:$0xf]
  %v50 = vld [vmem:[%s0 + $0x14] sm:$0xf]
  %v51 = vld [vmem:[%s0 + $0x18] sm:$0xf]
  %v52 = vld [vmem:[%s0 + $0x1c] sm:$0xf]
  %v53 = vld [vmem:[%s0 + $0x20] sm:$0xf]
  %v54 = vld [vmem:[%s0 + $0x24] sm:$0xf]
  %v55 = vld [vmem:[%s0 + $0x28] sm:$0xf]
  %v56 = vld [vmem:[%s0 + $0x2c] sm:$0xf]
  %v57 = vld [vmem:[%s0 + $0x30] sm:$0xf]
  %v58 = vld [vmem:[%s0 + $0x34] sm:$0xf]
  %v59 = vld [vmem:[%s0 + $0x38] sm:$0xf]
  %v60 = vld [vmem:[%s0 + $0x3c] sm:$0xf]
  %v61 = vunpack.c.l.bf16 %v45
  %v62 = vunpack.c.l.bf16 %v46
  %v63 = vunpack.c.l.bf16 %v47
  %v64 = vunpack.c.l.bf16 %v48
  %v65 = vunpack.c.l.bf16 %v49
  %v66 = vunpack.c.l.bf16 %v50
  %v67 = vunpack.c.l.bf16 %v51
  %v68 = vunpack.c.l.bf16 %v52
  %v69 = vunpack.c.l.bf16 %v53
  %v70 = vunpack.c.l.bf16 %v54
  %v71 = vunpack.c.l.bf16 %v55
  %v72 = vunpack.c.l.bf16 %v56
  %v73 = vunpack.c.l.bf16 %v57
  %v74 = vunpack.c.l.bf16 %v58
  %v75 = vunpack.c.l.bf16 %v59
  %v76 = vunpack.c.l.bf16 %v60
  %v77 = vld [vmem:[%s2] sm:$0x1]
  %v79 = vperm.slane %v77, 0
  %v81 = vmul.f32 %v61, %v79
  %v82 = vmul.f32 %v62, %v79
  %v83 = vmul.f32 %v63, %v79
  %v84 = vmul.f32 %v64, %v79
  %v85 = vmul.f32 %v65, %v79
  %v86 = vmul.f32 %v66, %v79
  %v87 = vmul.f32 %v67, %v79
  %v88 = vmul.f32 %v68, %v79
  %v89 = vmul.f32 %v69, %v79
  %v90 = vmul.f32 %v70, %v79
  %v91 = vmul.f32 %v71, %v79
  %v92 = vmul.f32 %v72, %v79
  %v93 = vmul.f32 %v73, %v79
  %v94 = vmul.f32 %v74, %v79
  %v95 = vmul.f32 %v75, %v79
  %v96 = vmul.f32 %v76, %v79
  %v97 = vld [vmem:[%s3] sm:$0x1]
  %v99 = vperm.slane %v97, 0
  %v101 = vadd.f32 %v81, %v99
  %v102 = vadd.f32 %v82, %v99
  %v103 = vadd.f32 %v83, %v99
  %v104 = vadd.f32 %v84, %v99
  %v105 = vadd.f32 %v85, %v99
  %v106 = vadd.f32 %v86, %v99
  %v107 = vadd.f32 %v87, %v99
  %v108 = vadd.f32 %v88, %v99
  %v109 = vadd.f32 %v89, %v99
  %v110 = vadd.f32 %v90, %v99
  %v111 = vadd.f32 %v91, %v99
  %v112 = vadd.f32 %v92, %v99
  %v113 = vadd.f32 %v93, %v99
  %v114 = vadd.f32 %v94, %v99
  %v115 = vadd.f32 %v95, %v99
  %v116 = vadd.f32 %v96, %v99
  %v117 = vmax.f32 %v101, 0.0
  %v118 = vmax.f32 %v102, 0.0
  %v119 = vmax.f32 %v103, 0.0
  %v120 = vmax.f32 %v104, 0.0
  %v121 = vmax.f32 %v105, 0.0
  %v122 = vmax.f32 %v106, 0.0
  %v123 = vmax.f32 %v107, 0.0
  %v124 = vmax.f32 %v108, 0.0
  %v125 = vmax.f32 %v109, 0.0
  %v126 = vmax.f32 %v110, 0.0
  %v127 = vmax.f32 %v111, 0.0
  %v128 = vmax.f32 %v112, 0.0
  %v129 = vmax.f32 %v113, 0.0
  %v130 = vmax.f32 %v114, 0.0
  %v131 = vmax.f32 %v115, 0.0
  %v132 = vmax.f32 %v116, 0.0
  %v133 = vpack.c.bf16 %v118, %v117
  %v134 = vpack.c.bf16 %v120, %v119
  %v135 = vpack.c.bf16 %v122, %v121
  %v136 = vpack.c.bf16 %v124, %v123
  %v137 = vpack.c.bf16 %v126, %v125
  %v138 = vpack.c.bf16 %v128, %v127
  %v139 = vpack.c.bf16 %v130, %v129
  %v140 = vpack.c.bf16 %v132, %v131
  %v141 = vld [vmem:[#allocation2] sm:$0xff]
  %v142 = vld [vmem:[#allocation2 + $0x8] sm:$0xff]
  %v143 = vld [vmem:[#allocation2 + $0x10] sm:$0xff]
  %v144 = vld [vmem:[#allocation2 + $0x18] sm:$0xff]
  %v145 = vld [vmem:[#allocation2 + $0x20] sm:$0xff]
  %v146 = vld [vmem:[#allocation2 + $0x28] sm:$0xff]
  %v147 = vld [vmem:[#allocation2 + $0x30] sm:$0xff]
  %v148 = vld [vmem:[#allocation2 + $0x38] sm:$0xff]
  %v149 = vld [vmem:[#allocation2 + $0x40] sm:$0xff]
  %v150 = vld [vmem:[#allocation2 + $0x48] sm:$0xff]
  %v151 = vld [vmem:[#allocation2 + $0x50] sm:$0xff]
  %v152 = vld [vmem:[#allocation2 + $0x58] sm:$0xff]
  %v153 = vld [vmem:[#allocation2 + $0x60] sm:$0xff]
  %v154 = vld [vmem:[#allocation2 + $0x68] sm:$0xff]
  %v155 = vld [vmem:[#allocation2 + $0x70] sm:$0xff]
  %v156 = vld [vmem:[#allocation2 + $0x78] sm:$0xff]
  %v157 = vld [vmem:[%s1] sm:$0xf]
  %v158 = vld [vmem:[%s1 + $0x4] sm:$0xf]
  %v159 = vld [vmem:[%s1 + $0x8] sm:$0xf]
  %v163 = vunpack.c.l.b16 %v157
  %v164 = vunpack.c.l.b16 %v158
  %v165 = vunpack.c.l.b16 %v159
  %v166 = vpack.c.b16 %v164, %v163
  %v167 = vpack.c.b16 %v165, %v165
  %vm169 = vcmask 195584
  %v171 = vsel %vm169, %v133, 0
  %v174 = vsel %vm169, %v134, 0
  %v177 = vsel %vm169, %v135, 0
  %v180 = vsel %vm169, %v136, 0
  %v183 = vsel %vm169, %v137, 0
  %v186 = vsel %vm169, %v138, 0
  %v189 = vsel %vm169, %v139, 0
  %v192 = vsel %vm169, %v140, 0
  %vm194 = vcmask 1043456
  %v196 = vsel %vm194, %v167, 0
  %198 = vmatpush.bf16.msra.mxu0 0
  %199 = vmatpush.bf16.msra.mxu0 0
  %200 = vmatpush.bf16.msra.mxu0 0
  %201 = vmatpush.bf16.msra.mxu0 0
  %202 = vmatpush.bf16.msra.mxu0 0
  %203 = vmatpush.bf16.msra.mxu0 0
  %204 = vmatpush.bf16.msra.mxu0 %v196
  %205 = vmatpush.bf16.msra.mxu0 %v166
  %206 = vmatmul.bf16.gmra.mxu0 %v171
  %v207 = vpop.f32.mrf.mxu0
  %v208 = vadd.f32 0.0, %v207
  %v209 = vpop.f32.mrf.mxu0
  %v210 = vadd.f32 0.0, %v209
  %211 = vmatmul.bf16.gmra.mxu0 %v174
  %v212 = vpop.f32.mrf.mxu0
  %v213 = vadd.f32 0.0, %v212
  %v214 = vpop.f32.mrf.mxu0
  %v215 = vadd.f32 0.0, %v214
  %216 = vmatmul.bf16.gmra.mxu0 %v177
  %v217 = vpop.f32.mrf.mxu0
  %v218 = vadd.f32 0.0, %v217
  %v219 = vpop.f32.mrf.mxu0
  %v220 = vadd.f32 0.0, %v219
  %221 = vmatmul.bf16.gmra.mxu0 %v180
  %v222 = vpop.f32.mrf.mxu0
  %v223 = vadd.f32 0.0, %v222
  %v224 = vpop.f32.mrf.mxu0
  %v225 = vadd.f32 0.0, %v224
  %226 = vmatmul.bf16.gmra.mxu0 %v183
  %v227 = vpop.f32.mrf.mxu0
  %v228 = vadd.f32 0.0, %v227
  %v229 = vpop.f32.mrf.mxu0
  %v230 = vadd.f32 0.0, %v229
  %231 = vmatmul.bf16.gmra.mxu0 %v186
  %v232 = vpop.f32.mrf.mxu0
  %v233 = vadd.f32 0.0, %v232
  %v234 = vpop.f32.mrf.mxu0
  %v235 = vadd.f32 0.0, %v234
  %236 = vmatmul.bf16.gmra.mxu0 %v189
  %v237 = vpop.f32.mrf.mxu0
  %v238 = vadd.f32 0.0, %v237
  %v239 = vpop.f32.mrf.mxu0
  %v240 = vadd.f32 0.0, %v239
  %241 = vmatmul.bf16.gmra.mxu0 %v192
  %v242 = vpop.f32.mrf.mxu0
  %v243 = vadd.f32 0.0, %v242
  %v244 = vpop.f32.mrf.mxu0
  %v245 = vadd.f32 0.0, %v244
  %246 = vdwg.mxu0
  %v247 = vadd.f32 %v141, %v208
  %v248 = vadd.f32 %v142, %v210
  %v249 = vadd.f32 %v143, %v213
  %v250 = vadd.f32 %v144, %v215
  %v251 = vadd.f32 %v145, %v218
  %v252 = vadd.f32 %v146, %v220
  %v253 = vadd.f32 %v147, %v223
  %v254 = vadd.f32 %v148, %v225
  %v255 = vadd.f32 %v149, %v228
  %v256 = vadd.f32 %v150, %v230
  %v257 = vadd.f32 %v151, %v233
  %v258 = vadd.f32 %v152, %v235
  %v259 = vadd.f32 %v153, %v238
  %v260 = vadd.f32 %v154, %v240
  %v261 = vadd.f32 %v155, %v243
  %v262 = vadd.f32 %v156, %v245
  %vm263 = vcmask 261120
  %264 = vst.msk [vmem:[#allocation2] sm:$0xff] %vm263, %v247
  %265 = vst.msk [vmem:[#allocation2 + $0x8] sm:$0xff] %vm263, %v248
  %266 = vst.msk [vmem:[#allocation2 + $0x10] sm:$0xff] %vm263, %v249
  %267 = vst.msk [vmem:[#allocation2 + $0x18] sm:$0xff] %vm263, %v250
  %268 = vst.msk [vmem:[#allocation2 + $0x20] sm:$0xff] %vm263, %v251
  %269 = vst.msk [vmem:[#allocation2 + $0x28] sm:$0xff] %vm263, %v252
  %270 = vst.msk [vmem:[#allocation2 + $0x30] sm:$0xff] %vm263, %v253
  %271 = vst.msk [vmem:[#allocation2 + $0x38] sm:$0xff] %vm263, %v254
  %272 = vst.msk [vmem:[#allocation2 + $0x40] sm:$0xff] %vm263, %v255
  %273 = vst.msk [vmem:[#allocation2 + $0x48] sm:$0xff] %vm263, %v256
  %274 = vst.msk [vmem:[#allocation2 + $0x50] sm:$0xff] %vm263, %v257
  %275 = vst.msk [vmem:[#allocation2 + $0x58] sm:$0xff] %vm263, %v258
  %276 = vst.msk [vmem:[#allocation2 + $0x60] sm:$0xff] %vm263, %v259
  %277 = vst.msk [vmem:[#allocation2 + $0x68] sm:$0xff] %vm263, %v260
  %278 = vst.msk [vmem:[#allocation2 + $0x70] sm:$0xff] %vm263, %v261
  %279 = vst.msk [vmem:[#allocation2 + $0x78] sm:$0xff] %vm263, %v262
  // Predicated region
  $region30: #{_lambda_.17} parent=0 // pred_check
    %p280 = pneg %p24
  $region31: #{_lambda_.17} parent=0 // pred_check_branch
    %282 = sbr.rel (%p280) target = $region33
  $region32: #{_lambda_.17} parent=0 // pred_region
    %v283 = vld [vmem:[#allocation2] sm:$0xff]
    %v284 = vld [vmem:[#allocation2 + $0x8] sm:$0xff]
    %v285 = vld [vmem:[#allocation2 + $0x10] sm:$0xff]
    %v286 = vld [vmem:[#allocation2 + $0x18] sm:$0xff]
    %v287 = vld [vmem:[#allocation2 + $0x20] sm:$0xff]
    %v288 = vld [vmem:[#allocation2 + $0x28] sm:$0xff]
    %v289 = vld [vmem:[#allocation2 + $0x30] sm:$0xff]
    %v290 = vld [vmem:[#allocation2 + $0x38] sm:$0xff]
    %v291 = vld [vmem:[#allocation2 + $0x40] sm:$0xff]
    %v292 = vld [vmem:[#allocation2 + $0x48] sm:$0xff]
    %v293 = vld [vmem:[#allocation2 + $0x50] sm:$0xff]
    %v294 = vld [vmem:[#allocation2 + $0x58] sm:$0xff]
    %v295 = vld [vmem:[#allocation2 + $0x60] sm:$0xff]
    %v296 = vld [vmem:[#allocation2 + $0x68] sm:$0xff]
    %v297 = vld [vmem:[#allocation2 + $0x70] sm:$0xff]
    %v298 = vld [vmem:[#allocation2 + $0x78] sm:$0xff]
    %v299 = vld [vmem:[%s4] sm:$0x1]
    %v301 = vperm.slane %v299, 0
    %v303 = vmul.f32 %v283, %v301
    %v304 = vmul.f32 %v284, %v301
    %v305 = vmul.f32 %v285, %v301
    %v306 = vmul.f32 %v286, %v301
    %v307 = vmul.f32 %v287, %v301
    %v308 = vmul.f32 %v288, %v301
    %v309 = vmul.f32 %v289, %v301
    %v310 = vmul.f32 %v290, %v301
    %v311 = vmul.f32 %v291, %v301
    %v312 = vmul.f32 %v292, %v301
    %v313 = vmul.f32 %v293, %v301
    %v314 = vmul.f32 %v294, %v301
    %v315 = vmul.f32 %v295, %v301
    %v316 = vmul.f32 %v296, %v301
    %v317 = vmul.f32 %v297, %v301
    %v318 = vmul.f32 %v298, %v301
    %v319 = vld [vmem:[%s5] sm:$0x1]
    %v321 = vperm.slane %v319, 0
    %v323 = vadd.f32 %v303, %v321
    %v324 = vadd.f32 %v304, %v321
    %v325 = vadd.f32 %v305, %v321
    %v326 = vadd.f32 %v306, %v321
    %v327 = vadd.f32 %v307, %v321
    %v328 = vadd.f32 %v308, %v321
    %v329 = vadd.f32 %v309, %v321
    %v330 = vadd.f32 %v310, %v321
    %v331 = vadd.f32 %v311, %v321
    %v332 = vadd.f32 %v312, %v321
    %v333 = vadd.f32 %v313, %v321
    %v334 = vadd.f32 %v314, %v321
    %v335 = vadd.f32 %v315, %v321
    %v336 = vadd.f32 %v316, %v321
    %v337 = vadd.f32 %v317, %v321
    %v338 = vadd.f32 %v318, %v321
    %v339 = vmax.f32 %v323, 0.0
    %v340 = vmax.f32 %v324, 0.0
    %v341 = vmax.f32 %v325, 0.0
    %v342 = vmax.f32 %v326, 0.0
    %v343 = vmax.f32 %v327, 0.0
    %v344 = vmax.f32 %v328, 0.0
    %v345 = vmax.f32 %v329, 0.0
    %v346 = vmax.f32 %v330, 0.0
    %v347 = vmax.f32 %v331, 0.0
    %v348 = vmax.f32 %v332, 0.0
    %v349 = vmax.f32 %v333, 0.0
    %v350 = vmax.f32 %v334, 0.0
    %v351 = vmax.f32 %v335, 0.0
    %v352 = vmax.f32 %v336, 0.0
    %v353 = vmax.f32 %v337, 0.0
    %v354 = vmax.f32 %v338, 0.0
    %v355 = vpack.c.bf16 %v339, %v339
    %v356 = vpack.c.bf16 %v340, %v340
    %v357 = vpack.c.bf16 %v341, %v341
    %v358 = vpack.c.bf16 %v342, %v342
    %v359 = vpack.c.bf16 %v343, %v343
    %v360 = vpack.c.bf16 %v344, %v344
    %v361 = vpack.c.bf16 %v345, %v345
    %v362 = vpack.c.bf16 %v346, %v346
    %v363 = vpack.c.bf16 %v347, %v347
    %v364 = vpack.c.bf16 %v348, %v348
    %v365 = vpack.c.bf16 %v349, %v349
    %v366 = vpack.c.bf16 %v350, %v350
    %v367 = vpack.c.bf16 %v351, %v351
    %v368 = vpack.c.bf16 %v352, %v352
    %v369 = vpack.c.bf16 %v353, %v353
    %v370 = vpack.c.bf16 %v354, %v354
    %vm371 = vcmask 257024
    %372 = vst.msk [vmem:[%s6] sm:$0xf] %vm371, %v355
    %373 = vst.msk [vmem:[%s6 + $0x4] sm:$0xf] %vm371, %v356
    %374 = vst.msk [vmem:[%s6 + $0x8] sm:$0xf] %vm371, %v357
    %375 = vst.msk [vmem:[%s6 + $0xc] sm:$0xf] %vm371, %v358
    %376 = vst.msk [vmem:[%s6 + $0x10] sm:$0xf] %vm371, %v359
    %377 = vst.msk [vmem:[%s6 + $0x14] sm:$0xf] %vm371, %v360
    %378 = vst.msk [vmem:[%s6 + $0x18] sm:$0xf] %vm371, %v361
    %379 = vst.msk [vmem:[%s6 + $0x1c] sm:$0xf] %vm371, %v362
    %380 = vst.msk [vmem:[%s6 + $0x20] sm:$0xf] %vm371, %v363
    %381 = vst.msk [vmem:[%s6 + $0x24] sm:$0xf] %vm371, %v364
    %382 = vst.msk [vmem:[%s6 + $0x28] sm:$0xf] %vm371, %v365
    %383 = vst.msk [vmem:[%s6 + $0x2c] sm:$0xf] %vm371, %v366
    %384 = vst.msk [vmem:[%s6 + $0x30] sm:$0xf] %vm371, %v367
    %385 = vst.msk [vmem:[%s6 + $0x34] sm:$0xf] %vm371, %v368
    %386 = vst.msk [vmem:[%s6 + $0x38] sm:$0xf] %vm371, %v369
    %387 = vst.msk [vmem:[%s6 + $0x3c] sm:$0xf] %vm371, %v370
  $region33: #{_lambda_.17} parent=0 // pred_fallthru
    _
  // Predicated region
  $region34: #{_lambda_.17} parent=0 // pred_check
    _
  $region35: #{_lambda_.17} parent=0 // pred_check_branch
    %389 = sbr.rel (0) target = $region37
  $region36: #{_lambda_.17} parent=0 // pred_region
    _
  $region37: #{_lambda_.17} parent=0 // pred_fallthru
    _
  // Predicated region
  $region38: #{_lambda_.17} parent=0 // pred_check
    _
  $region39: #{_lambda_.17} parent=0 // pred_check_branch
    %391 = sbr.rel (0) target = $region41
  $region40: #{_lambda_.17} parent=0 // pred_region
    _
  $region41: #{_lambda_.17} parent=0 // pred_fallthru
    _

// kernel: _lambda_.20
$region0: #{_lambda_.20}
  #allocation0 [shape = 'u32[]', space=smem, size = 0x4, offset = 0x4, fixed_abs, tag = 'smem constant byte address 0x4 - core index']
  #allocation1 [shape = 'u32[72,128]{1,0:T(1,128)}', space=vmem, size = 0x9000, scoped, tag = 'internal scratch']
  %s0 = inlined_call_operand.vmem [shape: bf16[32,16], index: 0, kind: input, shape index: {}]
  %s1 = inlined_call_operand.vmem [shape: bf16[32,16], index: 1, kind: input, shape index: {}]
  %s2 = inlined_call_operand.vmem [shape: bf16[32,16], index: 2, kind: input, shape index: {}]
  %s3 = inlined_call_operand.vmem [shape: bf16[32,16], index: 3, kind: input, shape index: {}]
  %s4 = inlined_call_operand.vmem [shape: bf16[32,16], index: 4, kind: output, shape index: {}]
  %s5 = sld [smem:[#allocation0]]
  $region26: #{_lambda_.20} parent=0
    _
  %s7 = ssub.s32 1, %s5
  %s8 = scalar_select 0, %s7, %s5
  // Predicated region
  $region2: #{_lambda_.20} parent=0 // pred_check
    _
  $region3: #{_lambda_.20} parent=0 // pred_check_branch
    %10 = sbr.rel (0) target = $region5
  $region4: #{_lambda_.20} parent=0 // pred_region
    _
  $region5: #{_lambda_.20} parent=0 // pred_fallthru
    _
  // Predicated region
  $region6: #{_lambda_.20} parent=0 // pred_check
    _
  $region7: #{_lambda_.20} parent=0 // pred_check_branch
    %12 = sbr.rel (0) target = $region9
  $region8: #{_lambda_.20} parent=0 // pred_region
    _
  $region9: #{_lambda_.20} parent=0 // pred_fallthru
    _
  // Predicated region
  $region10: #{_lambda_.20} parent=0 // pred_check
    _
  $region11: #{_lambda_.20} parent=0 // pred_check_branch
    %14 = sbr.rel (0) target = $region13
  $region12: #{_lambda_.20} parent=0 // pred_region
    _
  $region13: #{_lambda_.20} parent=0 // pred_fallthru
    _
  // Predicated region
  $region14: #{_lambda_.20} parent=0 // pred_check
    _
  $region15: #{_lambda_.20} parent=0 // pred_check_branch
    %16 = sbr.rel (0) target = $region17
  $region16: #{_lambda_.20} parent=0 // pred_region
    _
  $region17: #{_lambda_.20} parent=0 // pred_fallthru
    _
  %v17 = vld [vmem:[%s0] sm:$0xf]
  %v18 = vld [vmem:[%s0 + $0x4] sm:$0xf]
  %v19 = vld [vmem:[%s0 + $0x8] sm:$0xf]
  %v20 = vld [vmem:[%s0 + $0xc] sm:$0xf]
  %v21 = vunpack.c.l.bf16 %v17
  %v22 = vunpack.c.l.bf16 %v18
  %v23 = vunpack.c.l.bf16 %v19
  %v24 = vunpack.c.l.bf16 %v20
  %v25 = vld [vmem:[%s1] sm:$0xf]
  %v26 = vld [vmem:[%s1 + $0x4] sm:$0xf]
  %v27 = vld [vmem:[%s1 + $0x8] sm:$0xf]
  %v28 = vld [vmem:[%s1 + $0xc] sm:$0xf]
  %v29 = vunpack.c.l.bf16 %v25
  %v30 = vunpack.c.l.bf16 %v26
  %v31 = vunpack.c.l.bf16 %v27
  %v32 = vunpack.c.l.bf16 %v28
  %v33 = vadd.f32 %v21, %v29
  %v34 = vadd.f32 %v22, %v30
  %v35 = vadd.f32 %v23, %v31
  %v36 = vadd.f32 %v24, %v32
  %v37 = vld [vmem:[%s2] sm:$0xf]
  %v38 = vld [vmem:[%s2 + $0x4] sm:$0xf]
  %v39 = vld [vmem:[%s2 + $0x8] sm:$0xf]
  %v40 = vld [vmem:[%s2 + $0xc] sm:$0xf]
  %v41 = vunpack.c.l.bf16 %v37
  %v42 = vunpack.c.l.bf16 %v38
  %v43 = vunpack.c.l.bf16 %v39
  %v44 = vunpack.c.l.bf16 %v40
  %v45 = vadd.f32 %v33, %v41
  %v46 = vadd.f32 %v34, %v42
  %v47 = vadd.f32 %v35, %v43
  %v48 = vadd.f32 %v36, %v44
  %v49 = vld [vmem:[%s3] sm:$0xf]
  %v50 = vld [vmem:[%s3 + $0x4] sm:$0xf]
  %v51 = vld [vmem:[%s3 + $0x8] sm:$0xf]
  %v52 = vld [vmem:[%s3 + $0xc] sm:$0xf]
  %v53 = vunpack.c.l.bf16 %v49
  %v54 = vunpack.c.l.bf16 %v50
  %v55 = vunpack.c.l.bf16 %v51
  %v56 = vunpack.c.l.bf16 %v52
  %v57 = vadd.f32 %v45, %v53
  %v58 = vadd.f32 %v46, %v54
  %v59 = vadd.f32 %v47, %v55
  %v60 = vadd.f32 %v48, %v56
  %v61 = vmul.f32 %v57, 0.25
  %v62 = vmul.f32 %v58, 0.25
  %v63 = vmul.f32 %v59, 0.25
  %v64 = vmul.f32 %v60, 0.25
  %v65 = vpack.c.bf16 %v61, %v61
  %v66 = vpack.c.bf16 %v62, %v62
  %v67 = vpack.c.bf16 %v63, %v63
  %v68 = vpack.c.bf16 %v64, %v64
  %vm69 = vcmask 125952
  %70 = vst.msk [vmem:[%s4] sm:$0xf] %vm69, %v65
  %71 = vst.msk [vmem:[%s4 + $0x4] sm:$0xf] %vm69, %v66
  %72 = vst.msk [vmem:[%s4 + $0x8] sm:$0xf] %vm69, %v67
  %73 = vst.msk [vmem:[%s4 + $0xc] sm:$0xf] %vm69, %v68
  // Predicated region
  $region18: #{_lambda_.20} parent=0 // pred_check
    _
  $region19: #{_lambda_.20} parent=0 // pred_check_branch
    %75 = sbr.rel (0) target = $region21
  $region20: #{_lambda_.20} parent=0 // pred_region
    _
  $region21: #{_lambda_.20} parent=0 // pred_fallthru
    _
  // Predicated region
  $region22: #{_lambda_.20} parent=0 // pred_check
    _
  $region23: #{_lambda_.20} parent=0 // pred_check_branch
    %77 = sbr.rel (0) target = $region25
  $region24: #{_lambda_.20} parent=0 // pred_region
    _
  $region25: #{_lambda_.20} parent=0 // pred_fallthru
    _

// kernel: _lambda_.21
$region0: #{_lambda_.21}
  #allocation0 [shape = 'u32[]', space=smem, size = 0x4, offset = 0x4, fixed_abs, tag = 'smem constant byte address 0x4 - core index']
  #allocation1 [shape = 'u32[72,128]{1,0:T(1,128)}', space=vmem, size = 0x9000, scoped, tag = 'internal scratch']
  #allocation2 [shape = 'f32[32,32]{1,0:T(8,128)}', space=vmem, size = 0x4000, scoped, tag = 'scratch operand']
  %s0 = inlined_call_operand.vmem [shape: bf16[32,16], index: 0, kind: input, shape index: {}]
  %s1 = inlined_call_operand.vmem [shape: bf16[16,32], index: 1, kind: input, shape index: {}]
  %s2 = inlined_call_operand.vmem [shape: f32[1,16], index: 2, kind: input, shape index: {}]
  %s3 = inlined_call_operand.vmem [shape: f32[1,16], index: 3, kind: input, shape index: {}]
  %s4 = inlined_call_operand.vmem [shape: f32[1,32], index: 4, kind: input, shape index: {}]
  %s5 = inlined_call_operand.vmem [shape: f32[1,32], index: 5, kind: input, shape index: {}]
  %s6 = inlined_call_operand.vmem [shape: bf16[32,32], index: 6, kind: output, shape index: {}]
  %s7 = sld [smem:[#allocation0]]
  $region42: #{_lambda_.21} parent=0
    _
  %s9 = ssub.s32 1, %s7
  %s10 = scalar_select 0, %s9, %s7
  // Predicated region
  $region2: #{_lambda_.21} parent=0 // pred_check
    _
  $region3: #{_lambda_.21} parent=0 // pred_check_branch
    %12 = sbr.rel (0) target = $region5
  $region4: #{_lambda_.21} parent=0 // pred_region
    _
  $region5: #{_lambda_.21} parent=0 // pred_fallthru
    _
  // Predicated region
  $region6: #{_lambda_.21} parent=0 // pred_check
    _
  $region7: #{_lambda_.21} parent=0 // pred_check_branch
    %14 = sbr.rel (0) target = $region9
  $region8: #{_lambda_.21} parent=0 // pred_region
    _
  $region9: #{_lambda_.21} parent=0 // pred_fallthru
    _
  // Predicated region
  $region10: #{_lambda_.21} parent=0 // pred_check
    _
  $region11: #{_lambda_.21} parent=0 // pred_check_branch
    %16 = sbr.rel (0) target = $region13
  $region12: #{_lambda_.21} parent=0 // pred_region
    _
  $region13: #{_lambda_.21} parent=0 // pred_fallthru
    _
  // Predicated region
  $region14: #{_lambda_.21} parent=0 // pred_check
    _
  $region15: #{_lambda_.21} parent=0 // pred_check_branch
    %18 = sbr.rel (0) target = $region17
  $region16: #{_lambda_.21} parent=0 // pred_region
    _
  $region17: #{_lambda_.21} parent=0 // pred_fallthru
    _
  // Predicated region
  $region18: #{_lambda_.21} parent=0 // pred_check
    _
  $region19: #{_lambda_.21} parent=0 // pred_check_branch
    %20 = sbr.rel (0) target = $region21
  $region20: #{_lambda_.21} parent=0 // pred_region
    _
  $region21: #{_lambda_.21} parent=0 // pred_fallthru
    _
  // Predicated region
  $region22: #{_lambda_.21} parent=0 // pred_check
    _
  $region23: #{_lambda_.21} parent=0 // pred_check_branch
    %22 = sbr.rel (0) target = $region25
  $region24: #{_lambda_.21} parent=0 // pred_region
    _
  $region25: #{_lambda_.21} parent=0 // pred_fallthru
    _
  %p24 = scmp.eq.s32.totalorder 0, 0
  // Predicated region
  $region26: #{_lambda_.21} parent=0 // pred_check
    %p25 = pneg %p24
  $region27: #{_lambda_.21} parent=0 // pred_check_branch
    %27 = sbr.rel (%p25) target = $region29
  $region28: #{_lambda_.21} parent=0 // pred_region
    %vm28 = vcmask 261120
    %29 = vst.msk [vmem:[#allocation2] sm:$0xff] %vm28, 0.0
    %30 = vst.msk [vmem:[#allocation2 + $0x8] sm:$0xff] %vm28, 0.0
    %31 = vst.msk [vmem:[#allocation2 + $0x10] sm:$0xff] %vm28, 0.0
    %32 = vst.msk [vmem:[#allocation2 + $0x18] sm:$0xff] %vm28, 0.0
  $region29: #{_lambda_.21} parent=0 // pred_fallthru
    _
  %v33 = vld [vmem:[%s0] sm:$0xf]
  %v34 = vld [vmem:[%s0 + $0x4] sm:$0xf]
  %v35 = vld [vmem:[%s0 + $0x8] sm:$0xf]
  %v36 = vld [vmem:[%s0 + $0xc] sm:$0xf]
  %v37 = vunpack.c.l.bf16 %v33
  %v38 = vunpack.c.l.bf16 %v34
  %v39 = vunpack.c.l.bf16 %v35
  %v40 = vunpack.c.l.bf16 %v36
  %v41 = vld [vmem:[%s2] sm:$0x1]
  %v43 = vperm.slane %v41, 0
  %v45 = vmul.f32 %v37, %v43
  %v46 = vmul.f32 %v38, %v43
  %v47 = vmul.f32 %v39, %v43
  %v48 = vmul.f32 %v40, %v43
  %v49 = vld [vmem:[%s3] sm:$0x1]
  %v51 = vperm.slane %v49, 0
  %v53 = vadd.f32 %v45, %v51
  %v54 = vadd.f32 %v46, %v51
  %v55 = vadd.f32 %v47, %v51
  %v56 = vadd.f32 %v48, %v51
  %v57 = vmax.f32 %v53, 0.0
  %v58 = vmax.f32 %v54, 0.0
  %v59 = vmax.f32 %v55, 0.0
  %v60 = vmax.f32 %v56, 0.0
  %v61 = vpack.c.bf16 %v58, %v57
  %v62 = vpack.c.bf16 %v60, %v59
  %v63 = vld [vmem:[#allocation2] sm:$0xff]
  %v64 = vld [vmem:[#allocation2 + $0x8] sm:$0xff]
  %v65 = vld [vmem:[#allocation2 + $0x10] sm:$0xff]
  %v66 = vld [vmem:[#allocation2 + $0x18] sm:$0xff]
  %v67 = vld [vmem:[%s1] sm:$0xf]
  %v68 = vld [vmem:[%s1 + $0x4] sm:$0xf]
  %v71 = vunpack.c.l.b16 %v67
  %v72 = vunpack.c.l.b16 %v68
  %v73 = vpack.c.b16 %v72, %v71
  %vm75 = vcmask 130048
  %v77 = vsel %vm75, %v61, 0
  %v80 = vsel %vm75, %v62, 0
  %82 = vmatpush.bf16.msra.mxu0 0
  %83 = vmatpush.bf16.msra.mxu0 0
  %84 = vmatpush.bf16.msra.mxu0 0
  %85 = vmatpush.bf16.msra.mxu0 0
  %86 = vmatpush.bf16.msra.mxu0 0
  %87 = vmatpush.bf16.msra.mxu0 0
  %88 = vmatpush.bf16.msra.mxu0 0
  %89 = vmatpush.bf16.msra.mxu0 %v73
  %90 = vmatmul.bf16.gmra.mxu0 %v77
  %v91 = vpop.f32.mrf.mxu0
  %v92 = vadd.f32 0.0, %v91
  %v93 = vpop.f32.mrf.mxu0
  %v94 = vadd.f32 0.0, %v93
  %95 = vmatmul.bf16.gmra.mxu0 %v80
  %v96 = vpop.f32.mrf.mxu0
  %v97 = vadd.f32 0.0, %v96
  %v98 = vpop.f32.mrf.mxu0
  %v99 = vadd.f32 0.0, %v98
  %100 = vdwg.mxu0
  %v101 = vadd.f32 %v63, %v92
  %v102 = vadd.f32 %v64, %v94
  %v103 = vadd.f32 %v65, %v97
  %v104 = vadd.f32 %v66, %v99
  %vm105 = vcmask 261120
  %106 = vst.msk [vmem:[#allocation2] sm:$0xff] %vm105, %v101
  %107 = vst.msk [vmem:[#allocation2 + $0x8] sm:$0xff] %vm105, %v102
  %108 = vst.msk [vmem:[#allocation2 + $0x10] sm:$0xff] %vm105, %v103
  %109 = vst.msk [vmem:[#allocation2 + $0x18] sm:$0xff] %vm105, %v104
  // Predicated region
  $region30: #{_lambda_.21} parent=0 // pred_check
    %p110 = pneg %p24
  $region31: #{_lambda_.21} parent=0 // pred_check_branch
    %112 = sbr.rel (%p110) target = $region33
  $region32: #{_lambda_.21} parent=0 // pred_region
    %v113 = vld [vmem:[#allocation2] sm:$0xff]
    %v114 = vld [vmem:[#allocation2 + $0x8] sm:$0xff]
    %v115 = vld [vmem:[#allocation2 + $0x10] sm:$0xff]
    %v116 = vld [vmem:[#allocation2 + $0x18] sm:$0xff]
    %v117 = vld [vmem:[%s4] sm:$0x1]
    %v119 = vperm.slane %v117, 0
    %v121 = vmul.f32 %v113, %v119
    %v122 = vmul.f32 %v114, %v119
    %v123 = vmul.f32 %v115, %v119
    %v124 = vmul.f32 %v116, %v119
    %v125 = vld [vmem:[%s5] sm:$0x1]
    %v127 = vperm.slane %v125, 0
    %v129 = vadd.f32 %v121, %v127
    %v130 = vadd.f32 %v122, %v127
    %v131 = vadd.f32 %v123, %v127
    %v132 = vadd.f32 %v124, %v127
    %v133 = vmax.f32 %v129, 0.0
    %v134 = vmax.f32 %v130, 0.0
    %v135 = vmax.f32 %v131, 0.0
    %v136 = vmax.f32 %v132, 0.0
    %v137 = vpack.c.bf16 %v133, %v133
    %v138 = vpack.c.bf16 %v134, %v134
    %v139 = vpack.c.bf16 %v135, %v135
    %v140 = vpack.c.bf16 %v136, %v136
    %vm141 = vcmask 257024
    %142 = vst.msk [vmem:[%s6] sm:$0xf] %vm141, %v137
    %143 = vst.msk [vmem:[%s6 + $0x4] sm:$0xf] %vm141, %v138
    %144 = vst.msk [vmem:[%s6 + $0x8] sm:$0xf] %vm141, %v139
    %145 = vst.msk [vmem:[%s6 + $0xc] sm:$0xf] %vm141, %v140
  $region33: #{_lambda_.21} parent=0 // pred_fallthru
    _
  // Predicated region
  $region34: #{_lambda_.21} parent=0 // pred_check
    _
  $region35: #{_lambda_.21} parent=0 // pred_check_branch
    %147 = sbr.rel (0) target = $region37
  $region36: #{_lambda_.21} parent=0 // pred_region
    _
  $region37: #{_lambda_.21} parent=0 // pred_fallthru
    _
  // Predicated region
  $region38: #{_lambda_.21} parent=0 // pred_check
    _
  $region39: #{_lambda_.21} parent=0 // pred_check_branch
    %149 = sbr.rel (0) target = $region41
  $region40: #{_lambda_.21} parent=0 // pred_region
    _
  $region41: #{_lambda_.21} parent=0 // pred_fallthru
    _

// kernel: _lambda_.22
$region0: #{_lambda_.22}
  #allocation0 [shape = 'u32[]', space=smem, size = 0x4, offset = 0x4, fixed_abs, tag = 'smem constant byte address 0x4 - core index']
  #allocation1 [shape = 'u32[72,128]{1,0:T(1,128)}', space=vmem, size = 0x9000, scoped, tag = 'internal scratch']
  %s0 = inlined_call_operand.vmem [shape: bf16[2,6,6,32], index: 0, kind: input, shape index: {}, may-alias: {0,1,2}]
  %s1 = inlined_call_operand.vmem [shape: bf16[2,6,6,32], index: 1, kind: input, shape index: {}, may-alias: {0,1,2}]
  %s2 = inlined_call_operand.vmem [shape: bf16[2,6,6,32], index: 2, kind: input, shape index: {}, may-alias: {0,1,2}]
  %s3 = inlined_call_operand.vmem [shape: bf16[9,32,8], index: 3, kind: input, shape index: {}]
  %s4 = inlined_call_operand.vmem [shape: bf16[2,4,4,8], index: 4, kind: output, shape index: {}]
  %s5 = sld [smem:[#allocation0]]
  $region49: #{_lambda_.22} parent=0
    _
  %s7 = ssub.s32 1, %s5
  %s8 = scalar_select 0, %s7, %s5
  loop: start=0, step=1, limit=10
  $region2: #{_lambda_.22} parent=0 // loop_pre_header
    _
  $region3: #{_lambda_.22} parent=0 // loop_header
    %s10 = sphi 0, %s14
    %p11 = scmp.ge.s32.totalorder %s10, 10
    %s17 = sphi 0, %s29
    %s18 = sphi 0, %s25
    %s19 = sphi 0, %s17
    %s20 = sphi 0, %s18
    %s21 = sphi 0, %s19
    %s22 = sphi 0, %s20
    %s34 = sphi 0, %s36
    %s37 = sphi 0, %s34
    %s38 = sphi 0, %s37
    %s54 = sphi 0, %s38
    %s64 = sphi 0, %s66
    %s67 = sphi 0, %s64
    %s68 = sphi 0, %s67
    %s84 = sphi 0, %s68
    %s94 = sphi 0, %s96
    %s97 = sphi 0, %s94
    %s98 = sphi 0, %s97
    %s114 = sphi 0, %s98
    %s118 = sphi 0, %s118
    %s120 = sphi 0, %s118
    %s121 = sphi 0, %s120
    %s135 = sphi 0, %s121
    %s143 = sphi 0, %s145
    %s146 = sphi 0, %s143
    %s147 = sphi 0, %s146
    %s163 = sphi 0, %s147
  $region4: #{_lambda_.22} parent=0 // loop_header_branch
    %13 = sbr.rel (%p11) target = $region8
  $region5: #{_lambda_.22} parent=0 // loop_body
    %s15 = ssub.s32 %s10, 1
    %s16 = ssub.s32 %s10, 2
    %s23 = sadd.s32 1, %s18
    %p24 = scmp.ge.s32.totalorder %s23, 4
    %s25 = scalar_select %p24, 0, %s23
    %s26 = sadd.s32 1, %s17
    %s27 = scalar_select %p24, %s26, %s17
    %p28 = scmp.ge.s32.totalorder %s27, 2
    %s29 = scalar_select %p28, 0, %s27
    %s30 = ssub.s32 %s17, %s29
    %s31 = ssub.s32 %s18, %s25
    %s32 = sor.u32 %s30, %s31
    %p33 = scmp.eq.s32.totalorder %s32, 0
    %s35 = sadd.s32 %s34, 1
    %s36 = scalar_select %p33, %s34, %s35
    %p39 = pneg %p33
    %p40 = scmp.eq.s32.totalorder %s10, 7
    %p41 = por %p39, %p40
    %p42 = scmp.ne.s32.totalorder %s34, %s37
    %p43 = scmp.eq.s32.totalorder %s10, 0
    %p44 = por %p42, %p43
    %p45 = scmp.ne.s32.totalorder %s34, %s37
    %p46 = scmp.eq.s32.totalorder %s15, 7
    %p47 = por %p45, %p46
    %p48 = scmp.ne.s32.totalorder %s37, %s38
    %p49 = scmp.eq.s32.totalorder %s15, 0
    %p50 = por %p48, %p49
    %p51 = scmp.ne.s32.totalorder %s37, %s38
    %p52 = scmp.eq.s32.totalorder %s16, 7
    %p53 = por %p51, %p52
    %p55 = scmp.ne.s32.totalorder %s38, %s54
    %p56 = scmp.eq.s32.totalorder %s16, 0
    %p57 = por %p55, %p56
    %s58 = sadd.s32 %s18, 1
    %s59 = sadd.s32 %s25, 1
    %s60 = ssub.s32 %s17, %s29
    %s61 = ssub.s32 %s58, %s59
    %s62 = sor.u32 %s60, %s61
    %p63 = scmp.eq.s32.totalorder %s62, 0
    %s65 = sadd.s32 %s64, 1
    %s66 = scalar_select %p63, %s64, %s65
    %p69 = pneg %p63
    %p70 = scmp.eq.s32.totalorder %s10, 7
    %p71 = por %p69, %p70
    %p72 = scmp.ne.s32.totalorder %s64, %s67
    %p73 = scmp.eq.s32.totalorder %s10, 0
    %p74 = por %p72, %p73
    %p75 = scmp.ne.s32.totalorder %s64, %s67
    %p76 = scmp.eq.s32.totalorder %s15, 7
    %p77 = por %p75, %p76
    %p78 = scmp.ne.s32.totalorder %s67, %s68
    %p79 = scmp.eq.s32.totalorder %s15, 0
    %p80 = por %p78, %p79
    %p81 = scmp.ne.s32.totalorder %s67, %s68
    %p82 = scmp.eq.s32.totalorder %s16, 7
    %p83 = por %p81, %p82
    %p85 = scmp.ne.s32.totalorder %s68, %s84
    %p86 = scmp.eq.s32.totalorder %s16, 0
    %p87 = por %p85, %p86
    %s88 = sadd.s32 %s18, 2
    %s89 = sadd.s32 %s25, 2
    %s90 = ssub.s32 %s17, %s29
    %s91 = ssub.s32 %s88, %s89
    %s92 = sor.u32 %s90, %s91
    %p93 = scmp.eq.s32.totalorder %s92, 0
    %s95 = sadd.s32 %s94, 1
    %s96 = scalar_select %p93, %s94, %s95
    %p99 = pneg %p93
    %p100 = scmp.eq.s32.totalorder %s10, 7
    %p101 = por %p99, %p100
    %p102 = scmp.ne.s32.totalorder %s94, %s97
    %p103 = scmp.eq.s32.totalorder %s10, 0
    %p104 = por %p102, %p103
    %p105 = scmp.ne.s32.totalorder %s94, %s97
    %p106 = scmp.eq.s32.totalorder %s15, 7
    %p107 = por %p105, %p106
    %p108 = scmp.ne.s32.totalorder %s97, %s98
    %p109 = scmp.eq.s32.totalorder %s15, 0
    %p110 = por %p108, %p109
    %p111 = scmp.ne.s32.totalorder %s97, %s98
    %p112 = scmp.eq.s32.totalorder %s16, 7
    %p113 = por %p111, %p112
    %p115 = scmp.ne.s32.totalorder %s98, %s114
    %p116 = scmp.eq.s32.totalorder %s16, 0
    %p117 = por %p115, %p116
    %s119 = sadd.s32 %s118, 1
    %p122 = scmp.eq.s32.totalorder %s10, 7
    %p123 = scmp.ne.s32.totalorder %s118, %s120
    %p124 = scmp.eq.s32.totalorder %s10, 0
    %p125 = por %p123, %p124
    %p126 = scmp.ne.s32.totalorder %s118, %s120
    %p127 = scmp.eq.s32.totalorder %s15, 7
    %p128 = por %p126, %p127
    %p129 = scmp.ne.s32.totalorder %s120, %s121
    %p130 = scmp.eq.s32.totalorder %s15, 0
    %p131 = por %p129, %p130
    %p132 = scmp.ne.s32.totalorder %s120, %s121
    %p133 = scmp.eq.s32.totalorder %s16, 7
    %p134 = por %p132, %p133
    %p136 = scmp.ne.s32.totalorder %s121, %s135
    %p137 = scmp.eq.s32.totalorder %s16, 0
    %p138 = por %p136, %p137
    %s139 = ssub.s32 %s17, %s29
    %s140 = ssub.s32 %s18, %s25
    %s141 = sor.u32 %s139, %s140
    %p142 = scmp.eq.s32.totalorder %s141, 0
    %s144 = sadd.s32 %s143, 1
    %s145 = scalar_select %p142, %s143, %s144
    %p148 = pneg %p142
    %p149 = scmp.eq.s32.totalorder %s10, 7
    %p150 = por %p148, %p149
    %p151 = scmp.ne.s32.totalorder %s143, %s146
    %p152 = scmp.eq.s32.totalorder %s10, 0
    %p153 = por %p151, %p152
    %p154 = scmp.ne.s32.totalorder %s143, %s146
    %p155 = scmp.eq.s32.totalorder %s15, 7
    %p156 = por %p154, %p155
    %p157 = scmp.ne.s32.totalorder %s146, %s147
    %p158 = scmp.eq.s32.totalorder %s15, 0
    %p159 = por %p157, %p158
    %p160 = scmp.ne.s32.totalorder %s146, %s147
    %p161 = scmp.eq.s32.totalorder %s16, 7
    %p162 = por %p160, %p161
    %p164 = scmp.ne.s32.totalorder %s147, %s163
    %p165 = scmp.eq.s32.totalorder %s16, 0
    %p166 = por %p164, %p165
    %p167 = scmp.le.s32.totalorder 1, %s10
    %p168 = scmp.lt.s32.totalorder %s10, 9
    %p169 = pnand %p167, %p168
    %p170 = pneg %p169
    // Predicated region
    $region9: #{_lambda_.22} parent=5 // pred_check
      _
    $region10: #{_lambda_.22} parent=5 // pred_check_branch
      %172 = sbr.rel (%p169) target = $region12
    $region11: #{_lambda_.22} parent=5 // pred_region
      %s173 = ssub.s32 %s10, 1
      // Predicated region
      $region13: #{_lambda_.22} parent=11 // pred_check
        %p174 = pneg %p131
      $region14: #{_lambda_.22} parent=11 // pred_check_branch
        %176 = sbr.rel (%p174) target = $region16
      $region15: #{_lambda_.22} parent=11 // pred_region
        _
      $region16: #{_lambda_.22} parent=11 // pred_fallthru
        _
    $region12: #{_lambda_.22} parent=5 // pred_fallthru
      _
    %p177 = scmp.lt.s32.totalorder %s10, 8
    // Predicated region
    $region17: #{_lambda_.22} parent=5 // pred_check
      %p178 = pneg %p177
    $region18: #{_lambda_.22} parent=5 // pred_check_branch
      %180 = sbr.rel (%p178) target = $region20
    $region19: #{_lambda_.22} parent=5 // pred_region
      // Predicated region
      $region21: #{_lambda_.22} parent=19 // pred_check
        %p181 = pneg %p44
      $region22: #{_lambda_.22} parent=19 // pred_check_branch
        %183 = sbr.rel (%p181) target = $region24
      $region23: #{_lambda_.22} parent=19 // pred_region
        %p184 = scmp.lt.s32.totalorder %s17, 1
        %s185 = scalar_select %p184, %s17, 1
        %p186 = scmp.lt.s32.totalorder %s18, 5
        %s187 = scalar_select %p186, %s18, 5
        %s188 = smul.addr %s185, 6
        %s189 = sadd.s32 %s187, %s188
        %s190 = smul.addr %s189, 4
        %s191 = scalar_lea.vmem %s0, %s190
      $region24: #{_lambda_.22} parent=19 // pred_fallthru
        _
      // Predicated region
      $region25: #{_lambda_.22} parent=19 // pred_check
        %p192 = pneg %p74
      $region26: #{_lambda_.22} parent=19 // pred_check_branch
        %194 = sbr.rel (%p192) target = $region28
      $region27: #{_lambda_.22} parent=19 // pred_region
        %s195 = sadd.s32 %s18, 1
        %p196 = scmp.lt.s32.totalorder %s17, 1
        %s197 = scalar_select %p196, %s17, 1
        %p198 = scmp.lt.s32.totalorder %s195, 5
        %s199 = scalar_select %p198, %s195, 5
        %s200 = smul.addr %s197, 6
        %s201 = sadd.s32 %s199, %s200
        %s202 = smul.addr %s201, 4
        %s203 = scalar_lea.vmem %s1, %s202
        %s204 = sadd.s32 %s18, 1
      $region28: #{_lambda_.22} parent=19 // pred_fallthru
        _
      // Predicated region
      $region29: #{_lambda_.22} parent=19 // pred_check
        %p205 = pneg %p104
      $region30: #{_lambda_.22} parent=19 // pred_check_branch
        %207 = sbr.rel (%p205) target = $region32
      $region31: #{_lambda_.22} parent=19 // pred_region
        %s208 = sadd.s32 %s18, 2
        %p209 = scmp.lt.s32.totalorder %s17, 1
        %s210 = scalar_select %p209, %s17, 1
        %p211 = scmp.lt.s32.totalorder %s208, 5
        %s212 = scalar_select %p211, %s208, 5
        %s213 = smul.addr %s210, 6
        %s214 = sadd.s32 %s212, %s213
        %s215 = smul.addr %s214, 4
        %s216 = scalar_lea.vmem %s2, %s215
        %s217 = sadd.s32 %s18, 2
      $region32: #{_lambda_.22} parent=19 // pred_fallthru
        _
    $region20: #{_lambda_.22} parent=5 // pred_fallthru
      _
    %p218 = scmp.le.s32.totalorder 1, %s10
    %p219 = scmp.lt.s32.totalorder %s10, 9
    %p220 = pnand %p218, %p219
    %p221 = pneg %p220
    // Predicated region
    $region33: #{_lambda_.22} parent=5 // pred_check
      _
    $region34: #{_lambda_.22} parent=5 // pred_check_branch
      %223 = sbr.rel (%p220) target = $region36
    $region35: #{_lambda_.22} parent=5 // pred_region
      %s224 = ssub.s32 %s10, 1
      %p225 = scmp.lt.s32.totalorder %s19, 1
      %s226 = scalar_select %p225, %s19, 1
      %p227 = scmp.lt.s32.totalorder %s20, 5
      %s228 = scalar_select %p227, %s20, 5
      %s229 = smul.addr %s226, 6
      %s230 = sadd.s32 %s228, %s229
      %s231 = smul.addr %s230, 4
      %s232 = scalar_lea.vmem %s0, %s231
      %p233 = pneg %p50
      %p234 = pneg %p47
      %s235 = sadd.s32 %s20, 1
      %p236 = scmp.lt.s32.totalorder %s19, 1
      %s237 = scalar_select %p236, %s19, 1
      %p238 = scmp.lt.s32.totalorder %s235, 5
      %s239 = scalar_select %p238, %s235, 5
      %s240 = smul.addr %s237, 6
      %s241 = sadd.s32 %s239, %s240
      %s242 = smul.addr %s241, 4
      %s243 = scalar_lea.vmem %s1, %s242
      %p244 = pneg %p80
      %p245 = pneg %p77
      %s246 = sadd.s32 %s20, 2
      %p247 = scmp.lt.s32.totalorder %s19, 1
      %s248 = scalar_select %p247, %s19, 1
      %p249 = scmp.lt.s32.totalorder %s246, 5
      %s250 = scalar_select %p249, %s246, 5
      %s251 = smul.addr %s248, 6
      %s252 = sadd.s32 %s250, %s251
      %s253 = smul.addr %s252, 4
      %s254 = scalar_lea.vmem %s2, %s253
      %p255 = pneg %p110
      %p256 = pneg %p107
      %p257 = pneg %p131
      %p258 = pneg %p128
      %p259 = pneg %p159
      %p260 = pneg %p156
      %p261 = scmp.lt.s32.totalorder %s19, 1
      %s262 = scalar_select %p261, %s19, 1
      %p263 = scmp.lt.s32.totalorder %s20, 3
      %s264 = scalar_select %p263, %s20, 3
      %s265 = smul.addr %s262, 4
      %s266 = sadd.s32 %s264, %s265
      %s267 = smul.addr %s266, 2
      %s268 = scalar_lea.vmem %s4, %s267
      %p269 = scmp.lt.s32.totalorder %s19, 1
      %s270 = scalar_select %p269, %s19, 1
      %p271 = scmp.lt.s32.totalorder %s20, 5
      %s272 = scalar_select %p271, %s20, 5
      %s273 = smul.addr %s270, 6
      %s274 = sadd.s32 %s272, %s273
      %s275 = smul.addr %s274, 4
      %s276 = scalar_lea.vmem %s0, %s275
      %s277 = sadd.s32 %s20, 1
      %p278 = scmp.lt.s32.totalorder %s19, 1
      %s279 = scalar_select %p278, %s19, 1
      %p280 = scmp.lt.s32.totalorder %s277, 5
      %s281 = scalar_select %p280, %s277, 5
      %s282 = smul.addr %s279, 6
      %s283 = sadd.s32 %s281, %s282
      %s284 = smul.addr %s283, 4
      %s285 = scalar_lea.vmem %s1, %s284
      %s286 = sadd.s32 %s20, 1
      %s287 = sadd.s32 %s20, 2
      %p288 = scmp.lt.s32.totalorder %s19, 1
      %s289 = scalar_select %p288, %s19, 1
      %p290 = scmp.lt.s32.totalorder %s287, 5
      %s291 = scalar_select %p290, %s287, 5
      %s292 = smul.addr %s289, 6
      %s293 = sadd.s32 %s291, %s292
      %s294 = smul.addr %s293, 4
      %s295 = scalar_lea.vmem %s2, %s294
      %s296 = sadd.s32 %s20, 2
      %p297 = scmp.lt.s32.totalorder %s19, 1
      %s298 = scalar_select %p297, %s19, 1
      %p299 = scmp.lt.s32.totalorder %s20, 3
      %s300 = scalar_select %p299, %s20, 3
      %s301 = smul.addr %s298, 4
      %s302 = sadd.s32 %s300, %s301
      %s303 = smul.addr %s302, 2
      %s304 = scalar_lea.vmem %s4, %s303
      %v306 = vld [vmem:[%s276] sm:$0x3]
      %v307 = vld [vmem:[%s3] sm:$0xf]
      %v308 = vld [vmem:[%s3 + $0x4] sm:$0xf]
      %v309 = vld [vmem:[%s3 + $0x8] sm:$0xf]
      %v310 = vld [vmem:[%s3 + $0xc] sm:$0xf]
      %v311 = vld [vmem:[%s276] sm:$0x7]
      %s312 = scalar_lea.vmem %s3, 16
      %v313 = vld [vmem:[%s312] sm:$0xf]
      %v314 = vld [vmem:[%s312 + $0x4] sm:$0xf]
      %v315 = vld [vmem:[%s312 + $0x8] sm:$0xf]
      %v316 = vld [vmem:[%s312 + $0xc] sm:$0xf]
      %v318 = vunpack.c.l.b16 %v311
      %v319 = vpack.c.b16 %v318, %v318
      %v321 = vshrl.u32 %v319, 16
      %v323 = vshll.u32 %v319, 16
      %v325 = vrot.slane %v323, 1
      %v326 = vor.u32 %v321, %v325
      %v331 = vunpack.c.l.b16 %v313
      %v332 = vunpack.c.l.b16 %v314
      %v333 = vunpack.c.l.b16 %v315
      %v334 = vunpack.c.l.b16 %v316
      %v335 = vpack.c.b16 %v332, %v331
      %v336 = vpack.c.b16 %v334, %v333
      %vm339 = vcmask 261120
      %v341 = vsel %vm339, %v326, 0
      %343 = vmatpush.bf16.msra.mxu0 0
      %344 = vmatpush.bf16.msra.mxu0 0
      %345 = vmatpush.bf16.msra.mxu0 0
      %346 = vmatpush.bf16.msra.mxu0 0
      %347 = vmatpush.bf16.msra.mxu0 0
      %348 = vmatpush.bf16.msra.mxu0 0
      %349 = vmatpush.bf16.msra.mxu0 %v336
      %350 = vmatpush.bf16.msra.mxu0 %v335
      %351 = vmatmul.bf16.gmra.mxu0 %v341
      %v352 = vpop.f32.mrf.mxu0
      %v353 = vadd.f32 0.0, %v352
      %v354 = vpop.f32.mrf.mxu0
      %355 = vdwg.mxu0
      %v360 = vunpack.c.l.b16 %v307
      %v361 = vunpack.c.l.b16 %v308
      %v362 = vunpack.c.l.b16 %v309
      %v363 = vunpack.c.l.b16 %v310
      %v364 = vpack.c.b16 %v361, %v360
      %v365 = vpack.c.b16 %v363, %v362
      %v369 = vsel %vm339, %v306, 0
      %371 = vmatpush.bf16.msra.mxu0 0
      %372 = vmatpush.bf16.msra.mxu0 0
      %373 = vmatpush.bf16.msra.mxu0 0
      %374 = vmatpush.bf16.msra.mxu0 0
      %375 = vmatpush.bf16.msra.mxu0 0
      %376 = vmatpush.bf16.msra.mxu0 0
      %377 = vmatpush.bf16.msra.mxu0 %v365
      %378 = vmatpush.bf16.msra.mxu0 %v364
      %379 = vmatmul.bf16.gmra.mxu0 %v369
      %v380 = vpop.f32.mrf.mxu0
      %v381 = vadd.f32 %v353, %v380
      %v382 = vpop.f32.mrf.mxu0
      %383 = vdwg.mxu0
      %v384 = vld [vmem:[%s276] sm:$0x6]
      %s385 = scalar_lea.vmem %s3, 32
      %v386 = vld [vmem:[%s385] sm:$0xf]
      %v387 = vld [vmem:[%s385 + $0x4] sm:$0xf]
      %v388 = vld [vmem:[%s385 + $0x8] sm:$0xf]
      %v389 = vld [vmem:[%s385 + $0xc] sm:$0xf]
      %v391 = vunpack.c.l.b16 %v384
      %v392 = vpack.c.b16 %v391, %v391
      %v393 = vrot.slane %v392, 1
      %v398 = vunpack.c.l.b16 %v386
      %v399 = vunpack.c.l.b16 %v387
      %v400 = vunpack.c.l.b16 %v388
      %v401 = vunpack.c.l.b16 %v389
      %v402 = vpack.c.b16 %v399, %v398
      %v403 = vpack.c.b16 %v401, %v400
      %v407 = vsel %vm339, %v393, 0
      %409 = vmatpush.bf16.msra.mxu0 0
      %410 = vmatpush.bf16.msra.mxu0 0
      %411 = vmatpush.bf16.msra.mxu0 0
      %412 = vmatpush.bf16.msra.mxu0 0
      %413 = vmatpush.bf16.msra.mxu0 0
      %414 = vmatpush.bf16.msra.mxu0 0
      %415 = vmatpush.bf16.msra.mxu0 %v403
      %416 = vmatpush.bf16.msra.mxu0 %v402
      %417 = vmatmul.bf16.gmra.mxu0 %v407
      %v418 = vpop.f32.mrf.mxu0
      %v419 = vadd.f32 0.0, %v418
      %v420 = vpop.f32.mrf.mxu0
      %421 = vdwg.mxu0
      %v422 = vadd.f32 %v381, %v419
      %v423 = vld [vmem:[%s285] sm:$0x3]
      %s424 = scalar_lea.vmem %s3, 48
      %v425 = vld [vmem:[%s424] sm:$0xf]
      %v426 = vld [vmem:[%s424 + $0x4] sm:$0xf]
      %v427 = vld [vmem:[%s424 + $0x8] sm:$0xf]
      %v428 = vld [vmem:[%s424 + $0xc] sm:$0xf]
      %v433 = vunpack.c.l.b16 %v425
      %v434 = vunpack.c.l.b16 %v426
      %v435 = vunpack.c.l.b16 %v427
      %v436 = vunpack.c.l.b16 %v428
      %v437 = vpack.c.b16 %v434, %v433
      %v438 = vpack.c.b16 %v436, %v435
      %v442 = vsel %vm339, %v423, 0
      %444 = vmatpush.bf16.msra.mxu0 0
      %445 = vmatpush.bf16.msra.mxu0 0
      %446 = vmatpush.bf16.msra.mxu0 0
      %447 = vmatpush.bf16.msra.mxu0 0
      %448 = vmatpush.bf16.msra.mxu0 0
      %449 = vmatpush.bf16.msra.mxu0 0
      %450 = vmatpush.bf16.msra.mxu0 %v438
      %451 = vmatpush.bf16.msra.mxu0 %v437
      %452 = vmatmul.bf16.gmra.mxu0 %v442
      %v453 = vpop.f32.mrf.mxu0
      %v454 = vadd.f32 0.0, %v453
      %v455 = vpop.f32.mrf.mxu0
      %456 = vdwg.mxu0
      %v457 = vadd.f32 %v422, %v454
      %v458 = vld [vmem:[%s285] sm:$0x7]
      %s459 = scalar_lea.vmem %s3, 64
      %v460 = vld [vmem:[%s459] sm:$0xf]
      %v461 = vld [vmem:[%s459 + $0x4] sm:$0xf]
      %v462 = vld [vmem:[%s459 + $0x8] sm:$0xf]
      %v463 = vld [vmem:[%s459 + $0xc] sm:$0xf]
      %v465 = vunpack.c.l.b16 %v458
      %v466 = vpack.c.b16 %v465, %v465
      %v468 = vshrl.u32 %v466, 16
      %v470 = vshll.u32 %v466, 16
      %v472 = vrot.slane %v470, 1
      %v473 = vor.u32 %v468, %v472
      %v478 = vunpack.c.l.b16 %v460
      %v479 = vunpack.c.l.b16 %v461
      %v480 = vunpack.c.l.b16 %v462
      %v481 = vunpack.c.l.b16 %v463
      %v482 = vpack.c.b16 %v479, %v478
      %v483 = vpack.c.b16 %v481, %v480
      %v487 = vsel %vm339, %v473, 0
      %489 = vmatpush.bf16.msra.mxu0 0
      %490 = vmatpush.bf16.msra.mxu0 0
      %491 = vmatpush.bf16.msra.mxu0 0
      %492 = vmatpush.bf16.msra.mxu0 0
      %493 = vmatpush.bf16.msra.mxu0 0
      %494 = vmatpush.bf16.msra.mxu0 0
      %495 = vmatpush.bf16.msra.mxu0 %v483
      %496 = vmatpush.bf16.msra.mxu0 %v482
      %497 = vmatmul.bf16.gmra.mxu0 %v487
      %v498 = vpop.f32.mrf.mxu0
      %v499 = vadd.f32 0.0, %v498
      %v500 = vpop.f32.mrf.mxu0
      %501 = vdwg.mxu0
      %v502 = vadd.f32 %v457, %v499
      %v503 = vld [vmem:[%s285] sm:$0x6]
      %s504 = scalar_lea.vmem %s3, 80
      %v505 = vld [vmem:[%s504] sm:$0xf]
      %v506 = vld [vmem:[%s504 + $0x4] sm:$0xf]
      %v507 = vld [vmem:[%s504 + $0x8] sm:$0xf]
      %v508 = vld [vmem:[%s504 + $0xc] sm:$0xf]
      %v510 = vunpack.c.l.b16 %v503
      %v511 = vpack.c.b16 %v510, %v510
      %v512 = vrot.slane %v511, 1
      %v517 = vunpack.c.l.b16 %v505
      %v518 = vunpack.c.l.b16 %v506
      %v519 = vunpack.c.l.b16 %v507
      %v520 = vunpack.c.l.b16 %v508
      %v521 = vpack.c.b16 %v518, %v517
      %v522 = vpack.c.b16 %v520, %v519
      %v526 = vsel %vm339, %v512, 0
      %528 = vmatpush.bf16.msra.mxu0 0
      %529 = vmatpush.bf16.msra.mxu0 0
      %530 = vmatpush.bf16.msra.mxu0 0
      %531 = vmatpush.bf16.msra.mxu0 0
      %532 = vmatpush.bf16.msra.mxu0 0
      %533 = vmatpush.bf16.msra.mxu0 0
      %534 = vmatpush.bf16.msra.mxu0 %v522
      %535 = vmatpush.bf16.msra.mxu0 %v521
      %536 = vmatmul.bf16.gmra.mxu0 %v526
      %v537 = vpop.f32.mrf.mxu0
      %v538 = vadd.f32 0.0, %v537
      %v539 = vpop.f32.mrf.mxu0
      %540 = vdwg.mxu0
      %v541 = vadd.f32 %v502, %v538
      %v542 = vld [vmem:[%s295] sm:$0x3]
      %s543 = scalar_lea.vmem %s3, 96
      %v544 = vld [vmem:[%s543] sm:$0xf]
      %v545 = vld [vmem:[%s543 + $0x4] sm:$0xf]
      %v546 = vld [vmem:[%s543 + $0x8] sm:$0xf]
      %v547 = vld [vmem:[%s543 + $0xc] sm:$0xf]
      %v552 = vunpack.c.l.b16 %v544
      %v553 = vunpack.c.l.b16 %v545
      %v554 = vunpack.c.l.b16 %v546
      %v555 = vunpack.c.l.b16 %v547
      %v556 = vpack.c.b16 %v553, %v552
      %v557 = vpack.c.b16 %v555, %v554
      %v561 = vsel %vm339, %v542, 0
      %563 = vmatpush.bf16.msra.mxu0 0
      %564 = vmatpush.bf16.msra.mxu0 0
      %565 = vmatpush.bf16.msra.mxu0 0
      %566 = vmatpush.bf16.msra.mxu0 0
      %567 = vmatpush.bf16.msra.mxu0 0
      %568 = vmatpush.bf16.msra.mxu0 0
      %569 = vmatpush.bf16.msra.mxu0 %v557
      %570 = vmatpush.bf16.msra.mxu0 %v556
      %571 = vmatmul.bf16.gmra.mxu0 %v561
      %v572 = vpop.f32.mrf.mxu0
      %v573 = vadd.f32 0.0, %v572
      %v574 = vpop.f32.mrf.mxu0
      %575 = vdwg.mxu0
      %v576 = vadd.f32 %v541, %v573
      %v577 = vld [vmem:[%s295] sm:$0x7]
      %s578 = scalar_lea.vmem %s3, 112
      %v579 = vld [vmem:[%s578] sm:$0xf]
      %v580 = vld [vmem:[%s578 + $0x4] sm:$0xf]
      %v581 = vld [vmem:[%s578 + $0x8] sm:$0xf]
      %v582 = vld [vmem:[%s578 + $0xc] sm:$0xf]
      %v584 = vunpack.c.l.b16 %v577
      %v585 = vpack.c.b16 %v584, %v584
      %v587 = vshrl.u32 %v585, 16
      %v589 = vshll.u32 %v585, 16
      %v591 = vrot.slane %v589, 1
      %v592 = vor.u32 %v587, %v591
      %v597 = vunpack.c.l.b16 %v579
      %v598 = vunpack.c.l.b16 %v580
      %v599 = vunpack.c.l.b16 %v581
      %v600 = vunpack.c.l.b16 %v582
      %v601 = vpack.c.b16 %v598, %v597
      %v602 = vpack.c.b16 %v600, %v599
      %v606 = vsel %vm339, %v592, 0
      %608 = vmatpush.bf16.msra.mxu0 0
      %609 = vmatpush.bf16.msra.mxu0 0
      %610 = vmatpush.bf16.msra.mxu0 0
      %611 = vmatpush.bf16.msra.mxu0 0
      %612 = vmatpush.bf16.msra.mxu0 0
      %613 = vmatpush.bf16.msra.mxu0 0
      %614 = vmatpush.bf16.msra.mxu0 %v602
      %615 = vmatpush.bf16.msra.mxu0 %v601
      %616 = vmatmul.bf16.gmra.mxu0 %v606
      %v617 = vpop.f32.mrf.mxu0
      %v618 = vadd.f32 0.0, %v617
      %v619 = vpop.f32.mrf.mxu0
      %620 = vdwg.mxu0
      %v621 = vadd.f32 %v576, %v618
      %v622 = vld [vmem:[%s295] sm:$0x6]
      %s623 = scalar_lea.vmem %s3, 128
      %v624 = vld [vmem:[%s623] sm:$0xf]
      %v625 = vld [vmem:[%s623 + $0x4] sm:$0xf]
      %v626 = vld [vmem:[%s623 + $0x8] sm:$0xf]
      %v627 = vld [vmem:[%s623 + $0xc] sm:$0xf]
      %v629 = vunpack.c.l.b16 %v622
      %v630 = vpack.c.b16 %v629, %v629
      %v631 = vrot.slane %v630, 1
      %v636 = vunpack.c.l.b16 %v624
      %v637 = vunpack.c.l.b16 %v625
      %v638 = vunpack.c.l.b16 %v626
      %v639 = vunpack.c.l.b16 %v627
      %v640 = vpack.c.b16 %v637, %v636
      %v641 = vpack.c.b16 %v639, %v638
      %v645 = vsel %vm339, %v631, 0
      %647 = vmatpush.bf16.msra.mxu0 0
      %648 = vmatpush.bf16.msra.mxu0 0
      %649 = vmatpush.bf16.msra.mxu0 0
      %650 = vmatpush.bf16.msra.mxu0 0
      %651 = vmatpush.bf16.msra.mxu0 0
      %652 = vmatpush.bf16.msra.mxu0 0
      %653 = vmatpush.bf16.msra.mxu0 %v641
      %654 = vmatpush.bf16.msra.mxu0 %v640
      %655 = vmatmul.bf16.gmra.mxu0 %v645
      %v656 = vpop.f32.mrf.mxu0
      %v657 = vadd.f32 0.0, %v656
      %v658 = vpop.f32.mrf.mxu0
      %659 = vdwg.mxu0
      %v660 = vadd.f32 %v621, %v657
      %v661 = vpack.c.bf16 %v660, %v660
      %vm662 = vcmask 58368
      %663 = vst.msk [vmem:[%s304] sm:$0x3] %vm662, %v661
      %p664 = scmp.lt.s32.totalorder %s19, 1
      %s665 = scalar_select %p664, %s19, 1
      %p666 = scmp.lt.s32.totalorder %s20, 3
      %s667 = scalar_select %p666, %s20, 3
      %s668 = smul.addr %s665, 4
      %s669 = sadd.s32 %s667, %s668
      %s670 = smul.addr %s669, 2
      %s671 = scalar_lea.vmem %s4, %s670
      // Predicated region
      $region37: #{_lambda_.22} parent=35 // pred_check
        %p672 = pneg %p156
      $region38: #{_lambda_.22} parent=35 // pred_check_branch
        %674 = sbr.rel (%p672) target = $region40
      $region39: #{_lambda_.22} parent=35 // pred_region
        _
      $region40: #{_lambda_.22} parent=35 // pred_fallthru
        _
    $region36: #{_lambda_.22} parent=5 // pred_fallthru
      _
    %p675 = scmp.le.s32.totalorder 2, %s10
    // Predicated region
    $region41: #{_lambda_.22} parent=5 // pred_check
      %p676 = pneg %p675
    $region42: #{_lambda_.22} parent=5 // pred_check_branch
      %678 = sbr.rel (%p676) target = $region44
    $region43: #{_lambda_.22} parent=5 // pred_region
      %s679 = ssub.s32 %s10, 2
      // Predicated region
      $region45: #{_lambda_.22} parent=43 // pred_check
        %p680 = pneg %p162
      $region46: #{_lambda_.22} parent=43 // pred_check_branch
        %682 = sbr.rel (%p680) target = $region48
      $region47: #{_lambda_.22} parent=43 // pred_region
        %p683 = scmp.lt.s32.totalorder %s21, 1
        %s684 = scalar_select %p683, %s21, 1
        %p685 = scmp.lt.s32.totalorder %s22, 3
        %s686 = scalar_select %p685, %s22, 3
        %s687 = smul.addr %s684, 4
        %s688 = sadd.s32 %s686, %s687
        %s689 = smul.addr %s688, 2
        %s690 = scalar_lea.vmem %s4, %s689
      $region48: #{_lambda_.22} parent=43 // pred_fallthru
        _
    $region44: #{_lambda_.22} parent=5 // pred_fallthru
      _
  $region6: #{_lambda_.22} parent=0 // loop_footer
    %s14 = sadd.s32 1, %s10
  $region7: #{_lambda_.22} parent=0 // loop_footer_branch
    %9 = sbr.rel target = $region3
  $region8: #{_lambda_.22} parent=0 // loop_exit
    _

// kernel: _lambda_.23
$region0: #{_lambda_.23}
  #allocation0 [shape = 'u32[]', space=smem, size = 0x4, offset = 0x4, fixed_abs, tag = 'smem constant byte address 0x4 - core index']
  #allocation1 [shape = 'u32[72,128]{1,0:T(1,128)}', space=vmem, size = 0x9000, scoped, tag = 'internal scratch']
  #allocation2 [shape = 'f32[32,32]{1,0:T(8,128)}', space=vmem, size = 0x4000, scoped, tag = 'scratch operand']
  %s0 = inlined_call_operand.vmem [shape: bf16[32,24], index: 0, kind: input, shape index: {}]
  %s1 = inlined_call_operand.vmem [shape: bf16[24,32], index: 1, kind: input, shape index: {}]
  %s2 = inlined_call_operand.vmem [shape: f32[1,24], index: 2, kind: input, shape index: {}]
  %s3 = inlined_call_operand.vmem [shape: f32[1,24], index: 3, kind: input, shape index: {}]
  %s4 = inlined_call_operand.vmem [shape: f32[1,32], index: 4, kind: input, shape index: {}]
  %s5 = inlined_call_operand.vmem [shape: f32[1,32], index: 5, kind: input, shape index: {}]
  %s6 = inlined_call_operand.vmem [shape: bf16[32,32], index: 6, kind: output, shape index: {}]
  %s7 = sld [smem:[#allocation0]]
  $region42: #{_lambda_.23} parent=0
    _
  %s9 = ssub.s32 1, %s7
  %s10 = scalar_select 0, %s9, %s7
  // Predicated region
  $region2: #{_lambda_.23} parent=0 // pred_check
    _
  $region3: #{_lambda_.23} parent=0 // pred_check_branch
    %12 = sbr.rel (0) target = $region5
  $region4: #{_lambda_.23} parent=0 // pred_region
    _
  $region5: #{_lambda_.23} parent=0 // pred_fallthru
    _
  // Predicated region
  $region6: #{_lambda_.23} parent=0 // pred_check
    _
  $region7: #{_lambda_.23} parent=0 // pred_check_branch
    %14 = sbr.rel (0) target = $region9
  $region8: #{_lambda_.23} parent=0 // pred_region
    _
  $region9: #{_lambda_.23} parent=0 // pred_fallthru
    _
  // Predicated region
  $region10: #{_lambda_.23} parent=0 // pred_check
    _
  $region11: #{_lambda_.23} parent=0 // pred_check_branch
    %16 = sbr.rel (0) target = $region13
  $region12: #{_lambda_.23} parent=0 // pred_region
    _
  $region13: #{_lambda_.23} parent=0 // pred_fallthru
    _
  // Predicated region
  $region14: #{_lambda_.23} parent=0 // pred_check
    _
  $region15: #{_lambda_.23} parent=0 // pred_check_branch
    %18 = sbr.rel (0) target = $region17
  $region16: #{_lambda_.23} parent=0 // pred_region
    _
  $region17: #{_lambda_.23} parent=0 // pred_fallthru
    _
  // Predicated region
  $region18: #{_lambda_.23} parent=0 // pred_check
    _
  $region19: #{_lambda_.23} parent=0 // pred_check_branch
    %20 = sbr.rel (0) target = $region21
  $region20: #{_lambda_.23} parent=0 // pred_region
    _
  $region21: #{_lambda_.23} parent=0 // pred_fallthru
    _
  // Predicated region
  $region22: #{_lambda_.23} parent=0 // pred_check
    _
  $region23: #{_lambda_.23} parent=0 // pred_check_branch
    %22 = sbr.rel (0) target = $region25
  $region24: #{_lambda_.23} parent=0 // pred_region
    _
  $region25: #{_lambda_.23} parent=0 // pred_fallthru
    _
  %p24 = scmp.eq.s32.totalorder 0, 0
  // Predicated region
  $region26: #{_lambda_.23} parent=0 // pred_check
    %p25 = pneg %p24
  $region27: #{_lambda_.23} parent=0 // pred_check_branch
    %27 = sbr.rel (%p25) target = $region29
  $region28: #{_lambda_.23} parent=0 // pred_region
    %vm28 = vcmask 261120
    %29 = vst.msk [vmem:[#allocation2] sm:$0xff] %vm28, 0.0
    %30 = vst.msk [vmem:[#allocation2 + $0x8] sm:$0xff] %vm28, 0.0
    %31 = vst.msk [vmem:[#allocation2 + $0x10] sm:$0xff] %vm28, 0.0
    %32 = vst.msk [vmem:[#allocation2 + $0x18] sm:$0xff] %vm28, 0.0
  $region29: #{_lambda_.23} parent=0 // pred_fallthru
    _
  %v33 = vld [vmem:[%s0] sm:$0xf]
  %v34 = vld [vmem:[%s0 + $0x4] sm:$0xf]
  %v35 = vld [vmem:[%s0 + $0x8] sm:$0xf]
  %v36 = vld [vmem:[%s0 + $0xc] sm:$0xf]
  %v37 = vunpack.c.l.bf16 %v33
  %v38 = vunpack.c.l.bf16 %v34
  %v39 = vunpack.c.l.bf16 %v35
  %v40 = vunpack.c.l.bf16 %v36
  %v41 = vld [vmem:[%s2] sm:$0x1]
  %v43 = vperm.slane %v41, 0
  %v45 = vmul.f32 %v37, %v43
  %v46 = vmul.f32 %v38, %v43
  %v47 = vmul.f32 %v39, %v43
  %v48 = vmul.f32 %v40, %v43
  %v49 = vld [vmem:[%s3] sm:$0x1]
  %v51 = vperm.slane %v49, 0
  %v53 = vadd.f32 %v45, %v51
  %v54 = vadd.f32 %v46, %v51
  %v55 = vadd.f32 %v47, %v51
  %v56 = vadd.f32 %v48, %v51
  %v57 = vmax.f32 %v53, 0.0
  %v58 = vmax.f32 %v54, 0.0
  %v59 = vmax.f32 %v55, 0.0
  %v60 = vmax.f32 %v56, 0.0
  %v61 = vpack.c.bf16 %v58, %v57
  %v62 = vpack.c.bf16 %v60, %v59
  %v63 = vld [vmem:[#allocation2] sm:$0xff]
  %v64 = vld [vmem:[#allocation2 + $0x8] sm:$0xff]
  %v65 = vld [vmem:[#allocation2 + $0x10] sm:$0xff]
  %v66 = vld [vmem:[#allocation2 + $0x18] sm:$0xff]
  %v67 = vld [vmem:[%s1] sm:$0xf]
  %v68 = vld [vmem:[%s1 + $0x4] sm:$0xf]
  %v69 = vld [vmem:[%s1 + $0x8] sm:$0xf]
  %v73 = vunpack.c.l.b16 %v67
  %v74 = vunpack.c.l.b16 %v68
  %v75 = vunpack.c.l.b16 %v69
  %v76 = vpack.c.b16 %v74, %v73
  %v77 = vpack.c.b16 %v75, %v75
  %vm79 = vcmask 195584
  %v81 = vsel %vm79, %v61, 0
  %v84 = vsel %vm79, %v62, 0
  %vm86 = vcmask 1043456
  %v88 = vsel %vm86, %v77, 0
  %90 = vmatpush.bf16.msra.mxu0 0
  %91 = vmatpush.bf16.msra.mxu0 0
  %92 = vmatpush.bf16.msra.mxu0 0
  %93 = vmatpush.bf16.msra.mxu0 0
  %94 = vmatpush.bf16.msra.mxu0 0
  %95 = vmatpush.bf16.msra.mxu0 0
  %96 = vmatpush.bf16.msra.mxu0 %v88
  %97 = vmatpush.bf16.msra.mxu0 %v76
  %98 = vmatmul.bf16.gmra.mxu0 %v81
  %v99 = vpop.f32.mrf.mxu0
  %v100 = vadd.f32 0.0, %v99
  %v101 = vpop.f32.mrf.mxu0
  %v102 = vadd.f32 0.0, %v101
  %103 = vmatmul.bf16.gmra.mxu0 %v84
  %v104 = vpop.f32.mrf.mxu0
  %v105 = vadd.f32 0.0, %v104
  %v106 = vpop.f32.mrf.mxu0
  %v107 = vadd.f32 0.0, %v106
  %108 = vdwg.mxu0
  %v109 = vadd.f32 %v63, %v100
  %v110 = vadd.f32 %v64, %v102
  %v111 = vadd.f32 %v65, %v105
  %v112 = vadd.f32 %v66, %v107
  %vm113 = vcmask 261120
  %114 = vst.msk [vmem:[#allocation2] sm:$0xff] %vm113, %v109
  %115 = vst.msk [vmem:[#allocation2 + $0x8] sm:$0xff] %vm113, %v110
  %116 = vst.msk [vmem:[#allocation2 + $0x10] sm:$0xff] %vm113, %v111
  %117 = vst.msk [vmem:[#allocation2 + $0x18] sm:$0xff] %vm113, %v112
  // Predicated region
  $region30: #{_lambda_.23} parent=0 // pred_check
    %p118 = pneg %p24
  $region31: #{_lambda_.23} parent=0 // pred_check_branch
    %120 = sbr.rel (%p118) target = $region33
  $region32: #{_lambda_.23} parent=0 // pred_region
    %v121 = vld [vmem:[#allocation2] sm:$0xff]
    %v122 = vld [vmem:[#allocation2 + $0x8] sm:$0xff]
    %v123 = vld [vmem:[#allocation2 + $0x10] sm:$0xff]
    %v124 = vld [vmem:[#allocation2 + $0x18] sm:$0xff]
    %v125 = vld [vmem:[%s4] sm:$0x1]
    %v127 = vperm.slane %v125, 0
    %v129 = vmul.f32 %v121, %v127
    %v130 = vmul.f32 %v122, %v127
    %v131 = vmul.f32 %v123, %v127
    %v132 = vmul.f32 %v124, %v127
    %v133 = vld [vmem:[%s5] sm:$0x1]
    %v135 = vperm.slane %v133, 0
    %v137 = vadd.f32 %v129, %v135
    %v138 = vadd.f32 %v130, %v135
    %v139 = vadd.f32 %v131, %v135
    %v140 = vadd.f32 %v132, %v135
    %v141 = vmax.f32 %v137, 0.0
    %v142 = vmax.f32 %v138, 0.0
    %v143 = vmax.f32 %v139, 0.0
    %v144 = vmax.f32 %v140, 0.0
    %v145 = vpack.c.bf16 %v141, %v141
    %v146 = vpack.c.bf16 %v142, %v142
    %v147 = vpack.c.bf16 %v143, %v143
    %v148 = vpack.c.bf16 %v144, %v144
    %vm149 = vcmask 257024
    %150 = vst.msk [vmem:[%s6] sm:$0xf] %vm149, %v145
    %151 = vst.msk [vmem:[%s6 + $0x4] sm:$0xf] %vm149, %v146
    %152 = vst.msk [vmem:[%s6 + $0x8] sm:$0xf] %vm149, %v147
    %153 = vst.msk [vmem:[%s6 + $0xc] sm:$0xf] %vm149, %v148
  $region33: #{_lambda_.23} parent=0 // pred_fallthru
    _
  // Predicated region
  $region34: #{_lambda_.23} parent=0 // pred_check
    _
  $region35: #{_lambda_.23} parent=0 // pred_check_branch
    %155 = sbr.rel (0) target = $region37
  $region36: #{_lambda_.23} parent=0 // pred_region
    _
  $region37: #{_lambda_.23} parent=0 // pred_fallthru
    _
  // Predicated region
  $region38: #{_lambda_.23} parent=0 // pred_check
    _
  $region39: #{_lambda_.23} parent=0 // pred_check_branch
    %157 = sbr.rel (0) target = $region41
  $region40: #{_lambda_.23} parent=0 // pred_region
    _
  $region41: #{_lambda_.23} parent=0 // pred_fallthru
    _

// kernel: _lambda_.25
$region0: #{_lambda_.25}
  #allocation0 [shape = 'u32[]', space=smem, size = 0x4, offset = 0x4, fixed_abs, tag = 'smem constant byte address 0x4 - core index']
  #allocation1 [shape = 'u32[72,128]{1,0:T(1,128)}', space=vmem, size = 0x9000, scoped, tag = 'internal scratch']
  #allocation2 [shape = 'f32[2,32]{1,0:T(2,128)}', space=vmem, size = 0x400, scoped, tag = 'scratch operand']
  %s0 = inlined_call_operand.vmem [shape: bf16[2,4,4,32], index: 0, kind: input, shape index: {}]
  %s1 = inlined_call_operand.vmem [shape: f32[1,1,1,32], index: 1, kind: input, shape index: {}]
  %s2 = inlined_call_operand.vmem [shape: f32[1,1,1,32], index: 2, kind: input, shape index: {}]
  %s3 = inlined_call_operand.vmem [shape: f32[2,2], index: 3, kind: input, shape index: {}]
  %s4 = inlined_call_operand.vmem [shape: f32[2,128], index: 4, kind: input, shape index: {}]
  %s5 = inlined_call_operand.vmem [shape: f32[32,128], index: 5, kind: input, shape index: {}]
  %s6 = inlined_call_operand.vmem [shape: f32[1,128], index: 6, kind: input, shape index: {}]
  %s7 = inlined_call_operand.hbm [shape: f32[2,128], index: 7, kind: output, shape index: {}]
  %s8 = sld [smem:[#allocation0]]
  $region103: #{_lambda_.25} parent=0
    _
  %s10 = ssub.s32 1, %s8
  %s11 = scalar_select 0, %s10, %s8
  $region1: #{_lambda_.25} parent=0
    #allocation3 [shape = 'u8[4096]{0}', space=vmem, size = 0x1000, scoped, tag = 'input window, operand 0']
    #allocation4 [shape = 'u8[1024]{0}', space=vmem, size = 0x400, scoped, tag = 'output window, operand 0, single buffered']
    #allocation5 [shape = 's32[2]{0}', space=sflag, size = 0x8, scoped, tag = 'scoped memory for _lambda_.25']
    %12 = vsyncpa [#allocation5], 0
    loop: start=0, step=1, limit=6
    $region2: #{_lambda_.25} parent=1 // loop_pre_header
      _
    $region3: #{_lambda_.25} parent=1 // loop_header
      %s14 = sphi 0, %s18
      %p15 = scmp.ge.s32.totalorder %s14, 6
      %s24 = sphi 0, %s26
      %s27 = sphi 0, %s24
      %s28 = sphi 0, %s27
      %s44 = sphi 0, %s28
      %s48 = sphi 0, %s48
      %s50 = sphi 0, %s48
      %s51 = sphi 0, %s50
      %s65 = sphi 0, %s51
      %s69 = sphi 0, %s69
      %s71 = sphi 0, %s69
      %s72 = sphi 0, %s71
      %s86 = sphi 0, %s72
      %s90 = sphi 0, %s90
      %s92 = sphi 0, %s90
      %s93 = sphi 0, %s92
      %s107 = sphi 0, %s93
      %s111 = sphi 0, %s111
      %s113 = sphi 0, %s111
      %s114 = sphi 0, %s113
      %s128 = sphi 0, %s114
      %s132 = sphi 0, %s132
      %s134 = sphi 0, %s132
      %s135 = sphi 0, %s134
      %s149 = sphi 0, %s135
      %s153 = sphi 0, %s153
      %s155 = sphi 0, %s153
      %s156 = sphi 0, %s155
      %s170 = sphi 0, %s156
      %s174 = sphi 0, %s174
      %s176 = sphi 0, %s174
      %s177 = sphi 0, %s176
      %s191 = sphi 0, %s177
    $region4: #{_lambda_.25} parent=1 // loop_header_branch
      %17 = sbr.rel (%p15) target = $region8
    $region5: #{_lambda_.25} parent=1 // loop_body
      %s19 = ssub.s32 %s14, 1
      %s20 = ssub.s32 %s14, 2
      %s21 = sadd.s32 %s14, 1
      %s22 = ssub.s32 %s14, %s21
      %p23 = scmp.eq.s32.totalorder %s22, 0
      %s25 = sadd.s32 %s24, 1
      %s26 = scalar_select %p23, %s24, %s25
      %p29 = pneg %p23
      %p30 = scmp.eq.s32.totalorder %s14, 3
      %p31 = por %p29, %p30
      %p32 = scmp.ne.s32.totalorder %s24, %s27
      %p33 = scmp.eq.s32.totalorder %s14, 0
      %p34 = por %p32, %p33
      %p35 = scmp.ne.s32.totalorder %s24, %s27
      %p36 = scmp.eq.s32.totalorder %s19, 3
      %p37 = por %p35, %p36
      %p38 = scmp.ne.s32.totalorder %s27, %s28
      %p39 = scmp.eq.s32.totalorder %s19, 0
      %p40 = por %p38, %p39
      %p41 = scmp.ne.s32.totalorder %s27, %s28
      %p42 = scmp.eq.s32.totalorder %s20, 3
      %p43 = por %p41, %p42
      %p45 = scmp.ne.s32.totalorder %s28, %s44
      %p46 = scmp.eq.s32.totalorder %s20, 0
      %p47 = por %p45, %p46
      %s49 = sadd.s32 %s48, 1
      %p52 = scmp.eq.s32.totalorder %s14, 3
      %p53 = scmp.ne.s32.totalorder %s48, %s50
      %p54 = scmp.eq.s32.totalorder %s14, 0
      %p55 = por %p53, %p54
      %p56 = scmp.ne.s32.totalorder %s48, %s50
      %p57 = scmp.eq.s32.totalorder %s19, 3
      %p58 = por %p56, %p57
      %p59 = scmp.ne.s32.totalorder %s50, %s51
      %p60 = scmp.eq.s32.totalorder %s19, 0
      %p61 = por %p59, %p60
      %p62 = scmp.ne.s32.totalorder %s50, %s51
      %p63 = scmp.eq.s32.totalorder %s20, 3
      %p64 = por %p62, %p63
      %p66 = scmp.ne.s32.totalorder %s51, %s65
      %p67 = scmp.eq.s32.totalorder %s20, 0
      %p68 = por %p66, %p67
      %s70 = sadd.s32 %s69, 1
      %p73 = scmp.eq.s32.totalorder %s14, 3
      %p74 = scmp.ne.s32.totalorder %s69, %s71
      %p75 = scmp.eq.s32.totalorder %s14, 0
      %p76 = por %p74, %p75
      %p77 = scmp.ne.s32.totalorder %s69, %s71
      %p78 = scmp.eq.s32.totalorder %s19, 3
      %p79 = por %p77, %p78
      %p80 = scmp.ne.s32.totalorder %s71, %s72
      %p81 = scmp.eq.s32.totalorder %s19, 0
      %p82 = por %p80, %p81
      %p83 = scmp.ne.s32.totalorder %s71, %s72
      %p84 = scmp.eq.s32.totalorder %s20, 3
      %p85 = por %p83, %p84
      %p87 = scmp.ne.s32.totalorder %s72, %s86
      %p88 = scmp.eq.s32.totalorder %s20, 0
      %p89 = por %p87, %p88
      %s91 = sadd.s32 %s90, 1
      %p94 = scmp.eq.s32.totalorder %s14, 3
      %p95 = scmp.ne.s32.totalorder %s90, %s92
      %p96 = scmp.eq.s32.totalorder %s14, 0
      %p97 = por %p95, %p96
      %p98 = scmp.ne.s32.totalorder %s90, %s92
      %p99 = scmp.eq.s32.totalorder %s19, 3
      %p100 = por %p98, %p99
      %p101 = scmp.ne.s32.totalorder %s92, %s93
      %p102 = scmp.eq.s32.totalorder %s19, 0
      %p103 = por %p101, %p102
      %p104 = scmp.ne.s32.totalorder %s92, %s93
      %p105 = scmp.eq.s32.totalorder %s20, 3
      %p106 = por %p104, %p105
      %p108 = scmp.ne.s32.totalorder %s93, %s107
      %p109 = scmp.eq.s32.totalorder %s20, 0
      %p110 = por %p108, %p109
      %s112 = sadd.s32 %s111, 1
      %p115 = scmp.eq.s32.totalorder %s14, 3
      %p116 = scmp.ne.s32.totalorder %s111, %s113
      %p117 = scmp.eq.s32.totalorder %s14, 0
      %p118 = por %p116, %p117
      %p119 = scmp.ne.s32.totalorder %s111, %s113
      %p120 = scmp.eq.s32.totalorder %s19, 3
      %p121 = por %p119, %p120
      %p122 = scmp.ne.s32.totalorder %s113, %s114
      %p123 = scmp.eq.s32.totalorder %s19, 0
      %p124 = por %p122, %p123
      %p125 = scmp.ne.s32.totalorder %s113, %s114
      %p126 = scmp.eq.s32.totalorder %s20, 3
      %p127 = por %p125, %p126
      %p129 = scmp.ne.s32.totalorder %s114, %s128
      %p130 = scmp.eq.s32.totalorder %s20, 0
      %p131 = por %p129, %p130
      %s133 = sadd.s32 %s132, 1
      %p136 = scmp.eq.s32.totalorder %s14, 3
      %p137 = scmp.ne.s32.totalorder %s132, %s134
      %p138 = scmp.eq.s32.totalorder %s14, 0
      %p139 = por %p137, %p138
      %p140 = scmp.ne.s32.totalorder %s132, %s134
      %p141 = scmp.eq.s32.totalorder %s19, 3
      %p142 = por %p140, %p141
      %p143 = scmp.ne.s32.totalorder %s134, %s135
      %p144 = scmp.eq.s32.totalorder %s19, 0
      %p145 = por %p143, %p144
      %p146 = scmp.ne.s32.totalorder %s134, %s135
      %p147 = scmp.eq.s32.totalorder %s20, 3
      %p148 = por %p146, %p147
      %p150 = scmp.ne.s32.totalorder %s135, %s149
      %p151 = scmp.eq.s32.totalorder %s20, 0
      %p152 = por %p150, %p151
      %s154 = sadd.s32 %s153, 1
      %p157 = scmp.eq.s32.totalorder %s14, 3
      %p158 = scmp.ne.s32.totalorder %s153, %s155
      %p159 = scmp.eq.s32.totalorder %s14, 0
      %p160 = por %p158, %p159
      %p161 = scmp.ne.s32.totalorder %s153, %s155
      %p162 = scmp.eq.s32.totalorder %s19, 3
      %p163 = por %p161, %p162
      %p164 = scmp.ne.s32.totalorder %s155, %s156
      %p165 = scmp.eq.s32.totalorder %s19, 0
      %p166 = por %p164, %p165
      %p167 = scmp.ne.s32.totalorder %s155, %s156
      %p168 = scmp.eq.s32.totalorder %s20, 3
      %p169 = por %p167, %p168
      %p171 = scmp.ne.s32.totalorder %s156, %s170
      %p172 = scmp.eq.s32.totalorder %s20, 0
      %p173 = por %p171, %p172
      %s175 = sadd.s32 %s174, 1
      %p178 = scmp.eq.s32.totalorder %s14, 3
      %p179 = scmp.ne.s32.totalorder %s174, %s176
      %p180 = scmp.eq.s32.totalorder %s14, 0
      %p181 = por %p179, %p180
      %p182 = scmp.ne.s32.totalorder %s174, %s176
      %p183 = scmp.eq.s32.totalorder %s19, 3
      %p184 = por %p182, %p183
      %p185 = scmp.ne.s32.totalorder %s176, %s177
      %p186 = scmp.eq.s32.totalorder %s19, 0
      %p187 = por %p185, %p186
      %p188 = scmp.ne.s32.totalorder %s176, %s177
      %p189 = scmp.eq.s32.totalorder %s20, 3
      %p190 = por %p188, %p189
      %p192 = scmp.ne.s32.totalorder %s177, %s191
      %p193 = scmp.eq.s32.totalorder %s20, 0
      %p194 = por %p192, %p193
      %p195 = scmp.le.s32.totalorder 1, %s14
      %p196 = scmp.lt.s32.totalorder %s14, 5
      %p197 = pnand %p195, %p196
      %p198 = pneg %p197
      // Predicated region
      $region9: #{_lambda_.25} parent=5 // pred_check
        _
      $region10: #{_lambda_.25} parent=5 // pred_check_branch
        %200 = sbr.rel (%p197) target = $region12
      $region11: #{_lambda_.25} parent=5 // pred_region
        %s201 = ssub.s32 %s14, 1
        // Predicated region
        $region13: #{_lambda_.25} parent=11 // pred_check
          %p202 = pneg %p61
        $region14: #{_lambda_.25} parent=11 // pred_check_branch
          %204 = sbr.rel (%p202) target = $region16
        $region15: #{_lambda_.25} parent=11 // pred_region
          _
        $region16: #{_lambda_.25} parent=11 // pred_fallthru
          _
        // Predicated region
        $region17: #{_lambda_.25} parent=11 // pred_check
          %p205 = pneg %p82
        $region18: #{_lambda_.25} parent=11 // pred_check_branch
          %207 = sbr.rel (%p205) target = $region20
        $region19: #{_lambda_.25} parent=11 // pred_region
          _
        $region20: #{_lambda_.25} parent=11 // pred_fallthru
          _
        // Predicated region
        $region21: #{_lambda_.25} parent=11 // pred_check
          %p208 = pneg %p103
        $region22: #{_lambda_.25} parent=11 // pred_check_branch
          %210 = sbr.rel (%p208) target = $region24
        $region23: #{_lambda_.25} parent=11 // pred_region
          _
        $region24: #{_lambda_.25} parent=11 // pred_fallthru
          _
        // Predicated region
        $region25: #{_lambda_.25} parent=11 // pred_check
          %p211 = pneg %p124
        $region26: #{_lambda_.25} parent=11 // pred_check_branch
          %213 = sbr.rel (%p211) target = $region28
        $region27: #{_lambda_.25} parent=11 // pred_region
          _
        $region28: #{_lambda_.25} parent=11 // pred_fallthru
          _
        // Predicated region
        $region29: #{_lambda_.25} parent=11 // pred_check
          %p214 = pneg %p145
        $region30: #{_lambda_.25} parent=11 // pred_check_branch
          %216 = sbr.rel (%p214) target = $region32
        $region31: #{_lambda_.25} parent=11 // pred_region
          _
        $region32: #{_lambda_.25} parent=11 // pred_fallthru
          _
        // Predicated region
        $region33: #{_lambda_.25} parent=11 // pred_check
          %p217 = pneg %p166
        $region34: #{_lambda_.25} parent=11 // pred_check_branch
          %219 = sbr.rel (%p217) target = $region36
        $region35: #{_lambda_.25} parent=11 // pred_region
          _
        $region36: #{_lambda_.25} parent=11 // pred_fallthru
          _
      $region12: #{_lambda_.25} parent=5 // pred_fallthru
        _
      %p220 = scmp.lt.s32.totalorder %s14, 4
      // Predicated region
      $region37: #{_lambda_.25} parent=5 // pred_check
        %p221 = pneg %p220
      $region38: #{_lambda_.25} parent=5 // pred_check_branch
        %223 = sbr.rel (%p221) target = $region40
      $region39: #{_lambda_.25} parent=5 // pred_region
        // Predicated region
        $region41: #{_lambda_.25} parent=39 // pred_check
          %p224 = pneg %p34
        $region42: #{_lambda_.25} parent=39 // pred_check_branch
          %226 = sbr.rel (%p224) target = $region44
        $region43: #{_lambda_.25} parent=39 // pred_region
          %s227 = sand.u32 %s24, 1
          %s228 = sand.u32 %s24, 1
          %s229 = smul.addr %s228, 4
          %s230 = scalar_lea.vmem [#allocation3], %s229
          %s231 = smul.addr %s14, 2
          %s232 = scalar_lea.vmem %s0, %s231
          // Predicated region
          $region45: #{_lambda_.25} parent=43 // pred_check
            _
          $region46: #{_lambda_.25} parent=43 // pred_check_branch
            %234 = sbr.rel (0) target = $region48
          $region47: #{_lambda_.25} parent=43 // pred_region
            // Predicated region
            $region49: #{_lambda_.25} parent=47 // pred_check
              _
            $region50: #{_lambda_.25} parent=47 // pred_check_branch
              %236 = sbr.rel target = $region52
            $region51: #{_lambda_.25} parent=47 // pred_region
              // Predicated region
              $region64: #{_lambda_.25} parent=51 // pred_check
                _
              $region65: #{_lambda_.25} parent=51 // pred_check_branch
                %254 = sbr.rel (0) target = $region67
              $region66: #{_lambda_.25} parent=51 // pred_region
                %s256 = ssub.s32 4, 1
                loop: start=0, step=1, limit=1
                $region68: #{_lambda_.25} parent=66 // loop_pre_header
                  _
                $region69: #{_lambda_.25} parent=66 // loop_header
                  %s258 = sphi 0, %s262
                  %p259 = scmp.ge.s32.totalorder %s258, 1
                  %s263 = sphi %s232, %s232
                  %s264 = sphi %s230, %s230
                $region70: #{_lambda_.25} parent=66 // loop_header_branch
                  %261 = sbr.rel (%p259) target = $region74
                $region71: #{_lambda_.25} parent=66 // loop_body
                  %v265 = vld [vmem:[%s263] sm:%s256]
                  %266 = vst [vmem:[%s264] sm:%s256] %v265
                  %v267 = vld [vmem:[%s263 + $0x8] sm:%s256]
                  %268 = vst [vmem:[%s264 + $0x2] sm:%s256] %v267
                $region72: #{_lambda_.25} parent=66 // loop_footer
                  %s262 = sadd.s32 1, %s258
                $region73: #{_lambda_.25} parent=66 // loop_footer_branch
                  %257 = sbr.rel target = $region69
                $region74: #{_lambda_.25} parent=66 // loop_exit
                  _
              $region67: #{_lambda_.25} parent=51 // pred_fallthru
                _
            $region52: #{_lambda_.25} parent=47 // pred_fallthru
              _
            // Predicated region
            $region53: #{_lambda_.25} parent=47 // pred_check
              _
            $region54: #{_lambda_.25} parent=47 // pred_check_branch
              %238 = sbr.rel (0) target = $region56
            $region55: #{_lambda_.25} parent=47 // pred_region
              %s240 = ssub.s32 4, 1
              loop: start=0, step=1, limit=1
              $region57: #{_lambda_.25} parent=55 // loop_pre_header
                _
              $region58: #{_lambda_.25} parent=55 // loop_header
                %s242 = sphi 0, %s246
                %p243 = scmp.ge.s32.totalorder %s242, 1
                %s247 = sphi %s232, %s232
                %s248 = sphi %s230, %s230
              $region59: #{_lambda_.25} parent=55 // loop_header_branch
                %245 = sbr.rel (%p243) target = $region63
              $region60: #{_lambda_.25} parent=55 // loop_body
                %v249 = vld [vmem:[%s247] sm:%s240]
                %250 = vst [vmem:[%s248] sm:%s240] %v249
                %v251 = vld [vmem:[%s247 + $0x8] sm:%s240]
                %252 = vst [vmem:[%s248 + $0x2] sm:%s240] %v251
              $region61: #{_lambda_.25} parent=55 // loop_footer
                %s246 = sadd.s32 1, %s242
              $region62: #{_lambda_.25} parent=55 // loop_footer_branch
                %241 = sbr.rel target = $region58
              $region63: #{_lambda_.25} parent=55 // loop_exit
                _
            $region56: #{_lambda_.25} parent=47 // pred_fallthru
              _
          $region48: #{_lambda_.25} parent=43 // pred_fallthru
            _
          %269 = vnop
        $region44: #{_lambda_.25} parent=39 // pred_fallthru
          _
      $region40: #{_lambda_.25} parent=5 // pred_fallthru
        _
      %p270 = scmp.le.s32.totalorder 1, %s14
      %p271 = scmp.lt.s32.totalorder %s14, 5
      %p272 = pnand %p270, %p271
      %p273 = pneg %p272
      // Predicated region
      $region75: #{_lambda_.25} parent=5 // pred_check
        _
      $region76: #{_lambda_.25} parent=5 // pred_check_branch
        %275 = sbr.rel (%p272) target = $region78
      $region77: #{_lambda_.25} parent=5 // pred_region
        %s276 = ssub.s32 %s14, 1
        %s277 = sand.u32 %s27, 1
        %s278 = sand.u32 %s27, 1
        %s279 = smul.addr %s278, 4
        %s280 = scalar_lea.vmem [#allocation3], %s279
        // Predicated region
        $region79: #{_lambda_.25} parent=77 // pred_check
          %p281 = pneg %p40
        $region80: #{_lambda_.25} parent=77 // pred_check_branch
          %283 = sbr.rel (%p281) target = $region82
        $region81: #{_lambda_.25} parent=77 // pred_region
          _
        $region82: #{_lambda_.25} parent=77 // pred_fallthru
          _
        %s284 = sand.u32 %s27, 1
        %s285 = sand.u32 %s27, 1
        %s286 = smul.addr %s285, 4
        %s287 = scalar_lea.vmem [#allocation3], %s286
        %p288 = pneg %p40
        %p289 = pneg %p37
        %p290 = pneg %p61
        %p291 = pneg %p58
        %p292 = pneg %p82
        %p293 = pneg %p79
        %p294 = pneg %p103
        %p295 = pneg %p100
        %p296 = pneg %p124
        %p297 = pneg %p121
        %p298 = pneg %p145
        %p299 = pneg %p142
        %p300 = pneg %p166
        %p301 = pneg %p163
        %p302 = pneg %p187
        %p303 = pneg %p184
        %p304 = scmp.eq.s32.totalorder %s19, 0
        // Predicated region
        $region83: #{_lambda_.25} parent=77 // pred_check
          %p305 = pneg %p304
        $region84: #{_lambda_.25} parent=77 // pred_check_branch
          %307 = sbr.rel (%p305) target = $region86
        $region85: #{_lambda_.25} parent=77 // pred_region
          %vm308 = vcmask 254976
          %309 = vst.msk [vmem:[#allocation2] sm:$0x3] %vm308, 0.0
        $region86: #{_lambda_.25} parent=77 // pred_fallthru
          _
        %v310 = vld [vmem:[%s280] sm:$0x3]
        %v311 = vld [vmem:[%s280 + $0x2] sm:$0x3]
        %v312 = vunpack.c.l.bf16 %v310
        %v313 = vunpack.c.l.bf16 %v311
        %v314 = vld [vmem:[%s1] sm:$0x1]
        %v316 = vperm.slane %v314, 0
        %v318 = vmul.f32 %v312, %v316
        %v319 = vmul.f32 %v313, %v316
        %v320 = vld [vmem:[%s2] sm:$0x1]
        %v322 = vperm.slane %v320, 0
        %v324 = vadd.f32 %v318, %v322
        %v325 = vadd.f32 %v319, %v322
        %v326 = vmax.f32 %v324, 0.0
        %v327 = vmax.f32 %v325, 0.0
        %v328 = vld [vmem:[#allocation2] sm:$0x3]
        %vm329 = vcmask 257024
        %v330 = vsel %vm329, %v326, 0.0
        %v331 = vrot.slane %v330, 4
        %v332 = vadd.f32 %v330, %v331
        %v333 = vrot.slane %v332, 2
        %v334 = vadd.f32 %v332, %v333
        %v335 = vrot.slane %v334, 1
        %v336 = vadd.f32 %v334, %v335
        %v337 = vsel %vm329, %v327, 0.0
        %v338 = vrot.slane %v337, 4
        %v339 = vadd.f32 %v337, %v338
        %v340 = vrot.slane %v339, 2
        %v341 = vadd.f32 %v339, %v340
        %v342 = vrot.slane %v341, 1
        %v343 = vadd.f32 %v341, %v342
        %vm346 = vcmask 1041409
        %v347 = vsel %vm346, %v343, %v336
        %v349 = vadd.f32 %v328, %v347
        %vm350 = vcmask 254976
        %351 = vst.msk [vmem:[#allocation2] sm:$0x3] %vm350, %v349
        %p352 = scmp.eq.s32.totalorder %s19, 3
        // Predicated region
        $region87: #{_lambda_.25} parent=77 // pred_check
          %p353 = pneg %p352
        $region88: #{_lambda_.25} parent=77 // pred_check_branch
          %355 = sbr.rel (%p353) target = $region90
        $region89: #{_lambda_.25} parent=77 // pred_region
          %v356 = vld [vmem:[#allocation2] sm:$0x3]
          %v357 = vmul.f32 %v356, 0.0625
          %v358 = vld [vmem:[%s5] sm:$0xff]
          %v359 = vld [vmem:[%s5 + $0x8] sm:$0xff]
          %v360 = vld [vmem:[%s5 + $0x10] sm:$0xff]
          %v361 = vld [vmem:[%s5 + $0x18] sm:$0xff]
          %v362 = vld [vmem:[%s3] sm:$0x3]
          %v363 = vld [vmem:[%s4] sm:$0x3]
          %vm364 = vcmask 15360
          %v366 = vsel %vm364, %v362, 0
          %vm368 = vcmask 1041408
          %v370 = vsel %vm368, %v363, 0
          %372 = vmatpush.msra.mxu0 0.0
          %373 = vmatpush.msra.mxu0 0.0
          %374 = vmatpush.msra.mxu0 0.0
          %375 = vmatpush.msra.mxu0 0.0
          %376 = vmatpush.msra.mxu0 0.0
          %377 = vmatpush.msra.mxu0 0.0
          %378 = vmatpush.msra.mxu0 0.0
          %379 = vmatpush.msra.mxu0 0.0
          %380 = vmatpush.msra.mxu0 0.0
          %381 = vmatpush.msra.mxu0 0.0
          %382 = vmatpush.msra.mxu0 0.0
          %383 = vmatpush.msra.mxu0 0.0
          %384 = vmatpush.msra.mxu0 0.0
          %385 = vmatpush.msra.mxu0 0.0
          %386 = vmatpush.msra.mxu0 0.0
          %387 = vmatpush.msra.mxu0 %v370
          %388 = vmatmul.f32.gmra.mxu0 %v366
          %v389 = vpop.f32.mrf.mxu0
          %v390 = vadd.f32 0.0, %v389
          %391 = vdwg.mxu0
          %vm392 = vcmask 261120
          %v394 = vsel %vm392, %v357, 0
          %396 = vmatpush.msra.mxu0 0.0
          %397 = vmatpush.msra.mxu0 0.0
          %398 = vmatpush.msra.mxu0 0.0
          %399 = vmatpush.msra.mxu0 0.0
          %400 = vmatpush.msra.mxu0 0.0
          %401 = vmatpush.msra.mxu0 0.0
          %402 = vmatpush.msra.mxu0 0.0
          %403 = vmatpush.msra.mxu0 0.0
          %404 = vmatpush.msra.mxu0 0.0
          %405 = vmatpush.msra.mxu0 0.0
          %406 = vmatpush.msra.mxu0 0.0
          %407 = vmatpush.msra.mxu0 0.0
          %408 = vmatpush.msra.mxu0 %v361
          %409 = vmatpush.msra.mxu0 %v360
          %410 = vmatpush.msra.mxu0 %v359
          %411 = vmatpush.msra.mxu0 %v358
          %412 = vmatmul.f32.gmra.mxu0 %v394
          %v413 = vpop.f32.mrf.mxu0
          %v414 = vadd.f32 %v390, %v413
          %415 = vdwg.mxu0
          %v416 = vld [vmem:[%s6] sm:$0x1]
          %v418 = vperm.slane %v416, 0
          %v420 = vadd.f32 %v414, %v418
          %421 = vst [vmem:[#allocation4] sm:$0x3] %v420
        $region90: #{_lambda_.25} parent=77 // pred_fallthru
          _
        // Predicated region
        $region91: #{_lambda_.25} parent=77 // pred_check
          %p422 = pneg %p184
        $region92: #{_lambda_.25} parent=77 // pred_check_branch
          %424 = sbr.rel (%p422) target = $region94
        $region93: #{_lambda_.25} parent=77 // pred_region
          %426 = vsyncadd [#allocation5], 0
          %s428 = sshll.u32 [#allocation4], 4
          %s429 = int_to_ptr.vmem [resolvable:$true] %s428
          %s430 = sshll.u32 %s7, 4
          %s431 = int_to_ptr.hbm [resolvable:$true] %s430
          %433 = dma.vmem_to_hbm [thread:$0]  %s429, 32, %s431, [#allocation5]
        $region94: #{_lambda_.25} parent=77 // pred_fallthru
          _
        // Predicated region
        $region95: #{_lambda_.25} parent=77 // pred_check
          %p434 = pneg %p184
        $region96: #{_lambda_.25} parent=77 // pred_check_branch
          %436 = sbr.rel (%p434) target = $region98
        $region97: #{_lambda_.25} parent=77 // pred_region
          %438 = dma.done [#allocation5], 32
        $region98: #{_lambda_.25} parent=77 // pred_fallthru
          _
      $region78: #{_lambda_.25} parent=5 // pred_fallthru
        _
      %p439 = scmp.le.s32.totalorder 2, %s14
      // Predicated region
      $region99: #{_lambda_.25} parent=5 // pred_check
        %p440 = pneg %p439
      $region100: #{_lambda_.25} parent=5 // pred_check_branch
        %442 = sbr.rel (%p440) target = $region102
      $region101: #{_lambda_.25} parent=5 // pred_region
        %s443 = ssub.s32 %s14, 2
      $region102: #{_lambda_.25} parent=5 // pred_fallthru
        _
    $region6: #{_lambda_.25} parent=1 // loop_footer
      %s18 = sadd.s32 1, %s14
    $region7: #{_lambda_.25} parent=1 // loop_footer_branch
      %13 = sbr.rel target = $region3
    $region8: #{_lambda_.25} parent=1 // loop_exit
      _
    %444 = vsyncpa [#allocation5], 1
    %s445 = scalar_lea.sflag [#allocation5], 1
    %446 = vsyncpa %s445, 1

</llo_original>
